<compile_context>
chip_gen: v7x
topology: tpu7x:2x2x1
jax: 0.10.0
libtpu: 0.0.40
codegen_flags: <defaults>
</compile_context>

<pallas_src>
import numpy as np

import jax
import jax.numpy as jnp
from jax.experimental import pallas as pl
from jax.experimental.pallas import tpu as pltpu

# bf16 operands are MXU-native on v5e/v6e/v7x; accumulation stays f32.
# Set to jnp.float32 to run a pure-f32 variant (reference check still passes).
MATMUL_DTYPE = jnp.bfloat16

C_ALIGN = 16    # channel (sublane) padding: bf16 packed tile is (16, 128)
M_ALIGN = 128   # flattened-spatial (lane) padding: lane-dense vregs / MXU cols


def _round_up(x, m):
    return (x + m - 1) // m * m


# ---------------------------------------------------------------------------
# Parameters: synthetic conv+BN (PyTorch weight layout Cout,Cin,kh,kw), BN
# scale folded into the weights at build time, channels padded & cast to bf16.
# ---------------------------------------------------------------------------
def make_conv_bn_params(key, cin, cout, ksize=3, stride=1, eps=1e-5):
    w = 0.1 * jax.random.normal(key, (cout, cin, ksize, ksize), dtype=jnp.float32)
    gamma = 1.0 + 0.01 * jnp.arange(cout, dtype=jnp.float32)
    beta = 0.01 * jnp.arange(cout, dtype=jnp.float32)
    mean = jnp.zeros((cout,), jnp.float32)
    var = jnp.ones((cout,), jnp.float32)
    scale = gamma / jnp.sqrt(var + eps)
    bias = beta - mean * scale

    cin_p = _round_up(cin, C_ALIGN)
    cout_p = _round_up(cout, C_ALIGN)

    # (Cout,Cin,kh,kw) -> (k=kh*3+kw, Cout, Cin); fold BN scale into out rows.
    wk = jnp.transpose(w, (2, 3, 0, 1)).reshape(ksize * ksize, cout, cin)
    wk = wk * scale[None, :, None]
    # Zero-pad channels; padded rows/cols stay exactly 0 through bias+ReLU.
    wk = jnp.pad(wk, ((0, 0), (0, cout_p - cout), (0, cin_p - cin)))
    wk = wk.astype(MATMUL_DTYPE)
    bias_p = jnp.pad(bias, (0, cout_p - cout)).reshape(cout_p, 1)  # f32

    return dict(w=wk, bias=bias_p, cin=cin, cout=cout,
                cin_pad=cin_p, cout_pad=cout_p, stride=stride)


# ---------------------------------------------------------------------------
# One-hot gather matrix = in-kernel im2col.  S[min, k*Mout_pad + mout] = 1 iff
# input position `min` feeds output position `mout` at kernel offset k (zero
# columns for the pad=1 ring, zero rows for padded positions).
# ---------------------------------------------------------------------------
def _build_gather(B, Hin, Win, stride, m_in_pad, ksize=3, pad=1):
    Ho = (Hin + 2 * pad - ksize) // stride + 1
    Wo = (Win + 2 * pad - ksize) // stride + 1
    m_out = B * Ho * Wo
    m_out_pad = _round_up(m_out, M_ALIGN)
    S = np.zeros((m_in_pad, ksize * ksize * m_out_pad), np.float32)
    for b in range(B):
        for ho in range(Ho):
            for wo in range(Wo):
                mo = (b * Ho + ho) * Wo + wo
                for kh in range(ksize):
                    for kw in range(ksize):
                        hi = ho * stride + kh - pad
                        wi = wo * stride + kw - pad
                        if 0 <= hi < Hin and 0 <= wi < Win:
                            mi = (b * Hin + hi) * Win + wi
                            k = kh * ksize + kw
                            S[mi, k * m_out_pad + mo] = 1.0
    return jnp.asarray(S, dtype=MATMUL_DTYPE), Ho, Wo, m_out, m_out_pad


def _build_plan(layers, B, Hin, Win, cin):
    """Static per-layer geometry + operands for the fused kernel."""
    plan = []
    H, W = Hin, Win
    m_in = B * H * W
    m_in_pad0 = _round_up(m_in, M_ALIGN)
    m_in_pad = m_in_pad0
    for p in layers:
        assert p["cin"] == cin, (p["cin"], cin)
        S, Ho, Wo, m_out, m_out_pad = _build_gather(B, H, W, p["stride"], m_in_pad)
        plan.append(dict(S=S, w=p["w"], bias=p["bias"],
                         cin_pad=p["cin_pad"], cout_pad=p["cout_pad"],
                         cout=p["cout"], m_out=m_out, m_out_pad=m_out_pad,
                         Ho=Ho, Wo=Wo))
        H, W, cin = Ho, Wo, p["cout"]
        m_in_pad = m_out_pad
    return plan, m_in_pad0


# ---------------------------------------------------------------------------
# The fused Pallas kernel: whole conv-bn-relu chain in one call.
#   per layer:  g   = act (Cp,Mp) @ S (Mp, 9*Mo)          # gather / im2col
#               acc = sum_k W_k (Co,Cp) @ g_k (Cp,Mo)      # f32 accumulate
#               act = relu(acc + bias)                      # stays on-chip
# Only the final layer's (padded) activation is written to HBM.
# ---------------------------------------------------------------------------
def _fused_forward(x_cm_pad, plan):
    n_layers = len(plan)
    last = plan[-1]
    out_shape = jax.ShapeDtypeStruct((last["cout_pad"], last["m_out_pad"]),
                                     jnp.float32)

    def kernel(*refs):
        x_ref, out_ref = refs[0], refs[-1]
        act = x_ref[...]
        if act.dtype != MATMUL_DTYPE:
            act = act.astype(MATMUL_DTYPE)
        y = None
        for li in range(n_layers):
            s_ref, w_ref, b_ref = refs[1 + 3 * li: 4 + 3 * li]
            cout_p = w_ref.shape[1]
            m_out_p = s_ref.shape[1] // 9
            # One big MXU gather matmul (contraction over Min_pad, lane-dense).
            g = jnp.dot(act, s_ref[...], preferred_element_type=jnp.float32)
            g = g.astype(MATMUL_DTYPE)
            acc = jnp.zeros((cout_p, m_out_p), jnp.float32)
            for k in range(9):
                gk = g[:, k * m_out_p:(k + 1) * m_out_p]   # 128-aligned lane slice
                acc = acc + jnp.dot(w_ref[k], gk,
                                    preferred_element_type=jnp.float32)
            # Folded-BN bias (f32, (Cout_pad,1) lane-broadcast) + ReLU.
            # NOTE: padded M lanes carry relu(bias) garbage; they are never
            # selected by downstream gather matrices and are sliced off later.
            y = jnp.maximum(acc + b_ref[...], 0.0)
            act = y.astype(MATMUL_DTYPE)
        out_ref[...] = y.astype(out_ref.dtype)

    operands = [x_cm_pad]
    for lp in plan:
        operands += [lp["S"], lp["w"], lp["bias"]]

    def _full_spec(a):
        nd = a.ndim

        def imap(i):
            return (0,) * nd

        return pl.BlockSpec(a.shape, imap)

    in_specs = [_full_spec(a) for a in operands]
    out_specs = pl.BlockSpec(out_shape.shape, lambda i: (0, 0))

    flops = 0
    for lp in plan:
        flops += 2 * lp["cin_pad"] * lp["S"].shape[0] * lp["S"].shape[1]
        flops += 9 * 2 * lp["cout_pad"] * lp["cin_pad"] * lp["m_out_pad"]
    bytes_accessed = sum(int(np.prod(a.shape)) * int(a.dtype.itemsize)
                         for a in operands)
    bytes_accessed += int(np.prod(out_shape.shape)) * 4
    cost = pl.CostEstimate(flops=int(flops), transcendentals=0,
                           bytes_accessed=int(bytes_accessed))

    return pl.pallas_call(
        kernel,
        out_shape=out_shape,
        grid=(1,),
        in_specs=in_specs,
        out_specs=out_specs,
        compiler_params=pltpu.CompilerParams(
            dimension_semantics=("arbitrary",),
            vmem_limit_bytes=32 * 1024 * 1024),
        cost_estimate=cost,
    )(*operands)


# ---------------------------------------------------------------------------
# Synthetic HRNet-style backbone model (4 scales).  The whole chain needed for
# a given scale runs as ONE fused Pallas call; wrapper-side ops are only the
# NCHW <-> (C, B*H*W) layout transforms and channel/position zero-padding.
# ---------------------------------------------------------------------------
class SmallHRNetModel:
    def __init__(self, key, cin=4):
        k = jax.random.split(key, 5)
        self.cin = cin
        self.stem = make_conv_bn_params(k[0], cin, 8, stride=2)
        self.branch0 = make_conv_bn_params(k[1], 8, 8, stride=1)
        self.trans1 = make_conv_bn_params(k[2], 8, 16, stride=2)
        self.trans2 = make_conv_bn_params(k[3], 16, 32, stride=2)
        self.trans3 = make_conv_bn_params(k[4], 32, 64, stride=2)
        self._plan_cache = {}

    def chain(self, scale):
        layers = [self.stem, self.branch0, self.trans1, self.trans2, self.trans3]
        return layers[: scale + 2]

    def _plan(self, x_shape, scale):
        key = (tuple(int(d) for d in x_shape), int(scale))
        if key not in self._plan_cache:
            B, C, H, W = key[0]
            self._plan_cache[key] = _build_plan(self.chain(scale), B, H, W, C)
        return self._plan_cache[key]

    def forward_scale(self, x_nchw, scale):
        B, C, H, W = x_nchw.shape
        plan, m_in_pad = self._plan(x_nchw.shape, scale)
        cin_pad = plan[0]["cin_pad"]
        # NCHW -> (C, B*H*W) once; zero-pad channels (sublane) / positions (lane).
        x_cm = jnp.transpose(x_nchw, (1, 0, 2, 3)).reshape(C, B * H * W)
        x_cm = jnp.pad(x_cm, ((0, cin_pad - C), (0, m_in_pad - B * H * W)))
        x_cm = x_cm.astype(MATMUL_DTYPE)

        y = _fused_forward(x_cm, plan)                # (Cout_pad, Mout_pad) f32
        last = plan[-1]
        y = y[: last["cout"], : last["m_out"]]        # drop padded rows/lanes
        y = y.reshape(last["cout"], B, last["Ho"], last["Wo"])
        return jnp.transpose(y, (1, 0, 2, 3))         # NCHW

    def __call__(self, x_nchw):
        return [self.forward_scale(x_nchw, s) for s in range(4)]


# ---------------------------------------------------------------------------
# HRNetBackbone wrapper — exact semantics of the PyTorch module (jit'ed).
# Only the selected scale's chain is built/executed (same result as the
# original model(x)[scale] since deeper layers don't feed earlier scales).
# ---------------------------------------------------------------------------
class HRNetBackbone:
    def __init__(self, model, scale=2):
        self.model = model
        self.scale = scale
        self._forward = jax.jit(
            lambda x: {"out": self.model.forward_scale(x, self.scale)})

    def forward(self, x):
        return self._forward(x)

    __call__ = forward


# ---------------------------------------------------------------------------
# Pure-XLA reference with the SAME numerics (bf16 operands, f32 accumulation,
# per-kernel-position accumulation) for the correctness cross-check.
# ---------------------------------------------------------------------------
def _reference_forward(model, x_nchw, scale):
    act = jnp.transpose(x_nchw, (0, 2, 3, 1))       # NHWC, f32
    for p in model.chain(scale):
        B, H, W, Cin = act.shape
        s = p["stride"]
        Ho = (H + 2 - 3) // s + 1
        Wo = (W + 2 - 3) // s + 1
        xp = jnp.pad(act.astype(MATMUL_DTYPE), ((0, 0), (1, 1), (1, 1), (0, 0)))
        acc = jnp.zeros((B, Ho, Wo, p["cout"]), jnp.float32)
        for k in range(9):
            kh, kw = divmod(k, 3)
            patch = xp[:, kh:kh + s * Ho:s, kw:kw + s * Wo:s, :]
            wk = p["w"][k, :p["cout"], :Cin]          # bf16, BN scale folded
            acc = acc + jnp.einsum("bhwc,oc->bhwo", patch, wk,
                                   preferred_element_type=jnp.float32)
        act = jnp.maximum(acc + p["bias"][: p["cout"], 0], 0.0)
    return jnp.transpose(act, (0, 3, 1, 2))


if __name__ == "__main__":
    key = jax.random.PRNGKey(0)
    k_params, k_input = jax.random.split(key)

    model = SmallHRNetModel(k_params, cin=4)
    backbone = HRNetBackbone(model, scale=2)

    # small NCHW input consistent with the module's conv-backbone interface
    x = jax.random.normal(k_input, (2, 4, 16, 16), dtype=jnp.float32)

    out = backbone(x)["out"]
    out = jax.block_until_ready(out)

    assert out.shape == (2, 32, 2, 2), out.shape
    assert out.dtype == jnp.float32
    assert bool(jnp.all(jnp.isfinite(out)))

    ref = _reference_forward(model, x, scale=2)
    assert bool(jnp.allclose(out, ref, rtol=1e-2, atol=1e-3)), (
        float(jnp.max(jnp.abs(out - ref))))

    print("KERNEL_OK")
</pallas_src>

<mosaic_0001>
module attributes {stable_mosaic.version = 11 : i64} {
  func.func @kernel(%arg0: i32, %arg1: memref<16x512xbf16, #tpu.memory_space<vmem>>, %arg2: memref<512x1152xbf16, #tpu.memory_space<vmem>>, %arg3: memref<9x16x16xbf16, #tpu.memory_space<vmem>>, %arg4: memref<16x1xf32, #tpu.memory_space<vmem>>, %arg5: memref<128x1152xbf16, #tpu.memory_space<vmem>>, %arg6: memref<9x16x16xbf16, #tpu.memory_space<vmem>>, %arg7: memref<16x1xf32, #tpu.memory_space<vmem>>, %arg8: memref<128x1152xbf16, #tpu.memory_space<vmem>>, %arg9: memref<9x16x16xbf16, #tpu.memory_space<vmem>>, %arg10: memref<16x1xf32, #tpu.memory_space<vmem>>, %arg11: memref<128x1152xbf16, #tpu.memory_space<vmem>>, %arg12: memref<9x32x16xbf16, #tpu.memory_space<vmem>>, %arg13: memref<32x1xf32, #tpu.memory_space<vmem>>, %arg14: memref<32x128xf32, #tpu.memory_space<vmem>>) attributes {dimension_semantics = [#tpu.dimension_semantics<arbitrary>], iteration_bounds = array<i64: 1>, scalar_prefetch = 0 : i64, scratch_operands = 0 : i64, tpu.core_type = #tpu.core_type<tc>, window_params = [{pipeline_mode = #tpu.pipeline_mode<synchronous>, transform_indices = @transform_0, window_bounds = array<i64: 16, 512>}, {pipeline_mode = #tpu.pipeline_mode<synchronous>, transform_indices = @transform_1, window_bounds = array<i64: 512, 1152>}, {pipeline_mode = #tpu.pipeline_mode<synchronous>, transform_indices = @transform_2, window_bounds = array<i64: 9, 16, 16>}, {pipeline_mode = #tpu.pipeline_mode<synchronous>, transform_indices = @transform_3, window_bounds = array<i64: 16, 1>}, {pipeline_mode = #tpu.pipeline_mode<synchronous>, transform_indices = @transform_4, window_bounds = array<i64: 128, 1152>}, {pipeline_mode = #tpu.pipeline_mode<synchronous>, transform_indices = @transform_5, window_bounds = array<i64: 9, 16, 16>}, {pipeline_mode = #tpu.pipeline_mode<synchronous>, transform_indices = @transform_6, window_bounds = array<i64: 16, 1>}, {pipeline_mode = #tpu.pipeline_mode<synchronous>, transform_indices = @transform_7, window_bounds = array<i64: 128, 1152>}, {pipeline_mode = #tpu.pipeline_mode<synchronous>, transform_indices = @transform_8, window_bounds = array<i64: 9, 16, 16>}, {pipeline_mode = #tpu.pipeline_mode<synchronous>, transform_indices = @transform_9, window_bounds = array<i64: 16, 1>}, {pipeline_mode = #tpu.pipeline_mode<synchronous>, transform_indices = @transform_10, window_bounds = array<i64: 128, 1152>}, {pipeline_mode = #tpu.pipeline_mode<synchronous>, transform_indices = @transform_11, window_bounds = array<i64: 9, 32, 16>}, {pipeline_mode = #tpu.pipeline_mode<synchronous>, transform_indices = @transform_12, window_bounds = array<i64: 32, 1>}, {pipeline_mode = #tpu.pipeline_mode<synchronous>, transform_indices = @transform_13, window_bounds = array<i64: 32, 128>}]} {
    %c0 = arith.constant 0 : index
    %c0_0 = arith.constant 0 : index
    %0 = vector.load %arg1[%c0, %c0_0] : memref<16x512xbf16, #tpu.memory_space<vmem>>, vector<16x512xbf16>
    %c0_1 = arith.constant 0 : index
    %c0_2 = arith.constant 0 : index
    %1 = vector.load %arg2[%c0_1, %c0_2] : memref<512x1152xbf16, #tpu.memory_space<vmem>>, vector<512x1152xbf16>
    %cst = arith.constant dense<0.000000e+00> : vector<16x1152xf32>
    %2 = tpu.matmul %0, %1, %cst {dimension_numbers = #tpu.dot_dimension_numbers<[1], [0], [0], [1], [0, 0, 1, 1], [], []>} : vector<16x512xbf16>, vector<512x1152xbf16>, vector<16x1152xf32> -> vector<16x1152xf32>
    %3 = arith.truncf %2 : vector<16x1152xf32> to vector<16x1152xbf16>
    %cst_3 = arith.constant 0.000000e+00 : f32
    %4 = vector.broadcast %cst_3 : f32 to vector<16x128xf32>
    %5 = vector.extract_strided_slice %3 {offsets = [0, 0], sizes = [16, 128], strides = [1, 1]} : vector<16x1152xbf16> to vector<16x128xbf16>
    %c0_4 = arith.constant 0 : index
    %c0_5 = arith.constant 0 : index
    %c0_6 = arith.constant 0 : index
    %6 = vector.load %arg3[%c0_4, %c0_5, %c0_6] : memref<9x16x16xbf16, #tpu.memory_space<vmem>>, vector<1x16x16xbf16>
    %7 = vector.shape_cast %6 : vector<1x16x16xbf16> to vector<16x16xbf16>
    %cst_7 = arith.constant dense<0.000000e+00> : vector<16x128xf32>
    %8 = tpu.matmul %7, %5, %cst_7 {dimension_numbers = #tpu.dot_dimension_numbers<[1], [0], [0], [1], [0, 0, 1, 1], [], []>} : vector<16x16xbf16>, vector<16x128xbf16>, vector<16x128xf32> -> vector<16x128xf32>
    %9 = arith.addf %4, %8 : vector<16x128xf32>
    %10 = vector.extract_strided_slice %3 {offsets = [0, 128], sizes = [16, 128], strides = [1, 1]} : vector<16x1152xbf16> to vector<16x128xbf16>
    %c1 = arith.constant 1 : index
    %c0_8 = arith.constant 0 : index
    %c0_9 = arith.constant 0 : index
    %11 = vector.load %arg3[%c1, %c0_8, %c0_9] : memref<9x16x16xbf16, #tpu.memory_space<vmem>>, vector<1x16x16xbf16>
    %12 = vector.shape_cast %11 : vector<1x16x16xbf16> to vector<16x16xbf16>
    %cst_10 = arith.constant dense<0.000000e+00> : vector<16x128xf32>
    %13 = tpu.matmul %12, %10, %cst_10 {dimension_numbers = #tpu.dot_dimension_numbers<[1], [0], [0], [1], [0, 0, 1, 1], [], []>} : vector<16x16xbf16>, vector<16x128xbf16>, vector<16x128xf32> -> vector<16x128xf32>
    %14 = arith.addf %9, %13 : vector<16x128xf32>
    %15 = vector.extract_strided_slice %3 {offsets = [0, 256], sizes = [16, 128], strides = [1, 1]} : vector<16x1152xbf16> to vector<16x128xbf16>
    %c2 = arith.constant 2 : index
    %c0_11 = arith.constant 0 : index
    %c0_12 = arith.constant 0 : index
    %16 = vector.load %arg3[%c2, %c0_11, %c0_12] : memref<9x16x16xbf16, #tpu.memory_space<vmem>>, vector<1x16x16xbf16>
    %17 = vector.shape_cast %16 : vector<1x16x16xbf16> to vector<16x16xbf16>
    %cst_13 = arith.constant dense<0.000000e+00> : vector<16x128xf32>
    %18 = tpu.matmul %17, %15, %cst_13 {dimension_numbers = #tpu.dot_dimension_numbers<[1], [0], [0], [1], [0, 0, 1, 1], [], []>} : vector<16x16xbf16>, vector<16x128xbf16>, vector<16x128xf32> -> vector<16x128xf32>
    %19 = arith.addf %14, %18 : vector<16x128xf32>
    %20 = vector.extract_strided_slice %3 {offsets = [0, 384], sizes = [16, 128], strides = [1, 1]} : vector<16x1152xbf16> to vector<16x128xbf16>
    %c3 = arith.constant 3 : index
    %c0_14 = arith.constant 0 : index
    %c0_15 = arith.constant 0 : index
    %21 = vector.load %arg3[%c3, %c0_14, %c0_15] : memref<9x16x16xbf16, #tpu.memory_space<vmem>>, vector<1x16x16xbf16>
    %22 = vector.shape_cast %21 : vector<1x16x16xbf16> to vector<16x16xbf16>
    %cst_16 = arith.constant dense<0.000000e+00> : vector<16x128xf32>
    %23 = tpu.matmul %22, %20, %cst_16 {dimension_numbers = #tpu.dot_dimension_numbers<[1], [0], [0], [1], [0, 0, 1, 1], [], []>} : vector<16x16xbf16>, vector<16x128xbf16>, vector<16x128xf32> -> vector<16x128xf32>
    %24 = arith.addf %19, %23 : vector<16x128xf32>
    %25 = vector.extract_strided_slice %3 {offsets = [0, 512], sizes = [16, 128], strides = [1, 1]} : vector<16x1152xbf16> to vector<16x128xbf16>
    %c4 = arith.constant 4 : index
    %c0_17 = arith.constant 0 : index
    %c0_18 = arith.constant 0 : index
    %26 = vector.load %arg3[%c4, %c0_17, %c0_18] : memref<9x16x16xbf16, #tpu.memory_space<vmem>>, vector<1x16x16xbf16>
    %27 = vector.shape_cast %26 : vector<1x16x16xbf16> to vector<16x16xbf16>
    %cst_19 = arith.constant dense<0.000000e+00> : vector<16x128xf32>
    %28 = tpu.matmul %27, %25, %cst_19 {dimension_numbers = #tpu.dot_dimension_numbers<[1], [0], [0], [1], [0, 0, 1, 1], [], []>} : vector<16x16xbf16>, vector<16x128xbf16>, vector<16x128xf32> -> vector<16x128xf32>
    %29 = arith.addf %24, %28 : vector<16x128xf32>
    %30 = vector.extract_strided_slice %3 {offsets = [0, 640], sizes = [16, 128], strides = [1, 1]} : vector<16x1152xbf16> to vector<16x128xbf16>
    %c5 = arith.constant 5 : index
    %c0_20 = arith.constant 0 : index
    %c0_21 = arith.constant 0 : index
    %31 = vector.load %arg3[%c5, %c0_20, %c0_21] : memref<9x16x16xbf16, #tpu.memory_space<vmem>>, vector<1x16x16xbf16>
    %32 = vector.shape_cast %31 : vector<1x16x16xbf16> to vector<16x16xbf16>
    %cst_22 = arith.constant dense<0.000000e+00> : vector<16x128xf32>
    %33 = tpu.matmul %32, %30, %cst_22 {dimension_numbers = #tpu.dot_dimension_numbers<[1], [0], [0], [1], [0, 0, 1, 1], [], []>} : vector<16x16xbf16>, vector<16x128xbf16>, vector<16x128xf32> -> vector<16x128xf32>
    %34 = arith.addf %29, %33 : vector<16x128xf32>
    %35 = vector.extract_strided_slice %3 {offsets = [0, 768], sizes = [16, 128], strides = [1, 1]} : vector<16x1152xbf16> to vector<16x128xbf16>
    %c6 = arith.constant 6 : index
    %c0_23 = arith.constant 0 : index
    %c0_24 = arith.constant 0 : index
    %36 = vector.load %arg3[%c6, %c0_23, %c0_24] : memref<9x16x16xbf16, #tpu.memory_space<vmem>>, vector<1x16x16xbf16>
    %37 = vector.shape_cast %36 : vector<1x16x16xbf16> to vector<16x16xbf16>
    %cst_25 = arith.constant dense<0.000000e+00> : vector<16x128xf32>
    %38 = tpu.matmul %37, %35, %cst_25 {dimension_numbers = #tpu.dot_dimension_numbers<[1], [0], [0], [1], [0, 0, 1, 1], [], []>} : vector<16x16xbf16>, vector<16x128xbf16>, vector<16x128xf32> -> vector<16x128xf32>
    %39 = arith.addf %34, %38 : vector<16x128xf32>
    %40 = vector.extract_strided_slice %3 {offsets = [0, 896], sizes = [16, 128], strides = [1, 1]} : vector<16x1152xbf16> to vector<16x128xbf16>
    %c7 = arith.constant 7 : index
    %c0_26 = arith.constant 0 : index
    %c0_27 = arith.constant 0 : index
    %41 = vector.load %arg3[%c7, %c0_26, %c0_27] : memref<9x16x16xbf16, #tpu.memory_space<vmem>>, vector<1x16x16xbf16>
    %42 = vector.shape_cast %41 : vector<1x16x16xbf16> to vector<16x16xbf16>
    %cst_28 = arith.constant dense<0.000000e+00> : vector<16x128xf32>
    %43 = tpu.matmul %42, %40, %cst_28 {dimension_numbers = #tpu.dot_dimension_numbers<[1], [0], [0], [1], [0, 0, 1, 1], [], []>} : vector<16x16xbf16>, vector<16x128xbf16>, vector<16x128xf32> -> vector<16x128xf32>
    %44 = arith.addf %39, %43 : vector<16x128xf32>
    %45 = vector.extract_strided_slice %3 {offsets = [0, 1024], sizes = [16, 128], strides = [1, 1]} : vector<16x1152xbf16> to vector<16x128xbf16>
    %c8 = arith.constant 8 : index
    %c0_29 = arith.constant 0 : index
    %c0_30 = arith.constant 0 : index
    %46 = vector.load %arg3[%c8, %c0_29, %c0_30] : memref<9x16x16xbf16, #tpu.memory_space<vmem>>, vector<1x16x16xbf16>
    %47 = vector.shape_cast %46 : vector<1x16x16xbf16> to vector<16x16xbf16>
    %cst_31 = arith.constant dense<0.000000e+00> : vector<16x128xf32>
    %48 = tpu.matmul %47, %45, %cst_31 {dimension_numbers = #tpu.dot_dimension_numbers<[1], [0], [0], [1], [0, 0, 1, 1], [], []>} : vector<16x16xbf16>, vector<16x128xbf16>, vector<16x128xf32> -> vector<16x128xf32>
    %49 = arith.addf %44, %48 : vector<16x128xf32>
    %c0_32 = arith.constant 0 : index
    %c0_33 = arith.constant 0 : index
    %50 = vector.load %arg4[%c0_32, %c0_33] : memref<16x1xf32, #tpu.memory_space<vmem>>, vector<16x1xf32>
    %51 = vector.broadcast %50 : vector<16x1xf32> to vector<16x128xf32>
    %52 = arith.addf %49, %51 : vector<16x128xf32>
    %cst_34 = arith.constant 0.000000e+00 : f32
    %53 = vector.broadcast %cst_34 : f32 to vector<16x128xf32>
    %54 = arith.maximumf %52, %53 : vector<16x128xf32>
    %55 = arith.truncf %54 : vector<16x128xf32> to vector<16x128xbf16>
    %c0_35 = arith.constant 0 : index
    %c0_36 = arith.constant 0 : index
    %56 = vector.load %arg5[%c0_35, %c0_36] : memref<128x1152xbf16, #tpu.memory_space<vmem>>, vector<128x1152xbf16>
    %cst_37 = arith.constant dense<0.000000e+00> : vector<16x1152xf32>
    %57 = tpu.matmul %55, %56, %cst_37 {dimension_numbers = #tpu.dot_dimension_numbers<[1], [0], [0], [1], [0, 0, 1, 1], [], []>} : vector<16x128xbf16>, vector<128x1152xbf16>, vector<16x1152xf32> -> vector<16x1152xf32>
    %58 = arith.truncf %57 : vector<16x1152xf32> to vector<16x1152xbf16>
    %cst_38 = arith.constant 0.000000e+00 : f32
    %59 = vector.broadcast %cst_38 : f32 to vector<16x128xf32>
    %60 = vector.extract_strided_slice %58 {offsets = [0, 0], sizes = [16, 128], strides = [1, 1]} : vector<16x1152xbf16> to vector<16x128xbf16>
    %c0_39 = arith.constant 0 : index
    %c0_40 = arith.constant 0 : index
    %c0_41 = arith.constant 0 : index
    %61 = vector.load %arg6[%c0_39, %c0_40, %c0_41] : memref<9x16x16xbf16, #tpu.memory_space<vmem>>, vector<1x16x16xbf16>
    %62 = vector.shape_cast %61 : vector<1x16x16xbf16> to vector<16x16xbf16>
    %cst_42 = arith.constant dense<0.000000e+00> : vector<16x128xf32>
    %63 = tpu.matmul %62, %60, %cst_42 {dimension_numbers = #tpu.dot_dimension_numbers<[1], [0], [0], [1], [0, 0, 1, 1], [], []>} : vector<16x16xbf16>, vector<16x128xbf16>, vector<16x128xf32> -> vector<16x128xf32>
    %64 = arith.addf %59, %63 : vector<16x128xf32>
    %65 = vector.extract_strided_slice %58 {offsets = [0, 128], sizes = [16, 128], strides = [1, 1]} : vector<16x1152xbf16> to vector<16x128xbf16>
    %c1_43 = arith.constant 1 : index
    %c0_44 = arith.constant 0 : index
    %c0_45 = arith.constant 0 : index
    %66 = vector.load %arg6[%c1_43, %c0_44, %c0_45] : memref<9x16x16xbf16, #tpu.memory_space<vmem>>, vector<1x16x16xbf16>
    %67 = vector.shape_cast %66 : vector<1x16x16xbf16> to vector<16x16xbf16>
    %cst_46 = arith.constant dense<0.000000e+00> : vector<16x128xf32>
    %68 = tpu.matmul %67, %65, %cst_46 {dimension_numbers = #tpu.dot_dimension_numbers<[1], [0], [0], [1], [0, 0, 1, 1], [], []>} : vector<16x16xbf16>, vector<16x128xbf16>, vector<16x128xf32> -> vector<16x128xf32>
    %69 = arith.addf %64, %68 : vector<16x128xf32>
    %70 = vector.extract_strided_slice %58 {offsets = [0, 256], sizes = [16, 128], strides = [1, 1]} : vector<16x1152xbf16> to vector<16x128xbf16>
    %c2_47 = arith.constant 2 : index
    %c0_48 = arith.constant 0 : index
    %c0_49 = arith.constant 0 : index
    %71 = vector.load %arg6[%c2_47, %c0_48, %c0_49] : memref<9x16x16xbf16, #tpu.memory_space<vmem>>, vector<1x16x16xbf16>
    %72 = vector.shape_cast %71 : vector<1x16x16xbf16> to vector<16x16xbf16>
    %cst_50 = arith.constant dense<0.000000e+00> : vector<16x128xf32>
    %73 = tpu.matmul %72, %70, %cst_50 {dimension_numbers = #tpu.dot_dimension_numbers<[1], [0], [0], [1], [0, 0, 1, 1], [], []>} : vector<16x16xbf16>, vector<16x128xbf16>, vector<16x128xf32> -> vector<16x128xf32>
    %74 = arith.addf %69, %73 : vector<16x128xf32>
    %75 = vector.extract_strided_slice %58 {offsets = [0, 384], sizes = [16, 128], strides = [1, 1]} : vector<16x1152xbf16> to vector<16x128xbf16>
    %c3_51 = arith.constant 3 : index
    %c0_52 = arith.constant 0 : index
    %c0_53 = arith.constant 0 : index
    %76 = vector.load %arg6[%c3_51, %c0_52, %c0_53] : memref<9x16x16xbf16, #tpu.memory_space<vmem>>, vector<1x16x16xbf16>
    %77 = vector.shape_cast %76 : vector<1x16x16xbf16> to vector<16x16xbf16>
    %cst_54 = arith.constant dense<0.000000e+00> : vector<16x128xf32>
    %78 = tpu.matmul %77, %75, %cst_54 {dimension_numbers = #tpu.dot_dimension_numbers<[1], [0], [0], [1], [0, 0, 1, 1], [], []>} : vector<16x16xbf16>, vector<16x128xbf16>, vector<16x128xf32> -> vector<16x128xf32>
    %79 = arith.addf %74, %78 : vector<16x128xf32>
    %80 = vector.extract_strided_slice %58 {offsets = [0, 512], sizes = [16, 128], strides = [1, 1]} : vector<16x1152xbf16> to vector<16x128xbf16>
    %c4_55 = arith.constant 4 : index
    %c0_56 = arith.constant 0 : index
    %c0_57 = arith.constant 0 : index
    %81 = vector.load %arg6[%c4_55, %c0_56, %c0_57] : memref<9x16x16xbf16, #tpu.memory_space<vmem>>, vector<1x16x16xbf16>
    %82 = vector.shape_cast %81 : vector<1x16x16xbf16> to vector<16x16xbf16>
    %cst_58 = arith.constant dense<0.000000e+00> : vector<16x128xf32>
    %83 = tpu.matmul %82, %80, %cst_58 {dimension_numbers = #tpu.dot_dimension_numbers<[1], [0], [0], [1], [0, 0, 1, 1], [], []>} : vector<16x16xbf16>, vector<16x128xbf16>, vector<16x128xf32> -> vector<16x128xf32>
    %84 = arith.addf %79, %83 : vector<16x128xf32>
    %85 = vector.extract_strided_slice %58 {offsets = [0, 640], sizes = [16, 128], strides = [1, 1]} : vector<16x1152xbf16> to vector<16x128xbf16>
    %c5_59 = arith.constant 5 : index
    %c0_60 = arith.constant 0 : index
    %c0_61 = arith.constant 0 : index
    %86 = vector.load %arg6[%c5_59, %c0_60, %c0_61] : memref<9x16x16xbf16, #tpu.memory_space<vmem>>, vector<1x16x16xbf16>
    %87 = vector.shape_cast %86 : vector<1x16x16xbf16> to vector<16x16xbf16>
    %cst_62 = arith.constant dense<0.000000e+00> : vector<16x128xf32>
    %88 = tpu.matmul %87, %85, %cst_62 {dimension_numbers = #tpu.dot_dimension_numbers<[1], [0], [0], [1], [0, 0, 1, 1], [], []>} : vector<16x16xbf16>, vector<16x128xbf16>, vector<16x128xf32> -> vector<16x128xf32>
    %89 = arith.addf %84, %88 : vector<16x128xf32>
    %90 = vector.extract_strided_slice %58 {offsets = [0, 768], sizes = [16, 128], strides = [1, 1]} : vector<16x1152xbf16> to vector<16x128xbf16>
    %c6_63 = arith.constant 6 : index
    %c0_64 = arith.constant 0 : index
    %c0_65 = arith.constant 0 : index
    %91 = vector.load %arg6[%c6_63, %c0_64, %c0_65] : memref<9x16x16xbf16, #tpu.memory_space<vmem>>, vector<1x16x16xbf16>
    %92 = vector.shape_cast %91 : vector<1x16x16xbf16> to vector<16x16xbf16>
    %cst_66 = arith.constant dense<0.000000e+00> : vector<16x128xf32>
    %93 = tpu.matmul %92, %90, %cst_66 {dimension_numbers = #tpu.dot_dimension_numbers<[1], [0], [0], [1], [0, 0, 1, 1], [], []>} : vector<16x16xbf16>, vector<16x128xbf16>, vector<16x128xf32> -> vector<16x128xf32>
    %94 = arith.addf %89, %93 : vector<16x128xf32>
    %95 = vector.extract_strided_slice %58 {offsets = [0, 896], sizes = [16, 128], strides = [1, 1]} : vector<16x1152xbf16> to vector<16x128xbf16>
    %c7_67 = arith.constant 7 : index
    %c0_68 = arith.constant 0 : index
    %c0_69 = arith.constant 0 : index
    %96 = vector.load %arg6[%c7_67, %c0_68, %c0_69] : memref<9x16x16xbf16, #tpu.memory_space<vmem>>, vector<1x16x16xbf16>
    %97 = vector.shape_cast %96 : vector<1x16x16xbf16> to vector<16x16xbf16>
    %cst_70 = arith.constant dense<0.000000e+00> : vector<16x128xf32>
    %98 = tpu.matmul %97, %95, %cst_70 {dimension_numbers = #tpu.dot_dimension_numbers<[1], [0], [0], [1], [0, 0, 1, 1], [], []>} : vector<16x16xbf16>, vector<16x128xbf16>, vector<16x128xf32> -> vector<16x128xf32>
    %99 = arith.addf %94, %98 : vector<16x128xf32>
    %100 = vector.extract_strided_slice %58 {offsets = [0, 1024], sizes = [16, 128], strides = [1, 1]} : vector<16x1152xbf16> to vector<16x128xbf16>
    %c8_71 = arith.constant 8 : index
    %c0_72 = arith.constant 0 : index
    %c0_73 = arith.constant 0 : index
    %101 = vector.load %arg6[%c8_71, %c0_72, %c0_73] : memref<9x16x16xbf16, #tpu.memory_space<vmem>>, vector<1x16x16xbf16>
    %102 = vector.shape_cast %101 : vector<1x16x16xbf16> to vector<16x16xbf16>
    %cst_74 = arith.constant dense<0.000000e+00> : vector<16x128xf32>
    %103 = tpu.matmul %102, %100, %cst_74 {dimension_numbers = #tpu.dot_dimension_numbers<[1], [0], [0], [1], [0, 0, 1, 1], [], []>} : vector<16x16xbf16>, vector<16x128xbf16>, vector<16x128xf32> -> vector<16x128xf32>
    %104 = arith.addf %99, %103 : vector<16x128xf32>
    %c0_75 = arith.constant 0 : index
    %c0_76 = arith.constant 0 : index
    %105 = vector.load %arg7[%c0_75, %c0_76] : memref<16x1xf32, #tpu.memory_space<vmem>>, vector<16x1xf32>
    %106 = vector.broadcast %105 : vector<16x1xf32> to vector<16x128xf32>
    %107 = arith.addf %104, %106 : vector<16x128xf32>
    %cst_77 = arith.constant 0.000000e+00 : f32
    %108 = vector.broadcast %cst_77 : f32 to vector<16x128xf32>
    %109 = arith.maximumf %107, %108 : vector<16x128xf32>
    %110 = arith.truncf %109 : vector<16x128xf32> to vector<16x128xbf16>
    %c0_78 = arith.constant 0 : index
    %c0_79 = arith.constant 0 : index
    %111 = vector.load %arg8[%c0_78, %c0_79] : memref<128x1152xbf16, #tpu.memory_space<vmem>>, vector<128x1152xbf16>
    %cst_80 = arith.constant dense<0.000000e+00> : vector<16x1152xf32>
    %112 = tpu.matmul %110, %111, %cst_80 {dimension_numbers = #tpu.dot_dimension_numbers<[1], [0], [0], [1], [0, 0, 1, 1], [], []>} : vector<16x128xbf16>, vector<128x1152xbf16>, vector<16x1152xf32> -> vector<16x1152xf32>
    %113 = arith.truncf %112 : vector<16x1152xf32> to vector<16x1152xbf16>
    %cst_81 = arith.constant 0.000000e+00 : f32
    %114 = vector.broadcast %cst_81 : f32 to vector<16x128xf32>
    %115 = vector.extract_strided_slice %113 {offsets = [0, 0], sizes = [16, 128], strides = [1, 1]} : vector<16x1152xbf16> to vector<16x128xbf16>
    %c0_82 = arith.constant 0 : index
    %c0_83 = arith.constant 0 : index
    %c0_84 = arith.constant 0 : index
    %116 = vector.load %arg9[%c0_82, %c0_83, %c0_84] : memref<9x16x16xbf16, #tpu.memory_space<vmem>>, vector<1x16x16xbf16>
    %117 = vector.shape_cast %116 : vector<1x16x16xbf16> to vector<16x16xbf16>
    %cst_85 = arith.constant dense<0.000000e+00> : vector<16x128xf32>
    %118 = tpu.matmul %117, %115, %cst_85 {dimension_numbers = #tpu.dot_dimension_numbers<[1], [0], [0], [1], [0, 0, 1, 1], [], []>} : vector<16x16xbf16>, vector<16x128xbf16>, vector<16x128xf32> -> vector<16x128xf32>
    %119 = arith.addf %114, %118 : vector<16x128xf32>
    %120 = vector.extract_strided_slice %113 {offsets = [0, 128], sizes = [16, 128], strides = [1, 1]} : vector<16x1152xbf16> to vector<16x128xbf16>
    %c1_86 = arith.constant 1 : index
    %c0_87 = arith.constant 0 : index
    %c0_88 = arith.constant 0 : index
    %121 = vector.load %arg9[%c1_86, %c0_87, %c0_88] : memref<9x16x16xbf16, #tpu.memory_space<vmem>>, vector<1x16x16xbf16>
    %122 = vector.shape_cast %121 : vector<1x16x16xbf16> to vector<16x16xbf16>
    %cst_89 = arith.constant dense<0.000000e+00> : vector<16x128xf32>
    %123 = tpu.matmul %122, %120, %cst_89 {dimension_numbers = #tpu.dot_dimension_numbers<[1], [0], [0], [1], [0, 0, 1, 1], [], []>} : vector<16x16xbf16>, vector<16x128xbf16>, vector<16x128xf32> -> vector<16x128xf32>
    %124 = arith.addf %119, %123 : vector<16x128xf32>
    %125 = vector.extract_strided_slice %113 {offsets = [0, 256], sizes = [16, 128], strides = [1, 1]} : vector<16x1152xbf16> to vector<16x128xbf16>
    %c2_90 = arith.constant 2 : index
    %c0_91 = arith.constant 0 : index
    %c0_92 = arith.constant 0 : index
    %126 = vector.load %arg9[%c2_90, %c0_91, %c0_92] : memref<9x16x16xbf16, #tpu.memory_space<vmem>>, vector<1x16x16xbf16>
    %127 = vector.shape_cast %126 : vector<1x16x16xbf16> to vector<16x16xbf16>
    %cst_93 = arith.constant dense<0.000000e+00> : vector<16x128xf32>
    %128 = tpu.matmul %127, %125, %cst_93 {dimension_numbers = #tpu.dot_dimension_numbers<[1], [0], [0], [1], [0, 0, 1, 1], [], []>} : vector<16x16xbf16>, vector<16x128xbf16>, vector<16x128xf32> -> vector<16x128xf32>
    %129 = arith.addf %124, %128 : vector<16x128xf32>
    %130 = vector.extract_strided_slice %113 {offsets = [0, 384], sizes = [16, 128], strides = [1, 1]} : vector<16x1152xbf16> to vector<16x128xbf16>
    %c3_94 = arith.constant 3 : index
    %c0_95 = arith.constant 0 : index
    %c0_96 = arith.constant 0 : index
    %131 = vector.load %arg9[%c3_94, %c0_95, %c0_96] : memref<9x16x16xbf16, #tpu.memory_space<vmem>>, vector<1x16x16xbf16>
    %132 = vector.shape_cast %131 : vector<1x16x16xbf16> to vector<16x16xbf16>
    %cst_97 = arith.constant dense<0.000000e+00> : vector<16x128xf32>
    %133 = tpu.matmul %132, %130, %cst_97 {dimension_numbers = #tpu.dot_dimension_numbers<[1], [0], [0], [1], [0, 0, 1, 1], [], []>} : vector<16x16xbf16>, vector<16x128xbf16>, vector<16x128xf32> -> vector<16x128xf32>
    %134 = arith.addf %129, %133 : vector<16x128xf32>
    %135 = vector.extract_strided_slice %113 {offsets = [0, 512], sizes = [16, 128], strides = [1, 1]} : vector<16x1152xbf16> to vector<16x128xbf16>
    %c4_98 = arith.constant 4 : index
    %c0_99 = arith.constant 0 : index
    %c0_100 = arith.constant 0 : index
    %136 = vector.load %arg9[%c4_98, %c0_99, %c0_100] : memref<9x16x16xbf16, #tpu.memory_space<vmem>>, vector<1x16x16xbf16>
    %137 = vector.shape_cast %136 : vector<1x16x16xbf16> to vector<16x16xbf16>
    %cst_101 = arith.constant dense<0.000000e+00> : vector<16x128xf32>
    %138 = tpu.matmul %137, %135, %cst_101 {dimension_numbers = #tpu.dot_dimension_numbers<[1], [0], [0], [1], [0, 0, 1, 1], [], []>} : vector<16x16xbf16>, vector<16x128xbf16>, vector<16x128xf32> -> vector<16x128xf32>
    %139 = arith.addf %134, %138 : vector<16x128xf32>
    %140 = vector.extract_strided_slice %113 {offsets = [0, 640], sizes = [16, 128], strides = [1, 1]} : vector<16x1152xbf16> to vector<16x128xbf16>
    %c5_102 = arith.constant 5 : index
    %c0_103 = arith.constant 0 : index
    %c0_104 = arith.constant 0 : index
    %141 = vector.load %arg9[%c5_102, %c0_103, %c0_104] : memref<9x16x16xbf16, #tpu.memory_space<vmem>>, vector<1x16x16xbf16>
    %142 = vector.shape_cast %141 : vector<1x16x16xbf16> to vector<16x16xbf16>
    %cst_105 = arith.constant dense<0.000000e+00> : vector<16x128xf32>
    %143 = tpu.matmul %142, %140, %cst_105 {dimension_numbers = #tpu.dot_dimension_numbers<[1], [0], [0], [1], [0, 0, 1, 1], [], []>} : vector<16x16xbf16>, vector<16x128xbf16>, vector<16x128xf32> -> vector<16x128xf32>
    %144 = arith.addf %139, %143 : vector<16x128xf32>
    %145 = vector.extract_strided_slice %113 {offsets = [0, 768], sizes = [16, 128], strides = [1, 1]} : vector<16x1152xbf16> to vector<16x128xbf16>
    %c6_106 = arith.constant 6 : index
    %c0_107 = arith.constant 0 : index
    %c0_108 = arith.constant 0 : index
    %146 = vector.load %arg9[%c6_106, %c0_107, %c0_108] : memref<9x16x16xbf16, #tpu.memory_space<vmem>>, vector<1x16x16xbf16>
    %147 = vector.shape_cast %146 : vector<1x16x16xbf16> to vector<16x16xbf16>
    %cst_109 = arith.constant dense<0.000000e+00> : vector<16x128xf32>
    %148 = tpu.matmul %147, %145, %cst_109 {dimension_numbers = #tpu.dot_dimension_numbers<[1], [0], [0], [1], [0, 0, 1, 1], [], []>} : vector<16x16xbf16>, vector<16x128xbf16>, vector<16x128xf32> -> vector<16x128xf32>
    %149 = arith.addf %144, %148 : vector<16x128xf32>
    %150 = vector.extract_strided_slice %113 {offsets = [0, 896], sizes = [16, 128], strides = [1, 1]} : vector<16x1152xbf16> to vector<16x128xbf16>
    %c7_110 = arith.constant 7 : index
    %c0_111 = arith.constant 0 : index
    %c0_112 = arith.constant 0 : index
    %151 = vector.load %arg9[%c7_110, %c0_111, %c0_112] : memref<9x16x16xbf16, #tpu.memory_space<vmem>>, vector<1x16x16xbf16>
    %152 = vector.shape_cast %151 : vector<1x16x16xbf16> to vector<16x16xbf16>
    %cst_113 = arith.constant dense<0.000000e+00> : vector<16x128xf32>
    %153 = tpu.matmul %152, %150, %cst_113 {dimension_numbers = #tpu.dot_dimension_numbers<[1], [0], [0], [1], [0, 0, 1, 1], [], []>} : vector<16x16xbf16>, vector<16x128xbf16>, vector<16x128xf32> -> vector<16x128xf32>
    %154 = arith.addf %149, %153 : vector<16x128xf32>
    %155 = vector.extract_strided_slice %113 {offsets = [0, 1024], sizes = [16, 128], strides = [1, 1]} : vector<16x1152xbf16> to vector<16x128xbf16>
    %c8_114 = arith.constant 8 : index
    %c0_115 = arith.constant 0 : index
    %c0_116 = arith.constant 0 : index
    %156 = vector.load %arg9[%c8_114, %c0_115, %c0_116] : memref<9x16x16xbf16, #tpu.memory_space<vmem>>, vector<1x16x16xbf16>
    %157 = vector.shape_cast %156 : vector<1x16x16xbf16> to vector<16x16xbf16>
    %cst_117 = arith.constant dense<0.000000e+00> : vector<16x128xf32>
    %158 = tpu.matmul %157, %155, %cst_117 {dimension_numbers = #tpu.dot_dimension_numbers<[1], [0], [0], [1], [0, 0, 1, 1], [], []>} : vector<16x16xbf16>, vector<16x128xbf16>, vector<16x128xf32> -> vector<16x128xf32>
    %159 = arith.addf %154, %158 : vector<16x128xf32>
    %c0_118 = arith.constant 0 : index
    %c0_119 = arith.constant 0 : index
    %160 = vector.load %arg10[%c0_118, %c0_119] : memref<16x1xf32, #tpu.memory_space<vmem>>, vector<16x1xf32>
    %161 = vector.broadcast %160 : vector<16x1xf32> to vector<16x128xf32>
    %162 = arith.addf %159, %161 : vector<16x128xf32>
    %cst_120 = arith.constant 0.000000e+00 : f32
    %163 = vector.broadcast %cst_120 : f32 to vector<16x128xf32>
    %164 = arith.maximumf %162, %163 : vector<16x128xf32>
    %165 = arith.truncf %164 : vector<16x128xf32> to vector<16x128xbf16>
    %c0_121 = arith.constant 0 : index
    %c0_122 = arith.constant 0 : index
    %166 = vector.load %arg11[%c0_121, %c0_122] : memref<128x1152xbf16, #tpu.memory_space<vmem>>, vector<128x1152xbf16>
    %cst_123 = arith.constant dense<0.000000e+00> : vector<16x1152xf32>
    %167 = tpu.matmul %165, %166, %cst_123 {dimension_numbers = #tpu.dot_dimension_numbers<[1], [0], [0], [1], [0, 0, 1, 1], [], []>} : vector<16x128xbf16>, vector<128x1152xbf16>, vector<16x1152xf32> -> vector<16x1152xf32>
    %168 = arith.truncf %167 : vector<16x1152xf32> to vector<16x1152xbf16>
    %cst_124 = arith.constant 0.000000e+00 : f32
    %169 = vector.broadcast %cst_124 : f32 to vector<32x128xf32>
    %170 = vector.extract_strided_slice %168 {offsets = [0, 0], sizes = [16, 128], strides = [1, 1]} : vector<16x1152xbf16> to vector<16x128xbf16>
    %c0_125 = arith.constant 0 : index
    %c0_126 = arith.constant 0 : index
    %c0_127 = arith.constant 0 : index
    %171 = vector.load %arg12[%c0_125, %c0_126, %c0_127] : memref<9x32x16xbf16, #tpu.memory_space<vmem>>, vector<1x32x16xbf16>
    %172 = vector.shape_cast %171 : vector<1x32x16xbf16> to vector<32x16xbf16>
    %cst_128 = arith.constant dense<0.000000e+00> : vector<32x128xf32>
    %173 = tpu.matmul %172, %170, %cst_128 {dimension_numbers = #tpu.dot_dimension_numbers<[1], [0], [0], [1], [0, 0, 1, 1], [], []>} : vector<32x16xbf16>, vector<16x128xbf16>, vector<32x128xf32> -> vector<32x128xf32>
    %174 = arith.addf %169, %173 : vector<32x128xf32>
    %175 = vector.extract_strided_slice %168 {offsets = [0, 128], sizes = [16, 128], strides = [1, 1]} : vector<16x1152xbf16> to vector<16x128xbf16>
    %c1_129 = arith.constant 1 : index
    %c0_130 = arith.constant 0 : index
    %c0_131 = arith.constant 0 : index
    %176 = vector.load %arg12[%c1_129, %c0_130, %c0_131] : memref<9x32x16xbf16, #tpu.memory_space<vmem>>, vector<1x32x16xbf16>
    %177 = vector.shape_cast %176 : vector<1x32x16xbf16> to vector<32x16xbf16>
    %cst_132 = arith.constant dense<0.000000e+00> : vector<32x128xf32>
    %178 = tpu.matmul %177, %175, %cst_132 {dimension_numbers = #tpu.dot_dimension_numbers<[1], [0], [0], [1], [0, 0, 1, 1], [], []>} : vector<32x16xbf16>, vector<16x128xbf16>, vector<32x128xf32> -> vector<32x128xf32>
    %179 = arith.addf %174, %178 : vector<32x128xf32>
    %180 = vector.extract_strided_slice %168 {offsets = [0, 256], sizes = [16, 128], strides = [1, 1]} : vector<16x1152xbf16> to vector<16x128xbf16>
    %c2_133 = arith.constant 2 : index
    %c0_134 = arith.constant 0 : index
    %c0_135 = arith.constant 0 : index
    %181 = vector.load %arg12[%c2_133, %c0_134, %c0_135] : memref<9x32x16xbf16, #tpu.memory_space<vmem>>, vector<1x32x16xbf16>
    %182 = vector.shape_cast %181 : vector<1x32x16xbf16> to vector<32x16xbf16>
    %cst_136 = arith.constant dense<0.000000e+00> : vector<32x128xf32>
    %183 = tpu.matmul %182, %180, %cst_136 {dimension_numbers = #tpu.dot_dimension_numbers<[1], [0], [0], [1], [0, 0, 1, 1], [], []>} : vector<32x16xbf16>, vector<16x128xbf16>, vector<32x128xf32> -> vector<32x128xf32>
    %184 = arith.addf %179, %183 : vector<32x128xf32>
    %185 = vector.extract_strided_slice %168 {offsets = [0, 384], sizes = [16, 128], strides = [1, 1]} : vector<16x1152xbf16> to vector<16x128xbf16>
    %c3_137 = arith.constant 3 : index
    %c0_138 = arith.constant 0 : index
    %c0_139 = arith.constant 0 : index
    %186 = vector.load %arg12[%c3_137, %c0_138, %c0_139] : memref<9x32x16xbf16, #tpu.memory_space<vmem>>, vector<1x32x16xbf16>
    %187 = vector.shape_cast %186 : vector<1x32x16xbf16> to vector<32x16xbf16>
    %cst_140 = arith.constant dense<0.000000e+00> : vector<32x128xf32>
    %188 = tpu.matmul %187, %185, %cst_140 {dimension_numbers = #tpu.dot_dimension_numbers<[1], [0], [0], [1], [0, 0, 1, 1], [], []>} : vector<32x16xbf16>, vector<16x128xbf16>, vector<32x128xf32> -> vector<32x128xf32>
    %189 = arith.addf %184, %188 : vector<32x128xf32>
    %190 = vector.extract_strided_slice %168 {offsets = [0, 512], sizes = [16, 128], strides = [1, 1]} : vector<16x1152xbf16> to vector<16x128xbf16>
    %c4_141 = arith.constant 4 : index
    %c0_142 = arith.constant 0 : index
    %c0_143 = arith.constant 0 : index
    %191 = vector.load %arg12[%c4_141, %c0_142, %c0_143] : memref<9x32x16xbf16, #tpu.memory_space<vmem>>, vector<1x32x16xbf16>
    %192 = vector.shape_cast %191 : vector<1x32x16xbf16> to vector<32x16xbf16>
    %cst_144 = arith.constant dense<0.000000e+00> : vector<32x128xf32>
    %193 = tpu.matmul %192, %190, %cst_144 {dimension_numbers = #tpu.dot_dimension_numbers<[1], [0], [0], [1], [0, 0, 1, 1], [], []>} : vector<32x16xbf16>, vector<16x128xbf16>, vector<32x128xf32> -> vector<32x128xf32>
    %194 = arith.addf %189, %193 : vector<32x128xf32>
    %195 = vector.extract_strided_slice %168 {offsets = [0, 640], sizes = [16, 128], strides = [1, 1]} : vector<16x1152xbf16> to vector<16x128xbf16>
    %c5_145 = arith.constant 5 : index
    %c0_146 = arith.constant 0 : index
    %c0_147 = arith.constant 0 : index
    %196 = vector.load %arg12[%c5_145, %c0_146, %c0_147] : memref<9x32x16xbf16, #tpu.memory_space<vmem>>, vector<1x32x16xbf16>
    %197 = vector.shape_cast %196 : vector<1x32x16xbf16> to vector<32x16xbf16>
    %cst_148 = arith.constant dense<0.000000e+00> : vector<32x128xf32>
    %198 = tpu.matmul %197, %195, %cst_148 {dimension_numbers = #tpu.dot_dimension_numbers<[1], [0], [0], [1], [0, 0, 1, 1], [], []>} : vector<32x16xbf16>, vector<16x128xbf16>, vector<32x128xf32> -> vector<32x128xf32>
    %199 = arith.addf %194, %198 : vector<32x128xf32>
    %200 = vector.extract_strided_slice %168 {offsets = [0, 768], sizes = [16, 128], strides = [1, 1]} : vector<16x1152xbf16> to vector<16x128xbf16>
    %c6_149 = arith.constant 6 : index
    %c0_150 = arith.constant 0 : index
    %c0_151 = arith.constant 0 : index
    %201 = vector.load %arg12[%c6_149, %c0_150, %c0_151] : memref<9x32x16xbf16, #tpu.memory_space<vmem>>, vector<1x32x16xbf16>
    %202 = vector.shape_cast %201 : vector<1x32x16xbf16> to vector<32x16xbf16>
    %cst_152 = arith.constant dense<0.000000e+00> : vector<32x128xf32>
    %203 = tpu.matmul %202, %200, %cst_152 {dimension_numbers = #tpu.dot_dimension_numbers<[1], [0], [0], [1], [0, 0, 1, 1], [], []>} : vector<32x16xbf16>, vector<16x128xbf16>, vector<32x128xf32> -> vector<32x128xf32>
    %204 = arith.addf %199, %203 : vector<32x128xf32>
    %205 = vector.extract_strided_slice %168 {offsets = [0, 896], sizes = [16, 128], strides = [1, 1]} : vector<16x1152xbf16> to vector<16x128xbf16>
    %c7_153 = arith.constant 7 : index
    %c0_154 = arith.constant 0 : index
    %c0_155 = arith.constant 0 : index
    %206 = vector.load %arg12[%c7_153, %c0_154, %c0_155] : memref<9x32x16xbf16, #tpu.memory_space<vmem>>, vector<1x32x16xbf16>
    %207 = vector.shape_cast %206 : vector<1x32x16xbf16> to vector<32x16xbf16>
    %cst_156 = arith.constant dense<0.000000e+00> : vector<32x128xf32>
    %208 = tpu.matmul %207, %205, %cst_156 {dimension_numbers = #tpu.dot_dimension_numbers<[1], [0], [0], [1], [0, 0, 1, 1], [], []>} : vector<32x16xbf16>, vector<16x128xbf16>, vector<32x128xf32> -> vector<32x128xf32>
    %209 = arith.addf %204, %208 : vector<32x128xf32>
    %210 = vector.extract_strided_slice %168 {offsets = [0, 1024], sizes = [16, 128], strides = [1, 1]} : vector<16x1152xbf16> to vector<16x128xbf16>
    %c8_157 = arith.constant 8 : index
    %c0_158 = arith.constant 0 : index
    %c0_159 = arith.constant 0 : index
    %211 = vector.load %arg12[%c8_157, %c0_158, %c0_159] : memref<9x32x16xbf16, #tpu.memory_space<vmem>>, vector<1x32x16xbf16>
    %212 = vector.shape_cast %211 : vector<1x32x16xbf16> to vector<32x16xbf16>
    %cst_160 = arith.constant dense<0.000000e+00> : vector<32x128xf32>
    %213 = tpu.matmul %212, %210, %cst_160 {dimension_numbers = #tpu.dot_dimension_numbers<[1], [0], [0], [1], [0, 0, 1, 1], [], []>} : vector<32x16xbf16>, vector<16x128xbf16>, vector<32x128xf32> -> vector<32x128xf32>
    %214 = arith.addf %209, %213 : vector<32x128xf32>
    %c0_161 = arith.constant 0 : index
    %c0_162 = arith.constant 0 : index
    %215 = vector.load %arg13[%c0_161, %c0_162] : memref<32x1xf32, #tpu.memory_space<vmem>>, vector<32x1xf32>
    %216 = vector.broadcast %215 : vector<32x1xf32> to vector<32x128xf32>
    %217 = arith.addf %214, %216 : vector<32x128xf32>
    %cst_163 = arith.constant 0.000000e+00 : f32
    %218 = vector.broadcast %cst_163 : f32 to vector<32x128xf32>
    %219 = arith.maximumf %217, %218 : vector<32x128xf32>
    %c0_164 = arith.constant 0 : index
    %c0_165 = arith.constant 0 : index
    %220 = vector.load %arg14[%c0_164, %c0_165] : memref<32x128xf32, #tpu.memory_space<vmem>>, vector<32x128xf32>
    tpu.vector_store %arg14[%c0_164, %c0_165], %219 {strides = array<i32>} : memref<32x128xf32, #tpu.memory_space<vmem>>, vector<32x128xf32>,
    return
  }
  func.func @transform_0(%arg0: i32) -> (i32, i32) {
    %c0_i32 = arith.constant 0 : i32
    %c0_i32_0 = arith.constant 0 : i32
    %c0_i32_1 = arith.constant 0 : i32
    return %c0_i32, %c0_i32_0 : i32, i32
  }
  func.func @transform_1(%arg0: i32) -> (i32, i32) {
    %c0_i32 = arith.constant 0 : i32
    %c0_i32_0 = arith.constant 0 : i32
    %c0_i32_1 = arith.constant 0 : i32
    return %c0_i32, %c0_i32_0 : i32, i32
  }
  func.func @transform_2(%arg0: i32) -> (i32, i32, i32) {
    %c0_i32 = arith.constant 0 : i32
    %c0_i32_0 = arith.constant 0 : i32
    %c0_i32_1 = arith.constant 0 : i32
    %c0_i32_2 = arith.constant 0 : i32
    return %c0_i32, %c0_i32_0, %c0_i32_1 : i32, i32, i32
  }
  func.func @transform_3(%arg0: i32) -> (i32, i32) {
    %c0_i32 = arith.constant 0 : i32
    %c0_i32_0 = arith.constant 0 : i32
    %c0_i32_1 = arith.constant 0 : i32
    return %c0_i32, %c0_i32_0 : i32, i32
  }
  func.func @transform_4(%arg0: i32) -> (i32, i32) {
    %c0_i32 = arith.constant 0 : i32
    %c0_i32_0 = arith.constant 0 : i32
    %c0_i32_1 = arith.constant 0 : i32
    return %c0_i32, %c0_i32_0 : i32, i32
  }
  func.func @transform_5(%arg0: i32) -> (i32, i32, i32) {
    %c0_i32 = arith.constant 0 : i32
    %c0_i32_0 = arith.constant 0 : i32
    %c0_i32_1 = arith.constant 0 : i32
    %c0_i32_2 = arith.constant 0 : i32
    return %c0_i32, %c0_i32_0, %c0_i32_1 : i32, i32, i32
  }
  func.func @transform_6(%arg0: i32) -> (i32, i32) {
    %c0_i32 = arith.constant 0 : i32
    %c0_i32_0 = arith.constant 0 : i32
    %c0_i32_1 = arith.constant 0 : i32
    return %c0_i32, %c0_i32_0 : i32, i32
  }
  func.func @transform_7(%arg0: i32) -> (i32, i32) {
    %c0_i32 = arith.constant 0 : i32
    %c0_i32_0 = arith.constant 0 : i32
    %c0_i32_1 = arith.constant 0 : i32
    return %c0_i32, %c0_i32_0 : i32, i32
  }
  func.func @transform_8(%arg0: i32) -> (i32, i32, i32) {
    %c0_i32 = arith.constant 0 : i32
    %c0_i32_0 = arith.constant 0 : i32
    %c0_i32_1 = arith.constant 0 : i32
    %c0_i32_2 = arith.constant 0 : i32
    return %c0_i32, %c0_i32_0, %c0_i32_1 : i32, i32, i32
  }
  func.func @transform_9(%arg0: i32) -> (i32, i32) {
    %c0_i32 = arith.constant 0 : i32
    %c0_i32_0 = arith.constant 0 : i32
    %c0_i32_1 = arith.constant 0 : i32
    return %c0_i32, %c0_i32_0 : i32, i32
  }
  func.func @transform_10(%arg0: i32) -> (i32, i32) {
    %c0_i32 = arith.constant 0 : i32
    %c0_i32_0 = arith.constant 0 : i32
    %c0_i32_1 = arith.constant 0 : i32
    return %c0_i32, %c0_i32_0 : i32, i32
  }
  func.func @transform_11(%arg0: i32) -> (i32, i32, i32) {
    %c0_i32 = arith.constant 0 : i32
    %c0_i32_0 = arith.constant 0 : i32
    %c0_i32_1 = arith.constant 0 : i32
    %c0_i32_2 = arith.constant 0 : i32
    return %c0_i32, %c0_i32_0, %c0_i32_1 : i32, i32, i32
  }
  func.func @transform_12(%arg0: i32) -> (i32, i32) {
    %c0_i32 = arith.constant 0 : i32
    %c0_i32_0 = arith.constant 0 : i32
    %c0_i32_1 = arith.constant 0 : i32
    return %c0_i32, %c0_i32_0 : i32, i32
  }
  func.func @transform_13(%arg0: i32) -> (i32, i32) {
    %c0_i32 = arith.constant 0 : i32
    %c0_i32_0 = arith.constant 0 : i32
    %c0_i32_1 = arith.constant 0 : i32
    return %c0_i32, %c0_i32_0 : i32, i32
  }
}

</mosaic_0001>

<llo_original>
// kernel: _lambda_.1
$region0: #{_lambda_.1}
  #allocation0 [shape = 'u32[]', space=smem, size = 0x4, offset = 0x4, fixed_abs, tag = 'smem constant byte address 0x4 - core index']
  #allocation1 [shape = 'u32[144,128]{1,0:T(1,128)}', space=vmem, size = 0x12000, scoped, tag = 'internal scratch']
  %s0 = inlined_call_operand.vmem [shape: bf16[16,512], index: 0, kind: input, shape index: {}]
  %s1 = inlined_call_operand.vmem [shape: bf16[512,1152], index: 1, kind: input, shape index: {}]
  %s2 = inlined_call_operand.vmem [shape: bf16[9,16,16], index: 2, kind: input, shape index: {}]
  %s3 = inlined_call_operand.vmem [shape: f32[16,1], index: 3, kind: input, shape index: {}, may-alias: {3,6}]
  %s4 = inlined_call_operand.vmem [shape: bf16[128,1152], index: 4, kind: input, shape index: {}]
  %s5 = inlined_call_operand.vmem [shape: bf16[9,16,16], index: 5, kind: input, shape index: {}]
  %s6 = inlined_call_operand.vmem [shape: f32[16,1], index: 6, kind: input, shape index: {}, may-alias: {3,6}]
  %s7 = inlined_call_operand.vmem [shape: bf16[128,1152], index: 7, kind: input, shape index: {}]
  %s8 = inlined_call_operand.vmem [shape: bf16[9,16,16], index: 8, kind: input, shape index: {}]
  %s9 = inlined_call_operand.vmem [shape: f32[16,1], index: 9, kind: input, shape index: {}]
  %s10 = inlined_call_operand.vmem [shape: bf16[128,1152], index: 10, kind: input, shape index: {}]
  %s11 = inlined_call_operand.vmem [shape: bf16[9,32,16], index: 11, kind: input, shape index: {}]
  %s12 = inlined_call_operand.vmem [shape: f32[32,1], index: 12, kind: input, shape index: {}]
  %s13 = inlined_call_operand.vmem [shape: f32[32,128], index: 13, kind: output, shape index: {}]
  %s14 = sld [smem:[#allocation0]]
  $region62: #{_lambda_.1} parent=0
    _
  %s16 = ssub.s32 1, %s14
  %s17 = scalar_select 0, %s16, %s14
  // Predicated region
  $region2: #{_lambda_.1} parent=0 // pred_check
    _
  $region3: #{_lambda_.1} parent=0 // pred_check_branch
    %19 = sbr.rel (0) target = $region5
  $region4: #{_lambda_.1} parent=0 // pred_region
    _
  $region5: #{_lambda_.1} parent=0 // pred_fallthru
    _
  // Predicated region
  $region6: #{_lambda_.1} parent=0 // pred_check
    _
  $region7: #{_lambda_.1} parent=0 // pred_check_branch
    %21 = sbr.rel (0) target = $region9
  $region8: #{_lambda_.1} parent=0 // pred_region
    _
  $region9: #{_lambda_.1} parent=0 // pred_fallthru
    _
  // Predicated region
  $region10: #{_lambda_.1} parent=0 // pred_check
    _
  $region11: #{_lambda_.1} parent=0 // pred_check_branch
    %23 = sbr.rel (0) target = $region13
  $region12: #{_lambda_.1} parent=0 // pred_region
    _
  $region13: #{_lambda_.1} parent=0 // pred_fallthru
    _
  // Predicated region
  $region14: #{_lambda_.1} parent=0 // pred_check
    _
  $region15: #{_lambda_.1} parent=0 // pred_check_branch
    %25 = sbr.rel (0) target = $region17
  $region16: #{_lambda_.1} parent=0 // pred_region
    _
  $region17: #{_lambda_.1} parent=0 // pred_fallthru
    _
  // Predicated region
  $region18: #{_lambda_.1} parent=0 // pred_check
    _
  $region19: #{_lambda_.1} parent=0 // pred_check_branch
    %27 = sbr.rel (0) target = $region21
  $region20: #{_lambda_.1} parent=0 // pred_region
    _
  $region21: #{_lambda_.1} parent=0 // pred_fallthru
    _
  // Predicated region
  $region22: #{_lambda_.1} parent=0 // pred_check
    _
  $region23: #{_lambda_.1} parent=0 // pred_check_branch
    %29 = sbr.rel (0) target = $region25
  $region24: #{_lambda_.1} parent=0 // pred_region
    _
  $region25: #{_lambda_.1} parent=0 // pred_fallthru
    _
  // Predicated region
  $region26: #{_lambda_.1} parent=0 // pred_check
    _
  $region27: #{_lambda_.1} parent=0 // pred_check_branch
    %31 = sbr.rel (0) target = $region29
  $region28: #{_lambda_.1} parent=0 // pred_region
    _
  $region29: #{_lambda_.1} parent=0 // pred_fallthru
    _
  // Predicated region
  $region30: #{_lambda_.1} parent=0 // pred_check
    _
  $region31: #{_lambda_.1} parent=0 // pred_check_branch
    %33 = sbr.rel (0) target = $region33
  $region32: #{_lambda_.1} parent=0 // pred_region
    _
  $region33: #{_lambda_.1} parent=0 // pred_fallthru
    _
  // Predicated region
  $region34: #{_lambda_.1} parent=0 // pred_check
    _
  $region35: #{_lambda_.1} parent=0 // pred_check_branch
    %35 = sbr.rel (0) target = $region37
  $region36: #{_lambda_.1} parent=0 // pred_region
    _
  $region37: #{_lambda_.1} parent=0 // pred_fallthru
    _
  // Predicated region
  $region38: #{_lambda_.1} parent=0 // pred_check
    _
  $region39: #{_lambda_.1} parent=0 // pred_check_branch
    %37 = sbr.rel (0) target = $region41
  $region40: #{_lambda_.1} parent=0 // pred_region
    _
  $region41: #{_lambda_.1} parent=0 // pred_fallthru
    _
  // Predicated region
  $region42: #{_lambda_.1} parent=0 // pred_check
    _
  $region43: #{_lambda_.1} parent=0 // pred_check_branch
    %39 = sbr.rel (0) target = $region45
  $region44: #{_lambda_.1} parent=0 // pred_region
    _
  $region45: #{_lambda_.1} parent=0 // pred_fallthru
    _
  // Predicated region
  $region46: #{_lambda_.1} parent=0 // pred_check
    _
  $region47: #{_lambda_.1} parent=0 // pred_check_branch
    %41 = sbr.rel (0) target = $region49
  $region48: #{_lambda_.1} parent=0 // pred_region
    _
  $region49: #{_lambda_.1} parent=0 // pred_fallthru
    _
  // Predicated region
  $region50: #{_lambda_.1} parent=0 // pred_check
    _
  $region51: #{_lambda_.1} parent=0 // pred_check_branch
    %43 = sbr.rel (0) target = $region53
  $region52: #{_lambda_.1} parent=0 // pred_region
    _
  $region53: #{_lambda_.1} parent=0 // pred_fallthru
    _
  %v45 = vld [vmem:[%s0] sm:$0xff]
  %v46 = vld [vmem:[%s0 + $0x8] sm:$0xff]
  %v47 = vld [vmem:[%s0 + $0x10] sm:$0xff]
  %v48 = vld [vmem:[%s0 + $0x18] sm:$0xff]
  %v49 = vld [vmem:[%s1] sm:$0xff]
  %v50 = vld [vmem:[%s1 + $0x8] sm:$0xff]
  %v51 = vld [vmem:[%s1 + $0x10] sm:$0xff]
  %v52 = vld [vmem:[%s1 + $0x18] sm:$0xff]
  %v53 = vld [vmem:[%s1 + $0x20] sm:$0xf]
  %v54 = vld [vmem:[%s1 + $0x24] sm:$0xff]
  %v55 = vld [vmem:[%s1 + $0x2c] sm:$0xff]
  %v56 = vld [vmem:[%s1 + $0x34] sm:$0xff]
  %v57 = vld [vmem:[%s1 + $0x3c] sm:$0xff]
  %v58 = vld [vmem:[%s1 + $0x44] sm:$0xf]
  %v59 = vld [vmem:[%s1 + $0x48] sm:$0xff]
  %v60 = vld [vmem:[%s1 + $0x50] sm:$0xff]
  %v61 = vld [vmem:[%s1 + $0x58] sm:$0xff]
  %v62 = vld [vmem:[%s1 + $0x60] sm:$0xff]
  %v63 = vld [vmem:[%s1 + $0x68] sm:$0xf]
  %v64 = vld [vmem:[%s1 + $0x6c] sm:$0xff]
  %v65 = vld [vmem:[%s1 + $0x74] sm:$0xff]
  %v66 = vld [vmem:[%s1 + $0x7c] sm:$0xff]
  %v67 = vld [vmem:[%s1 + $0x84] sm:$0xff]
  %v68 = vld [vmem:[%s1 + $0x8c] sm:$0xf]
  %v69 = vld [vmem:[%s1 + $0x90] sm:$0xff]
  %v70 = vld [vmem:[%s1 + $0x98] sm:$0xff]
  %v71 = vld [vmem:[%s1 + $0xa0] sm:$0xff]
  %v72 = vld [vmem:[%s1 + $0xa8] sm:$0xff]
  %v73 = vld [vmem:[%s1 + $0xb0] sm:$0xf]
  %v74 = vld [vmem:[%s1 + $0xb4] sm:$0xff]
  %v75 = vld [vmem:[%s1 + $0xbc] sm:$0xff]
  %v76 = vld [vmem:[%s1 + $0xc4] sm:$0xff]
  %v77 = vld [vmem:[%s1 + $0xcc] sm:$0xff]
  %v78 = vld [vmem:[%s1 + $0xd4] sm:$0xf]
  %v79 = vld [vmem:[%s1 + $0xd8] sm:$0xff]
  %v80 = vld [vmem:[%s1 + $0xe0] sm:$0xff]
  %v81 = vld [vmem:[%s1 + $0xe8] sm:$0xff]
  %v82 = vld [vmem:[%s1 + $0xf0] sm:$0xff]
  %v83 = vld [vmem:[%s1 + $0xf8] sm:$0xf]
  %v84 = vld [vmem:[%s1 + $0xfc] sm:$0xff]
  %v85 = vld [vmem:[%s1 + $0x104] sm:$0xff]
  %v86 = vld [vmem:[%s1 + $0x10c] sm:$0xff]
  %v87 = vld [vmem:[%s1 + $0x114] sm:$0xff]
  %v88 = vld [vmem:[%s1 + $0x11c] sm:$0xf]
  %v89 = vld [vmem:[%s1 + $0x120] sm:$0xff]
  %v90 = vld [vmem:[%s1 + $0x128] sm:$0xff]
  %v91 = vld [vmem:[%s1 + $0x130] sm:$0xff]
  %v92 = vld [vmem:[%s1 + $0x138] sm:$0xff]
  %v93 = vld [vmem:[%s1 + $0x140] sm:$0xf]
  %v94 = vld [vmem:[%s1 + $0x144] sm:$0xff]
  %v95 = vld [vmem:[%s1 + $0x14c] sm:$0xff]
  %v96 = vld [vmem:[%s1 + $0x154] sm:$0xff]
  %v97 = vld [vmem:[%s1 + $0x15c] sm:$0xff]
  %v98 = vld [vmem:[%s1 + $0x164] sm:$0xf]
  %v99 = vld [vmem:[%s1 + $0x168] sm:$0xff]
  %v100 = vld [vmem:[%s1 + $0x170] sm:$0xff]
  %v101 = vld [vmem:[%s1 + $0x178] sm:$0xff]
  %v102 = vld [vmem:[%s1 + $0x180] sm:$0xff]
  %v103 = vld [vmem:[%s1 + $0x188] sm:$0xf]
  %v104 = vld [vmem:[%s1 + $0x18c] sm:$0xff]
  %v105 = vld [vmem:[%s1 + $0x194] sm:$0xff]
  %v106 = vld [vmem:[%s1 + $0x19c] sm:$0xff]
  %v107 = vld [vmem:[%s1 + $0x1a4] sm:$0xff]
  %v108 = vld [vmem:[%s1 + $0x1ac] sm:$0xf]
  %v109 = vld [vmem:[%s1 + $0x1b0] sm:$0xff]
  %v110 = vld [vmem:[%s1 + $0x1b8] sm:$0xff]
  %v111 = vld [vmem:[%s1 + $0x1c0] sm:$0xff]
  %v112 = vld [vmem:[%s1 + $0x1c8] sm:$0xff]
  %v113 = vld [vmem:[%s1 + $0x1d0] sm:$0xf]
  %v114 = vld [vmem:[%s1 + $0x1d4] sm:$0xff]
  %v115 = vld [vmem:[%s1 + $0x1dc] sm:$0xff]
  %v116 = vld [vmem:[%s1 + $0x1e4] sm:$0xff]
  %v117 = vld [vmem:[%s1 + $0x1ec] sm:$0xff]
  %v118 = vld [vmem:[%s1 + $0x1f4] sm:$0xf]
  %v119 = vld [vmem:[%s1 + $0x1f8] sm:$0xff]
  %v120 = vld [vmem:[%s1 + $0x200] sm:$0xff]
  %v121 = vld [vmem:[%s1 + $0x208] sm:$0xff]
  %v122 = vld [vmem:[%s1 + $0x210] sm:$0xff]
  %v123 = vld [vmem:[%s1 + $0x218] sm:$0xf]
  %v124 = vld [vmem:[%s1 + $0x21c] sm:$0xff]
  %v125 = vld [vmem:[%s1 + $0x224] sm:$0xff]
  %v126 = vld [vmem:[%s1 + $0x22c] sm:$0xff]
  %v127 = vld [vmem:[%s1 + $0x234] sm:$0xff]
  %v128 = vld [vmem:[%s1 + $0x23c] sm:$0xf]
  %v129 = vld [vmem:[%s1 + $0x240] sm:$0xff]
  %v130 = vld [vmem:[%s1 + $0x248] sm:$0xff]
  %v131 = vld [vmem:[%s1 + $0x250] sm:$0xff]
  %v132 = vld [vmem:[%s1 + $0x258] sm:$0xff]
  %v133 = vld [vmem:[%s1 + $0x260] sm:$0xf]
  %v134 = vld [vmem:[%s1 + $0x264] sm:$0xff]
  %v135 = vld [vmem:[%s1 + $0x26c] sm:$0xff]
  %v136 = vld [vmem:[%s1 + $0x274] sm:$0xff]
  %v137 = vld [vmem:[%s1 + $0x27c] sm:$0xff]
  %v138 = vld [vmem:[%s1 + $0x284] sm:$0xf]
  %v139 = vld [vmem:[%s1 + $0x288] sm:$0xff]
  %v140 = vld [vmem:[%s1 + $0x290] sm:$0xff]
  %v141 = vld [vmem:[%s1 + $0x298] sm:$0xff]
  %v142 = vld [vmem:[%s1 + $0x2a0] sm:$0xff]
  %v143 = vld [vmem:[%s1 + $0x2a8] sm:$0xf]
  %v144 = vld [vmem:[%s1 + $0x2ac] sm:$0xff]
  %v145 = vld [vmem:[%s1 + $0x2b4] sm:$0xff]
  %v146 = vld [vmem:[%s1 + $0x2bc] sm:$0xff]
  %v147 = vld [vmem:[%s1 + $0x2c4] sm:$0xff]
  %v148 = vld [vmem:[%s1 + $0x2cc] sm:$0xf]
  %v149 = vld [vmem:[%s1 + $0x2d0] sm:$0xff]
  %v150 = vld [vmem:[%s1 + $0x2d8] sm:$0xff]
  %v151 = vld [vmem:[%s1 + $0x2e0] sm:$0xff]
  %v152 = vld [vmem:[%s1 + $0x2e8] sm:$0xff]
  %v153 = vld [vmem:[%s1 + $0x2f0] sm:$0xf]
  %v154 = vld [vmem:[%s1 + $0x2f4] sm:$0xff]
  %v155 = vld [vmem:[%s1 + $0x2fc] sm:$0xff]
  %v156 = vld [vmem:[%s1 + $0x304] sm:$0xff]
  %v157 = vld [vmem:[%s1 + $0x30c] sm:$0xff]
  %v158 = vld [vmem:[%s1 + $0x314] sm:$0xf]
  %v159 = vld [vmem:[%s1 + $0x318] sm:$0xff]
  %v160 = vld [vmem:[%s1 + $0x320] sm:$0xff]
  %v161 = vld [vmem:[%s1 + $0x328] sm:$0xff]
  %v162 = vld [vmem:[%s1 + $0x330] sm:$0xff]
  %v163 = vld [vmem:[%s1 + $0x338] sm:$0xf]
  %v164 = vld [vmem:[%s1 + $0x33c] sm:$0xff]
  %v165 = vld [vmem:[%s1 + $0x344] sm:$0xff]
  %v166 = vld [vmem:[%s1 + $0x34c] sm:$0xff]
  %v167 = vld [vmem:[%s1 + $0x354] sm:$0xff]
  %v168 = vld [vmem:[%s1 + $0x35c] sm:$0xf]
  %v169 = vld [vmem:[%s1 + $0x360] sm:$0xff]
  %v170 = vld [vmem:[%s1 + $0x368] sm:$0xff]
  %v171 = vld [vmem:[%s1 + $0x370] sm:$0xff]
  %v172 = vld [vmem:[%s1 + $0x378] sm:$0xff]
  %v173 = vld [vmem:[%s1 + $0x380] sm:$0xf]
  %v174 = vld [vmem:[%s1 + $0x384] sm:$0xff]
  %v175 = vld [vmem:[%s1 + $0x38c] sm:$0xff]
  %v176 = vld [vmem:[%s1 + $0x394] sm:$0xff]
  %v177 = vld [vmem:[%s1 + $0x39c] sm:$0xff]
  %v178 = vld [vmem:[%s1 + $0x3a4] sm:$0xf]
  %v179 = vld [vmem:[%s1 + $0x3a8] sm:$0xff]
  %v180 = vld [vmem:[%s1 + $0x3b0] sm:$0xff]
  %v181 = vld [vmem:[%s1 + $0x3b8] sm:$0xff]
  %v182 = vld [vmem:[%s1 + $0x3c0] sm:$0xff]
  %v183 = vld [vmem:[%s1 + $0x3c8] sm:$0xf]
  %v184 = vld [vmem:[%s1 + $0x3cc] sm:$0xff]
  %v185 = vld [vmem:[%s1 + $0x3d4] sm:$0xff]
  %v186 = vld [vmem:[%s1 + $0x3dc] sm:$0xff]
  %v187 = vld [vmem:[%s1 + $0x3e4] sm:$0xff]
  %v188 = vld [vmem:[%s1 + $0x3ec] sm:$0xf]
  %v189 = vld [vmem:[%s1 + $0x3f0] sm:$0xff]
  %v190 = vld [vmem:[%s1 + $0x3f8] sm:$0xff]
  %v191 = vld [vmem:[%s1 + $0x400] sm:$0xff]
  %v192 = vld [vmem:[%s1 + $0x408] sm:$0xff]
  %v193 = vld [vmem:[%s1 + $0x410] sm:$0xf]
  %v194 = vld [vmem:[%s1 + $0x414] sm:$0xff]
  %v195 = vld [vmem:[%s1 + $0x41c] sm:$0xff]
  %v196 = vld [vmem:[%s1 + $0x424] sm:$0xff]
  %v197 = vld [vmem:[%s1 + $0x42c] sm:$0xff]
  %v198 = vld [vmem:[%s1 + $0x434] sm:$0xf]
  %v199 = vld [vmem:[%s1 + $0x438] sm:$0xff]
  %v200 = vld [vmem:[%s1 + $0x440] sm:$0xff]
  %v201 = vld [vmem:[%s1 + $0x448] sm:$0xff]
  %v202 = vld [vmem:[%s1 + $0x450] sm:$0xff]
  %v203 = vld [vmem:[%s1 + $0x458] sm:$0xf]
  %v204 = vld [vmem:[%s1 + $0x45c] sm:$0xff]
  %v205 = vld [vmem:[%s1 + $0x464] sm:$0xff]
  %v206 = vld [vmem:[%s1 + $0x46c] sm:$0xff]
  %v207 = vld [vmem:[%s1 + $0x474] sm:$0xff]
  %v208 = vld [vmem:[%s1 + $0x47c] sm:$0xf]
  %v209 = vld [vmem:[%s1 + $0x480] sm:$0xff]
  %v210 = vld [vmem:[%s1 + $0x488] sm:$0xff]
  %v211 = vld [vmem:[%s1 + $0x490] sm:$0xff]
  %v212 = vld [vmem:[%s1 + $0x498] sm:$0xff]
  %v213 = vld [vmem:[%s1 + $0x4a0] sm:$0xf]
  %v214 = vld [vmem:[%s1 + $0x4a4] sm:$0xff]
  %v215 = vld [vmem:[%s1 + $0x4ac] sm:$0xff]
  %v216 = vld [vmem:[%s1 + $0x4b4] sm:$0xff]
  %v217 = vld [vmem:[%s1 + $0x4bc] sm:$0xff]
  %v218 = vld [vmem:[%s1 + $0x4c4] sm:$0xf]
  %v219 = vld [vmem:[%s1 + $0x4c8] sm:$0xff]
  %v220 = vld [vmem:[%s1 + $0x4d0] sm:$0xff]
  %v221 = vld [vmem:[%s1 + $0x4d8] sm:$0xff]
  %v222 = vld [vmem:[%s1 + $0x4e0] sm:$0xff]
  %v223 = vld [vmem:[%s1 + $0x4e8] sm:$0xf]
  %v224 = vld [vmem:[%s1 + $0x4ec] sm:$0xff]
  %v225 = vld [vmem:[%s1 + $0x4f4] sm:$0xff]
  %v226 = vld [vmem:[%s1 + $0x4fc] sm:$0xff]
  %v227 = vld [vmem:[%s1 + $0x504] sm:$0xff]
  %v228 = vld [vmem:[%s1 + $0x50c] sm:$0xf]
  %v229 = vld [vmem:[%s1 + $0x510] sm:$0xff]
  %v230 = vld [vmem:[%s1 + $0x518] sm:$0xff]
  %v231 = vld [vmem:[%s1 + $0x520] sm:$0xff]
  %v232 = vld [vmem:[%s1 + $0x528] sm:$0xff]
  %v233 = vld [vmem:[%s1 + $0x530] sm:$0xf]
  %v234 = vld [vmem:[%s1 + $0x534] sm:$0xff]
  %v235 = vld [vmem:[%s1 + $0x53c] sm:$0xff]
  %v236 = vld [vmem:[%s1 + $0x544] sm:$0xff]
  %v237 = vld [vmem:[%s1 + $0x54c] sm:$0xff]
  %v238 = vld [vmem:[%s1 + $0x554] sm:$0xf]
  %v239 = vld [vmem:[%s1 + $0x558] sm:$0xff]
  %v240 = vld [vmem:[%s1 + $0x560] sm:$0xff]
  %v241 = vld [vmem:[%s1 + $0x568] sm:$0xff]
  %v242 = vld [vmem:[%s1 + $0x570] sm:$0xff]
  %v243 = vld [vmem:[%s1 + $0x578] sm:$0xf]
  %v244 = vld [vmem:[%s1 + $0x57c] sm:$0xff]
  %v245 = vld [vmem:[%s1 + $0x584] sm:$0xff]
  %v246 = vld [vmem:[%s1 + $0x58c] sm:$0xff]
  %v247 = vld [vmem:[%s1 + $0x594] sm:$0xff]
  %v248 = vld [vmem:[%s1 + $0x59c] sm:$0xf]
  %v249 = vld [vmem:[%s1 + $0x5a0] sm:$0xff]
  %v250 = vld [vmem:[%s1 + $0x5a8] sm:$0xff]
  %v251 = vld [vmem:[%s1 + $0x5b0] sm:$0xff]
  %v252 = vld [vmem:[%s1 + $0x5b8] sm:$0xff]
  %v253 = vld [vmem:[%s1 + $0x5c0] sm:$0xf]
  %v254 = vld [vmem:[%s1 + $0x5c4] sm:$0xff]
  %v255 = vld [vmem:[%s1 + $0x5cc] sm:$0xff]
  %v256 = vld [vmem:[%s1 + $0x5d4] sm:$0xff]
  %v257 = vld [vmem:[%s1 + $0x5dc] sm:$0xff]
  %v258 = vld [vmem:[%s1 + $0x5e4] sm:$0xf]
  %v259 = vld [vmem:[%s1 + $0x5e8] sm:$0xff]
  %v260 = vld [vmem:[%s1 + $0x5f0] sm:$0xff]
  %v261 = vld [vmem:[%s1 + $0x5f8] sm:$0xff]
  %v262 = vld [vmem:[%s1 + $0x600] sm:$0xff]
  %v263 = vld [vmem:[%s1 + $0x608] sm:$0xf]
  %v264 = vld [vmem:[%s1 + $0x60c] sm:$0xff]
  %v265 = vld [vmem:[%s1 + $0x614] sm:$0xff]
  %v266 = vld [vmem:[%s1 + $0x61c] sm:$0xff]
  %v267 = vld [vmem:[%s1 + $0x624] sm:$0xff]
  %v268 = vld [vmem:[%s1 + $0x62c] sm:$0xf]
  %v269 = vld [vmem:[%s1 + $0x630] sm:$0xff]
  %v270 = vld [vmem:[%s1 + $0x638] sm:$0xff]
  %v271 = vld [vmem:[%s1 + $0x640] sm:$0xff]
  %v272 = vld [vmem:[%s1 + $0x648] sm:$0xff]
  %v273 = vld [vmem:[%s1 + $0x650] sm:$0xf]
  %v274 = vld [vmem:[%s1 + $0x654] sm:$0xff]
  %v275 = vld [vmem:[%s1 + $0x65c] sm:$0xff]
  %v276 = vld [vmem:[%s1 + $0x664] sm:$0xff]
  %v277 = vld [vmem:[%s1 + $0x66c] sm:$0xff]
  %v278 = vld [vmem:[%s1 + $0x674] sm:$0xf]
  %v279 = vld [vmem:[%s1 + $0x678] sm:$0xff]
  %v280 = vld [vmem:[%s1 + $0x680] sm:$0xff]
  %v281 = vld [vmem:[%s1 + $0x688] sm:$0xff]
  %v282 = vld [vmem:[%s1 + $0x690] sm:$0xff]
  %v283 = vld [vmem:[%s1 + $0x698] sm:$0xf]
  %v284 = vld [vmem:[%s1 + $0x69c] sm:$0xff]
  %v285 = vld [vmem:[%s1 + $0x6a4] sm:$0xff]
  %v286 = vld [vmem:[%s1 + $0x6ac] sm:$0xff]
  %v287 = vld [vmem:[%s1 + $0x6b4] sm:$0xff]
  %v288 = vld [vmem:[%s1 + $0x6bc] sm:$0xf]
  %v289 = vld [vmem:[%s1 + $0x6c0] sm:$0xff]
  %v290 = vld [vmem:[%s1 + $0x6c8] sm:$0xff]
  %v291 = vld [vmem:[%s1 + $0x6d0] sm:$0xff]
  %v292 = vld [vmem:[%s1 + $0x6d8] sm:$0xff]
  %v293 = vld [vmem:[%s1 + $0x6e0] sm:$0xf]
  %v294 = vld [vmem:[%s1 + $0x6e4] sm:$0xff]
  %v295 = vld [vmem:[%s1 + $0x6ec] sm:$0xff]
  %v296 = vld [vmem:[%s1 + $0x6f4] sm:$0xff]
  %v297 = vld [vmem:[%s1 + $0x6fc] sm:$0xff]
  %v298 = vld [vmem:[%s1 + $0x704] sm:$0xf]
  %v299 = vld [vmem:[%s1 + $0x708] sm:$0xff]
  %v300 = vld [vmem:[%s1 + $0x710] sm:$0xff]
  %v301 = vld [vmem:[%s1 + $0x718] sm:$0xff]
  %v302 = vld [vmem:[%s1 + $0x720] sm:$0xff]
  %v303 = vld [vmem:[%s1 + $0x728] sm:$0xf]
  %v304 = vld [vmem:[%s1 + $0x72c] sm:$0xff]
  %v305 = vld [vmem:[%s1 + $0x734] sm:$0xff]
  %v306 = vld [vmem:[%s1 + $0x73c] sm:$0xff]
  %v307 = vld [vmem:[%s1 + $0x744] sm:$0xff]
  %v308 = vld [vmem:[%s1 + $0x74c] sm:$0xf]
  %v309 = vld [vmem:[%s1 + $0x750] sm:$0xff]
  %v310 = vld [vmem:[%s1 + $0x758] sm:$0xff]
  %v311 = vld [vmem:[%s1 + $0x760] sm:$0xff]
  %v312 = vld [vmem:[%s1 + $0x768] sm:$0xff]
  %v313 = vld [vmem:[%s1 + $0x770] sm:$0xf]
  %v314 = vld [vmem:[%s1 + $0x774] sm:$0xff]
  %v315 = vld [vmem:[%s1 + $0x77c] sm:$0xff]
  %v316 = vld [vmem:[%s1 + $0x784] sm:$0xff]
  %v317 = vld [vmem:[%s1 + $0x78c] sm:$0xff]
  %v318 = vld [vmem:[%s1 + $0x794] sm:$0xf]
  %v319 = vld [vmem:[%s1 + $0x798] sm:$0xff]
  %v320 = vld [vmem:[%s1 + $0x7a0] sm:$0xff]
  %v321 = vld [vmem:[%s1 + $0x7a8] sm:$0xff]
  %v322 = vld [vmem:[%s1 + $0x7b0] sm:$0xff]
  %v323 = vld [vmem:[%s1 + $0x7b8] sm:$0xf]
  %v324 = vld [vmem:[%s1 + $0x7bc] sm:$0xff]
  %v325 = vld [vmem:[%s1 + $0x7c4] sm:$0xff]
  %v326 = vld [vmem:[%s1 + $0x7cc] sm:$0xff]
  %v327 = vld [vmem:[%s1 + $0x7d4] sm:$0xff]
  %v328 = vld [vmem:[%s1 + $0x7dc] sm:$0xf]
  %v329 = vld [vmem:[%s1 + $0x7e0] sm:$0xff]
  %v330 = vld [vmem:[%s1 + $0x7e8] sm:$0xff]
  %v331 = vld [vmem:[%s1 + $0x7f0] sm:$0xff]
  %v332 = vld [vmem:[%s1 + $0x7f8] sm:$0xff]
  %v333 = vld [vmem:[%s1 + $0x800] sm:$0xf]
  %v334 = vld [vmem:[%s1 + $0x804] sm:$0xff]
  %v335 = vld [vmem:[%s1 + $0x80c] sm:$0xff]
  %v336 = vld [vmem:[%s1 + $0x814] sm:$0xff]
  %v337 = vld [vmem:[%s1 + $0x81c] sm:$0xff]
  %v338 = vld [vmem:[%s1 + $0x824] sm:$0xf]
  %v339 = vld [vmem:[%s1 + $0x828] sm:$0xff]
  %v340 = vld [vmem:[%s1 + $0x830] sm:$0xff]
  %v341 = vld [vmem:[%s1 + $0x838] sm:$0xff]
  %v342 = vld [vmem:[%s1 + $0x840] sm:$0xff]
  %v343 = vld [vmem:[%s1 + $0x848] sm:$0xf]
  %v344 = vld [vmem:[%s1 + $0x84c] sm:$0xff]
  %v345 = vld [vmem:[%s1 + $0x854] sm:$0xff]
  %v346 = vld [vmem:[%s1 + $0x85c] sm:$0xff]
  %v347 = vld [vmem:[%s1 + $0x864] sm:$0xff]
  %v348 = vld [vmem:[%s1 + $0x86c] sm:$0xf]
  %v349 = vld [vmem:[%s1 + $0x870] sm:$0xff]
  %v350 = vld [vmem:[%s1 + $0x878] sm:$0xff]
  %v351 = vld [vmem:[%s1 + $0x880] sm:$0xff]
  %v352 = vld [vmem:[%s1 + $0x888] sm:$0xff]
  %v353 = vld [vmem:[%s1 + $0x890] sm:$0xf]
  %v354 = vld [vmem:[%s1 + $0x894] sm:$0xff]
  %v355 = vld [vmem:[%s1 + $0x89c] sm:$0xff]
  %v356 = vld [vmem:[%s1 + $0x8a4] sm:$0xff]
  %v357 = vld [vmem:[%s1 + $0x8ac] sm:$0xff]
  %v358 = vld [vmem:[%s1 + $0x8b4] sm:$0xf]
  %v359 = vld [vmem:[%s1 + $0x8b8] sm:$0xff]
  %v360 = vld [vmem:[%s1 + $0x8c0] sm:$0xff]
  %v361 = vld [vmem:[%s1 + $0x8c8] sm:$0xff]
  %v362 = vld [vmem:[%s1 + $0x8d0] sm:$0xff]
  %v363 = vld [vmem:[%s1 + $0x8d8] sm:$0xf]
  %v364 = vld [vmem:[%s1 + $0x8dc] sm:$0xff]
  %v365 = vld [vmem:[%s1 + $0x8e4] sm:$0xff]
  %v366 = vld [vmem:[%s1 + $0x8ec] sm:$0xff]
  %v367 = vld [vmem:[%s1 + $0x8f4] sm:$0xff]
  %v368 = vld [vmem:[%s1 + $0x8fc] sm:$0xf]
  %v373 = vunpack.c.l.b16 %v45
  %v374 = vunpack.c.h.b16 %v45
  %v375 = vunpack.c.l.b16 %v46
  %v376 = vunpack.c.h.b16 %v46
  %v377 = vunpack.c.l.b16 %v47
  %v378 = vunpack.c.h.b16 %v47
  %v379 = vunpack.c.l.b16 %v48
  %v380 = vunpack.c.h.b16 %v48
  %v381 = vpack.c.b16 %v377, %v373
  %v382 = vpack.c.b16 %v378, %v374
  %v383 = vpack.c.b16 %v379, %v375
  %v384 = vpack.c.b16 %v380, %v376
  %v709 = vunpack.c.l.b16 %v49
  %v710 = vunpack.c.h.b16 %v49
  %v711 = vunpack.c.l.b16 %v50
  %v712 = vunpack.c.h.b16 %v50
  %v713 = vunpack.c.l.b16 %v51
  %v714 = vunpack.c.h.b16 %v51
  %v715 = vunpack.c.l.b16 %v52
  %v716 = vunpack.c.h.b16 %v52
  %v717 = vunpack.c.l.b16 %v53
  %v718 = vunpack.c.l.b16 %v54
  %v719 = vunpack.c.h.b16 %v54
  %v720 = vunpack.c.l.b16 %v55
  %v721 = vunpack.c.h.b16 %v55
  %v722 = vunpack.c.l.b16 %v56
  %v723 = vunpack.c.h.b16 %v56
  %v724 = vunpack.c.l.b16 %v57
  %v725 = vunpack.c.h.b16 %v57
  %v726 = vunpack.c.l.b16 %v58
  %v727 = vunpack.c.l.b16 %v59
  %v728 = vunpack.c.h.b16 %v59
  %v729 = vunpack.c.l.b16 %v60
  %v730 = vunpack.c.h.b16 %v60
  %v731 = vunpack.c.l.b16 %v61
  %v732 = vunpack.c.h.b16 %v61
  %v733 = vunpack.c.l.b16 %v62
  %v734 = vunpack.c.h.b16 %v62
  %v735 = vunpack.c.l.b16 %v63
  %v736 = vunpack.c.l.b16 %v64
  %v737 = vunpack.c.h.b16 %v64
  %v738 = vunpack.c.l.b16 %v65
  %v739 = vunpack.c.h.b16 %v65
  %v740 = vunpack.c.l.b16 %v66
  %v741 = vunpack.c.h.b16 %v66
  %v742 = vunpack.c.l.b16 %v67
  %v743 = vunpack.c.h.b16 %v67
  %v744 = vunpack.c.l.b16 %v68
  %v745 = vunpack.c.l.b16 %v69
  %v746 = vunpack.c.h.b16 %v69
  %v747 = vunpack.c.l.b16 %v70
  %v748 = vunpack.c.h.b16 %v70
  %v749 = vunpack.c.l.b16 %v71
  %v750 = vunpack.c.h.b16 %v71
  %v751 = vunpack.c.l.b16 %v72
  %v752 = vunpack.c.h.b16 %v72
  %v753 = vunpack.c.l.b16 %v73
  %v754 = vunpack.c.l.b16 %v74
  %v755 = vunpack.c.h.b16 %v74
  %v756 = vunpack.c.l.b16 %v75
  %v757 = vunpack.c.h.b16 %v75
  %v758 = vunpack.c.l.b16 %v76
  %v759 = vunpack.c.h.b16 %v76
  %v760 = vunpack.c.l.b16 %v77
  %v761 = vunpack.c.h.b16 %v77
  %v762 = vunpack.c.l.b16 %v78
  %v763 = vunpack.c.l.b16 %v79
  %v764 = vunpack.c.h.b16 %v79
  %v765 = vunpack.c.l.b16 %v80
  %v766 = vunpack.c.h.b16 %v80
  %v767 = vunpack.c.l.b16 %v81
  %v768 = vunpack.c.h.b16 %v81
  %v769 = vunpack.c.l.b16 %v82
  %v770 = vunpack.c.h.b16 %v82
  %v771 = vunpack.c.l.b16 %v83
  %v772 = vunpack.c.l.b16 %v84
  %v773 = vunpack.c.h.b16 %v84
  %v774 = vunpack.c.l.b16 %v85
  %v775 = vunpack.c.h.b16 %v85
  %v776 = vunpack.c.l.b16 %v86
  %v777 = vunpack.c.h.b16 %v86
  %v778 = vunpack.c.l.b16 %v87
  %v779 = vunpack.c.h.b16 %v87
  %v780 = vunpack.c.l.b16 %v88
  %v781 = vunpack.c.l.b16 %v89
  %v782 = vunpack.c.h.b16 %v89
  %v783 = vunpack.c.l.b16 %v90
  %v784 = vunpack.c.h.b16 %v90
  %v785 = vunpack.c.l.b16 %v91
  %v786 = vunpack.c.h.b16 %v91
  %v787 = vunpack.c.l.b16 %v92
  %v788 = vunpack.c.h.b16 %v92
  %v789 = vunpack.c.l.b16 %v93
  %v790 = vunpack.c.l.b16 %v94
  %v791 = vunpack.c.h.b16 %v94
  %v792 = vunpack.c.l.b16 %v95
  %v793 = vunpack.c.h.b16 %v95
  %v794 = vunpack.c.l.b16 %v96
  %v795 = vunpack.c.h.b16 %v96
  %v796 = vunpack.c.l.b16 %v97
  %v797 = vunpack.c.h.b16 %v97
  %v798 = vunpack.c.l.b16 %v98
  %v799 = vunpack.c.l.b16 %v99
  %v800 = vunpack.c.h.b16 %v99
  %v801 = vunpack.c.l.b16 %v100
  %v802 = vunpack.c.h.b16 %v100
  %v803 = vunpack.c.l.b16 %v101
  %v804 = vunpack.c.h.b16 %v101
  %v805 = vunpack.c.l.b16 %v102
  %v806 = vunpack.c.h.b16 %v102
  %v807 = vunpack.c.l.b16 %v103
  %v808 = vunpack.c.l.b16 %v104
  %v809 = vunpack.c.h.b16 %v104
  %v810 = vunpack.c.l.b16 %v105
  %v811 = vunpack.c.h.b16 %v105
  %v812 = vunpack.c.l.b16 %v106
  %v813 = vunpack.c.h.b16 %v106
  %v814 = vunpack.c.l.b16 %v107
  %v815 = vunpack.c.h.b16 %v107
  %v816 = vunpack.c.l.b16 %v108
  %v817 = vunpack.c.l.b16 %v109
  %v818 = vunpack.c.h.b16 %v109
  %v819 = vunpack.c.l.b16 %v110
  %v820 = vunpack.c.h.b16 %v110
  %v821 = vunpack.c.l.b16 %v111
  %v822 = vunpack.c.h.b16 %v111
  %v823 = vunpack.c.l.b16 %v112
  %v824 = vunpack.c.h.b16 %v112
  %v825 = vunpack.c.l.b16 %v113
  %v826 = vunpack.c.l.b16 %v114
  %v827 = vunpack.c.h.b16 %v114
  %v828 = vunpack.c.l.b16 %v115
  %v829 = vunpack.c.h.b16 %v115
  %v830 = vunpack.c.l.b16 %v116
  %v831 = vunpack.c.h.b16 %v116
  %v832 = vunpack.c.l.b16 %v117
  %v833 = vunpack.c.h.b16 %v117
  %v834 = vunpack.c.l.b16 %v118
  %v835 = vunpack.c.l.b16 %v119
  %v836 = vunpack.c.h.b16 %v119
  %v837 = vunpack.c.l.b16 %v120
  %v838 = vunpack.c.h.b16 %v120
  %v839 = vunpack.c.l.b16 %v121
  %v840 = vunpack.c.h.b16 %v121
  %v841 = vunpack.c.l.b16 %v122
  %v842 = vunpack.c.h.b16 %v122
  %v843 = vunpack.c.l.b16 %v123
  %v844 = vunpack.c.l.b16 %v124
  %v845 = vunpack.c.h.b16 %v124
  %v846 = vunpack.c.l.b16 %v125
  %v847 = vunpack.c.h.b16 %v125
  %v848 = vunpack.c.l.b16 %v126
  %v849 = vunpack.c.h.b16 %v126
  %v850 = vunpack.c.l.b16 %v127
  %v851 = vunpack.c.h.b16 %v127
  %v852 = vunpack.c.l.b16 %v128
  %v853 = vunpack.c.l.b16 %v129
  %v854 = vunpack.c.h.b16 %v129
  %v855 = vunpack.c.l.b16 %v130
  %v856 = vunpack.c.h.b16 %v130
  %v857 = vunpack.c.l.b16 %v131
  %v858 = vunpack.c.h.b16 %v131
  %v859 = vunpack.c.l.b16 %v132
  %v860 = vunpack.c.h.b16 %v132
  %v861 = vunpack.c.l.b16 %v133
  %v862 = vunpack.c.l.b16 %v134
  %v863 = vunpack.c.h.b16 %v134
  %v864 = vunpack.c.l.b16 %v135
  %v865 = vunpack.c.h.b16 %v135
  %v866 = vunpack.c.l.b16 %v136
  %v867 = vunpack.c.h.b16 %v136
  %v868 = vunpack.c.l.b16 %v137
  %v869 = vunpack.c.h.b16 %v137
  %v870 = vunpack.c.l.b16 %v138
  %v871 = vunpack.c.l.b16 %v139
  %v872 = vunpack.c.h.b16 %v139
  %v873 = vunpack.c.l.b16 %v140
  %v874 = vunpack.c.h.b16 %v140
  %v875 = vunpack.c.l.b16 %v141
  %v876 = vunpack.c.h.b16 %v141
  %v877 = vunpack.c.l.b16 %v142
  %v878 = vunpack.c.h.b16 %v142
  %v879 = vunpack.c.l.b16 %v143
  %v880 = vunpack.c.l.b16 %v144
  %v881 = vunpack.c.h.b16 %v144
  %v882 = vunpack.c.l.b16 %v145
  %v883 = vunpack.c.h.b16 %v145
  %v884 = vunpack.c.l.b16 %v146
  %v885 = vunpack.c.h.b16 %v146
  %v886 = vunpack.c.l.b16 %v147
  %v887 = vunpack.c.h.b16 %v147
  %v888 = vunpack.c.l.b16 %v148
  %v889 = vunpack.c.l.b16 %v149
  %v890 = vunpack.c.h.b16 %v149
  %v891 = vunpack.c.l.b16 %v150
  %v892 = vunpack.c.h.b16 %v150
  %v893 = vunpack.c.l.b16 %v151
  %v894 = vunpack.c.h.b16 %v151
  %v895 = vunpack.c.l.b16 %v152
  %v896 = vunpack.c.h.b16 %v152
  %v897 = vunpack.c.l.b16 %v153
  %v898 = vunpack.c.l.b16 %v154
  %v899 = vunpack.c.h.b16 %v154
  %v900 = vunpack.c.l.b16 %v155
  %v901 = vunpack.c.h.b16 %v155
  %v902 = vunpack.c.l.b16 %v156
  %v903 = vunpack.c.h.b16 %v156
  %v904 = vunpack.c.l.b16 %v157
  %v905 = vunpack.c.h.b16 %v157
  %v906 = vunpack.c.l.b16 %v158
  %v907 = vunpack.c.l.b16 %v159
  %v908 = vunpack.c.h.b16 %v159
  %v909 = vunpack.c.l.b16 %v160
  %v910 = vunpack.c.h.b16 %v160
  %v911 = vunpack.c.l.b16 %v161
  %v912 = vunpack.c.h.b16 %v161
  %v913 = vunpack.c.l.b16 %v162
  %v914 = vunpack.c.h.b16 %v162
  %v915 = vunpack.c.l.b16 %v163
  %v916 = vunpack.c.l.b16 %v164
  %v917 = vunpack.c.h.b16 %v164
  %v918 = vunpack.c.l.b16 %v165
  %v919 = vunpack.c.h.b16 %v165
  %v920 = vunpack.c.l.b16 %v166
  %v921 = vunpack.c.h.b16 %v166
  %v922 = vunpack.c.l.b16 %v167
  %v923 = vunpack.c.h.b16 %v167
  %v924 = vunpack.c.l.b16 %v168
  %v925 = vunpack.c.l.b16 %v169
  %v926 = vunpack.c.h.b16 %v169
  %v927 = vunpack.c.l.b16 %v170
  %v928 = vunpack.c.h.b16 %v170
  %v929 = vunpack.c.l.b16 %v171
  %v930 = vunpack.c.h.b16 %v171
  %v931 = vunpack.c.l.b16 %v172
  %v932 = vunpack.c.h.b16 %v172
  %v933 = vunpack.c.l.b16 %v173
  %v934 = vunpack.c.l.b16 %v174
  %v935 = vunpack.c.h.b16 %v174
  %v936 = vunpack.c.l.b16 %v175
  %v937 = vunpack.c.h.b16 %v175
  %v938 = vunpack.c.l.b16 %v176
  %v939 = vunpack.c.h.b16 %v176
  %v940 = vunpack.c.l.b16 %v177
  %v941 = vunpack.c.h.b16 %v177
  %v942 = vunpack.c.l.b16 %v178
  %v943 = vunpack.c.l.b16 %v179
  %v944 = vunpack.c.h.b16 %v179
  %v945 = vunpack.c.l.b16 %v180
  %v946 = vunpack.c.h.b16 %v180
  %v947 = vunpack.c.l.b16 %v181
  %v948 = vunpack.c.h.b16 %v181
  %v949 = vunpack.c.l.b16 %v182
  %v950 = vunpack.c.h.b16 %v182
  %v951 = vunpack.c.l.b16 %v183
  %v952 = vunpack.c.l.b16 %v184
  %v953 = vunpack.c.h.b16 %v184
  %v954 = vunpack.c.l.b16 %v185
  %v955 = vunpack.c.h.b16 %v185
  %v956 = vunpack.c.l.b16 %v186
  %v957 = vunpack.c.h.b16 %v186
  %v958 = vunpack.c.l.b16 %v187
  %v959 = vunpack.c.h.b16 %v187
  %v960 = vunpack.c.l.b16 %v188
  %v961 = vunpack.c.l.b16 %v189
  %v962 = vunpack.c.h.b16 %v189
  %v963 = vunpack.c.l.b16 %v190
  %v964 = vunpack.c.h.b16 %v190
  %v965 = vunpack.c.l.b16 %v191
  %v966 = vunpack.c.h.b16 %v191
  %v967 = vunpack.c.l.b16 %v192
  %v968 = vunpack.c.h.b16 %v192
  %v969 = vunpack.c.l.b16 %v193
  %v970 = vunpack.c.l.b16 %v194
  %v971 = vunpack.c.h.b16 %v194
  %v972 = vunpack.c.l.b16 %v195
  %v973 = vunpack.c.h.b16 %v195
  %v974 = vunpack.c.l.b16 %v196
  %v975 = vunpack.c.h.b16 %v196
  %v976 = vunpack.c.l.b16 %v197
  %v977 = vunpack.c.h.b16 %v197
  %v978 = vunpack.c.l.b16 %v198
  %v979 = vunpack.c.l.b16 %v199
  %v980 = vunpack.c.h.b16 %v199
  %v981 = vunpack.c.l.b16 %v200
  %v982 = vunpack.c.h.b16 %v200
  %v983 = vunpack.c.l.b16 %v201
  %v984 = vunpack.c.h.b16 %v201
  %v985 = vunpack.c.l.b16 %v202
  %v986 = vunpack.c.h.b16 %v202
  %v987 = vunpack.c.l.b16 %v203
  %v988 = vunpack.c.l.b16 %v204
  %v989 = vunpack.c.h.b16 %v204
  %v990 = vunpack.c.l.b16 %v205
  %v991 = vunpack.c.h.b16 %v205
  %v992 = vunpack.c.l.b16 %v206
  %v993 = vunpack.c.h.b16 %v206
  %v994 = vunpack.c.l.b16 %v207
  %v995 = vunpack.c.h.b16 %v207
  %v996 = vunpack.c.l.b16 %v208
  %v997 = vunpack.c.l.b16 %v209
  %v998 = vunpack.c.h.b16 %v209
  %v999 = vunpack.c.l.b16 %v210
  %v1000 = vunpack.c.h.b16 %v210
  %v1001 = vunpack.c.l.b16 %v211
  %v1002 = vunpack.c.h.b16 %v211
  %v1003 = vunpack.c.l.b16 %v212
  %v1004 = vunpack.c.h.b16 %v212
  %v1005 = vunpack.c.l.b16 %v213
  %v1006 = vunpack.c.l.b16 %v214
  %v1007 = vunpack.c.h.b16 %v214
  %v1008 = vunpack.c.l.b16 %v215
  %v1009 = vunpack.c.h.b16 %v215
  %v1010 = vunpack.c.l.b16 %v216
  %v1011 = vunpack.c.h.b16 %v216
  %v1012 = vunpack.c.l.b16 %v217
  %v1013 = vunpack.c.h.b16 %v217
  %v1014 = vunpack.c.l.b16 %v218
  %v1015 = vunpack.c.l.b16 %v219
  %v1016 = vunpack.c.h.b16 %v219
  %v1017 = vunpack.c.l.b16 %v220
  %v1018 = vunpack.c.h.b16 %v220
  %v1019 = vunpack.c.l.b16 %v221
  %v1020 = vunpack.c.h.b16 %v221
  %v1021 = vunpack.c.l.b16 %v222
  %v1022 = vunpack.c.h.b16 %v222
  %v1023 = vunpack.c.l.b16 %v223
  %v1024 = vunpack.c.l.b16 %v224
  %v1025 = vunpack.c.h.b16 %v224
  %v1026 = vunpack.c.l.b16 %v225
  %v1027 = vunpack.c.h.b16 %v225
  %v1028 = vunpack.c.l.b16 %v226
  %v1029 = vunpack.c.h.b16 %v226
  %v1030 = vunpack.c.l.b16 %v227
  %v1031 = vunpack.c.h.b16 %v227
  %v1032 = vunpack.c.l.b16 %v228
  %v1033 = vunpack.c.l.b16 %v229
  %v1034 = vunpack.c.h.b16 %v229
  %v1035 = vunpack.c.l.b16 %v230
  %v1036 = vunpack.c.h.b16 %v230
  %v1037 = vunpack.c.l.b16 %v231
  %v1038 = vunpack.c.h.b16 %v231
  %v1039 = vunpack.c.l.b16 %v232
  %v1040 = vunpack.c.h.b16 %v232
  %v1041 = vunpack.c.l.b16 %v233
  %v1042 = vunpack.c.l.b16 %v234
  %v1043 = vunpack.c.h.b16 %v234
  %v1044 = vunpack.c.l.b16 %v235
  %v1045 = vunpack.c.h.b16 %v235
  %v1046 = vunpack.c.l.b16 %v236
  %v1047 = vunpack.c.h.b16 %v236
  %v1048 = vunpack.c.l.b16 %v237
  %v1049 = vunpack.c.h.b16 %v237
  %v1050 = vunpack.c.l.b16 %v238
  %v1051 = vunpack.c.l.b16 %v239
  %v1052 = vunpack.c.h.b16 %v239
  %v1053 = vunpack.c.l.b16 %v240
  %v1054 = vunpack.c.h.b16 %v240
  %v1055 = vunpack.c.l.b16 %v241
  %v1056 = vunpack.c.h.b16 %v241
  %v1057 = vunpack.c.l.b16 %v242
  %v1058 = vunpack.c.h.b16 %v242
  %v1059 = vunpack.c.l.b16 %v243
  %v1060 = vunpack.c.l.b16 %v244
  %v1061 = vunpack.c.h.b16 %v244
  %v1062 = vunpack.c.l.b16 %v245
  %v1063 = vunpack.c.h.b16 %v245
  %v1064 = vunpack.c.l.b16 %v246
  %v1065 = vunpack.c.h.b16 %v246
  %v1066 = vunpack.c.l.b16 %v247
  %v1067 = vunpack.c.h.b16 %v247
  %v1068 = vunpack.c.l.b16 %v248
  %v1069 = vunpack.c.l.b16 %v249
  %v1070 = vunpack.c.h.b16 %v249
  %v1071 = vunpack.c.l.b16 %v250
  %v1072 = vunpack.c.h.b16 %v250
  %v1073 = vunpack.c.l.b16 %v251
  %v1074 = vunpack.c.h.b16 %v251
  %v1075 = vunpack.c.l.b16 %v252
  %v1076 = vunpack.c.h.b16 %v252
  %v1077 = vunpack.c.l.b16 %v253
  %v1078 = vunpack.c.l.b16 %v254
  %v1079 = vunpack.c.h.b16 %v254
  %v1080 = vunpack.c.l.b16 %v255
  %v1081 = vunpack.c.h.b16 %v255
  %v1082 = vunpack.c.l.b16 %v256
  %v1083 = vunpack.c.h.b16 %v256
  %v1084 = vunpack.c.l.b16 %v257
  %v1085 = vunpack.c.h.b16 %v257
  %v1086 = vunpack.c.l.b16 %v258
  %v1087 = vunpack.c.l.b16 %v259
  %v1088 = vunpack.c.h.b16 %v259
  %v1089 = vunpack.c.l.b16 %v260
  %v1090 = vunpack.c.h.b16 %v260
  %v1091 = vunpack.c.l.b16 %v261
  %v1092 = vunpack.c.h.b16 %v261
  %v1093 = vunpack.c.l.b16 %v262
  %v1094 = vunpack.c.h.b16 %v262
  %v1095 = vunpack.c.l.b16 %v263
  %v1096 = vunpack.c.l.b16 %v264
  %v1097 = vunpack.c.h.b16 %v264
  %v1098 = vunpack.c.l.b16 %v265
  %v1099 = vunpack.c.h.b16 %v265
  %v1100 = vunpack.c.l.b16 %v266
  %v1101 = vunpack.c.h.b16 %v266
  %v1102 = vunpack.c.l.b16 %v267
  %v1103 = vunpack.c.h.b16 %v267
  %v1104 = vunpack.c.l.b16 %v268
  %v1105 = vunpack.c.l.b16 %v269
  %v1106 = vunpack.c.h.b16 %v269
  %v1107 = vunpack.c.l.b16 %v270
  %v1108 = vunpack.c.h.b16 %v270
  %v1109 = vunpack.c.l.b16 %v271
  %v1110 = vunpack.c.h.b16 %v271
  %v1111 = vunpack.c.l.b16 %v272
  %v1112 = vunpack.c.h.b16 %v272
  %v1113 = vunpack.c.l.b16 %v273
  %v1114 = vunpack.c.l.b16 %v274
  %v1115 = vunpack.c.h.b16 %v274
  %v1116 = vunpack.c.l.b16 %v275
  %v1117 = vunpack.c.h.b16 %v275
  %v1118 = vunpack.c.l.b16 %v276
  %v1119 = vunpack.c.h.b16 %v276
  %v1120 = vunpack.c.l.b16 %v277
  %v1121 = vunpack.c.h.b16 %v277
  %v1122 = vunpack.c.l.b16 %v278
  %v1123 = vunpack.c.l.b16 %v279
  %v1124 = vunpack.c.h.b16 %v279
  %v1125 = vunpack.c.l.b16 %v280
  %v1126 = vunpack.c.h.b16 %v280
  %v1127 = vunpack.c.l.b16 %v281
  %v1128 = vunpack.c.h.b16 %v281
  %v1129 = vunpack.c.l.b16 %v282
  %v1130 = vunpack.c.h.b16 %v282
  %v1131 = vunpack.c.l.b16 %v283
  %v1132 = vunpack.c.l.b16 %v284
  %v1133 = vunpack.c.h.b16 %v284
  %v1134 = vunpack.c.l.b16 %v285
  %v1135 = vunpack.c.h.b16 %v285
  %v1136 = vunpack.c.l.b16 %v286
  %v1137 = vunpack.c.h.b16 %v286
  %v1138 = vunpack.c.l.b16 %v287
  %v1139 = vunpack.c.h.b16 %v287
  %v1140 = vunpack.c.l.b16 %v288
  %v1141 = vunpack.c.l.b16 %v289
  %v1142 = vunpack.c.h.b16 %v289
  %v1143 = vunpack.c.l.b16 %v290
  %v1144 = vunpack.c.h.b16 %v290
  %v1145 = vunpack.c.l.b16 %v291
  %v1146 = vunpack.c.h.b16 %v291
  %v1147 = vunpack.c.l.b16 %v292
  %v1148 = vunpack.c.h.b16 %v292
  %v1149 = vunpack.c.l.b16 %v293
  %v1150 = vunpack.c.l.b16 %v294
  %v1151 = vunpack.c.h.b16 %v294
  %v1152 = vunpack.c.l.b16 %v295
  %v1153 = vunpack.c.h.b16 %v295
  %v1154 = vunpack.c.l.b16 %v296
  %v1155 = vunpack.c.h.b16 %v296
  %v1156 = vunpack.c.l.b16 %v297
  %v1157 = vunpack.c.h.b16 %v297
  %v1158 = vunpack.c.l.b16 %v298
  %v1159 = vunpack.c.l.b16 %v299
  %v1160 = vunpack.c.h.b16 %v299
  %v1161 = vunpack.c.l.b16 %v300
  %v1162 = vunpack.c.h.b16 %v300
  %v1163 = vunpack.c.l.b16 %v301
  %v1164 = vunpack.c.h.b16 %v301
  %v1165 = vunpack.c.l.b16 %v302
  %v1166 = vunpack.c.h.b16 %v302
  %v1167 = vunpack.c.l.b16 %v303
  %v1168 = vunpack.c.l.b16 %v304
  %v1169 = vunpack.c.h.b16 %v304
  %v1170 = vunpack.c.l.b16 %v305
  %v1171 = vunpack.c.h.b16 %v305
  %v1172 = vunpack.c.l.b16 %v306
  %v1173 = vunpack.c.h.b16 %v306
  %v1174 = vunpack.c.l.b16 %v307
  %v1175 = vunpack.c.h.b16 %v307
  %v1176 = vunpack.c.l.b16 %v308
  %v1177 = vunpack.c.l.b16 %v309
  %v1178 = vunpack.c.h.b16 %v309
  %v1179 = vunpack.c.l.b16 %v310
  %v1180 = vunpack.c.h.b16 %v310
  %v1181 = vunpack.c.l.b16 %v311
  %v1182 = vunpack.c.h.b16 %v311
  %v1183 = vunpack.c.l.b16 %v312
  %v1184 = vunpack.c.h.b16 %v312
  %v1185 = vunpack.c.l.b16 %v313
  %v1186 = vunpack.c.l.b16 %v314
  %v1187 = vunpack.c.h.b16 %v314
  %v1188 = vunpack.c.l.b16 %v315
  %v1189 = vunpack.c.h.b16 %v315
  %v1190 = vunpack.c.l.b16 %v316
  %v1191 = vunpack.c.h.b16 %v316
  %v1192 = vunpack.c.l.b16 %v317
  %v1193 = vunpack.c.h.b16 %v317
  %v1194 = vunpack.c.l.b16 %v318
  %v1195 = vunpack.c.l.b16 %v319
  %v1196 = vunpack.c.h.b16 %v319
  %v1197 = vunpack.c.l.b16 %v320
  %v1198 = vunpack.c.h.b16 %v320
  %v1199 = vunpack.c.l.b16 %v321
  %v1200 = vunpack.c.h.b16 %v321
  %v1201 = vunpack.c.l.b16 %v322
  %v1202 = vunpack.c.h.b16 %v322
  %v1203 = vunpack.c.l.b16 %v323
  %v1204 = vunpack.c.l.b16 %v324
  %v1205 = vunpack.c.h.b16 %v324
  %v1206 = vunpack.c.l.b16 %v325
  %v1207 = vunpack.c.h.b16 %v325
  %v1208 = vunpack.c.l.b16 %v326
  %v1209 = vunpack.c.h.b16 %v326
  %v1210 = vunpack.c.l.b16 %v327
  %v1211 = vunpack.c.h.b16 %v327
  %v1212 = vunpack.c.l.b16 %v328
  %v1213 = vunpack.c.l.b16 %v329
  %v1214 = vunpack.c.h.b16 %v329
  %v1215 = vunpack.c.l.b16 %v330
  %v1216 = vunpack.c.h.b16 %v330
  %v1217 = vunpack.c.l.b16 %v331
  %v1218 = vunpack.c.h.b16 %v331
  %v1219 = vunpack.c.l.b16 %v332
  %v1220 = vunpack.c.h.b16 %v332
  %v1221 = vunpack.c.l.b16 %v333
  %v1222 = vunpack.c.l.b16 %v334
  %v1223 = vunpack.c.h.b16 %v334
  %v1224 = vunpack.c.l.b16 %v335
  %v1225 = vunpack.c.h.b16 %v335
  %v1226 = vunpack.c.l.b16 %v336
  %v1227 = vunpack.c.h.b16 %v336
  %v1228 = vunpack.c.l.b16 %v337
  %v1229 = vunpack.c.h.b16 %v337
  %v1230 = vunpack.c.l.b16 %v338
  %v1231 = vunpack.c.l.b16 %v339
  %v1232 = vunpack.c.h.b16 %v339
  %v1233 = vunpack.c.l.b16 %v340
  %v1234 = vunpack.c.h.b16 %v340
  %v1235 = vunpack.c.l.b16 %v341
  %v1236 = vunpack.c.h.b16 %v341
  %v1237 = vunpack.c.l.b16 %v342
  %v1238 = vunpack.c.h.b16 %v342
  %v1239 = vunpack.c.l.b16 %v343
  %v1240 = vunpack.c.l.b16 %v344
  %v1241 = vunpack.c.h.b16 %v344
  %v1242 = vunpack.c.l.b16 %v345
  %v1243 = vunpack.c.h.b16 %v345
  %v1244 = vunpack.c.l.b16 %v346
  %v1245 = vunpack.c.h.b16 %v346
  %v1246 = vunpack.c.l.b16 %v347
  %v1247 = vunpack.c.h.b16 %v347
  %v1248 = vunpack.c.l.b16 %v348
  %v1249 = vunpack.c.l.b16 %v349
  %v1250 = vunpack.c.h.b16 %v349
  %v1251 = vunpack.c.l.b16 %v350
  %v1252 = vunpack.c.h.b16 %v350
  %v1253 = vunpack.c.l.b16 %v351
  %v1254 = vunpack.c.h.b16 %v351
  %v1255 = vunpack.c.l.b16 %v352
  %v1256 = vunpack.c.h.b16 %v352
  %v1257 = vunpack.c.l.b16 %v353
  %v1258 = vunpack.c.l.b16 %v354
  %v1259 = vunpack.c.h.b16 %v354
  %v1260 = vunpack.c.l.b16 %v355
  %v1261 = vunpack.c.h.b16 %v355
  %v1262 = vunpack.c.l.b16 %v356
  %v1263 = vunpack.c.h.b16 %v356
  %v1264 = vunpack.c.l.b16 %v357
  %v1265 = vunpack.c.h.b16 %v357
  %v1266 = vunpack.c.l.b16 %v358
  %v1267 = vunpack.c.l.b16 %v359
  %v1268 = vunpack.c.h.b16 %v359
  %v1269 = vunpack.c.l.b16 %v360
  %v1270 = vunpack.c.h.b16 %v360
  %v1271 = vunpack.c.l.b16 %v361
  %v1272 = vunpack.c.h.b16 %v361
  %v1273 = vunpack.c.l.b16 %v362
  %v1274 = vunpack.c.h.b16 %v362
  %v1275 = vunpack.c.l.b16 %v363
  %v1276 = vunpack.c.l.b16 %v364
  %v1277 = vunpack.c.h.b16 %v364
  %v1278 = vunpack.c.l.b16 %v365
  %v1279 = vunpack.c.h.b16 %v365
  %v1280 = vunpack.c.l.b16 %v366
  %v1281 = vunpack.c.h.b16 %v366
  %v1282 = vunpack.c.l.b16 %v367
  %v1283 = vunpack.c.h.b16 %v367
  %v1284 = vunpack.c.l.b16 %v368
  %v1285 = vpack.c.b16 %v718, %v709
  %v1286 = vpack.c.b16 %v719, %v710
  %v1287 = vpack.c.b16 %v720, %v711
  %v1288 = vpack.c.b16 %v721, %v712
  %v1289 = vpack.c.b16 %v722, %v713
  %v1290 = vpack.c.b16 %v723, %v714
  %v1291 = vpack.c.b16 %v724, %v715
  %v1292 = vpack.c.b16 %v725, %v716
  %v1293 = vpack.c.b16 %v726, %v717
  %v1294 = vpack.c.b16 %v736, %v727
  %v1295 = vpack.c.b16 %v737, %v728
  %v1296 = vpack.c.b16 %v738, %v729
  %v1297 = vpack.c.b16 %v739, %v730
  %v1298 = vpack.c.b16 %v740, %v731
  %v1299 = vpack.c.b16 %v741, %v732
  %v1300 = vpack.c.b16 %v742, %v733
  %v1301 = vpack.c.b16 %v743, %v734
  %v1302 = vpack.c.b16 %v744, %v735
  %v1303 = vpack.c.b16 %v754, %v745
  %v1304 = vpack.c.b16 %v755, %v746
  %v1305 = vpack.c.b16 %v756, %v747
  %v1306 = vpack.c.b16 %v757, %v748
  %v1307 = vpack.c.b16 %v758, %v749
  %v1308 = vpack.c.b16 %v759, %v750
  %v1309 = vpack.c.b16 %v760, %v751
  %v1310 = vpack.c.b16 %v761, %v752
  %v1311 = vpack.c.b16 %v762, %v753
  %v1312 = vpack.c.b16 %v772, %v763
  %v1313 = vpack.c.b16 %v773, %v764
  %v1314 = vpack.c.b16 %v774, %v765
  %v1315 = vpack.c.b16 %v775, %v766
  %v1316 = vpack.c.b16 %v776, %v767
  %v1317 = vpack.c.b16 %v777, %v768
  %v1318 = vpack.c.b16 %v778, %v769
  %v1319 = vpack.c.b16 %v779, %v770
  %v1320 = vpack.c.b16 %v780, %v771
  %v1321 = vpack.c.b16 %v790, %v781
  %v1322 = vpack.c.b16 %v791, %v782
  %v1323 = vpack.c.b16 %v792, %v783
  %v1324 = vpack.c.b16 %v793, %v784
  %v1325 = vpack.c.b16 %v794, %v785
  %v1326 = vpack.c.b16 %v795, %v786
  %v1327 = vpack.c.b16 %v796, %v787
  %v1328 = vpack.c.b16 %v797, %v788
  %v1329 = vpack.c.b16 %v798, %v789
  %v1330 = vpack.c.b16 %v808, %v799
  %v1331 = vpack.c.b16 %v809, %v800
  %v1332 = vpack.c.b16 %v810, %v801
  %v1333 = vpack.c.b16 %v811, %v802
  %v1334 = vpack.c.b16 %v812, %v803
  %v1335 = vpack.c.b16 %v813, %v804
  %v1336 = vpack.c.b16 %v814, %v805
  %v1337 = vpack.c.b16 %v815, %v806
  %v1338 = vpack.c.b16 %v816, %v807
  %v1339 = vpack.c.b16 %v826, %v817
  %v1340 = vpack.c.b16 %v827, %v818
  %v1341 = vpack.c.b16 %v828, %v819
  %v1342 = vpack.c.b16 %v829, %v820
  %v1343 = vpack.c.b16 %v830, %v821
  %v1344 = vpack.c.b16 %v831, %v822
  %v1345 = vpack.c.b16 %v832, %v823
  %v1346 = vpack.c.b16 %v833, %v824
  %v1347 = vpack.c.b16 %v834, %v825
  %v1348 = vpack.c.b16 %v844, %v835
  %v1349 = vpack.c.b16 %v845, %v836
  %v1350 = vpack.c.b16 %v846, %v837
  %v1351 = vpack.c.b16 %v847, %v838
  %v1352 = vpack.c.b16 %v848, %v839
  %v1353 = vpack.c.b16 %v849, %v840
  %v1354 = vpack.c.b16 %v850, %v841
  %v1355 = vpack.c.b16 %v851, %v842
  %v1356 = vpack.c.b16 %v852, %v843
  %v1357 = vpack.c.b16 %v862, %v853
  %v1358 = vpack.c.b16 %v863, %v854
  %v1359 = vpack.c.b16 %v864, %v855
  %v1360 = vpack.c.b16 %v865, %v856
  %v1361 = vpack.c.b16 %v866, %v857
  %v1362 = vpack.c.b16 %v867, %v858
  %v1363 = vpack.c.b16 %v868, %v859
  %v1364 = vpack.c.b16 %v869, %v860
  %v1365 = vpack.c.b16 %v870, %v861
  %v1366 = vpack.c.b16 %v880, %v871
  %v1367 = vpack.c.b16 %v881, %v872
  %v1368 = vpack.c.b16 %v882, %v873
  %v1369 = vpack.c.b16 %v883, %v874
  %v1370 = vpack.c.b16 %v884, %v875
  %v1371 = vpack.c.b16 %v885, %v876
  %v1372 = vpack.c.b16 %v886, %v877
  %v1373 = vpack.c.b16 %v887, %v878
  %v1374 = vpack.c.b16 %v888, %v879
  %v1375 = vpack.c.b16 %v898, %v889
  %v1376 = vpack.c.b16 %v899, %v890
  %v1377 = vpack.c.b16 %v900, %v891
  %v1378 = vpack.c.b16 %v901, %v892
  %v1379 = vpack.c.b16 %v902, %v893
  %v1380 = vpack.c.b16 %v903, %v894
  %v1381 = vpack.c.b16 %v904, %v895
  %v1382 = vpack.c.b16 %v905, %v896
  %v1383 = vpack.c.b16 %v906, %v897
  %v1384 = vpack.c.b16 %v916, %v907
  %v1385 = vpack.c.b16 %v917, %v908
  %v1386 = vpack.c.b16 %v918, %v909
  %v1387 = vpack.c.b16 %v919, %v910
  %v1388 = vpack.c.b16 %v920, %v911
  %v1389 = vpack.c.b16 %v921, %v912
  %v1390 = vpack.c.b16 %v922, %v913
  %v1391 = vpack.c.b16 %v923, %v914
  %v1392 = vpack.c.b16 %v924, %v915
  %v1393 = vpack.c.b16 %v934, %v925
  %v1394 = vpack.c.b16 %v935, %v926
  %v1395 = vpack.c.b16 %v936, %v927
  %v1396 = vpack.c.b16 %v937, %v928
  %v1397 = vpack.c.b16 %v938, %v929
  %v1398 = vpack.c.b16 %v939, %v930
  %v1399 = vpack.c.b16 %v940, %v931
  %v1400 = vpack.c.b16 %v941, %v932
  %v1401 = vpack.c.b16 %v942, %v933
  %v1402 = vpack.c.b16 %v952, %v943
  %v1403 = vpack.c.b16 %v953, %v944
  %v1404 = vpack.c.b16 %v954, %v945
  %v1405 = vpack.c.b16 %v955, %v946
  %v1406 = vpack.c.b16 %v956, %v947
  %v1407 = vpack.c.b16 %v957, %v948
  %v1408 = vpack.c.b16 %v958, %v949
  %v1409 = vpack.c.b16 %v959, %v950
  %v1410 = vpack.c.b16 %v960, %v951
  %v1411 = vpack.c.b16 %v970, %v961
  %v1412 = vpack.c.b16 %v971, %v962
  %v1413 = vpack.c.b16 %v972, %v963
  %v1414 = vpack.c.b16 %v973, %v964
  %v1415 = vpack.c.b16 %v974, %v965
  %v1416 = vpack.c.b16 %v975, %v966
  %v1417 = vpack.c.b16 %v976, %v967
  %v1418 = vpack.c.b16 %v977, %v968
  %v1419 = vpack.c.b16 %v978, %v969
  %v1420 = vpack.c.b16 %v988, %v979
  %v1421 = vpack.c.b16 %v989, %v980
  %v1422 = vpack.c.b16 %v990, %v981
  %v1423 = vpack.c.b16 %v991, %v982
  %v1424 = vpack.c.b16 %v992, %v983
  %v1425 = vpack.c.b16 %v993, %v984
  %v1426 = vpack.c.b16 %v994, %v985
  %v1427 = vpack.c.b16 %v995, %v986
  %v1428 = vpack.c.b16 %v996, %v987
  %v1429 = vpack.c.b16 %v1006, %v997
  %v1430 = vpack.c.b16 %v1007, %v998
  %v1431 = vpack.c.b16 %v1008, %v999
  %v1432 = vpack.c.b16 %v1009, %v1000
  %v1433 = vpack.c.b16 %v1010, %v1001
  %v1434 = vpack.c.b16 %v1011, %v1002
  %v1435 = vpack.c.b16 %v1012, %v1003
  %v1436 = vpack.c.b16 %v1013, %v1004
  %v1437 = vpack.c.b16 %v1014, %v1005
  %v1438 = vpack.c.b16 %v1024, %v1015
  %v1439 = vpack.c.b16 %v1025, %v1016
  %v1440 = vpack.c.b16 %v1026, %v1017
  %v1441 = vpack.c.b16 %v1027, %v1018
  %v1442 = vpack.c.b16 %v1028, %v1019
  %v1443 = vpack.c.b16 %v1029, %v1020
  %v1444 = vpack.c.b16 %v1030, %v1021
  %v1445 = vpack.c.b16 %v1031, %v1022
  %v1446 = vpack.c.b16 %v1032, %v1023
  %v1447 = vpack.c.b16 %v1042, %v1033
  %v1448 = vpack.c.b16 %v1043, %v1034
  %v1449 = vpack.c.b16 %v1044, %v1035
  %v1450 = vpack.c.b16 %v1045, %v1036
  %v1451 = vpack.c.b16 %v1046, %v1037
  %v1452 = vpack.c.b16 %v1047, %v1038
  %v1453 = vpack.c.b16 %v1048, %v1039
  %v1454 = vpack.c.b16 %v1049, %v1040
  %v1455 = vpack.c.b16 %v1050, %v1041
  %v1456 = vpack.c.b16 %v1060, %v1051
  %v1457 = vpack.c.b16 %v1061, %v1052
  %v1458 = vpack.c.b16 %v1062, %v1053
  %v1459 = vpack.c.b16 %v1063, %v1054
  %v1460 = vpack.c.b16 %v1064, %v1055
  %v1461 = vpack.c.b16 %v1065, %v1056
  %v1462 = vpack.c.b16 %v1066, %v1057
  %v1463 = vpack.c.b16 %v1067, %v1058
  %v1464 = vpack.c.b16 %v1068, %v1059
  %v1465 = vpack.c.b16 %v1078, %v1069
  %v1466 = vpack.c.b16 %v1079, %v1070
  %v1467 = vpack.c.b16 %v1080, %v1071
  %v1468 = vpack.c.b16 %v1081, %v1072
  %v1469 = vpack.c.b16 %v1082, %v1073
  %v1470 = vpack.c.b16 %v1083, %v1074
  %v1471 = vpack.c.b16 %v1084, %v1075
  %v1472 = vpack.c.b16 %v1085, %v1076
  %v1473 = vpack.c.b16 %v1086, %v1077
  %v1474 = vpack.c.b16 %v1096, %v1087
  %v1475 = vpack.c.b16 %v1097, %v1088
  %v1476 = vpack.c.b16 %v1098, %v1089
  %v1477 = vpack.c.b16 %v1099, %v1090
  %v1478 = vpack.c.b16 %v1100, %v1091
  %v1479 = vpack.c.b16 %v1101, %v1092
  %v1480 = vpack.c.b16 %v1102, %v1093
  %v1481 = vpack.c.b16 %v1103, %v1094
  %v1482 = vpack.c.b16 %v1104, %v1095
  %v1483 = vpack.c.b16 %v1114, %v1105
  %v1484 = vpack.c.b16 %v1115, %v1106
  %v1485 = vpack.c.b16 %v1116, %v1107
  %v1486 = vpack.c.b16 %v1117, %v1108
  %v1487 = vpack.c.b16 %v1118, %v1109
  %v1488 = vpack.c.b16 %v1119, %v1110
  %v1489 = vpack.c.b16 %v1120, %v1111
  %v1490 = vpack.c.b16 %v1121, %v1112
  %v1491 = vpack.c.b16 %v1122, %v1113
  %v1492 = vpack.c.b16 %v1132, %v1123
  %v1493 = vpack.c.b16 %v1133, %v1124
  %v1494 = vpack.c.b16 %v1134, %v1125
  %v1495 = vpack.c.b16 %v1135, %v1126
  %v1496 = vpack.c.b16 %v1136, %v1127
  %v1497 = vpack.c.b16 %v1137, %v1128
  %v1498 = vpack.c.b16 %v1138, %v1129
  %v1499 = vpack.c.b16 %v1139, %v1130
  %v1500 = vpack.c.b16 %v1140, %v1131
  %v1501 = vpack.c.b16 %v1150, %v1141
  %v1502 = vpack.c.b16 %v1151, %v1142
  %v1503 = vpack.c.b16 %v1152, %v1143
  %v1504 = vpack.c.b16 %v1153, %v1144
  %v1505 = vpack.c.b16 %v1154, %v1145
  %v1506 = vpack.c.b16 %v1155, %v1146
  %v1507 = vpack.c.b16 %v1156, %v1147
  %v1508 = vpack.c.b16 %v1157, %v1148
  %v1509 = vpack.c.b16 %v1158, %v1149
  %v1510 = vpack.c.b16 %v1168, %v1159
  %v1511 = vpack.c.b16 %v1169, %v1160
  %v1512 = vpack.c.b16 %v1170, %v1161
  %v1513 = vpack.c.b16 %v1171, %v1162
  %v1514 = vpack.c.b16 %v1172, %v1163
  %v1515 = vpack.c.b16 %v1173, %v1164
  %v1516 = vpack.c.b16 %v1174, %v1165
  %v1517 = vpack.c.b16 %v1175, %v1166
  %v1518 = vpack.c.b16 %v1176, %v1167
  %v1519 = vpack.c.b16 %v1186, %v1177
  %v1520 = vpack.c.b16 %v1187, %v1178
  %v1521 = vpack.c.b16 %v1188, %v1179
  %v1522 = vpack.c.b16 %v1189, %v1180
  %v1523 = vpack.c.b16 %v1190, %v1181
  %v1524 = vpack.c.b16 %v1191, %v1182
  %v1525 = vpack.c.b16 %v1192, %v1183
  %v1526 = vpack.c.b16 %v1193, %v1184
  %v1527 = vpack.c.b16 %v1194, %v1185
  %v1528 = vpack.c.b16 %v1204, %v1195
  %v1529 = vpack.c.b16 %v1205, %v1196
  %v1530 = vpack.c.b16 %v1206, %v1197
  %v1531 = vpack.c.b16 %v1207, %v1198
  %v1532 = vpack.c.b16 %v1208, %v1199
  %v1533 = vpack.c.b16 %v1209, %v1200
  %v1534 = vpack.c.b16 %v1210, %v1201
  %v1535 = vpack.c.b16 %v1211, %v1202
  %v1536 = vpack.c.b16 %v1212, %v1203
  %v1537 = vpack.c.b16 %v1222, %v1213
  %v1538 = vpack.c.b16 %v1223, %v1214
  %v1539 = vpack.c.b16 %v1224, %v1215
  %v1540 = vpack.c.b16 %v1225, %v1216
  %v1541 = vpack.c.b16 %v1226, %v1217
  %v1542 = vpack.c.b16 %v1227, %v1218
  %v1543 = vpack.c.b16 %v1228, %v1219
  %v1544 = vpack.c.b16 %v1229, %v1220
  %v1545 = vpack.c.b16 %v1230, %v1221
  %v1546 = vpack.c.b16 %v1240, %v1231
  %v1547 = vpack.c.b16 %v1241, %v1232
  %v1548 = vpack.c.b16 %v1242, %v1233
  %v1549 = vpack.c.b16 %v1243, %v1234
  %v1550 = vpack.c.b16 %v1244, %v1235
  %v1551 = vpack.c.b16 %v1245, %v1236
  %v1552 = vpack.c.b16 %v1246, %v1237
  %v1553 = vpack.c.b16 %v1247, %v1238
  %v1554 = vpack.c.b16 %v1248, %v1239
  %v1555 = vpack.c.b16 %v1258, %v1249
  %v1556 = vpack.c.b16 %v1259, %v1250
  %v1557 = vpack.c.b16 %v1260, %v1251
  %v1558 = vpack.c.b16 %v1261, %v1252
  %v1559 = vpack.c.b16 %v1262, %v1253
  %v1560 = vpack.c.b16 %v1263, %v1254
  %v1561 = vpack.c.b16 %v1264, %v1255
  %v1562 = vpack.c.b16 %v1265, %v1256
  %v1563 = vpack.c.b16 %v1266, %v1257
  %v1564 = vpack.c.b16 %v1276, %v1267
  %v1565 = vpack.c.b16 %v1277, %v1268
  %v1566 = vpack.c.b16 %v1278, %v1269
  %v1567 = vpack.c.b16 %v1279, %v1270
  %v1568 = vpack.c.b16 %v1280, %v1271
  %v1569 = vpack.c.b16 %v1281, %v1272
  %v1570 = vpack.c.b16 %v1282, %v1273
  %v1571 = vpack.c.b16 %v1283, %v1274
  %v1572 = vpack.c.b16 %v1284, %v1275
  %1861 = vmatprep.subr.bf16.mxu0 %v1286
  %1862 = vmatpush1.bf16.msra.mxu0 %v1285
  %1863 = vmatprep.subr.bf16.mxu0 %v1295
  %1864 = vmatpush1.bf16.msra.mxu0 %v1294
  %1865 = vmatprep.subr.bf16.mxu0 %v1304
  %1866 = vmatpush1.bf16.msra.mxu0 %v1303
  %1867 = vmatprep.subr.bf16.mxu0 %v1313
  %1868 = vmatpush1.bf16.msra.mxu0 %v1312
  %1869 = vmatprep.subr.bf16.mxu0 %v1322
  %1870 = vmatpush1.bf16.msra.mxu0 %v1321
  %1871 = vmatprep.subr.bf16.mxu0 %v1331
  %1872 = vmatpush1.bf16.msra.mxu0 %v1330
  %1873 = vmatprep.subr.bf16.mxu0 %v1340
  %1874 = vmatpush1.bf16.msra.mxu0 %v1339
  %1875 = vmatprep.subr.bf16.mxu0 %v1349
  %1876 = vmatpush1.bf16.msra.mxu0 %v1348
  %1877 = vmatprep.subr.bf16.mxu0 %v1358
  %1878 = vmatpush1.bf16.msra.mxu0 %v1357
  %1879 = vmatprep.subr.bf16.mxu0 %v1367
  %1880 = vmatpush1.bf16.msra.mxu0 %v1366
  %1881 = vmatprep.subr.bf16.mxu0 %v1376
  %1882 = vmatpush1.bf16.msra.mxu0 %v1375
  %1883 = vmatprep.subr.bf16.mxu0 %v1385
  %1884 = vmatpush1.bf16.msra.mxu0 %v1384
  %1885 = vmatprep.subr.bf16.mxu0 %v1394
  %1886 = vmatpush1.bf16.msra.mxu0 %v1393
  %1887 = vmatprep.subr.bf16.mxu0 %v1403
  %1888 = vmatpush1.bf16.msra.mxu0 %v1402
  %1889 = vmatprep.subr.bf16.mxu0 %v1412
  %1890 = vmatpush1.bf16.msra.mxu0 %v1411
  %1891 = vmatprep.subr.bf16.mxu0 %v1421
  %1892 = vmatpush1.bf16.msra.mxu0 %v1420
  %1893 = vmatprep.mubr.bf16.mxu0 %v382
  %1894 = vmatmul.mubr.bf16.gmra.mrb[0].mxu0 %v381
  %v1895 = vpop.f32.mrb[0].mxu0
  %v1896 = vadd.f32 0.0, %v1895
  %v1897 = vpop.f32.mrb[0].mxu0
  %v1898 = vadd.f32 0.0, %v1897
  %v1899 = vpop.f32.mrb[0].mxu0
  %v1900 = vadd.f32 0.0, %v1899
  %v1901 = vpop.f32.mrb[0].mxu0
  %v1902 = vadd.f32 0.0, %v1901
  %1903 = vdwg.mxu0
  %1904 = vmatprep.subr.bf16.mxu0 %v1430
  %1905 = vmatpush1.bf16.msra.mxu0 %v1429
  %1906 = vmatprep.subr.bf16.mxu0 %v1439
  %1907 = vmatpush1.bf16.msra.mxu0 %v1438
  %1908 = vmatprep.subr.bf16.mxu0 %v1448
  %1909 = vmatpush1.bf16.msra.mxu0 %v1447
  %1910 = vmatprep.subr.bf16.mxu0 %v1457
  %1911 = vmatpush1.bf16.msra.mxu0 %v1456
  %1912 = vmatprep.subr.bf16.mxu0 %v1466
  %1913 = vmatpush1.bf16.msra.mxu0 %v1465
  %1914 = vmatprep.subr.bf16.mxu0 %v1475
  %1915 = vmatpush1.bf16.msra.mxu0 %v1474
  %1916 = vmatprep.subr.bf16.mxu0 %v1484
  %1917 = vmatpush1.bf16.msra.mxu0 %v1483
  %1918 = vmatprep.subr.bf16.mxu0 %v1493
  %1919 = vmatpush1.bf16.msra.mxu0 %v1492
  %1920 = vmatprep.subr.bf16.mxu0 %v1502
  %1921 = vmatpush1.bf16.msra.mxu0 %v1501
  %1922 = vmatprep.subr.bf16.mxu0 %v1511
  %1923 = vmatpush1.bf16.msra.mxu0 %v1510
  %1924 = vmatprep.subr.bf16.mxu0 %v1520
  %1925 = vmatpush1.bf16.msra.mxu0 %v1519
  %1926 = vmatprep.subr.bf16.mxu0 %v1529
  %1927 = vmatpush1.bf16.msra.mxu0 %v1528
  %1928 = vmatprep.subr.bf16.mxu0 %v1538
  %1929 = vmatpush1.bf16.msra.mxu0 %v1537
  %1930 = vmatprep.subr.bf16.mxu0 %v1547
  %1931 = vmatpush1.bf16.msra.mxu0 %v1546
  %1932 = vmatprep.subr.bf16.mxu0 %v1556
  %1933 = vmatpush1.bf16.msra.mxu0 %v1555
  %1934 = vmatprep.subr.bf16.mxu0 %v1565
  %1935 = vmatpush1.bf16.msra.mxu0 %v1564
  %1936 = vmatprep.mubr.bf16.mxu0 %v384
  %1937 = vmatmul.mubr.bf16.gmra.mrb[0].mxu0 %v383
  %v1938 = vpop.f32.mrb[0].mxu0
  %v1939 = vadd.f32 %v1896, %v1938
  %v1940 = vpop.f32.mrb[0].mxu0
  %v1941 = vadd.f32 %v1898, %v1940
  %v1942 = vpop.f32.mrb[0].mxu0
  %v1943 = vadd.f32 %v1900, %v1942
  %v1944 = vpop.f32.mrb[0].mxu0
  %v1945 = vadd.f32 %v1902, %v1944
  %1946 = vdwg.mxu0
  %1947 = vmatprep.subr.bf16.mxu0 %v1288
  %1948 = vmatpush1.bf16.msra.mxu0 %v1287
  %1949 = vmatprep.subr.bf16.mxu0 %v1297
  %1950 = vmatpush1.bf16.msra.mxu0 %v1296
  %1951 = vmatprep.subr.bf16.mxu0 %v1306
  %1952 = vmatpush1.bf16.msra.mxu0 %v1305
  %1953 = vmatprep.subr.bf16.mxu0 %v1315
  %1954 = vmatpush1.bf16.msra.mxu0 %v1314
  %1955 = vmatprep.subr.bf16.mxu0 %v1324
  %1956 = vmatpush1.bf16.msra.mxu0 %v1323
  %1957 = vmatprep.subr.bf16.mxu0 %v1333
  %1958 = vmatpush1.bf16.msra.mxu0 %v1332
  %1959 = vmatprep.subr.bf16.mxu0 %v1342
  %1960 = vmatpush1.bf16.msra.mxu0 %v1341
  %1961 = vmatprep.subr.bf16.mxu0 %v1351
  %1962 = vmatpush1.bf16.msra.mxu0 %v1350
  %1963 = vmatprep.subr.bf16.mxu0 %v1360
  %1964 = vmatpush1.bf16.msra.mxu0 %v1359
  %1965 = vmatprep.subr.bf16.mxu0 %v1369
  %1966 = vmatpush1.bf16.msra.mxu0 %v1368
  %1967 = vmatprep.subr.bf16.mxu0 %v1378
  %1968 = vmatpush1.bf16.msra.mxu0 %v1377
  %1969 = vmatprep.subr.bf16.mxu0 %v1387
  %1970 = vmatpush1.bf16.msra.mxu0 %v1386
  %1971 = vmatprep.subr.bf16.mxu0 %v1396
  %1972 = vmatpush1.bf16.msra.mxu0 %v1395
  %1973 = vmatprep.subr.bf16.mxu0 %v1405
  %1974 = vmatpush1.bf16.msra.mxu0 %v1404
  %1975 = vmatprep.subr.bf16.mxu0 %v1414
  %1976 = vmatpush1.bf16.msra.mxu0 %v1413
  %1977 = vmatprep.subr.bf16.mxu0 %v1423
  %1978 = vmatpush1.bf16.msra.mxu0 %v1422
  %1979 = vmatprep.mubr.bf16.mxu0 %v382
  %1980 = vmatmul.mubr.bf16.gmra.mrb[0].mxu0 %v381
  %v1981 = vpop.f32.mrb[0].mxu0
  %v1982 = vadd.f32 0.0, %v1981
  %v1983 = vpop.f32.mrb[0].mxu0
  %v1984 = vadd.f32 0.0, %v1983
  %v1985 = vpop.f32.mrb[0].mxu0
  %v1986 = vadd.f32 0.0, %v1985
  %v1987 = vpop.f32.mrb[0].mxu0
  %v1988 = vadd.f32 0.0, %v1987
  %1989 = vdwg.mxu0
  %1990 = vmatprep.subr.bf16.mxu0 %v1432
  %1991 = vmatpush1.bf16.msra.mxu0 %v1431
  %1992 = vmatprep.subr.bf16.mxu0 %v1441
  %1993 = vmatpush1.bf16.msra.mxu0 %v1440
  %1994 = vmatprep.subr.bf16.mxu0 %v1450
  %1995 = vmatpush1.bf16.msra.mxu0 %v1449
  %1996 = vmatprep.subr.bf16.mxu0 %v1459
  %1997 = vmatpush1.bf16.msra.mxu0 %v1458
  %1998 = vmatprep.subr.bf16.mxu0 %v1468
  %1999 = vmatpush1.bf16.msra.mxu0 %v1467
  %2000 = vmatprep.subr.bf16.mxu0 %v1477
  %2001 = vmatpush1.bf16.msra.mxu0 %v1476
  %2002 = vmatprep.subr.bf16.mxu0 %v1486
  %2003 = vmatpush1.bf16.msra.mxu0 %v1485
  %2004 = vmatprep.subr.bf16.mxu0 %v1495
  %2005 = vmatpush1.bf16.msra.mxu0 %v1494
  %2006 = vmatprep.subr.bf16.mxu0 %v1504
  %2007 = vmatpush1.bf16.msra.mxu0 %v1503
  %2008 = vmatprep.subr.bf16.mxu0 %v1513
  %2009 = vmatpush1.bf16.msra.mxu0 %v1512
  %2010 = vmatprep.subr.bf16.mxu0 %v1522
  %2011 = vmatpush1.bf16.msra.mxu0 %v1521
  %2012 = vmatprep.subr.bf16.mxu0 %v1531
  %2013 = vmatpush1.bf16.msra.mxu0 %v1530
  %2014 = vmatprep.subr.bf16.mxu0 %v1540
  %2015 = vmatpush1.bf16.msra.mxu0 %v1539
  %2016 = vmatprep.subr.bf16.mxu0 %v1549
  %2017 = vmatpush1.bf16.msra.mxu0 %v1548
  %2018 = vmatprep.subr.bf16.mxu0 %v1558
  %2019 = vmatpush1.bf16.msra.mxu0 %v1557
  %2020 = vmatprep.subr.bf16.mxu0 %v1567
  %2021 = vmatpush1.bf16.msra.mxu0 %v1566
  %2022 = vmatprep.mubr.bf16.mxu0 %v384
  %2023 = vmatmul.mubr.bf16.gmra.mrb[0].mxu0 %v383
  %v2024 = vpop.f32.mrb[0].mxu0
  %v2025 = vadd.f32 %v1982, %v2024
  %v2026 = vpop.f32.mrb[0].mxu0
  %v2027 = vadd.f32 %v1984, %v2026
  %v2028 = vpop.f32.mrb[0].mxu0
  %v2029 = vadd.f32 %v1986, %v2028
  %v2030 = vpop.f32.mrb[0].mxu0
  %v2031 = vadd.f32 %v1988, %v2030
  %2032 = vdwg.mxu0
  %2033 = vmatprep.subr.bf16.mxu0 %v1290
  %2034 = vmatpush1.bf16.msra.mxu0 %v1289
  %2035 = vmatprep.subr.bf16.mxu0 %v1299
  %2036 = vmatpush1.bf16.msra.mxu0 %v1298
  %2037 = vmatprep.subr.bf16.mxu0 %v1308
  %2038 = vmatpush1.bf16.msra.mxu0 %v1307
  %2039 = vmatprep.subr.bf16.mxu0 %v1317
  %2040 = vmatpush1.bf16.msra.mxu0 %v1316
  %2041 = vmatprep.subr.bf16.mxu0 %v1326
  %2042 = vmatpush1.bf16.msra.mxu0 %v1325
  %2043 = vmatprep.subr.bf16.mxu0 %v1335
  %2044 = vmatpush1.bf16.msra.mxu0 %v1334
  %2045 = vmatprep.subr.bf16.mxu0 %v1344
  %2046 = vmatpush1.bf16.msra.mxu0 %v1343
  %2047 = vmatprep.subr.bf16.mxu0 %v1353
  %2048 = vmatpush1.bf16.msra.mxu0 %v1352
  %2049 = vmatprep.subr.bf16.mxu0 %v1362
  %2050 = vmatpush1.bf16.msra.mxu0 %v1361
  %2051 = vmatprep.subr.bf16.mxu0 %v1371
  %2052 = vmatpush1.bf16.msra.mxu0 %v1370
  %2053 = vmatprep.subr.bf16.mxu0 %v1380
  %2054 = vmatpush1.bf16.msra.mxu0 %v1379
  %2055 = vmatprep.subr.bf16.mxu0 %v1389
  %2056 = vmatpush1.bf16.msra.mxu0 %v1388
  %2057 = vmatprep.subr.bf16.mxu0 %v1398
  %2058 = vmatpush1.bf16.msra.mxu0 %v1397
  %2059 = vmatprep.subr.bf16.mxu0 %v1407
  %2060 = vmatpush1.bf16.msra.mxu0 %v1406
  %2061 = vmatprep.subr.bf16.mxu0 %v1416
  %2062 = vmatpush1.bf16.msra.mxu0 %v1415
  %2063 = vmatprep.subr.bf16.mxu0 %v1425
  %2064 = vmatpush1.bf16.msra.mxu0 %v1424
  %2065 = vmatprep.mubr.bf16.mxu0 %v382
  %2066 = vmatmul.mubr.bf16.gmra.mrb[0].mxu0 %v381
  %v2067 = vpop.f32.mrb[0].mxu0
  %v2068 = vadd.f32 0.0, %v2067
  %v2069 = vpop.f32.mrb[0].mxu0
  %v2070 = vadd.f32 0.0, %v2069
  %v2071 = vpop.f32.mrb[0].mxu0
  %v2072 = vadd.f32 0.0, %v2071
  %v2073 = vpop.f32.mrb[0].mxu0
  %v2074 = vadd.f32 0.0, %v2073
  %2075 = vdwg.mxu0
  %2076 = vmatprep.subr.bf16.mxu0 %v1434
  %2077 = vmatpush1.bf16.msra.mxu0 %v1433
  %2078 = vmatprep.subr.bf16.mxu0 %v1443
  %2079 = vmatpush1.bf16.msra.mxu0 %v1442
  %2080 = vmatprep.subr.bf16.mxu0 %v1452
  %2081 = vmatpush1.bf16.msra.mxu0 %v1451
  %2082 = vmatprep.subr.bf16.mxu0 %v1461
  %2083 = vmatpush1.bf16.msra.mxu0 %v1460
  %2084 = vmatprep.subr.bf16.mxu0 %v1470
  %2085 = vmatpush1.bf16.msra.mxu0 %v1469
  %2086 = vmatprep.subr.bf16.mxu0 %v1479
  %2087 = vmatpush1.bf16.msra.mxu0 %v1478
  %2088 = vmatprep.subr.bf16.mxu0 %v1488
  %2089 = vmatpush1.bf16.msra.mxu0 %v1487
  %2090 = vmatprep.subr.bf16.mxu0 %v1497
  %2091 = vmatpush1.bf16.msra.mxu0 %v1496
  %2092 = vmatprep.subr.bf16.mxu0 %v1506
  %2093 = vmatpush1.bf16.msra.mxu0 %v1505
  %2094 = vmatprep.subr.bf16.mxu0 %v1515
  %2095 = vmatpush1.bf16.msra.mxu0 %v1514
  %2096 = vmatprep.subr.bf16.mxu0 %v1524
  %2097 = vmatpush1.bf16.msra.mxu0 %v1523
  %2098 = vmatprep.subr.bf16.mxu0 %v1533
  %2099 = vmatpush1.bf16.msra.mxu0 %v1532
  %2100 = vmatprep.subr.bf16.mxu0 %v1542
  %2101 = vmatpush1.bf16.msra.mxu0 %v1541
  %2102 = vmatprep.subr.bf16.mxu0 %v1551
  %2103 = vmatpush1.bf16.msra.mxu0 %v1550
  %2104 = vmatprep.subr.bf16.mxu0 %v1560
  %2105 = vmatpush1.bf16.msra.mxu0 %v1559
  %2106 = vmatprep.subr.bf16.mxu0 %v1569
  %2107 = vmatpush1.bf16.msra.mxu0 %v1568
  %2108 = vmatprep.mubr.bf16.mxu0 %v384
  %2109 = vmatmul.mubr.bf16.gmra.mrb[0].mxu0 %v383
  %v2110 = vpop.f32.mrb[0].mxu0
  %v2111 = vadd.f32 %v2068, %v2110
  %v2112 = vpop.f32.mrb[0].mxu0
  %v2113 = vadd.f32 %v2070, %v2112
  %v2114 = vpop.f32.mrb[0].mxu0
  %v2115 = vadd.f32 %v2072, %v2114
  %v2116 = vpop.f32.mrb[0].mxu0
  %v2117 = vadd.f32 %v2074, %v2116
  %2118 = vdwg.mxu0
  %2119 = vmatprep.subr.bf16.mxu0 %v1292
  %2120 = vmatpush1.bf16.msra.mxu0 %v1291
  %2121 = vmatprep.subr.bf16.mxu0 %v1301
  %2122 = vmatpush1.bf16.msra.mxu0 %v1300
  %2123 = vmatprep.subr.bf16.mxu0 %v1310
  %2124 = vmatpush1.bf16.msra.mxu0 %v1309
  %2125 = vmatprep.subr.bf16.mxu0 %v1319
  %2126 = vmatpush1.bf16.msra.mxu0 %v1318
  %2127 = vmatprep.subr.bf16.mxu0 %v1328
  %2128 = vmatpush1.bf16.msra.mxu0 %v1327
  %2129 = vmatprep.subr.bf16.mxu0 %v1337
  %2130 = vmatpush1.bf16.msra.mxu0 %v1336
  %2131 = vmatprep.subr.bf16.mxu0 %v1346
  %2132 = vmatpush1.bf16.msra.mxu0 %v1345
  %2133 = vmatprep.subr.bf16.mxu0 %v1355
  %2134 = vmatpush1.bf16.msra.mxu0 %v1354
  %2135 = vmatprep.subr.bf16.mxu0 %v1364
  %2136 = vmatpush1.bf16.msra.mxu0 %v1363
  %2137 = vmatprep.subr.bf16.mxu0 %v1373
  %2138 = vmatpush1.bf16.msra.mxu0 %v1372
  %2139 = vmatprep.subr.bf16.mxu0 %v1382
  %2140 = vmatpush1.bf16.msra.mxu0 %v1381
  %2141 = vmatprep.subr.bf16.mxu0 %v1391
  %2142 = vmatpush1.bf16.msra.mxu0 %v1390
  %2143 = vmatprep.subr.bf16.mxu0 %v1400
  %2144 = vmatpush1.bf16.msra.mxu0 %v1399
  %2145 = vmatprep.subr.bf16.mxu0 %v1409
  %2146 = vmatpush1.bf16.msra.mxu0 %v1408
  %2147 = vmatprep.subr.bf16.mxu0 %v1418
  %2148 = vmatpush1.bf16.msra.mxu0 %v1417
  %2149 = vmatprep.subr.bf16.mxu0 %v1427
  %2150 = vmatpush1.bf16.msra.mxu0 %v1426
  %2151 = vmatprep.mubr.bf16.mxu0 %v382
  %2152 = vmatmul.mubr.bf16.gmra.mrb[0].mxu0 %v381
  %v2153 = vpop.f32.mrb[0].mxu0
  %v2154 = vadd.f32 0.0, %v2153
  %v2155 = vpop.f32.mrb[0].mxu0
  %v2156 = vadd.f32 0.0, %v2155
  %v2157 = vpop.f32.mrb[0].mxu0
  %v2158 = vadd.f32 0.0, %v2157
  %v2159 = vpop.f32.mrb[0].mxu0
  %v2160 = vadd.f32 0.0, %v2159
  %2161 = vdwg.mxu0
  %2162 = vmatprep.subr.bf16.mxu0 %v1436
  %2163 = vmatpush1.bf16.msra.mxu0 %v1435
  %2164 = vmatprep.subr.bf16.mxu0 %v1445
  %2165 = vmatpush1.bf16.msra.mxu0 %v1444
  %2166 = vmatprep.subr.bf16.mxu0 %v1454
  %2167 = vmatpush1.bf16.msra.mxu0 %v1453
  %2168 = vmatprep.subr.bf16.mxu0 %v1463
  %2169 = vmatpush1.bf16.msra.mxu0 %v1462
  %2170 = vmatprep.subr.bf16.mxu0 %v1472
  %2171 = vmatpush1.bf16.msra.mxu0 %v1471
  %2172 = vmatprep.subr.bf16.mxu0 %v1481
  %2173 = vmatpush1.bf16.msra.mxu0 %v1480
  %2174 = vmatprep.subr.bf16.mxu0 %v1490
  %2175 = vmatpush1.bf16.msra.mxu0 %v1489
  %2176 = vmatprep.subr.bf16.mxu0 %v1499
  %2177 = vmatpush1.bf16.msra.mxu0 %v1498
  %2178 = vmatprep.subr.bf16.mxu0 %v1508
  %2179 = vmatpush1.bf16.msra.mxu0 %v1507
  %2180 = vmatprep.subr.bf16.mxu0 %v1517
  %2181 = vmatpush1.bf16.msra.mxu0 %v1516
  %2182 = vmatprep.subr.bf16.mxu0 %v1526
  %2183 = vmatpush1.bf16.msra.mxu0 %v1525
  %2184 = vmatprep.subr.bf16.mxu0 %v1535
  %2185 = vmatpush1.bf16.msra.mxu0 %v1534
  %2186 = vmatprep.subr.bf16.mxu0 %v1544
  %2187 = vmatpush1.bf16.msra.mxu0 %v1543
  %2188 = vmatprep.subr.bf16.mxu0 %v1553
  %2189 = vmatpush1.bf16.msra.mxu0 %v1552
  %2190 = vmatprep.subr.bf16.mxu0 %v1562
  %2191 = vmatpush1.bf16.msra.mxu0 %v1561
  %2192 = vmatprep.subr.bf16.mxu0 %v1571
  %2193 = vmatpush1.bf16.msra.mxu0 %v1570
  %2194 = vmatprep.mubr.bf16.mxu0 %v384
  %2195 = vmatmul.mubr.bf16.gmra.mrb[0].mxu0 %v383
  %v2196 = vpop.f32.mrb[0].mxu0
  %v2197 = vadd.f32 %v2154, %v2196
  %v2198 = vpop.f32.mrb[0].mxu0
  %v2199 = vadd.f32 %v2156, %v2198
  %v2200 = vpop.f32.mrb[0].mxu0
  %v2201 = vadd.f32 %v2158, %v2200
  %v2202 = vpop.f32.mrb[0].mxu0
  %v2203 = vadd.f32 %v2160, %v2202
  %2204 = vdwg.mxu0
  %2205 = vmatprep.subr.bf16.mxu0 0
  %2206 = vmatpush1.bf16.msra.mxu0 %v1293
  %2207 = vmatprep.subr.bf16.mxu0 0
  %2208 = vmatpush1.bf16.msra.mxu0 %v1302
  %2209 = vmatprep.subr.bf16.mxu0 0
  %2210 = vmatpush1.bf16.msra.mxu0 %v1311
  %2211 = vmatprep.subr.bf16.mxu0 0
  %2212 = vmatpush1.bf16.msra.mxu0 %v1320
  %2213 = vmatprep.subr.bf16.mxu0 0
  %2214 = vmatpush1.bf16.msra.mxu0 %v1329
  %2215 = vmatprep.subr.bf16.mxu0 0
  %2216 = vmatpush1.bf16.msra.mxu0 %v1338
  %2217 = vmatprep.subr.bf16.mxu0 0
  %2218 = vmatpush1.bf16.msra.mxu0 %v1347
  %2219 = vmatprep.subr.bf16.mxu0 0
  %2220 = vmatpush1.bf16.msra.mxu0 %v1356
  %2221 = vmatprep.subr.bf16.mxu0 0
  %2222 = vmatpush1.bf16.msra.mxu0 %v1365
  %2223 = vmatprep.subr.bf16.mxu0 0
  %2224 = vmatpush1.bf16.msra.mxu0 %v1374
  %2225 = vmatprep.subr.bf16.mxu0 0
  %2226 = vmatpush1.bf16.msra.mxu0 %v1383
  %2227 = vmatprep.subr.bf16.mxu0 0
  %2228 = vmatpush1.bf16.msra.mxu0 %v1392
  %2229 = vmatprep.subr.bf16.mxu0 0
  %2230 = vmatpush1.bf16.msra.mxu0 %v1401
  %2231 = vmatprep.subr.bf16.mxu0 0
  %2232 = vmatpush1.bf16.msra.mxu0 %v1410
  %2233 = vmatprep.subr.bf16.mxu0 0
  %2234 = vmatpush1.bf16.msra.mxu0 %v1419
  %2235 = vmatprep.subr.bf16.mxu0 0
  %2236 = vmatpush1.bf16.msra.mxu0 %v1428
  %2237 = vmatprep.mubr.bf16.mxu0 %v382
  %2238 = vmatmul.mubr.bf16.gmra.mrb[0].mxu0 %v381
  %v2239 = vpop.f32.mrb[0].mxu0
  %v2240 = vadd.f32 0.0, %v2239
  %v2241 = vpop.f32.mrb[0].mxu0
  %v2242 = vpop.f32.mrb[0].mxu0
  %v2243 = vadd.f32 0.0, %v2242
  %v2244 = vpop.f32.mrb[0].mxu0
  %2245 = vdwg.mxu0
  %2246 = vmatprep.subr.bf16.mxu0 0
  %2247 = vmatpush1.bf16.msra.mxu0 %v1437
  %2248 = vmatprep.subr.bf16.mxu0 0
  %2249 = vmatpush1.bf16.msra.mxu0 %v1446
  %2250 = vmatprep.subr.bf16.mxu0 0
  %2251 = vmatpush1.bf16.msra.mxu0 %v1455
  %2252 = vmatprep.subr.bf16.mxu0 0
  %2253 = vmatpush1.bf16.msra.mxu0 %v1464
  %2254 = vmatprep.subr.bf16.mxu0 0
  %2255 = vmatpush1.bf16.msra.mxu0 %v1473
  %2256 = vmatprep.subr.bf16.mxu0 0
  %2257 = vmatpush1.bf16.msra.mxu0 %v1482
  %2258 = vmatprep.subr.bf16.mxu0 0
  %2259 = vmatpush1.bf16.msra.mxu0 %v1491
  %2260 = vmatprep.subr.bf16.mxu0 0
  %2261 = vmatpush1.bf16.msra.mxu0 %v1500
  %2262 = vmatprep.subr.bf16.mxu0 0
  %2263 = vmatpush1.bf16.msra.mxu0 %v1509
  %2264 = vmatprep.subr.bf16.mxu0 0
  %2265 = vmatpush1.bf16.msra.mxu0 %v1518
  %2266 = vmatprep.subr.bf16.mxu0 0
  %2267 = vmatpush1.bf16.msra.mxu0 %v1527
  %2268 = vmatprep.subr.bf16.mxu0 0
  %2269 = vmatpush1.bf16.msra.mxu0 %v1536
  %2270 = vmatprep.subr.bf16.mxu0 0
  %2271 = vmatpush1.bf16.msra.mxu0 %v1545
  %2272 = vmatprep.subr.bf16.mxu0 0
  %2273 = vmatpush1.bf16.msra.mxu0 %v1554
  %2274 = vmatprep.subr.bf16.mxu0 0
  %2275 = vmatpush1.bf16.msra.mxu0 %v1563
  %2276 = vmatprep.subr.bf16.mxu0 0
  %2277 = vmatpush1.bf16.msra.mxu0 %v1572
  %2278 = vmatprep.mubr.bf16.mxu0 %v384
  %2279 = vmatmul.mubr.bf16.gmra.mrb[0].mxu0 %v383
  %v2280 = vpop.f32.mrb[0].mxu0
  %v2281 = vadd.f32 %v2240, %v2280
  %v2282 = vpop.f32.mrb[0].mxu0
  %v2283 = vpop.f32.mrb[0].mxu0
  %v2284 = vadd.f32 %v2243, %v2283
  %v2285 = vpop.f32.mrb[0].mxu0
  %2286 = vdwg.mxu0
  %v2287 = vpack.c.bf16 %v1943, %v1939
  %v2288 = vpack.c.bf16 %v1945, %v1941
  %v2289 = vpack.c.bf16 %v2029, %v2025
  %v2290 = vpack.c.bf16 %v2031, %v2027
  %v2291 = vpack.c.bf16 %v2115, %v2111
  %v2292 = vpack.c.bf16 %v2117, %v2113
  %v2293 = vpack.c.bf16 %v2201, %v2197
  %v2294 = vpack.c.bf16 %v2203, %v2199
  %v2295 = vpack.c.bf16 %v2284, %v2281
  %v2296 = vld [vmem:[%s2] sm:$0xf]
  %v2297 = vld [vmem:[%s2 + $0x4] sm:$0xf]
  %s2298 = scalar_lea.vmem %s2, 8
  %v2299 = vld [vmem:[%s2298] sm:$0xf]
  %v2300 = vld [vmem:[%s2298 + $0x4] sm:$0xf]
  %v2303 = vunpack.c.l.b16 %v2299
  %v2304 = vunpack.c.l.b16 %v2300
  %v2305 = vpack.c.b16 %v2304, %v2303
  %vm2306 = vcmask 130048
  %v2308 = vsel %vm2306, %v2305, 0
  %2310 = vmatprep.subr.bf16.mxu0 0
  %2311 = vmatpush1.bf16.msra.mxu0 %v2288
  %2312 = vmatprep.subr.bf16.mxu0 0
  %2313 = vmatpush1.bf16.msra.mxu0 0
  %2314 = vmatprep.subr.bf16.mxu0 0
  %2315 = vmatpush1.bf16.msra.mxu0 0
  %2316 = vmatprep.subr.bf16.mxu0 0
  %2317 = vmatpush1.bf16.msra.mxu0 0
  %2318 = vmatprep.subr.bf16.mxu0 0
  %2319 = vmatpush1.bf16.msra.mxu0 0
  %2320 = vmatprep.subr.bf16.mxu0 0
  %2321 = vmatpush1.bf16.msra.mxu0 0
  %2322 = vmatprep.subr.bf16.mxu0 0
  %2323 = vmatpush1.bf16.msra.mxu0 0
  %2324 = vmatprep.subr.bf16.mxu0 0
  %2325 = vmatpush1.bf16.msra.mxu0 0
  %2326 = vmatprep.subr.bf16.mxu0 0
  %2327 = vmatpush1.bf16.msra.mxu0 0
  %2328 = vmatprep.subr.bf16.mxu0 0
  %2329 = vmatpush1.bf16.msra.mxu0 0
  %2330 = vmatprep.subr.bf16.mxu0 0
  %2331 = vmatpush1.bf16.msra.mxu0 0
  %2332 = vmatprep.subr.bf16.mxu0 0
  %2333 = vmatpush1.bf16.msra.mxu0 0
  %2334 = vmatprep.subr.bf16.mxu0 0
  %2335 = vmatpush1.bf16.msra.mxu0 0
  %2336 = vmatprep.subr.bf16.mxu0 0
  %2337 = vmatpush1.bf16.msra.mxu0 0
  %2338 = vmatprep.subr.bf16.mxu0 0
  %2339 = vmatpush1.bf16.msra.mxu0 0
  %2340 = vmatprep.subr.bf16.mxu0 0
  %2341 = vmatpush1.bf16.msra.mxu0 0
  %2342 = vmatprep.mubr.bf16.mxu0 0
  %2343 = vmatmul.mubr.bf16.gmra.mrb[0].mxu0 %v2308
  %v2344 = vpop.f32.mrb[0].mxu0
  %v2345 = vadd.f32 0.0, %v2344
  %v2346 = vpop.f32.mrb[0].mxu0
  %v2347 = vpop.f32.mrb[0].mxu0
  %v2348 = vadd.f32 0.0, %v2347
  %v2349 = vpop.f32.mrb[0].mxu0
  %2350 = vdwg.mxu0
  %v2353 = vunpack.c.l.b16 %v2296
  %v2354 = vunpack.c.l.b16 %v2297
  %v2355 = vpack.c.b16 %v2354, %v2353
  %v2357 = vsel %vm2306, %v2355, 0
  %2359 = vmatprep.subr.bf16.mxu0 0
  %2360 = vmatpush1.bf16.msra.mxu0 %v2287
  %2361 = vmatprep.subr.bf16.mxu0 0
  %2362 = vmatpush1.bf16.msra.mxu0 0
  %2363 = vmatprep.subr.bf16.mxu0 0
  %2364 = vmatpush1.bf16.msra.mxu0 0
  %2365 = vmatprep.subr.bf16.mxu0 0
  %2366 = vmatpush1.bf16.msra.mxu0 0
  %2367 = vmatprep.subr.bf16.mxu0 0
  %2368 = vmatpush1.bf16.msra.mxu0 0
  %2369 = vmatprep.subr.bf16.mxu0 0
  %2370 = vmatpush1.bf16.msra.mxu0 0
  %2371 = vmatprep.subr.bf16.mxu0 0
  %2372 = vmatpush1.bf16.msra.mxu0 0
  %2373 = vmatprep.subr.bf16.mxu0 0
  %2374 = vmatpush1.bf16.msra.mxu0 0
  %2375 = vmatprep.subr.bf16.mxu0 0
  %2376 = vmatpush1.bf16.msra.mxu0 0
  %2377 = vmatprep.subr.bf16.mxu0 0
  %2378 = vmatpush1.bf16.msra.mxu0 0
  %2379 = vmatprep.subr.bf16.mxu0 0
  %2380 = vmatpush1.bf16.msra.mxu0 0
  %2381 = vmatprep.subr.bf16.mxu0 0
  %2382 = vmatpush1.bf16.msra.mxu0 0
  %2383 = vmatprep.subr.bf16.mxu0 0
  %2384 = vmatpush1.bf16.msra.mxu0 0
  %2385 = vmatprep.subr.bf16.mxu0 0
  %2386 = vmatpush1.bf16.msra.mxu0 0
  %2387 = vmatprep.subr.bf16.mxu0 0
  %2388 = vmatpush1.bf16.msra.mxu0 0
  %2389 = vmatprep.subr.bf16.mxu0 0
  %2390 = vmatpush1.bf16.msra.mxu0 0
  %2391 = vmatprep.mubr.bf16.mxu0 0
  %2392 = vmatmul.mubr.bf16.gmra.mrb[0].mxu0 %v2357
  %v2393 = vpop.f32.mrb[0].mxu0
  %v2394 = vadd.f32 %v2345, %v2393
  %v2395 = vpop.f32.mrb[0].mxu0
  %v2396 = vpop.f32.mrb[0].mxu0
  %v2397 = vadd.f32 %v2348, %v2396
  %v2398 = vpop.f32.mrb[0].mxu0
  %2399 = vdwg.mxu0
  %s2400 = scalar_lea.vmem %s2, 16
  %v2401 = vld [vmem:[%s2400] sm:$0xf]
  %v2402 = vld [vmem:[%s2400 + $0x4] sm:$0xf]
  %v2405 = vunpack.c.l.b16 %v2401
  %v2406 = vunpack.c.l.b16 %v2402
  %v2407 = vpack.c.b16 %v2406, %v2405
  %v2409 = vsel %vm2306, %v2407, 0
  %2411 = vmatprep.subr.bf16.mxu0 0
  %2412 = vmatpush1.bf16.msra.mxu0 %v2289
  %2413 = vmatprep.subr.bf16.mxu0 0
  %2414 = vmatpush1.bf16.msra.mxu0 0
  %2415 = vmatprep.subr.bf16.mxu0 0
  %2416 = vmatpush1.bf16.msra.mxu0 0
  %2417 = vmatprep.subr.bf16.mxu0 0
  %2418 = vmatpush1.bf16.msra.mxu0 0
  %2419 = vmatprep.subr.bf16.mxu0 0
  %2420 = vmatpush1.bf16.msra.mxu0 0
  %2421 = vmatprep.subr.bf16.mxu0 0
  %2422 = vmatpush1.bf16.msra.mxu0 0
  %2423 = vmatprep.subr.bf16.mxu0 0
  %2424 = vmatpush1.bf16.msra.mxu0 0
  %2425 = vmatprep.subr.bf16.mxu0 0
  %2426 = vmatpush1.bf16.msra.mxu0 0
  %2427 = vmatprep.subr.bf16.mxu0 0
  %2428 = vmatpush1.bf16.msra.mxu0 0
  %2429 = vmatprep.subr.bf16.mxu0 0
  %2430 = vmatpush1.bf16.msra.mxu0 0
  %2431 = vmatprep.subr.bf16.mxu0 0
  %2432 = vmatpush1.bf16.msra.mxu0 0
  %2433 = vmatprep.subr.bf16.mxu0 0
  %2434 = vmatpush1.bf16.msra.mxu0 0
  %2435 = vmatprep.subr.bf16.mxu0 0
  %2436 = vmatpush1.bf16.msra.mxu0 0
  %2437 = vmatprep.subr.bf16.mxu0 0
  %2438 = vmatpush1.bf16.msra.mxu0 0
  %2439 = vmatprep.subr.bf16.mxu0 0
  %2440 = vmatpush1.bf16.msra.mxu0 0
  %2441 = vmatprep.subr.bf16.mxu0 0
  %2442 = vmatpush1.bf16.msra.mxu0 0
  %2443 = vmatprep.mubr.bf16.mxu0 0
  %2444 = vmatmul.mubr.bf16.gmra.mrb[0].mxu0 %v2409
  %v2445 = vpop.f32.mrb[0].mxu0
  %v2446 = vadd.f32 0.0, %v2445
  %v2447 = vpop.f32.mrb[0].mxu0
  %v2448 = vpop.f32.mrb[0].mxu0
  %v2449 = vadd.f32 0.0, %v2448
  %v2450 = vpop.f32.mrb[0].mxu0
  %2451 = vdwg.mxu0
  %v2452 = vadd.f32 %v2394, %v2446
  %v2453 = vadd.f32 %v2397, %v2449
  %s2454 = scalar_lea.vmem %s2, 24
  %v2455 = vld [vmem:[%s2454] sm:$0xf]
  %v2456 = vld [vmem:[%s2454 + $0x4] sm:$0xf]
  %v2459 = vunpack.c.l.b16 %v2455
  %v2460 = vunpack.c.l.b16 %v2456
  %v2461 = vpack.c.b16 %v2460, %v2459
  %v2463 = vsel %vm2306, %v2461, 0
  %2465 = vmatprep.subr.bf16.mxu0 0
  %2466 = vmatpush1.bf16.msra.mxu0 %v2290
  %2467 = vmatprep.subr.bf16.mxu0 0
  %2468 = vmatpush1.bf16.msra.mxu0 0
  %2469 = vmatprep.subr.bf16.mxu0 0
  %2470 = vmatpush1.bf16.msra.mxu0 0
  %2471 = vmatprep.subr.bf16.mxu0 0
  %2472 = vmatpush1.bf16.msra.mxu0 0
  %2473 = vmatprep.subr.bf16.mxu0 0
  %2474 = vmatpush1.bf16.msra.mxu0 0
  %2475 = vmatprep.subr.bf16.mxu0 0
  %2476 = vmatpush1.bf16.msra.mxu0 0
  %2477 = vmatprep.subr.bf16.mxu0 0
  %2478 = vmatpush1.bf16.msra.mxu0 0
  %2479 = vmatprep.subr.bf16.mxu0 0
  %2480 = vmatpush1.bf16.msra.mxu0 0
  %2481 = vmatprep.subr.bf16.mxu0 0
  %2482 = vmatpush1.bf16.msra.mxu0 0
  %2483 = vmatprep.subr.bf16.mxu0 0
  %2484 = vmatpush1.bf16.msra.mxu0 0
  %2485 = vmatprep.subr.bf16.mxu0 0
  %2486 = vmatpush1.bf16.msra.mxu0 0
  %2487 = vmatprep.subr.bf16.mxu0 0
  %2488 = vmatpush1.bf16.msra.mxu0 0
  %2489 = vmatprep.subr.bf16.mxu0 0
  %2490 = vmatpush1.bf16.msra.mxu0 0
  %2491 = vmatprep.subr.bf16.mxu0 0
  %2492 = vmatpush1.bf16.msra.mxu0 0
  %2493 = vmatprep.subr.bf16.mxu0 0
  %2494 = vmatpush1.bf16.msra.mxu0 0
  %2495 = vmatprep.subr.bf16.mxu0 0
  %2496 = vmatpush1.bf16.msra.mxu0 0
  %2497 = vmatprep.mubr.bf16.mxu0 0
  %2498 = vmatmul.mubr.bf16.gmra.mrb[0].mxu0 %v2463
  %v2499 = vpop.f32.mrb[0].mxu0
  %v2500 = vadd.f32 0.0, %v2499
  %v2501 = vpop.f32.mrb[0].mxu0
  %v2502 = vpop.f32.mrb[0].mxu0
  %v2503 = vadd.f32 0.0, %v2502
  %v2504 = vpop.f32.mrb[0].mxu0
  %2505 = vdwg.mxu0
  %v2506 = vadd.f32 %v2452, %v2500
  %v2507 = vadd.f32 %v2453, %v2503
  %s2508 = scalar_lea.vmem %s2, 32
  %v2509 = vld [vmem:[%s2508] sm:$0xf]
  %v2510 = vld [vmem:[%s2508 + $0x4] sm:$0xf]
  %v2513 = vunpack.c.l.b16 %v2509
  %v2514 = vunpack.c.l.b16 %v2510
  %v2515 = vpack.c.b16 %v2514, %v2513
  %v2517 = vsel %vm2306, %v2515, 0
  %2519 = vmatprep.subr.bf16.mxu0 0
  %2520 = vmatpush1.bf16.msra.mxu0 %v2291
  %2521 = vmatprep.subr.bf16.mxu0 0
  %2522 = vmatpush1.bf16.msra.mxu0 0
  %2523 = vmatprep.subr.bf16.mxu0 0
  %2524 = vmatpush1.bf16.msra.mxu0 0
  %2525 = vmatprep.subr.bf16.mxu0 0
  %2526 = vmatpush1.bf16.msra.mxu0 0
  %2527 = vmatprep.subr.bf16.mxu0 0
  %2528 = vmatpush1.bf16.msra.mxu0 0
  %2529 = vmatprep.subr.bf16.mxu0 0
  %2530 = vmatpush1.bf16.msra.mxu0 0
  %2531 = vmatprep.subr.bf16.mxu0 0
  %2532 = vmatpush1.bf16.msra.mxu0 0
  %2533 = vmatprep.subr.bf16.mxu0 0
  %2534 = vmatpush1.bf16.msra.mxu0 0
  %2535 = vmatprep.subr.bf16.mxu0 0
  %2536 = vmatpush1.bf16.msra.mxu0 0
  %2537 = vmatprep.subr.bf16.mxu0 0
  %2538 = vmatpush1.bf16.msra.mxu0 0
  %2539 = vmatprep.subr.bf16.mxu0 0
  %2540 = vmatpush1.bf16.msra.mxu0 0
  %2541 = vmatprep.subr.bf16.mxu0 0
  %2542 = vmatpush1.bf16.msra.mxu0 0
  %2543 = vmatprep.subr.bf16.mxu0 0
  %2544 = vmatpush1.bf16.msra.mxu0 0
  %2545 = vmatprep.subr.bf16.mxu0 0
  %2546 = vmatpush1.bf16.msra.mxu0 0
  %2547 = vmatprep.subr.bf16.mxu0 0
  %2548 = vmatpush1.bf16.msra.mxu0 0
  %2549 = vmatprep.subr.bf16.mxu0 0
  %2550 = vmatpush1.bf16.msra.mxu0 0
  %2551 = vmatprep.mubr.bf16.mxu0 0
  %2552 = vmatmul.mubr.bf16.gmra.mrb[0].mxu0 %v2517
  %v2553 = vpop.f32.mrb[0].mxu0
  %v2554 = vadd.f32 0.0, %v2553
  %v2555 = vpop.f32.mrb[0].mxu0
  %v2556 = vpop.f32.mrb[0].mxu0
  %v2557 = vadd.f32 0.0, %v2556
  %v2558 = vpop.f32.mrb[0].mxu0
  %2559 = vdwg.mxu0
  %v2560 = vadd.f32 %v2506, %v2554
  %v2561 = vadd.f32 %v2507, %v2557
  %s2562 = scalar_lea.vmem %s2, 40
  %v2563 = vld [vmem:[%s2562] sm:$0xf]
  %v2564 = vld [vmem:[%s2562 + $0x4] sm:$0xf]
  %v2567 = vunpack.c.l.b16 %v2563
  %v2568 = vunpack.c.l.b16 %v2564
  %v2569 = vpack.c.b16 %v2568, %v2567
  %v2571 = vsel %vm2306, %v2569, 0
  %2573 = vmatprep.subr.bf16.mxu0 0
  %2574 = vmatpush1.bf16.msra.mxu0 %v2292
  %2575 = vmatprep.subr.bf16.mxu0 0
  %2576 = vmatpush1.bf16.msra.mxu0 0
  %2577 = vmatprep.subr.bf16.mxu0 0
  %2578 = vmatpush1.bf16.msra.mxu0 0
  %2579 = vmatprep.subr.bf16.mxu0 0
  %2580 = vmatpush1.bf16.msra.mxu0 0
  %2581 = vmatprep.subr.bf16.mxu0 0
  %2582 = vmatpush1.bf16.msra.mxu0 0
  %2583 = vmatprep.subr.bf16.mxu0 0
  %2584 = vmatpush1.bf16.msra.mxu0 0
  %2585 = vmatprep.subr.bf16.mxu0 0
  %2586 = vmatpush1.bf16.msra.mxu0 0
  %2587 = vmatprep.subr.bf16.mxu0 0
  %2588 = vmatpush1.bf16.msra.mxu0 0
  %2589 = vmatprep.subr.bf16.mxu0 0
  %2590 = vmatpush1.bf16.msra.mxu0 0
  %2591 = vmatprep.subr.bf16.mxu0 0
  %2592 = vmatpush1.bf16.msra.mxu0 0
  %2593 = vmatprep.subr.bf16.mxu0 0
  %2594 = vmatpush1.bf16.msra.mxu0 0
  %2595 = vmatprep.subr.bf16.mxu0 0
  %2596 = vmatpush1.bf16.msra.mxu0 0
  %2597 = vmatprep.subr.bf16.mxu0 0
  %2598 = vmatpush1.bf16.msra.mxu0 0
  %2599 = vmatprep.subr.bf16.mxu0 0
  %2600 = vmatpush1.bf16.msra.mxu0 0
  %2601 = vmatprep.subr.bf16.mxu0 0
  %2602 = vmatpush1.bf16.msra.mxu0 0
  %2603 = vmatprep.subr.bf16.mxu0 0
  %2604 = vmatpush1.bf16.msra.mxu0 0
  %2605 = vmatprep.mubr.bf16.mxu0 0
  %2606 = vmatmul.mubr.bf16.gmra.mrb[0].mxu0 %v2571
  %v2607 = vpop.f32.mrb[0].mxu0
  %v2608 = vadd.f32 0.0, %v2607
  %v2609 = vpop.f32.mrb[0].mxu0
  %v2610 = vpop.f32.mrb[0].mxu0
  %v2611 = vadd.f32 0.0, %v2610
  %v2612 = vpop.f32.mrb[0].mxu0
  %2613 = vdwg.mxu0
  %v2614 = vadd.f32 %v2560, %v2608
  %v2615 = vadd.f32 %v2561, %v2611
  %s2616 = scalar_lea.vmem %s2, 48
  %v2617 = vld [vmem:[%s2616] sm:$0xf]
  %v2618 = vld [vmem:[%s2616 + $0x4] sm:$0xf]
  %v2621 = vunpack.c.l.b16 %v2617
  %v2622 = vunpack.c.l.b16 %v2618
  %v2623 = vpack.c.b16 %v2622, %v2621
  %v2625 = vsel %vm2306, %v2623, 0
  %2627 = vmatprep.subr.bf16.mxu0 0
  %2628 = vmatpush1.bf16.msra.mxu0 %v2293
  %2629 = vmatprep.subr.bf16.mxu0 0
  %2630 = vmatpush1.bf16.msra.mxu0 0
  %2631 = vmatprep.subr.bf16.mxu0 0
  %2632 = vmatpush1.bf16.msra.mxu0 0
  %2633 = vmatprep.subr.bf16.mxu0 0
  %2634 = vmatpush1.bf16.msra.mxu0 0
  %2635 = vmatprep.subr.bf16.mxu0 0
  %2636 = vmatpush1.bf16.msra.mxu0 0
  %2637 = vmatprep.subr.bf16.mxu0 0
  %2638 = vmatpush1.bf16.msra.mxu0 0
  %2639 = vmatprep.subr.bf16.mxu0 0
  %2640 = vmatpush1.bf16.msra.mxu0 0
  %2641 = vmatprep.subr.bf16.mxu0 0
  %2642 = vmatpush1.bf16.msra.mxu0 0
  %2643 = vmatprep.subr.bf16.mxu0 0
  %2644 = vmatpush1.bf16.msra.mxu0 0
  %2645 = vmatprep.subr.bf16.mxu0 0
  %2646 = vmatpush1.bf16.msra.mxu0 0
  %2647 = vmatprep.subr.bf16.mxu0 0
  %2648 = vmatpush1.bf16.msra.mxu0 0
  %2649 = vmatprep.subr.bf16.mxu0 0
  %2650 = vmatpush1.bf16.msra.mxu0 0
  %2651 = vmatprep.subr.bf16.mxu0 0
  %2652 = vmatpush1.bf16.msra.mxu0 0
  %2653 = vmatprep.subr.bf16.mxu0 0
  %2654 = vmatpush1.bf16.msra.mxu0 0
  %2655 = vmatprep.subr.bf16.mxu0 0
  %2656 = vmatpush1.bf16.msra.mxu0 0
  %2657 = vmatprep.subr.bf16.mxu0 0
  %2658 = vmatpush1.bf16.msra.mxu0 0
  %2659 = vmatprep.mubr.bf16.mxu0 0
  %2660 = vmatmul.mubr.bf16.gmra.mrb[0].mxu0 %v2625
  %v2661 = vpop.f32.mrb[0].mxu0
  %v2662 = vadd.f32 0.0, %v2661
  %v2663 = vpop.f32.mrb[0].mxu0
  %v2664 = vpop.f32.mrb[0].mxu0
  %v2665 = vadd.f32 0.0, %v2664
  %v2666 = vpop.f32.mrb[0].mxu0
  %2667 = vdwg.mxu0
  %v2668 = vadd.f32 %v2614, %v2662
  %v2669 = vadd.f32 %v2615, %v2665
  %s2670 = scalar_lea.vmem %s2, 56
  %v2671 = vld [vmem:[%s2670] sm:$0xf]
  %v2672 = vld [vmem:[%s2670 + $0x4] sm:$0xf]
  %v2675 = vunpack.c.l.b16 %v2671
  %v2676 = vunpack.c.l.b16 %v2672
  %v2677 = vpack.c.b16 %v2676, %v2675
  %v2679 = vsel %vm2306, %v2677, 0
  %2681 = vmatprep.subr.bf16.mxu0 0
  %2682 = vmatpush1.bf16.msra.mxu0 %v2294
  %2683 = vmatprep.subr.bf16.mxu0 0
  %2684 = vmatpush1.bf16.msra.mxu0 0
  %2685 = vmatprep.subr.bf16.mxu0 0
  %2686 = vmatpush1.bf16.msra.mxu0 0
  %2687 = vmatprep.subr.bf16.mxu0 0
  %2688 = vmatpush1.bf16.msra.mxu0 0
  %2689 = vmatprep.subr.bf16.mxu0 0
  %2690 = vmatpush1.bf16.msra.mxu0 0
  %2691 = vmatprep.subr.bf16.mxu0 0
  %2692 = vmatpush1.bf16.msra.mxu0 0
  %2693 = vmatprep.subr.bf16.mxu0 0
  %2694 = vmatpush1.bf16.msra.mxu0 0
  %2695 = vmatprep.subr.bf16.mxu0 0
  %2696 = vmatpush1.bf16.msra.mxu0 0
  %2697 = vmatprep.subr.bf16.mxu0 0
  %2698 = vmatpush1.bf16.msra.mxu0 0
  %2699 = vmatprep.subr.bf16.mxu0 0
  %2700 = vmatpush1.bf16.msra.mxu0 0
  %2701 = vmatprep.subr.bf16.mxu0 0
  %2702 = vmatpush1.bf16.msra.mxu0 0
  %2703 = vmatprep.subr.bf16.mxu0 0
  %2704 = vmatpush1.bf16.msra.mxu0 0
  %2705 = vmatprep.subr.bf16.mxu0 0
  %2706 = vmatpush1.bf16.msra.mxu0 0
  %2707 = vmatprep.subr.bf16.mxu0 0
  %2708 = vmatpush1.bf16.msra.mxu0 0
  %2709 = vmatprep.subr.bf16.mxu0 0
  %2710 = vmatpush1.bf16.msra.mxu0 0
  %2711 = vmatprep.subr.bf16.mxu0 0
  %2712 = vmatpush1.bf16.msra.mxu0 0
  %2713 = vmatprep.mubr.bf16.mxu0 0
  %2714 = vmatmul.mubr.bf16.gmra.mrb[0].mxu0 %v2679
  %v2715 = vpop.f32.mrb[0].mxu0
  %v2716 = vadd.f32 0.0, %v2715
  %v2717 = vpop.f32.mrb[0].mxu0
  %v2718 = vpop.f32.mrb[0].mxu0
  %v2719 = vadd.f32 0.0, %v2718
  %v2720 = vpop.f32.mrb[0].mxu0
  %2721 = vdwg.mxu0
  %v2722 = vadd.f32 %v2668, %v2716
  %v2723 = vadd.f32 %v2669, %v2719
  %s2724 = scalar_lea.vmem %s2, 64
  %v2725 = vld [vmem:[%s2724] sm:$0xf]
  %v2726 = vld [vmem:[%s2724 + $0x4] sm:$0xf]
  %v2729 = vunpack.c.l.b16 %v2725
  %v2730 = vunpack.c.l.b16 %v2726
  %v2731 = vpack.c.b16 %v2730, %v2729
  %v2733 = vsel %vm2306, %v2731, 0
  %2735 = vmatprep.subr.bf16.mxu0 0
  %2736 = vmatpush1.bf16.msra.mxu0 %v2295
  %2737 = vmatprep.subr.bf16.mxu0 0
  %2738 = vmatpush1.bf16.msra.mxu0 0
  %2739 = vmatprep.subr.bf16.mxu0 0
  %2740 = vmatpush1.bf16.msra.mxu0 0
  %2741 = vmatprep.subr.bf16.mxu0 0
  %2742 = vmatpush1.bf16.msra.mxu0 0
  %2743 = vmatprep.subr.bf16.mxu0 0
  %2744 = vmatpush1.bf16.msra.mxu0 0
  %2745 = vmatprep.subr.bf16.mxu0 0
  %2746 = vmatpush1.bf16.msra.mxu0 0
  %2747 = vmatprep.subr.bf16.mxu0 0
  %2748 = vmatpush1.bf16.msra.mxu0 0
  %2749 = vmatprep.subr.bf16.mxu0 0
  %2750 = vmatpush1.bf16.msra.mxu0 0
  %2751 = vmatprep.subr.bf16.mxu0 0
  %2752 = vmatpush1.bf16.msra.mxu0 0
  %2753 = vmatprep.subr.bf16.mxu0 0
  %2754 = vmatpush1.bf16.msra.mxu0 0
  %2755 = vmatprep.subr.bf16.mxu0 0
  %2756 = vmatpush1.bf16.msra.mxu0 0
  %2757 = vmatprep.subr.bf16.mxu0 0
  %2758 = vmatpush1.bf16.msra.mxu0 0
  %2759 = vmatprep.subr.bf16.mxu0 0
  %2760 = vmatpush1.bf16.msra.mxu0 0
  %2761 = vmatprep.subr.bf16.mxu0 0
  %2762 = vmatpush1.bf16.msra.mxu0 0
  %2763 = vmatprep.subr.bf16.mxu0 0
  %2764 = vmatpush1.bf16.msra.mxu0 0
  %2765 = vmatprep.subr.bf16.mxu0 0
  %2766 = vmatpush1.bf16.msra.mxu0 0
  %2767 = vmatprep.mubr.bf16.mxu0 0
  %2768 = vmatmul.mubr.bf16.gmra.mrb[0].mxu0 %v2733
  %v2769 = vpop.f32.mrb[0].mxu0
  %v2770 = vadd.f32 0.0, %v2769
  %v2771 = vpop.f32.mrb[0].mxu0
  %v2772 = vpop.f32.mrb[0].mxu0
  %v2773 = vadd.f32 0.0, %v2772
  %v2774 = vpop.f32.mrb[0].mxu0
  %2775 = vdwg.mxu0
  %v2776 = vadd.f32 %v2722, %v2770
  %v2777 = vadd.f32 %v2723, %v2773
  %v2778 = vld [vmem:[%s3] sm:$0xff]
  %v2779 = vld [vmem:[%s3 + $0x8] sm:$0xff]
  %2781 = vset.pattern.permute.xlu0 0
  %2782 = vperm.xlu0 %2781, %v2778
  %v2783 = vpop.permute.xlu0 %2782
  %2786 = vset.pattern.permute.xlu0 0
  %2787 = vperm.xlu0 %2786, %v2779
  %v2788 = vpop.permute.xlu0 %2787
  %v2790 = vadd.f32 %v2776, %v2783
  %v2791 = vadd.f32 %v2777, %v2788
  %v2792 = vmax.f32 %v2790, 0.0
  %v2793 = vmax.f32 %v2791, 0.0
  %v2794 = vpack.c.bf16 %v2793, %v2792
  %v2795 = vld [vmem:[%s4] sm:$0xff]
  %v2796 = vld [vmem:[%s4 + $0x8] sm:$0xff]
  %v2797 = vld [vmem:[%s4 + $0x10] sm:$0xff]
  %v2798 = vld [vmem:[%s4 + $0x18] sm:$0xff]
  %v2799 = vld [vmem:[%s4 + $0x20] sm:$0xf]
  %v2800 = vld [vmem:[%s4 + $0x24] sm:$0xff]
  %v2801 = vld [vmem:[%s4 + $0x2c] sm:$0xff]
  %v2802 = vld [vmem:[%s4 + $0x34] sm:$0xff]
  %v2803 = vld [vmem:[%s4 + $0x3c] sm:$0xff]
  %v2804 = vld [vmem:[%s4 + $0x44] sm:$0xf]
  %v2805 = vld [vmem:[%s4 + $0x48] sm:$0xff]
  %v2806 = vld [vmem:[%s4 + $0x50] sm:$0xff]
  %v2807 = vld [vmem:[%s4 + $0x58] sm:$0xff]
  %v2808 = vld [vmem:[%s4 + $0x60] sm:$0xff]
  %v2809 = vld [vmem:[%s4 + $0x68] sm:$0xf]
  %v2810 = vld [vmem:[%s4 + $0x6c] sm:$0xff]
  %v2811 = vld [vmem:[%s4 + $0x74] sm:$0xff]
  %v2812 = vld [vmem:[%s4 + $0x7c] sm:$0xff]
  %v2813 = vld [vmem:[%s4 + $0x84] sm:$0xff]
  %v2814 = vld [vmem:[%s4 + $0x8c] sm:$0xf]
  %v2815 = vld [vmem:[%s4 + $0x90] sm:$0xff]
  %v2816 = vld [vmem:[%s4 + $0x98] sm:$0xff]
  %v2817 = vld [vmem:[%s4 + $0xa0] sm:$0xff]
  %v2818 = vld [vmem:[%s4 + $0xa8] sm:$0xff]
  %v2819 = vld [vmem:[%s4 + $0xb0] sm:$0xf]
  %v2820 = vld [vmem:[%s4 + $0xb4] sm:$0xff]
  %v2821 = vld [vmem:[%s4 + $0xbc] sm:$0xff]
  %v2822 = vld [vmem:[%s4 + $0xc4] sm:$0xff]
  %v2823 = vld [vmem:[%s4 + $0xcc] sm:$0xff]
  %v2824 = vld [vmem:[%s4 + $0xd4] sm:$0xf]
  %v2825 = vld [vmem:[%s4 + $0xd8] sm:$0xff]
  %v2826 = vld [vmem:[%s4 + $0xe0] sm:$0xff]
  %v2827 = vld [vmem:[%s4 + $0xe8] sm:$0xff]
  %v2828 = vld [vmem:[%s4 + $0xf0] sm:$0xff]
  %v2829 = vld [vmem:[%s4 + $0xf8] sm:$0xf]
  %v2830 = vld [vmem:[%s4 + $0xfc] sm:$0xff]
  %v2831 = vld [vmem:[%s4 + $0x104] sm:$0xff]
  %v2832 = vld [vmem:[%s4 + $0x10c] sm:$0xff]
  %v2833 = vld [vmem:[%s4 + $0x114] sm:$0xff]
  %v2834 = vld [vmem:[%s4 + $0x11c] sm:$0xf]
  %v2835 = vld [vmem:[%s4 + $0x120] sm:$0xff]
  %v2836 = vld [vmem:[%s4 + $0x128] sm:$0xff]
  %v2837 = vld [vmem:[%s4 + $0x130] sm:$0xff]
  %v2838 = vld [vmem:[%s4 + $0x138] sm:$0xff]
  %v2839 = vld [vmem:[%s4 + $0x140] sm:$0xf]
  %v2840 = vld [vmem:[%s4 + $0x144] sm:$0xff]
  %v2841 = vld [vmem:[%s4 + $0x14c] sm:$0xff]
  %v2842 = vld [vmem:[%s4 + $0x154] sm:$0xff]
  %v2843 = vld [vmem:[%s4 + $0x15c] sm:$0xff]
  %v2844 = vld [vmem:[%s4 + $0x164] sm:$0xf]
  %v2845 = vld [vmem:[%s4 + $0x168] sm:$0xff]
  %v2846 = vld [vmem:[%s4 + $0x170] sm:$0xff]
  %v2847 = vld [vmem:[%s4 + $0x178] sm:$0xff]
  %v2848 = vld [vmem:[%s4 + $0x180] sm:$0xff]
  %v2849 = vld [vmem:[%s4 + $0x188] sm:$0xf]
  %v2850 = vld [vmem:[%s4 + $0x18c] sm:$0xff]
  %v2851 = vld [vmem:[%s4 + $0x194] sm:$0xff]
  %v2852 = vld [vmem:[%s4 + $0x19c] sm:$0xff]
  %v2853 = vld [vmem:[%s4 + $0x1a4] sm:$0xff]
  %v2854 = vld [vmem:[%s4 + $0x1ac] sm:$0xf]
  %v2855 = vld [vmem:[%s4 + $0x1b0] sm:$0xff]
  %v2856 = vld [vmem:[%s4 + $0x1b8] sm:$0xff]
  %v2857 = vld [vmem:[%s4 + $0x1c0] sm:$0xff]
  %v2858 = vld [vmem:[%s4 + $0x1c8] sm:$0xff]
  %v2859 = vld [vmem:[%s4 + $0x1d0] sm:$0xf]
  %v2860 = vld [vmem:[%s4 + $0x1d4] sm:$0xff]
  %v2861 = vld [vmem:[%s4 + $0x1dc] sm:$0xff]
  %v2862 = vld [vmem:[%s4 + $0x1e4] sm:$0xff]
  %v2863 = vld [vmem:[%s4 + $0x1ec] sm:$0xff]
  %v2864 = vld [vmem:[%s4 + $0x1f4] sm:$0xf]
  %v2865 = vld [vmem:[%s4 + $0x1f8] sm:$0xff]
  %v2866 = vld [vmem:[%s4 + $0x200] sm:$0xff]
  %v2867 = vld [vmem:[%s4 + $0x208] sm:$0xff]
  %v2868 = vld [vmem:[%s4 + $0x210] sm:$0xff]
  %v2869 = vld [vmem:[%s4 + $0x218] sm:$0xf]
  %v2870 = vld [vmem:[%s4 + $0x21c] sm:$0xff]
  %v2871 = vld [vmem:[%s4 + $0x224] sm:$0xff]
  %v2872 = vld [vmem:[%s4 + $0x22c] sm:$0xff]
  %v2873 = vld [vmem:[%s4 + $0x234] sm:$0xff]
  %v2874 = vld [vmem:[%s4 + $0x23c] sm:$0xf]
  %v2955 = vunpack.c.l.b16 %v2795
  %v2956 = vunpack.c.h.b16 %v2795
  %v2957 = vunpack.c.l.b16 %v2796
  %v2958 = vunpack.c.h.b16 %v2796
  %v2959 = vunpack.c.l.b16 %v2797
  %v2960 = vunpack.c.h.b16 %v2797
  %v2961 = vunpack.c.l.b16 %v2798
  %v2962 = vunpack.c.h.b16 %v2798
  %v2963 = vunpack.c.l.b16 %v2799
  %v2964 = vunpack.c.l.b16 %v2800
  %v2965 = vunpack.c.h.b16 %v2800
  %v2966 = vunpack.c.l.b16 %v2801
  %v2967 = vunpack.c.h.b16 %v2801
  %v2968 = vunpack.c.l.b16 %v2802
  %v2969 = vunpack.c.h.b16 %v2802
  %v2970 = vunpack.c.l.b16 %v2803
  %v2971 = vunpack.c.h.b16 %v2803
  %v2972 = vunpack.c.l.b16 %v2804
  %v2973 = vunpack.c.l.b16 %v2805
  %v2974 = vunpack.c.h.b16 %v2805
  %v2975 = vunpack.c.l.b16 %v2806
  %v2976 = vunpack.c.h.b16 %v2806
  %v2977 = vunpack.c.l.b16 %v2807
  %v2978 = vunpack.c.h.b16 %v2807
  %v2979 = vunpack.c.l.b16 %v2808
  %v2980 = vunpack.c.h.b16 %v2808
  %v2981 = vunpack.c.l.b16 %v2809
  %v2982 = vunpack.c.l.b16 %v2810
  %v2983 = vunpack.c.h.b16 %v2810
  %v2984 = vunpack.c.l.b16 %v2811
  %v2985 = vunpack.c.h.b16 %v2811
  %v2986 = vunpack.c.l.b16 %v2812
  %v2987 = vunpack.c.h.b16 %v2812
  %v2988 = vunpack.c.l.b16 %v2813
  %v2989 = vunpack.c.h.b16 %v2813
  %v2990 = vunpack.c.l.b16 %v2814
  %v2991 = vunpack.c.l.b16 %v2815
  %v2992 = vunpack.c.h.b16 %v2815
  %v2993 = vunpack.c.l.b16 %v2816
  %v2994 = vunpack.c.h.b16 %v2816
  %v2995 = vunpack.c.l.b16 %v2817
  %v2996 = vunpack.c.h.b16 %v2817
  %v2997 = vunpack.c.l.b16 %v2818
  %v2998 = vunpack.c.h.b16 %v2818
  %v2999 = vunpack.c.l.b16 %v2819
  %v3000 = vunpack.c.l.b16 %v2820
  %v3001 = vunpack.c.h.b16 %v2820
  %v3002 = vunpack.c.l.b16 %v2821
  %v3003 = vunpack.c.h.b16 %v2821
  %v3004 = vunpack.c.l.b16 %v2822
  %v3005 = vunpack.c.h.b16 %v2822
  %v3006 = vunpack.c.l.b16 %v2823
  %v3007 = vunpack.c.h.b16 %v2823
  %v3008 = vunpack.c.l.b16 %v2824
  %v3009 = vunpack.c.l.b16 %v2825
  %v3010 = vunpack.c.h.b16 %v2825
  %v3011 = vunpack.c.l.b16 %v2826
  %v3012 = vunpack.c.h.b16 %v2826
  %v3013 = vunpack.c.l.b16 %v2827
  %v3014 = vunpack.c.h.b16 %v2827
  %v3015 = vunpack.c.l.b16 %v2828
  %v3016 = vunpack.c.h.b16 %v2828
  %v3017 = vunpack.c.l.b16 %v2829
  %v3018 = vunpack.c.l.b16 %v2830
  %v3019 = vunpack.c.h.b16 %v2830
  %v3020 = vunpack.c.l.b16 %v2831
  %v3021 = vunpack.c.h.b16 %v2831
  %v3022 = vunpack.c.l.b16 %v2832
  %v3023 = vunpack.c.h.b16 %v2832
  %v3024 = vunpack.c.l.b16 %v2833
  %v3025 = vunpack.c.h.b16 %v2833
  %v3026 = vunpack.c.l.b16 %v2834
  %v3027 = vunpack.c.l.b16 %v2835
  %v3028 = vunpack.c.h.b16 %v2835
  %v3029 = vunpack.c.l.b16 %v2836
  %v3030 = vunpack.c.h.b16 %v2836
  %v3031 = vunpack.c.l.b16 %v2837
  %v3032 = vunpack.c.h.b16 %v2837
  %v3033 = vunpack.c.l.b16 %v2838
  %v3034 = vunpack.c.h.b16 %v2838
  %v3035 = vunpack.c.l.b16 %v2839
  %v3036 = vunpack.c.l.b16 %v2840
  %v3037 = vunpack.c.h.b16 %v2840
  %v3038 = vunpack.c.l.b16 %v2841
  %v3039 = vunpack.c.h.b16 %v2841
  %v3040 = vunpack.c.l.b16 %v2842
  %v3041 = vunpack.c.h.b16 %v2842
  %v3042 = vunpack.c.l.b16 %v2843
  %v3043 = vunpack.c.h.b16 %v2843
  %v3044 = vunpack.c.l.b16 %v2844
  %v3045 = vunpack.c.l.b16 %v2845
  %v3046 = vunpack.c.h.b16 %v2845
  %v3047 = vunpack.c.l.b16 %v2846
  %v3048 = vunpack.c.h.b16 %v2846
  %v3049 = vunpack.c.l.b16 %v2847
  %v3050 = vunpack.c.h.b16 %v2847
  %v3051 = vunpack.c.l.b16 %v2848
  %v3052 = vunpack.c.h.b16 %v2848
  %v3053 = vunpack.c.l.b16 %v2849
  %v3054 = vunpack.c.l.b16 %v2850
  %v3055 = vunpack.c.h.b16 %v2850
  %v3056 = vunpack.c.l.b16 %v2851
  %v3057 = vunpack.c.h.b16 %v2851
  %v3058 = vunpack.c.l.b16 %v2852
  %v3059 = vunpack.c.h.b16 %v2852
  %v3060 = vunpack.c.l.b16 %v2853
  %v3061 = vunpack.c.h.b16 %v2853
  %v3062 = vunpack.c.l.b16 %v2854
  %v3063 = vunpack.c.l.b16 %v2855
  %v3064 = vunpack.c.h.b16 %v2855
  %v3065 = vunpack.c.l.b16 %v2856
  %v3066 = vunpack.c.h.b16 %v2856
  %v3067 = vunpack.c.l.b16 %v2857
  %v3068 = vunpack.c.h.b16 %v2857
  %v3069 = vunpack.c.l.b16 %v2858
  %v3070 = vunpack.c.h.b16 %v2858
  %v3071 = vunpack.c.l.b16 %v2859
  %v3072 = vunpack.c.l.b16 %v2860
  %v3073 = vunpack.c.h.b16 %v2860
  %v3074 = vunpack.c.l.b16 %v2861
  %v3075 = vunpack.c.h.b16 %v2861
  %v3076 = vunpack.c.l.b16 %v2862
  %v3077 = vunpack.c.h.b16 %v2862
  %v3078 = vunpack.c.l.b16 %v2863
  %v3079 = vunpack.c.h.b16 %v2863
  %v3080 = vunpack.c.l.b16 %v2864
  %v3081 = vunpack.c.l.b16 %v2865
  %v3082 = vunpack.c.h.b16 %v2865
  %v3083 = vunpack.c.l.b16 %v2866
  %v3084 = vunpack.c.h.b16 %v2866
  %v3085 = vunpack.c.l.b16 %v2867
  %v3086 = vunpack.c.h.b16 %v2867
  %v3087 = vunpack.c.l.b16 %v2868
  %v3088 = vunpack.c.h.b16 %v2868
  %v3089 = vunpack.c.l.b16 %v2869
  %v3090 = vunpack.c.l.b16 %v2870
  %v3091 = vunpack.c.h.b16 %v2870
  %v3092 = vunpack.c.l.b16 %v2871
  %v3093 = vunpack.c.h.b16 %v2871
  %v3094 = vunpack.c.l.b16 %v2872
  %v3095 = vunpack.c.h.b16 %v2872
  %v3096 = vunpack.c.l.b16 %v2873
  %v3097 = vunpack.c.h.b16 %v2873
  %v3098 = vunpack.c.l.b16 %v2874
  %v3099 = vpack.c.b16 %v2964, %v2955
  %v3100 = vpack.c.b16 %v2965, %v2956
  %v3101 = vpack.c.b16 %v2966, %v2957
  %v3102 = vpack.c.b16 %v2967, %v2958
  %v3103 = vpack.c.b16 %v2968, %v2959
  %v3104 = vpack.c.b16 %v2969, %v2960
  %v3105 = vpack.c.b16 %v2970, %v2961
  %v3106 = vpack.c.b16 %v2971, %v2962
  %v3107 = vpack.c.b16 %v2972, %v2963
  %v3108 = vpack.c.b16 %v2982, %v2973
  %v3109 = vpack.c.b16 %v2983, %v2974
  %v3110 = vpack.c.b16 %v2984, %v2975
  %v3111 = vpack.c.b16 %v2985, %v2976
  %v3112 = vpack.c.b16 %v2986, %v2977
  %v3113 = vpack.c.b16 %v2987, %v2978
  %v3114 = vpack.c.b16 %v2988, %v2979
  %v3115 = vpack.c.b16 %v2989, %v2980
  %v3116 = vpack.c.b16 %v2990, %v2981
  %v3117 = vpack.c.b16 %v3000, %v2991
  %v3118 = vpack.c.b16 %v3001, %v2992
  %v3119 = vpack.c.b16 %v3002, %v2993
  %v3120 = vpack.c.b16 %v3003, %v2994
  %v3121 = vpack.c.b16 %v3004, %v2995
  %v3122 = vpack.c.b16 %v3005, %v2996
  %v3123 = vpack.c.b16 %v3006, %v2997
  %v3124 = vpack.c.b16 %v3007, %v2998
  %v3125 = vpack.c.b16 %v3008, %v2999
  %v3126 = vpack.c.b16 %v3018, %v3009
  %v3127 = vpack.c.b16 %v3019, %v3010
  %v3128 = vpack.c.b16 %v3020, %v3011
  %v3129 = vpack.c.b16 %v3021, %v3012
  %v3130 = vpack.c.b16 %v3022, %v3013
  %v3131 = vpack.c.b16 %v3023, %v3014
  %v3132 = vpack.c.b16 %v3024, %v3015
  %v3133 = vpack.c.b16 %v3025, %v3016
  %v3134 = vpack.c.b16 %v3026, %v3017
  %v3135 = vpack.c.b16 %v3036, %v3027
  %v3136 = vpack.c.b16 %v3037, %v3028
  %v3137 = vpack.c.b16 %v3038, %v3029
  %v3138 = vpack.c.b16 %v3039, %v3030
  %v3139 = vpack.c.b16 %v3040, %v3031
  %v3140 = vpack.c.b16 %v3041, %v3032
  %v3141 = vpack.c.b16 %v3042, %v3033
  %v3142 = vpack.c.b16 %v3043, %v3034
  %v3143 = vpack.c.b16 %v3044, %v3035
  %v3144 = vpack.c.b16 %v3054, %v3045
  %v3145 = vpack.c.b16 %v3055, %v3046
  %v3146 = vpack.c.b16 %v3056, %v3047
  %v3147 = vpack.c.b16 %v3057, %v3048
  %v3148 = vpack.c.b16 %v3058, %v3049
  %v3149 = vpack.c.b16 %v3059, %v3050
  %v3150 = vpack.c.b16 %v3060, %v3051
  %v3151 = vpack.c.b16 %v3061, %v3052
  %v3152 = vpack.c.b16 %v3062, %v3053
  %v3153 = vpack.c.b16 %v3072, %v3063
  %v3154 = vpack.c.b16 %v3073, %v3064
  %v3155 = vpack.c.b16 %v3074, %v3065
  %v3156 = vpack.c.b16 %v3075, %v3066
  %v3157 = vpack.c.b16 %v3076, %v3067
  %v3158 = vpack.c.b16 %v3077, %v3068
  %v3159 = vpack.c.b16 %v3078, %v3069
  %v3160 = vpack.c.b16 %v3079, %v3070
  %v3161 = vpack.c.b16 %v3080, %v3071
  %v3162 = vpack.c.b16 %v3090, %v3081
  %v3163 = vpack.c.b16 %v3091, %v3082
  %v3164 = vpack.c.b16 %v3092, %v3083
  %v3165 = vpack.c.b16 %v3093, %v3084
  %v3166 = vpack.c.b16 %v3094, %v3085
  %v3167 = vpack.c.b16 %v3095, %v3086
  %v3168 = vpack.c.b16 %v3096, %v3087
  %v3169 = vpack.c.b16 %v3097, %v3088
  %v3170 = vpack.c.b16 %v3098, %v3089
  %3243 = vmatprep.subr.bf16.mxu0 %v3100
  %3244 = vmatpush1.bf16.msra.mxu0 %v3099
  %3245 = vmatprep.subr.bf16.mxu0 %v3109
  %3246 = vmatpush1.bf16.msra.mxu0 %v3108
  %3247 = vmatprep.subr.bf16.mxu0 %v3118
  %3248 = vmatpush1.bf16.msra.mxu0 %v3117
  %3249 = vmatprep.subr.bf16.mxu0 %v3127
  %3250 = vmatpush1.bf16.msra.mxu0 %v3126
  %3251 = vmatprep.subr.bf16.mxu0 %v3136
  %3252 = vmatpush1.bf16.msra.mxu0 %v3135
  %3253 = vmatprep.subr.bf16.mxu0 %v3145
  %3254 = vmatpush1.bf16.msra.mxu0 %v3144
  %3255 = vmatprep.subr.bf16.mxu0 %v3154
  %3256 = vmatpush1.bf16.msra.mxu0 %v3153
  %3257 = vmatprep.subr.bf16.mxu0 %v3163
  %3258 = vmatpush1.bf16.msra.mxu0 %v3162
  %3259 = vmatprep.subr.bf16.mxu0 0
  %3260 = vmatpush1.bf16.msra.mxu0 0
  %3261 = vmatprep.subr.bf16.mxu0 0
  %3262 = vmatpush1.bf16.msra.mxu0 0
  %3263 = vmatprep.subr.bf16.mxu0 0
  %3264 = vmatpush1.bf16.msra.mxu0 0
  %3265 = vmatprep.subr.bf16.mxu0 0
  %3266 = vmatpush1.bf16.msra.mxu0 0
  %3267 = vmatprep.subr.bf16.mxu0 0
  %3268 = vmatpush1.bf16.msra.mxu0 0
  %3269 = vmatprep.subr.bf16.mxu0 0
  %3270 = vmatpush1.bf16.msra.mxu0 0
  %3271 = vmatprep.subr.bf16.mxu0 0
  %3272 = vmatpush1.bf16.msra.mxu0 0
  %3273 = vmatprep.subr.bf16.mxu0 0
  %3274 = vmatpush1.bf16.msra.mxu0 0
  %3275 = vmatprep.mubr.bf16.mxu0 0
  %3276 = vmatmul.mubr.bf16.gmra.mrb[0].mxu0 %v2794
  %v3277 = vpop.f32.mrb[0].mxu0
  %v3278 = vadd.f32 0.0, %v3277
  %v3279 = vpop.f32.mrb[0].mxu0
  %v3280 = vadd.f32 0.0, %v3279
  %v3281 = vpop.f32.mrb[0].mxu0
  %v3282 = vadd.f32 0.0, %v3281
  %v3283 = vpop.f32.mrb[0].mxu0
  %v3284 = vadd.f32 0.0, %v3283
  %3285 = vdwg.mxu0
  %3286 = vmatprep.subr.bf16.mxu0 %v3102
  %3287 = vmatpush1.bf16.msra.mxu0 %v3101
  %3288 = vmatprep.subr.bf16.mxu0 %v3111
  %3289 = vmatpush1.bf16.msra.mxu0 %v3110
  %3290 = vmatprep.subr.bf16.mxu0 %v3120
  %3291 = vmatpush1.bf16.msra.mxu0 %v3119
  %3292 = vmatprep.subr.bf16.mxu0 %v3129
  %3293 = vmatpush1.bf16.msra.mxu0 %v3128
  %3294 = vmatprep.subr.bf16.mxu0 %v3138
  %3295 = vmatpush1.bf16.msra.mxu0 %v3137
  %3296 = vmatprep.subr.bf16.mxu0 %v3147
  %3297 = vmatpush1.bf16.msra.mxu0 %v3146
  %3298 = vmatprep.subr.bf16.mxu0 %v3156
  %3299 = vmatpush1.bf16.msra.mxu0 %v3155
  %3300 = vmatprep.subr.bf16.mxu0 %v3165
  %3301 = vmatpush1.bf16.msra.mxu0 %v3164
  %3302 = vmatprep.subr.bf16.mxu0 0
  %3303 = vmatpush1.bf16.msra.mxu0 0
  %3304 = vmatprep.subr.bf16.mxu0 0
  %3305 = vmatpush1.bf16.msra.mxu0 0
  %3306 = vmatprep.subr.bf16.mxu0 0
  %3307 = vmatpush1.bf16.msra.mxu0 0
  %3308 = vmatprep.subr.bf16.mxu0 0
  %3309 = vmatpush1.bf16.msra.mxu0 0
  %3310 = vmatprep.subr.bf16.mxu0 0
  %3311 = vmatpush1.bf16.msra.mxu0 0
  %3312 = vmatprep.subr.bf16.mxu0 0
  %3313 = vmatpush1.bf16.msra.mxu0 0
  %3314 = vmatprep.subr.bf16.mxu0 0
  %3315 = vmatpush1.bf16.msra.mxu0 0
  %3316 = vmatprep.subr.bf16.mxu0 0
  %3317 = vmatpush1.bf16.msra.mxu0 0
  %3318 = vmatprep.mubr.bf16.mxu0 0
  %3319 = vmatmul.mubr.bf16.gmra.mrb[0].mxu0 %v2794
  %v3320 = vpop.f32.mrb[0].mxu0
  %v3321 = vadd.f32 0.0, %v3320
  %v3322 = vpop.f32.mrb[0].mxu0
  %v3323 = vadd.f32 0.0, %v3322
  %v3324 = vpop.f32.mrb[0].mxu0
  %v3325 = vadd.f32 0.0, %v3324
  %v3326 = vpop.f32.mrb[0].mxu0
  %v3327 = vadd.f32 0.0, %v3326
  %3328 = vdwg.mxu0
  %3329 = vmatprep.subr.bf16.mxu0 %v3104
  %3330 = vmatpush1.bf16.msra.mxu0 %v3103
  %3331 = vmatprep.subr.bf16.mxu0 %v3113
  %3332 = vmatpush1.bf16.msra.mxu0 %v3112
  %3333 = vmatprep.subr.bf16.mxu0 %v3122
  %3334 = vmatpush1.bf16.msra.mxu0 %v3121
  %3335 = vmatprep.subr.bf16.mxu0 %v3131
  %3336 = vmatpush1.bf16.msra.mxu0 %v3130
  %3337 = vmatprep.subr.bf16.mxu0 %v3140
  %3338 = vmatpush1.bf16.msra.mxu0 %v3139
  %3339 = vmatprep.subr.bf16.mxu0 %v3149
  %3340 = vmatpush1.bf16.msra.mxu0 %v3148
  %3341 = vmatprep.subr.bf16.mxu0 %v3158
  %3342 = vmatpush1.bf16.msra.mxu0 %v3157
  %3343 = vmatprep.subr.bf16.mxu0 %v3167
  %3344 = vmatpush1.bf16.msra.mxu0 %v3166
  %3345 = vmatprep.subr.bf16.mxu0 0
  %3346 = vmatpush1.bf16.msra.mxu0 0
  %3347 = vmatprep.subr.bf16.mxu0 0
  %3348 = vmatpush1.bf16.msra.mxu0 0
  %3349 = vmatprep.subr.bf16.mxu0 0
  %3350 = vmatpush1.bf16.msra.mxu0 0
  %3351 = vmatprep.subr.bf16.mxu0 0
  %3352 = vmatpush1.bf16.msra.mxu0 0
  %3353 = vmatprep.subr.bf16.mxu0 0
  %3354 = vmatpush1.bf16.msra.mxu0 0
  %3355 = vmatprep.subr.bf16.mxu0 0
  %3356 = vmatpush1.bf16.msra.mxu0 0
  %3357 = vmatprep.subr.bf16.mxu0 0
  %3358 = vmatpush1.bf16.msra.mxu0 0
  %3359 = vmatprep.subr.bf16.mxu0 0
  %3360 = vmatpush1.bf16.msra.mxu0 0
  %3361 = vmatprep.mubr.bf16.mxu0 0
  %3362 = vmatmul.mubr.bf16.gmra.mrb[0].mxu0 %v2794
  %v3363 = vpop.f32.mrb[0].mxu0
  %v3364 = vadd.f32 0.0, %v3363
  %v3365 = vpop.f32.mrb[0].mxu0
  %v3366 = vadd.f32 0.0, %v3365
  %v3367 = vpop.f32.mrb[0].mxu0
  %v3368 = vadd.f32 0.0, %v3367
  %v3369 = vpop.f32.mrb[0].mxu0
  %v3370 = vadd.f32 0.0, %v3369
  %3371 = vdwg.mxu0
  %3372 = vmatprep.subr.bf16.mxu0 %v3106
  %3373 = vmatpush1.bf16.msra.mxu0 %v3105
  %3374 = vmatprep.subr.bf16.mxu0 %v3115
  %3375 = vmatpush1.bf16.msra.mxu0 %v3114
  %3376 = vmatprep.subr.bf16.mxu0 %v3124
  %3377 = vmatpush1.bf16.msra.mxu0 %v3123
  %3378 = vmatprep.subr.bf16.mxu0 %v3133
  %3379 = vmatpush1.bf16.msra.mxu0 %v3132
  %3380 = vmatprep.subr.bf16.mxu0 %v3142
  %3381 = vmatpush1.bf16.msra.mxu0 %v3141
  %3382 = vmatprep.subr.bf16.mxu0 %v3151
  %3383 = vmatpush1.bf16.msra.mxu0 %v3150
  %3384 = vmatprep.subr.bf16.mxu0 %v3160
  %3385 = vmatpush1.bf16.msra.mxu0 %v3159
  %3386 = vmatprep.subr.bf16.mxu0 %v3169
  %3387 = vmatpush1.bf16.msra.mxu0 %v3168
  %3388 = vmatprep.subr.bf16.mxu0 0
  %3389 = vmatpush1.bf16.msra.mxu0 0
  %3390 = vmatprep.subr.bf16.mxu0 0
  %3391 = vmatpush1.bf16.msra.mxu0 0
  %3392 = vmatprep.subr.bf16.mxu0 0
  %3393 = vmatpush1.bf16.msra.mxu0 0
  %3394 = vmatprep.subr.bf16.mxu0 0
  %3395 = vmatpush1.bf16.msra.mxu0 0
  %3396 = vmatprep.subr.bf16.mxu0 0
  %3397 = vmatpush1.bf16.msra.mxu0 0
  %3398 = vmatprep.subr.bf16.mxu0 0
  %3399 = vmatpush1.bf16.msra.mxu0 0
  %3400 = vmatprep.subr.bf16.mxu0 0
  %3401 = vmatpush1.bf16.msra.mxu0 0
  %3402 = vmatprep.subr.bf16.mxu0 0
  %3403 = vmatpush1.bf16.msra.mxu0 0
  %3404 = vmatprep.mubr.bf16.mxu0 0
  %3405 = vmatmul.mubr.bf16.gmra.mrb[0].mxu0 %v2794
  %v3406 = vpop.f32.mrb[0].mxu0
  %v3407 = vadd.f32 0.0, %v3406
  %v3408 = vpop.f32.mrb[0].mxu0
  %v3409 = vadd.f32 0.0, %v3408
  %v3410 = vpop.f32.mrb[0].mxu0
  %v3411 = vadd.f32 0.0, %v3410
  %v3412 = vpop.f32.mrb[0].mxu0
  %v3413 = vadd.f32 0.0, %v3412
  %3414 = vdwg.mxu0
  %3415 = vmatprep.subr.bf16.mxu0 0
  %3416 = vmatpush1.bf16.msra.mxu0 %v3107
  %3417 = vmatprep.subr.bf16.mxu0 0
  %3418 = vmatpush1.bf16.msra.mxu0 %v3116
  %3419 = vmatprep.subr.bf16.mxu0 0
  %3420 = vmatpush1.bf16.msra.mxu0 %v3125
  %3421 = vmatprep.subr.bf16.mxu0 0
  %3422 = vmatpush1.bf16.msra.mxu0 %v3134
  %3423 = vmatprep.subr.bf16.mxu0 0
  %3424 = vmatpush1.bf16.msra.mxu0 %v3143
  %3425 = vmatprep.subr.bf16.mxu0 0
  %3426 = vmatpush1.bf16.msra.mxu0 %v3152
  %3427 = vmatprep.subr.bf16.mxu0 0
  %3428 = vmatpush1.bf16.msra.mxu0 %v3161
  %3429 = vmatprep.subr.bf16.mxu0 0
  %3430 = vmatpush1.bf16.msra.mxu0 %v3170
  %3431 = vmatprep.subr.bf16.mxu0 0
  %3432 = vmatpush1.bf16.msra.mxu0 0
  %3433 = vmatprep.subr.bf16.mxu0 0
  %3434 = vmatpush1.bf16.msra.mxu0 0
  %3435 = vmatprep.subr.bf16.mxu0 0
  %3436 = vmatpush1.bf16.msra.mxu0 0
  %3437 = vmatprep.subr.bf16.mxu0 0
  %3438 = vmatpush1.bf16.msra.mxu0 0
  %3439 = vmatprep.subr.bf16.mxu0 0
  %3440 = vmatpush1.bf16.msra.mxu0 0
  %3441 = vmatprep.subr.bf16.mxu0 0
  %3442 = vmatpush1.bf16.msra.mxu0 0
  %3443 = vmatprep.subr.bf16.mxu0 0
  %3444 = vmatpush1.bf16.msra.mxu0 0
  %3445 = vmatprep.subr.bf16.mxu0 0
  %3446 = vmatpush1.bf16.msra.mxu0 0
  %3447 = vmatprep.mubr.bf16.mxu0 0
  %3448 = vmatmul.mubr.bf16.gmra.mrb[0].mxu0 %v2794
  %v3449 = vpop.f32.mrb[0].mxu0
  %v3450 = vadd.f32 0.0, %v3449
  %v3451 = vpop.f32.mrb[0].mxu0
  %v3452 = vpop.f32.mrb[0].mxu0
  %v3453 = vadd.f32 0.0, %v3452
  %v3454 = vpop.f32.mrb[0].mxu0
  %3455 = vdwg.mxu0
  %v3456 = vpack.c.bf16 %v3282, %v3278
  %v3457 = vpack.c.bf16 %v3284, %v3280
  %v3458 = vpack.c.bf16 %v3325, %v3321
  %v3459 = vpack.c.bf16 %v3327, %v3323
  %v3460 = vpack.c.bf16 %v3368, %v3364
  %v3461 = vpack.c.bf16 %v3370, %v3366
  %v3462 = vpack.c.bf16 %v3411, %v3407
  %v3463 = vpack.c.bf16 %v3413, %v3409
  %v3464 = vpack.c.bf16 %v3453, %v3450
  %v3465 = vld [vmem:[%s5] sm:$0xf]
  %v3466 = vld [vmem:[%s5 + $0x4] sm:$0xf]
  %s3467 = scalar_lea.vmem %s5, 8
  %v3468 = vld [vmem:[%s3467] sm:$0xf]
  %v3469 = vld [vmem:[%s3467 + $0x4] sm:$0xf]
  %v3472 = vunpack.c.l.b16 %v3468
  %v3473 = vunpack.c.l.b16 %v3469
  %v3474 = vpack.c.b16 %v3473, %v3472
  %v3476 = vsel %vm2306, %v3474, 0
  %3478 = vmatprep.subr.bf16.mxu0 0
  %3479 = vmatpush1.bf16.msra.mxu0 %v3457
  %3480 = vmatprep.subr.bf16.mxu0 0
  %3481 = vmatpush1.bf16.msra.mxu0 0
  %3482 = vmatprep.subr.bf16.mxu0 0
  %3483 = vmatpush1.bf16.msra.mxu0 0
  %3484 = vmatprep.subr.bf16.mxu0 0
  %3485 = vmatpush1.bf16.msra.mxu0 0
  %3486 = vmatprep.subr.bf16.mxu0 0
  %3487 = vmatpush1.bf16.msra.mxu0 0
  %3488 = vmatprep.subr.bf16.mxu0 0
  %3489 = vmatpush1.bf16.msra.mxu0 0
  %3490 = vmatprep.subr.bf16.mxu0 0
  %3491 = vmatpush1.bf16.msra.mxu0 0
  %3492 = vmatprep.subr.bf16.mxu0 0
  %3493 = vmatpush1.bf16.msra.mxu0 0
  %3494 = vmatprep.subr.bf16.mxu0 0
  %3495 = vmatpush1.bf16.msra.mxu0 0
  %3496 = vmatprep.subr.bf16.mxu0 0
  %3497 = vmatpush1.bf16.msra.mxu0 0
  %3498 = vmatprep.subr.bf16.mxu0 0
  %3499 = vmatpush1.bf16.msra.mxu0 0
  %3500 = vmatprep.subr.bf16.mxu0 0
  %3501 = vmatpush1.bf16.msra.mxu0 0
  %3502 = vmatprep.subr.bf16.mxu0 0
  %3503 = vmatpush1.bf16.msra.mxu0 0
  %3504 = vmatprep.subr.bf16.mxu0 0
  %3505 = vmatpush1.bf16.msra.mxu0 0
  %3506 = vmatprep.subr.bf16.mxu0 0
  %3507 = vmatpush1.bf16.msra.mxu0 0
  %3508 = vmatprep.subr.bf16.mxu0 0
  %3509 = vmatpush1.bf16.msra.mxu0 0
  %3510 = vmatprep.mubr.bf16.mxu0 0
  %3511 = vmatmul.mubr.bf16.gmra.mrb[0].mxu0 %v3476
  %v3512 = vpop.f32.mrb[0].mxu0
  %v3513 = vadd.f32 0.0, %v3512
  %v3514 = vpop.f32.mrb[0].mxu0
  %v3515 = vpop.f32.mrb[0].mxu0
  %v3516 = vadd.f32 0.0, %v3515
  %v3517 = vpop.f32.mrb[0].mxu0
  %3518 = vdwg.mxu0
  %v3521 = vunpack.c.l.b16 %v3465
  %v3522 = vunpack.c.l.b16 %v3466
  %v3523 = vpack.c.b16 %v3522, %v3521
  %v3525 = vsel %vm2306, %v3523, 0
  %3527 = vmatprep.subr.bf16.mxu0 0
  %3528 = vmatpush1.bf16.msra.mxu0 %v3456
  %3529 = vmatprep.subr.bf16.mxu0 0
  %3530 = vmatpush1.bf16.msra.mxu0 0
  %3531 = vmatprep.subr.bf16.mxu0 0
  %3532 = vmatpush1.bf16.msra.mxu0 0
  %3533 = vmatprep.subr.bf16.mxu0 0
  %3534 = vmatpush1.bf16.msra.mxu0 0
  %3535 = vmatprep.subr.bf16.mxu0 0
  %3536 = vmatpush1.bf16.msra.mxu0 0
  %3537 = vmatprep.subr.bf16.mxu0 0
  %3538 = vmatpush1.bf16.msra.mxu0 0
  %3539 = vmatprep.subr.bf16.mxu0 0
  %3540 = vmatpush1.bf16.msra.mxu0 0
  %3541 = vmatprep.subr.bf16.mxu0 0
  %3542 = vmatpush1.bf16.msra.mxu0 0
  %3543 = vmatprep.subr.bf16.mxu0 0
  %3544 = vmatpush1.bf16.msra.mxu0 0
  %3545 = vmatprep.subr.bf16.mxu0 0
  %3546 = vmatpush1.bf16.msra.mxu0 0
  %3547 = vmatprep.subr.bf16.mxu0 0
  %3548 = vmatpush1.bf16.msra.mxu0 0
  %3549 = vmatprep.subr.bf16.mxu0 0
  %3550 = vmatpush1.bf16.msra.mxu0 0
  %3551 = vmatprep.subr.bf16.mxu0 0
  %3552 = vmatpush1.bf16.msra.mxu0 0
  %3553 = vmatprep.subr.bf16.mxu0 0
  %3554 = vmatpush1.bf16.msra.mxu0 0
  %3555 = vmatprep.subr.bf16.mxu0 0
  %3556 = vmatpush1.bf16.msra.mxu0 0
  %3557 = vmatprep.subr.bf16.mxu0 0
  %3558 = vmatpush1.bf16.msra.mxu0 0
  %3559 = vmatprep.mubr.bf16.mxu0 0
  %3560 = vmatmul.mubr.bf16.gmra.mrb[0].mxu0 %v3525
  %v3561 = vpop.f32.mrb[0].mxu0
  %v3562 = vadd.f32 %v3513, %v3561
  %v3563 = vpop.f32.mrb[0].mxu0
  %v3564 = vpop.f32.mrb[0].mxu0
  %v3565 = vadd.f32 %v3516, %v3564
  %v3566 = vpop.f32.mrb[0].mxu0
  %3567 = vdwg.mxu0
  %s3568 = scalar_lea.vmem %s5, 16
  %v3569 = vld [vmem:[%s3568] sm:$0xf]
  %v3570 = vld [vmem:[%s3568 + $0x4] sm:$0xf]
  %v3573 = vunpack.c.l.b16 %v3569
  %v3574 = vunpack.c.l.b16 %v3570
  %v3575 = vpack.c.b16 %v3574, %v3573
  %v3577 = vsel %vm2306, %v3575, 0
  %3579 = vmatprep.subr.bf16.mxu0 0
  %3580 = vmatpush1.bf16.msra.mxu0 %v3458
  %3581 = vmatprep.subr.bf16.mxu0 0
  %3582 = vmatpush1.bf16.msra.mxu0 0
  %3583 = vmatprep.subr.bf16.mxu0 0
  %3584 = vmatpush1.bf16.msra.mxu0 0
  %3585 = vmatprep.subr.bf16.mxu0 0
  %3586 = vmatpush1.bf16.msra.mxu0 0
  %3587 = vmatprep.subr.bf16.mxu0 0
  %3588 = vmatpush1.bf16.msra.mxu0 0
  %3589 = vmatprep.subr.bf16.mxu0 0
  %3590 = vmatpush1.bf16.msra.mxu0 0
  %3591 = vmatprep.subr.bf16.mxu0 0
  %3592 = vmatpush1.bf16.msra.mxu0 0
  %3593 = vmatprep.subr.bf16.mxu0 0
  %3594 = vmatpush1.bf16.msra.mxu0 0
  %3595 = vmatprep.subr.bf16.mxu0 0
  %3596 = vmatpush1.bf16.msra.mxu0 0
  %3597 = vmatprep.subr.bf16.mxu0 0
  %3598 = vmatpush1.bf16.msra.mxu0 0
  %3599 = vmatprep.subr.bf16.mxu0 0
  %3600 = vmatpush1.bf16.msra.mxu0 0
  %3601 = vmatprep.subr.bf16.mxu0 0
  %3602 = vmatpush1.bf16.msra.mxu0 0
  %3603 = vmatprep.subr.bf16.mxu0 0
  %3604 = vmatpush1.bf16.msra.mxu0 0
  %3605 = vmatprep.subr.bf16.mxu0 0
  %3606 = vmatpush1.bf16.msra.mxu0 0
  %3607 = vmatprep.subr.bf16.mxu0 0
  %3608 = vmatpush1.bf16.msra.mxu0 0
  %3609 = vmatprep.subr.bf16.mxu0 0
  %3610 = vmatpush1.bf16.msra.mxu0 0
  %3611 = vmatprep.mubr.bf16.mxu0 0
  %3612 = vmatmul.mubr.bf16.gmra.mrb[0].mxu0 %v3577
  %v3613 = vpop.f32.mrb[0].mxu0
  %v3614 = vadd.f32 0.0, %v3613
  %v3615 = vpop.f32.mrb[0].mxu0
  %v3616 = vpop.f32.mrb[0].mxu0
  %v3617 = vadd.f32 0.0, %v3616
  %v3618 = vpop.f32.mrb[0].mxu0
  %3619 = vdwg.mxu0
  %v3620 = vadd.f32 %v3562, %v3614
  %v3621 = vadd.f32 %v3565, %v3617
  %s3622 = scalar_lea.vmem %s5, 24
  %v3623 = vld [vmem:[%s3622] sm:$0xf]
  %v3624 = vld [vmem:[%s3622 + $0x4] sm:$0xf]
  %v3627 = vunpack.c.l.b16 %v3623
  %v3628 = vunpack.c.l.b16 %v3624
  %v3629 = vpack.c.b16 %v3628, %v3627
  %v3631 = vsel %vm2306, %v3629, 0
  %3633 = vmatprep.subr.bf16.mxu0 0
  %3634 = vmatpush1.bf16.msra.mxu0 %v3459
  %3635 = vmatprep.subr.bf16.mxu0 0
  %3636 = vmatpush1.bf16.msra.mxu0 0
  %3637 = vmatprep.subr.bf16.mxu0 0
  %3638 = vmatpush1.bf16.msra.mxu0 0
  %3639 = vmatprep.subr.bf16.mxu0 0
  %3640 = vmatpush1.bf16.msra.mxu0 0
  %3641 = vmatprep.subr.bf16.mxu0 0
  %3642 = vmatpush1.bf16.msra.mxu0 0
  %3643 = vmatprep.subr.bf16.mxu0 0
  %3644 = vmatpush1.bf16.msra.mxu0 0
  %3645 = vmatprep.subr.bf16.mxu0 0
  %3646 = vmatpush1.bf16.msra.mxu0 0
  %3647 = vmatprep.subr.bf16.mxu0 0
  %3648 = vmatpush1.bf16.msra.mxu0 0
  %3649 = vmatprep.subr.bf16.mxu0 0
  %3650 = vmatpush1.bf16.msra.mxu0 0
  %3651 = vmatprep.subr.bf16.mxu0 0
  %3652 = vmatpush1.bf16.msra.mxu0 0
  %3653 = vmatprep.subr.bf16.mxu0 0
  %3654 = vmatpush1.bf16.msra.mxu0 0
  %3655 = vmatprep.subr.bf16.mxu0 0
  %3656 = vmatpush1.bf16.msra.mxu0 0
  %3657 = vmatprep.subr.bf16.mxu0 0
  %3658 = vmatpush1.bf16.msra.mxu0 0
  %3659 = vmatprep.subr.bf16.mxu0 0
  %3660 = vmatpush1.bf16.msra.mxu0 0
  %3661 = vmatprep.subr.bf16.mxu0 0
  %3662 = vmatpush1.bf16.msra.mxu0 0
  %3663 = vmatprep.subr.bf16.mxu0 0
  %3664 = vmatpush1.bf16.msra.mxu0 0
  %3665 = vmatprep.mubr.bf16.mxu0 0
  %3666 = vmatmul.mubr.bf16.gmra.mrb[0].mxu0 %v3631
  %v3667 = vpop.f32.mrb[0].mxu0
  %v3668 = vadd.f32 0.0, %v3667
  %v3669 = vpop.f32.mrb[0].mxu0
  %v3670 = vpop.f32.mrb[0].mxu0
  %v3671 = vadd.f32 0.0, %v3670
  %v3672 = vpop.f32.mrb[0].mxu0
  %3673 = vdwg.mxu0
  %v3674 = vadd.f32 %v3620, %v3668
  %v3675 = vadd.f32 %v3621, %v3671
  %s3676 = scalar_lea.vmem %s5, 32
  %v3677 = vld [vmem:[%s3676] sm:$0xf]
  %v3678 = vld [vmem:[%s3676 + $0x4] sm:$0xf]
  %v3681 = vunpack.c.l.b16 %v3677
  %v3682 = vunpack.c.l.b16 %v3678
  %v3683 = vpack.c.b16 %v3682, %v3681
  %v3685 = vsel %vm2306, %v3683, 0
  %3687 = vmatprep.subr.bf16.mxu0 0
  %3688 = vmatpush1.bf16.msra.mxu0 %v3460
  %3689 = vmatprep.subr.bf16.mxu0 0
  %3690 = vmatpush1.bf16.msra.mxu0 0
  %3691 = vmatprep.subr.bf16.mxu0 0
  %3692 = vmatpush1.bf16.msra.mxu0 0
  %3693 = vmatprep.subr.bf16.mxu0 0
  %3694 = vmatpush1.bf16.msra.mxu0 0
  %3695 = vmatprep.subr.bf16.mxu0 0
  %3696 = vmatpush1.bf16.msra.mxu0 0
  %3697 = vmatprep.subr.bf16.mxu0 0
  %3698 = vmatpush1.bf16.msra.mxu0 0
  %3699 = vmatprep.subr.bf16.mxu0 0
  %3700 = vmatpush1.bf16.msra.mxu0 0
  %3701 = vmatprep.subr.bf16.mxu0 0
  %3702 = vmatpush1.bf16.msra.mxu0 0
  %3703 = vmatprep.subr.bf16.mxu0 0
  %3704 = vmatpush1.bf16.msra.mxu0 0
  %3705 = vmatprep.subr.bf16.mxu0 0
  %3706 = vmatpush1.bf16.msra.mxu0 0
  %3707 = vmatprep.subr.bf16.mxu0 0
  %3708 = vmatpush1.bf16.msra.mxu0 0
  %3709 = vmatprep.subr.bf16.mxu0 0
  %3710 = vmatpush1.bf16.msra.mxu0 0
  %3711 = vmatprep.subr.bf16.mxu0 0
  %3712 = vmatpush1.bf16.msra.mxu0 0
  %3713 = vmatprep.subr.bf16.mxu0 0
  %3714 = vmatpush1.bf16.msra.mxu0 0
  %3715 = vmatprep.subr.bf16.mxu0 0
  %3716 = vmatpush1.bf16.msra.mxu0 0
  %3717 = vmatprep.subr.bf16.mxu0 0
  %3718 = vmatpush1.bf16.msra.mxu0 0
  %3719 = vmatprep.mubr.bf16.mxu0 0
  %3720 = vmatmul.mubr.bf16.gmra.mrb[0].mxu0 %v3685
  %v3721 = vpop.f32.mrb[0].mxu0
  %v3722 = vadd.f32 0.0, %v3721
  %v3723 = vpop.f32.mrb[0].mxu0
  %v3724 = vpop.f32.mrb[0].mxu0
  %v3725 = vadd.f32 0.0, %v3724
  %v3726 = vpop.f32.mrb[0].mxu0
  %3727 = vdwg.mxu0
  %v3728 = vadd.f32 %v3674, %v3722
  %v3729 = vadd.f32 %v3675, %v3725
  %s3730 = scalar_lea.vmem %s5, 40
  %v3731 = vld [vmem:[%s3730] sm:$0xf]
  %v3732 = vld [vmem:[%s3730 + $0x4] sm:$0xf]
  %v3735 = vunpack.c.l.b16 %v3731
  %v3736 = vunpack.c.l.b16 %v3732
  %v3737 = vpack.c.b16 %v3736, %v3735
  %v3739 = vsel %vm2306, %v3737, 0
  %3741 = vmatprep.subr.bf16.mxu0 0
  %3742 = vmatpush1.bf16.msra.mxu0 %v3461
  %3743 = vmatprep.subr.bf16.mxu0 0
  %3744 = vmatpush1.bf16.msra.mxu0 0
  %3745 = vmatprep.subr.bf16.mxu0 0
  %3746 = vmatpush1.bf16.msra.mxu0 0
  %3747 = vmatprep.subr.bf16.mxu0 0
  %3748 = vmatpush1.bf16.msra.mxu0 0
  %3749 = vmatprep.subr.bf16.mxu0 0
  %3750 = vmatpush1.bf16.msra.mxu0 0
  %3751 = vmatprep.subr.bf16.mxu0 0
  %3752 = vmatpush1.bf16.msra.mxu0 0
  %3753 = vmatprep.subr.bf16.mxu0 0
  %3754 = vmatpush1.bf16.msra.mxu0 0
  %3755 = vmatprep.subr.bf16.mxu0 0
  %3756 = vmatpush1.bf16.msra.mxu0 0
  %3757 = vmatprep.subr.bf16.mxu0 0
  %3758 = vmatpush1.bf16.msra.mxu0 0
  %3759 = vmatprep.subr.bf16.mxu0 0
  %3760 = vmatpush1.bf16.msra.mxu0 0
  %3761 = vmatprep.subr.bf16.mxu0 0
  %3762 = vmatpush1.bf16.msra.mxu0 0
  %3763 = vmatprep.subr.bf16.mxu0 0
  %3764 = vmatpush1.bf16.msra.mxu0 0
  %3765 = vmatprep.subr.bf16.mxu0 0
  %3766 = vmatpush1.bf16.msra.mxu0 0
  %3767 = vmatprep.subr.bf16.mxu0 0
  %3768 = vmatpush1.bf16.msra.mxu0 0
  %3769 = vmatprep.subr.bf16.mxu0 0
  %3770 = vmatpush1.bf16.msra.mxu0 0
  %3771 = vmatprep.subr.bf16.mxu0 0
  %3772 = vmatpush1.bf16.msra.mxu0 0
  %3773 = vmatprep.mubr.bf16.mxu0 0
  %3774 = vmatmul.mubr.bf16.gmra.mrb[0].mxu0 %v3739
  %v3775 = vpop.f32.mrb[0].mxu0
  %v3776 = vadd.f32 0.0, %v3775
  %v3777 = vpop.f32.mrb[0].mxu0
  %v3778 = vpop.f32.mrb[0].mxu0
  %v3779 = vadd.f32 0.0, %v3778
  %v3780 = vpop.f32.mrb[0].mxu0
  %3781 = vdwg.mxu0
  %v3782 = vadd.f32 %v3728, %v3776
  %v3783 = vadd.f32 %v3729, %v3779
  %s3784 = scalar_lea.vmem %s5, 48
  %v3785 = vld [vmem:[%s3784] sm:$0xf]
  %v3786 = vld [vmem:[%s3784 + $0x4] sm:$0xf]
  %v3789 = vunpack.c.l.b16 %v3785
  %v3790 = vunpack.c.l.b16 %v3786
  %v3791 = vpack.c.b16 %v3790, %v3789
  %v3793 = vsel %vm2306, %v3791, 0
  %3795 = vmatprep.subr.bf16.mxu0 0
  %3796 = vmatpush1.bf16.msra.mxu0 %v3462
  %3797 = vmatprep.subr.bf16.mxu0 0
  %3798 = vmatpush1.bf16.msra.mxu0 0
  %3799 = vmatprep.subr.bf16.mxu0 0
  %3800 = vmatpush1.bf16.msra.mxu0 0
  %3801 = vmatprep.subr.bf16.mxu0 0
  %3802 = vmatpush1.bf16.msra.mxu0 0
  %3803 = vmatprep.subr.bf16.mxu0 0
  %3804 = vmatpush1.bf16.msra.mxu0 0
  %3805 = vmatprep.subr.bf16.mxu0 0
  %3806 = vmatpush1.bf16.msra.mxu0 0
  %3807 = vmatprep.subr.bf16.mxu0 0
  %3808 = vmatpush1.bf16.msra.mxu0 0
  %3809 = vmatprep.subr.bf16.mxu0 0
  %3810 = vmatpush1.bf16.msra.mxu0 0
  %3811 = vmatprep.subr.bf16.mxu0 0
  %3812 = vmatpush1.bf16.msra.mxu0 0
  %3813 = vmatprep.subr.bf16.mxu0 0
  %3814 = vmatpush1.bf16.msra.mxu0 0
  %3815 = vmatprep.subr.bf16.mxu0 0
  %3816 = vmatpush1.bf16.msra.mxu0 0
  %3817 = vmatprep.subr.bf16.mxu0 0
  %3818 = vmatpush1.bf16.msra.mxu0 0
  %3819 = vmatprep.subr.bf16.mxu0 0
  %3820 = vmatpush1.bf16.msra.mxu0 0
  %3821 = vmatprep.subr.bf16.mxu0 0
  %3822 = vmatpush1.bf16.msra.mxu0 0
  %3823 = vmatprep.subr.bf16.mxu0 0
  %3824 = vmatpush1.bf16.msra.mxu0 0
  %3825 = vmatprep.subr.bf16.mxu0 0
  %3826 = vmatpush1.bf16.msra.mxu0 0
  %3827 = vmatprep.mubr.bf16.mxu0 0
  %3828 = vmatmul.mubr.bf16.gmra.mrb[0].mxu0 %v3793
  %v3829 = vpop.f32.mrb[0].mxu0
  %v3830 = vadd.f32 0.0, %v3829
  %v3831 = vpop.f32.mrb[0].mxu0
  %v3832 = vpop.f32.mrb[0].mxu0
  %v3833 = vadd.f32 0.0, %v3832
  %v3834 = vpop.f32.mrb[0].mxu0
  %3835 = vdwg.mxu0
  %v3836 = vadd.f32 %v3782, %v3830
  %v3837 = vadd.f32 %v3783, %v3833
  %s3838 = scalar_lea.vmem %s5, 56
  %v3839 = vld [vmem:[%s3838] sm:$0xf]
  %v3840 = vld [vmem:[%s3838 + $0x4] sm:$0xf]
  %v3843 = vunpack.c.l.b16 %v3839
  %v3844 = vunpack.c.l.b16 %v3840
  %v3845 = vpack.c.b16 %v3844, %v3843
  %v3847 = vsel %vm2306, %v3845, 0
  %3849 = vmatprep.subr.bf16.mxu0 0
  %3850 = vmatpush1.bf16.msra.mxu0 %v3463
  %3851 = vmatprep.subr.bf16.mxu0 0
  %3852 = vmatpush1.bf16.msra.mxu0 0
  %3853 = vmatprep.subr.bf16.mxu0 0
  %3854 = vmatpush1.bf16.msra.mxu0 0
  %3855 = vmatprep.subr.bf16.mxu0 0
  %3856 = vmatpush1.bf16.msra.mxu0 0
  %3857 = vmatprep.subr.bf16.mxu0 0
  %3858 = vmatpush1.bf16.msra.mxu0 0
  %3859 = vmatprep.subr.bf16.mxu0 0
  %3860 = vmatpush1.bf16.msra.mxu0 0
  %3861 = vmatprep.subr.bf16.mxu0 0
  %3862 = vmatpush1.bf16.msra.mxu0 0
  %3863 = vmatprep.subr.bf16.mxu0 0
  %3864 = vmatpush1.bf16.msra.mxu0 0
  %3865 = vmatprep.subr.bf16.mxu0 0
  %3866 = vmatpush1.bf16.msra.mxu0 0
  %3867 = vmatprep.subr.bf16.mxu0 0
  %3868 = vmatpush1.bf16.msra.mxu0 0
  %3869 = vmatprep.subr.bf16.mxu0 0
  %3870 = vmatpush1.bf16.msra.mxu0 0
  %3871 = vmatprep.subr.bf16.mxu0 0
  %3872 = vmatpush1.bf16.msra.mxu0 0
  %3873 = vmatprep.subr.bf16.mxu0 0
  %3874 = vmatpush1.bf16.msra.mxu0 0
  %3875 = vmatprep.subr.bf16.mxu0 0
  %3876 = vmatpush1.bf16.msra.mxu0 0
  %3877 = vmatprep.subr.bf16.mxu0 0
  %3878 = vmatpush1.bf16.msra.mxu0 0
  %3879 = vmatprep.subr.bf16.mxu0 0
  %3880 = vmatpush1.bf16.msra.mxu0 0
  %3881 = vmatprep.mubr.bf16.mxu0 0
  %3882 = vmatmul.mubr.bf16.gmra.mrb[0].mxu0 %v3847
  %v3883 = vpop.f32.mrb[0].mxu0
  %v3884 = vadd.f32 0.0, %v3883
  %v3885 = vpop.f32.mrb[0].mxu0
  %v3886 = vpop.f32.mrb[0].mxu0
  %v3887 = vadd.f32 0.0, %v3886
  %v3888 = vpop.f32.mrb[0].mxu0
  %3889 = vdwg.mxu0
  %v3890 = vadd.f32 %v3836, %v3884
  %v3891 = vadd.f32 %v3837, %v3887
  %s3892 = scalar_lea.vmem %s5, 64
  %v3893 = vld [vmem:[%s3892] sm:$0xf]
  %v3894 = vld [vmem:[%s3892 + $0x4] sm:$0xf]
  %v3897 = vunpack.c.l.b16 %v3893
  %v3898 = vunpack.c.l.b16 %v3894
  %v3899 = vpack.c.b16 %v3898, %v3897
  %v3901 = vsel %vm2306, %v3899, 0
  %3903 = vmatprep.subr.bf16.mxu0 0
  %3904 = vmatpush1.bf16.msra.mxu0 %v3464
  %3905 = vmatprep.subr.bf16.mxu0 0
  %3906 = vmatpush1.bf16.msra.mxu0 0
  %3907 = vmatprep.subr.bf16.mxu0 0
  %3908 = vmatpush1.bf16.msra.mxu0 0
  %3909 = vmatprep.subr.bf16.mxu0 0
  %3910 = vmatpush1.bf16.msra.mxu0 0
  %3911 = vmatprep.subr.bf16.mxu0 0
  %3912 = vmatpush1.bf16.msra.mxu0 0
  %3913 = vmatprep.subr.bf16.mxu0 0
  %3914 = vmatpush1.bf16.msra.mxu0 0
  %3915 = vmatprep.subr.bf16.mxu0 0
  %3916 = vmatpush1.bf16.msra.mxu0 0
  %3917 = vmatprep.subr.bf16.mxu0 0
  %3918 = vmatpush1.bf16.msra.mxu0 0
  %3919 = vmatprep.subr.bf16.mxu0 0
  %3920 = vmatpush1.bf16.msra.mxu0 0
  %3921 = vmatprep.subr.bf16.mxu0 0
  %3922 = vmatpush1.bf16.msra.mxu0 0
  %3923 = vmatprep.subr.bf16.mxu0 0
  %3924 = vmatpush1.bf16.msra.mxu0 0
  %3925 = vmatprep.subr.bf16.mxu0 0
  %3926 = vmatpush1.bf16.msra.mxu0 0
  %3927 = vmatprep.subr.bf16.mxu0 0
  %3928 = vmatpush1.bf16.msra.mxu0 0
  %3929 = vmatprep.subr.bf16.mxu0 0
  %3930 = vmatpush1.bf16.msra.mxu0 0
  %3931 = vmatprep.subr.bf16.mxu0 0
  %3932 = vmatpush1.bf16.msra.mxu0 0
  %3933 = vmatprep.subr.bf16.mxu0 0
  %3934 = vmatpush1.bf16.msra.mxu0 0
  %3935 = vmatprep.mubr.bf16.mxu0 0
  %3936 = vmatmul.mubr.bf16.gmra.mrb[0].mxu0 %v3901
  %v3937 = vpop.f32.mrb[0].mxu0
  %v3938 = vadd.f32 0.0, %v3937
  %v3939 = vpop.f32.mrb[0].mxu0
  %v3940 = vpop.f32.mrb[0].mxu0
  %v3941 = vadd.f32 0.0, %v3940
  %v3942 = vpop.f32.mrb[0].mxu0
  %3943 = vdwg.mxu0
  %v3944 = vadd.f32 %v3890, %v3938
  %v3945 = vadd.f32 %v3891, %v3941
  %v3946 = vld [vmem:[%s6] sm:$0xff]
  %v3947 = vld [vmem:[%s6 + $0x8] sm:$0xff]
  %3949 = vset.pattern.permute.xlu0 0
  %3950 = vperm.xlu0 %3949, %v3946
  %v3951 = vpop.permute.xlu0 %3950
  %3954 = vset.pattern.permute.xlu0 0
  %3955 = vperm.xlu0 %3954, %v3947
  %v3956 = vpop.permute.xlu0 %3955
  %v3958 = vadd.f32 %v3944, %v3951
  %v3959 = vadd.f32 %v3945, %v3956
  %v3960 = vmax.f32 %v3958, 0.0
  %v3961 = vmax.f32 %v3959, 0.0
  %v3962 = vpack.c.bf16 %v3961, %v3960
  %v3963 = vld [vmem:[%s7] sm:$0xff]
  %v3964 = vld [vmem:[%s7 + $0x8] sm:$0xff]
  %v3965 = vld [vmem:[%s7 + $0x10] sm:$0xff]
  %v3966 = vld [vmem:[%s7 + $0x18] sm:$0xff]
  %v3967 = vld [vmem:[%s7 + $0x20] sm:$0xf]
  %v3968 = vld [vmem:[%s7 + $0x24] sm:$0xff]
  %v3969 = vld [vmem:[%s7 + $0x2c] sm:$0xff]
  %v3970 = vld [vmem:[%s7 + $0x34] sm:$0xff]
  %v3971 = vld [vmem:[%s7 + $0x3c] sm:$0xff]
  %v3972 = vld [vmem:[%s7 + $0x44] sm:$0xf]
  %v3973 = vld [vmem:[%s7 + $0x48] sm:$0xff]
  %v3974 = vld [vmem:[%s7 + $0x50] sm:$0xff]
  %v3975 = vld [vmem:[%s7 + $0x58] sm:$0xff]
  %v3976 = vld [vmem:[%s7 + $0x60] sm:$0xff]
  %v3977 = vld [vmem:[%s7 + $0x68] sm:$0xf]
  %v3978 = vld [vmem:[%s7 + $0x6c] sm:$0xff]
  %v3979 = vld [vmem:[%s7 + $0x74] sm:$0xff]
  %v3980 = vld [vmem:[%s7 + $0x7c] sm:$0xff]
  %v3981 = vld [vmem:[%s7 + $0x84] sm:$0xff]
  %v3982 = vld [vmem:[%s7 + $0x8c] sm:$0xf]
  %v3983 = vld [vmem:[%s7 + $0x90] sm:$0xff]
  %v3984 = vld [vmem:[%s7 + $0x98] sm:$0xff]
  %v3985 = vld [vmem:[%s7 + $0xa0] sm:$0xff]
  %v3986 = vld [vmem:[%s7 + $0xa8] sm:$0xff]
  %v3987 = vld [vmem:[%s7 + $0xb0] sm:$0xf]
  %v3988 = vld [vmem:[%s7 + $0xb4] sm:$0xff]
  %v3989 = vld [vmem:[%s7 + $0xbc] sm:$0xff]
  %v3990 = vld [vmem:[%s7 + $0xc4] sm:$0xff]
  %v3991 = vld [vmem:[%s7 + $0xcc] sm:$0xff]
  %v3992 = vld [vmem:[%s7 + $0xd4] sm:$0xf]
  %v3993 = vld [vmem:[%s7 + $0xd8] sm:$0xff]
  %v3994 = vld [vmem:[%s7 + $0xe0] sm:$0xff]
  %v3995 = vld [vmem:[%s7 + $0xe8] sm:$0xff]
  %v3996 = vld [vmem:[%s7 + $0xf0] sm:$0xff]
  %v3997 = vld [vmem:[%s7 + $0xf8] sm:$0xf]
  %v3998 = vld [vmem:[%s7 + $0xfc] sm:$0xff]
  %v3999 = vld [vmem:[%s7 + $0x104] sm:$0xff]
  %v4000 = vld [vmem:[%s7 + $0x10c] sm:$0xff]
  %v4001 = vld [vmem:[%s7 + $0x114] sm:$0xff]
  %v4002 = vld [vmem:[%s7 + $0x11c] sm:$0xf]
  %v4003 = vld [vmem:[%s7 + $0x120] sm:$0xff]
  %v4004 = vld [vmem:[%s7 + $0x128] sm:$0xff]
  %v4005 = vld [vmem:[%s7 + $0x130] sm:$0xff]
  %v4006 = vld [vmem:[%s7 + $0x138] sm:$0xff]
  %v4007 = vld [vmem:[%s7 + $0x140] sm:$0xf]
  %v4008 = vld [vmem:[%s7 + $0x144] sm:$0xff]
  %v4009 = vld [vmem:[%s7 + $0x14c] sm:$0xff]
  %v4010 = vld [vmem:[%s7 + $0x154] sm:$0xff]
  %v4011 = vld [vmem:[%s7 + $0x15c] sm:$0xff]
  %v4012 = vld [vmem:[%s7 + $0x164] sm:$0xf]
  %v4013 = vld [vmem:[%s7 + $0x168] sm:$0xff]
  %v4014 = vld [vmem:[%s7 + $0x170] sm:$0xff]
  %v4015 = vld [vmem:[%s7 + $0x178] sm:$0xff]
  %v4016 = vld [vmem:[%s7 + $0x180] sm:$0xff]
  %v4017 = vld [vmem:[%s7 + $0x188] sm:$0xf]
  %v4018 = vld [vmem:[%s7 + $0x18c] sm:$0xff]
  %v4019 = vld [vmem:[%s7 + $0x194] sm:$0xff]
  %v4020 = vld [vmem:[%s7 + $0x19c] sm:$0xff]
  %v4021 = vld [vmem:[%s7 + $0x1a4] sm:$0xff]
  %v4022 = vld [vmem:[%s7 + $0x1ac] sm:$0xf]
  %v4023 = vld [vmem:[%s7 + $0x1b0] sm:$0xff]
  %v4024 = vld [vmem:[%s7 + $0x1b8] sm:$0xff]
  %v4025 = vld [vmem:[%s7 + $0x1c0] sm:$0xff]
  %v4026 = vld [vmem:[%s7 + $0x1c8] sm:$0xff]
  %v4027 = vld [vmem:[%s7 + $0x1d0] sm:$0xf]
  %v4028 = vld [vmem:[%s7 + $0x1d4] sm:$0xff]
  %v4029 = vld [vmem:[%s7 + $0x1dc] sm:$0xff]
  %v4030 = vld [vmem:[%s7 + $0x1e4] sm:$0xff]
  %v4031 = vld [vmem:[%s7 + $0x1ec] sm:$0xff]
  %v4032 = vld [vmem:[%s7 + $0x1f4] sm:$0xf]
  %v4033 = vld [vmem:[%s7 + $0x1f8] sm:$0xff]
  %v4034 = vld [vmem:[%s7 + $0x200] sm:$0xff]
  %v4035 = vld [vmem:[%s7 + $0x208] sm:$0xff]
  %v4036 = vld [vmem:[%s7 + $0x210] sm:$0xff]
  %v4037 = vld [vmem:[%s7 + $0x218] sm:$0xf]
  %v4038 = vld [vmem:[%s7 + $0x21c] sm:$0xff]
  %v4039 = vld [vmem:[%s7 + $0x224] sm:$0xff]
  %v4040 = vld [vmem:[%s7 + $0x22c] sm:$0xff]
  %v4041 = vld [vmem:[%s7 + $0x234] sm:$0xff]
  %v4042 = vld [vmem:[%s7 + $0x23c] sm:$0xf]
  %v4123 = vunpack.c.l.b16 %v3963
  %v4124 = vunpack.c.h.b16 %v3963
  %v4125 = vunpack.c.l.b16 %v3964
  %v4126 = vunpack.c.h.b16 %v3964
  %v4127 = vunpack.c.l.b16 %v3965
  %v4128 = vunpack.c.h.b16 %v3965
  %v4129 = vunpack.c.l.b16 %v3966
  %v4130 = vunpack.c.h.b16 %v3966
  %v4131 = vunpack.c.l.b16 %v3967
  %v4132 = vunpack.c.l.b16 %v3968
  %v4133 = vunpack.c.h.b16 %v3968
  %v4134 = vunpack.c.l.b16 %v3969
  %v4135 = vunpack.c.h.b16 %v3969
  %v4136 = vunpack.c.l.b16 %v3970
  %v4137 = vunpack.c.h.b16 %v3970
  %v4138 = vunpack.c.l.b16 %v3971
  %v4139 = vunpack.c.h.b16 %v3971
  %v4140 = vunpack.c.l.b16 %v3972
  %v4141 = vunpack.c.l.b16 %v3973
  %v4142 = vunpack.c.h.b16 %v3973
  %v4143 = vunpack.c.l.b16 %v3974
  %v4144 = vunpack.c.h.b16 %v3974
  %v4145 = vunpack.c.l.b16 %v3975
  %v4146 = vunpack.c.h.b16 %v3975
  %v4147 = vunpack.c.l.b16 %v3976
  %v4148 = vunpack.c.h.b16 %v3976
  %v4149 = vunpack.c.l.b16 %v3977
  %v4150 = vunpack.c.l.b16 %v3978
  %v4151 = vunpack.c.h.b16 %v3978
  %v4152 = vunpack.c.l.b16 %v3979
  %v4153 = vunpack.c.h.b16 %v3979
  %v4154 = vunpack.c.l.b16 %v3980
  %v4155 = vunpack.c.h.b16 %v3980
  %v4156 = vunpack.c.l.b16 %v3981
  %v4157 = vunpack.c.h.b16 %v3981
  %v4158 = vunpack.c.l.b16 %v3982
  %v4159 = vunpack.c.l.b16 %v3983
  %v4160 = vunpack.c.h.b16 %v3983
  %v4161 = vunpack.c.l.b16 %v3984
  %v4162 = vunpack.c.h.b16 %v3984
  %v4163 = vunpack.c.l.b16 %v3985
  %v4164 = vunpack.c.h.b16 %v3985
  %v4165 = vunpack.c.l.b16 %v3986
  %v4166 = vunpack.c.h.b16 %v3986
  %v4167 = vunpack.c.l.b16 %v3987
  %v4168 = vunpack.c.l.b16 %v3988
  %v4169 = vunpack.c.h.b16 %v3988
  %v4170 = vunpack.c.l.b16 %v3989
  %v4171 = vunpack.c.h.b16 %v3989
  %v4172 = vunpack.c.l.b16 %v3990
  %v4173 = vunpack.c.h.b16 %v3990
  %v4174 = vunpack.c.l.b16 %v3991
  %v4175 = vunpack.c.h.b16 %v3991
  %v4176 = vunpack.c.l.b16 %v3992
  %v4177 = vunpack.c.l.b16 %v3993
  %v4178 = vunpack.c.h.b16 %v3993
  %v4179 = vunpack.c.l.b16 %v3994
  %v4180 = vunpack.c.h.b16 %v3994
  %v4181 = vunpack.c.l.b16 %v3995
  %v4182 = vunpack.c.h.b16 %v3995
  %v4183 = vunpack.c.l.b16 %v3996
  %v4184 = vunpack.c.h.b16 %v3996
  %v4185 = vunpack.c.l.b16 %v3997
  %v4186 = vunpack.c.l.b16 %v3998
  %v4187 = vunpack.c.h.b16 %v3998
  %v4188 = vunpack.c.l.b16 %v3999
  %v4189 = vunpack.c.h.b16 %v3999
  %v4190 = vunpack.c.l.b16 %v4000
  %v4191 = vunpack.c.h.b16 %v4000
  %v4192 = vunpack.c.l.b16 %v4001
  %v4193 = vunpack.c.h.b16 %v4001
  %v4194 = vunpack.c.l.b16 %v4002
  %v4195 = vunpack.c.l.b16 %v4003
  %v4196 = vunpack.c.h.b16 %v4003
  %v4197 = vunpack.c.l.b16 %v4004
  %v4198 = vunpack.c.h.b16 %v4004
  %v4199 = vunpack.c.l.b16 %v4005
  %v4200 = vunpack.c.h.b16 %v4005
  %v4201 = vunpack.c.l.b16 %v4006
  %v4202 = vunpack.c.h.b16 %v4006
  %v4203 = vunpack.c.l.b16 %v4007
  %v4204 = vunpack.c.l.b16 %v4008
  %v4205 = vunpack.c.h.b16 %v4008
  %v4206 = vunpack.c.l.b16 %v4009
  %v4207 = vunpack.c.h.b16 %v4009
  %v4208 = vunpack.c.l.b16 %v4010
  %v4209 = vunpack.c.h.b16 %v4010
  %v4210 = vunpack.c.l.b16 %v4011
  %v4211 = vunpack.c.h.b16 %v4011
  %v4212 = vunpack.c.l.b16 %v4012
  %v4213 = vunpack.c.l.b16 %v4013
  %v4214 = vunpack.c.h.b16 %v4013
  %v4215 = vunpack.c.l.b16 %v4014
  %v4216 = vunpack.c.h.b16 %v4014
  %v4217 = vunpack.c.l.b16 %v4015
  %v4218 = vunpack.c.h.b16 %v4015
  %v4219 = vunpack.c.l.b16 %v4016
  %v4220 = vunpack.c.h.b16 %v4016
  %v4221 = vunpack.c.l.b16 %v4017
  %v4222 = vunpack.c.l.b16 %v4018
  %v4223 = vunpack.c.h.b16 %v4018
  %v4224 = vunpack.c.l.b16 %v4019
  %v4225 = vunpack.c.h.b16 %v4019
  %v4226 = vunpack.c.l.b16 %v4020
  %v4227 = vunpack.c.h.b16 %v4020
  %v4228 = vunpack.c.l.b16 %v4021
  %v4229 = vunpack.c.h.b16 %v4021
  %v4230 = vunpack.c.l.b16 %v4022
  %v4231 = vunpack.c.l.b16 %v4023
  %v4232 = vunpack.c.h.b16 %v4023
  %v4233 = vunpack.c.l.b16 %v4024
  %v4234 = vunpack.c.h.b16 %v4024
  %v4235 = vunpack.c.l.b16 %v4025
  %v4236 = vunpack.c.h.b16 %v4025
  %v4237 = vunpack.c.l.b16 %v4026
  %v4238 = vunpack.c.h.b16 %v4026
  %v4239 = vunpack.c.l.b16 %v4027
  %v4240 = vunpack.c.l.b16 %v4028
  %v4241 = vunpack.c.h.b16 %v4028
  %v4242 = vunpack.c.l.b16 %v4029
  %v4243 = vunpack.c.h.b16 %v4029
  %v4244 = vunpack.c.l.b16 %v4030
  %v4245 = vunpack.c.h.b16 %v4030
  %v4246 = vunpack.c.l.b16 %v4031
  %v4247 = vunpack.c.h.b16 %v4031
  %v4248 = vunpack.c.l.b16 %v4032
  %v4249 = vunpack.c.l.b16 %v4033
  %v4250 = vunpack.c.h.b16 %v4033
  %v4251 = vunpack.c.l.b16 %v4034
  %v4252 = vunpack.c.h.b16 %v4034
  %v4253 = vunpack.c.l.b16 %v4035
  %v4254 = vunpack.c.h.b16 %v4035
  %v4255 = vunpack.c.l.b16 %v4036
  %v4256 = vunpack.c.h.b16 %v4036
  %v4257 = vunpack.c.l.b16 %v4037
  %v4258 = vunpack.c.l.b16 %v4038
  %v4259 = vunpack.c.h.b16 %v4038
  %v4260 = vunpack.c.l.b16 %v4039
  %v4261 = vunpack.c.h.b16 %v4039
  %v4262 = vunpack.c.l.b16 %v4040
  %v4263 = vunpack.c.h.b16 %v4040
  %v4264 = vunpack.c.l.b16 %v4041
  %v4265 = vunpack.c.h.b16 %v4041
  %v4266 = vunpack.c.l.b16 %v4042
  %v4267 = vpack.c.b16 %v4132, %v4123
  %v4268 = vpack.c.b16 %v4133, %v4124
  %v4269 = vpack.c.b16 %v4134, %v4125
  %v4270 = vpack.c.b16 %v4135, %v4126
  %v4271 = vpack.c.b16 %v4136, %v4127
  %v4272 = vpack.c.b16 %v4137, %v4128
  %v4273 = vpack.c.b16 %v4138, %v4129
  %v4274 = vpack.c.b16 %v4139, %v4130
  %v4275 = vpack.c.b16 %v4140, %v4131
  %v4276 = vpack.c.b16 %v4150, %v4141
  %v4277 = vpack.c.b16 %v4151, %v4142
  %v4278 = vpack.c.b16 %v4152, %v4143
  %v4279 = vpack.c.b16 %v4153, %v4144
  %v4280 = vpack.c.b16 %v4154, %v4145
  %v4281 = vpack.c.b16 %v4155, %v4146
  %v4282 = vpack.c.b16 %v4156, %v4147
  %v4283 = vpack.c.b16 %v4157, %v4148
  %v4284 = vpack.c.b16 %v4158, %v4149
  %v4285 = vpack.c.b16 %v4168, %v4159
  %v4286 = vpack.c.b16 %v4169, %v4160
  %v4287 = vpack.c.b16 %v4170, %v4161
  %v4288 = vpack.c.b16 %v4171, %v4162
  %v4289 = vpack.c.b16 %v4172, %v4163
  %v4290 = vpack.c.b16 %v4173, %v4164
  %v4291 = vpack.c.b16 %v4174, %v4165
  %v4292 = vpack.c.b16 %v4175, %v4166
  %v4293 = vpack.c.b16 %v4176, %v4167
  %v4294 = vpack.c.b16 %v4186, %v4177
  %v4295 = vpack.c.b16 %v4187, %v4178
  %v4296 = vpack.c.b16 %v4188, %v4179
  %v4297 = vpack.c.b16 %v4189, %v4180
  %v4298 = vpack.c.b16 %v4190, %v4181
  %v4299 = vpack.c.b16 %v4191, %v4182
  %v4300 = vpack.c.b16 %v4192, %v4183
  %v4301 = vpack.c.b16 %v4193, %v4184
  %v4302 = vpack.c.b16 %v4194, %v4185
  %v4303 = vpack.c.b16 %v4204, %v4195
  %v4304 = vpack.c.b16 %v4205, %v4196
  %v4305 = vpack.c.b16 %v4206, %v4197
  %v4306 = vpack.c.b16 %v4207, %v4198
  %v4307 = vpack.c.b16 %v4208, %v4199
  %v4308 = vpack.c.b16 %v4209, %v4200
  %v4309 = vpack.c.b16 %v4210, %v4201
  %v4310 = vpack.c.b16 %v4211, %v4202
  %v4311 = vpack.c.b16 %v4212, %v4203
  %v4312 = vpack.c.b16 %v4222, %v4213
  %v4313 = vpack.c.b16 %v4223, %v4214
  %v4314 = vpack.c.b16 %v4224, %v4215
  %v4315 = vpack.c.b16 %v4225, %v4216
  %v4316 = vpack.c.b16 %v4226, %v4217
  %v4317 = vpack.c.b16 %v4227, %v4218
  %v4318 = vpack.c.b16 %v4228, %v4219
  %v4319 = vpack.c.b16 %v4229, %v4220
  %v4320 = vpack.c.b16 %v4230, %v4221
  %v4321 = vpack.c.b16 %v4240, %v4231
  %v4322 = vpack.c.b16 %v4241, %v4232
  %v4323 = vpack.c.b16 %v4242, %v4233
  %v4324 = vpack.c.b16 %v4243, %v4234
  %v4325 = vpack.c.b16 %v4244, %v4235
  %v4326 = vpack.c.b16 %v4245, %v4236
  %v4327 = vpack.c.b16 %v4246, %v4237
  %v4328 = vpack.c.b16 %v4247, %v4238
  %v4329 = vpack.c.b16 %v4248, %v4239
  %v4330 = vpack.c.b16 %v4258, %v4249
  %v4331 = vpack.c.b16 %v4259, %v4250
  %v4332 = vpack.c.b16 %v4260, %v4251
  %v4333 = vpack.c.b16 %v4261, %v4252
  %v4334 = vpack.c.b16 %v4262, %v4253
  %v4335 = vpack.c.b16 %v4263, %v4254
  %v4336 = vpack.c.b16 %v4264, %v4255
  %v4337 = vpack.c.b16 %v4265, %v4256
  %v4338 = vpack.c.b16 %v4266, %v4257
  %4411 = vmatprep.subr.bf16.mxu0 %v4268
  %4412 = vmatpush1.bf16.msra.mxu0 %v4267
  %4413 = vmatprep.subr.bf16.mxu0 %v4277
  %4414 = vmatpush1.bf16.msra.mxu0 %v4276
  %4415 = vmatprep.subr.bf16.mxu0 %v4286
  %4416 = vmatpush1.bf16.msra.mxu0 %v4285
  %4417 = vmatprep.subr.bf16.mxu0 %v4295
  %4418 = vmatpush1.bf16.msra.mxu0 %v4294
  %4419 = vmatprep.subr.bf16.mxu0 %v4304
  %4420 = vmatpush1.bf16.msra.mxu0 %v4303
  %4421 = vmatprep.subr.bf16.mxu0 %v4313
  %4422 = vmatpush1.bf16.msra.mxu0 %v4312
  %4423 = vmatprep.subr.bf16.mxu0 %v4322
  %4424 = vmatpush1.bf16.msra.mxu0 %v4321
  %4425 = vmatprep.subr.bf16.mxu0 %v4331
  %4426 = vmatpush1.bf16.msra.mxu0 %v4330
  %4427 = vmatprep.subr.bf16.mxu0 0
  %4428 = vmatpush1.bf16.msra.mxu0 0
  %4429 = vmatprep.subr.bf16.mxu0 0
  %4430 = vmatpush1.bf16.msra.mxu0 0
  %4431 = vmatprep.subr.bf16.mxu0 0
  %4432 = vmatpush1.bf16.msra.mxu0 0
  %4433 = vmatprep.subr.bf16.mxu0 0
  %4434 = vmatpush1.bf16.msra.mxu0 0
  %4435 = vmatprep.subr.bf16.mxu0 0
  %4436 = vmatpush1.bf16.msra.mxu0 0
  %4437 = vmatprep.subr.bf16.mxu0 0
  %4438 = vmatpush1.bf16.msra.mxu0 0
  %4439 = vmatprep.subr.bf16.mxu0 0
  %4440 = vmatpush1.bf16.msra.mxu0 0
  %4441 = vmatprep.subr.bf16.mxu0 0
  %4442 = vmatpush1.bf16.msra.mxu0 0
  %4443 = vmatprep.mubr.bf16.mxu0 0
  %4444 = vmatmul.mubr.bf16.gmra.mrb[0].mxu0 %v3962
  %v4445 = vpop.f32.mrb[0].mxu0
  %v4446 = vadd.f32 0.0, %v4445
  %v4447 = vpop.f32.mrb[0].mxu0
  %v4448 = vadd.f32 0.0, %v4447
  %v4449 = vpop.f32.mrb[0].mxu0
  %v4450 = vadd.f32 0.0, %v4449
  %v4451 = vpop.f32.mrb[0].mxu0
  %v4452 = vadd.f32 0.0, %v4451
  %4453 = vdwg.mxu0
  %4454 = vmatprep.subr.bf16.mxu0 %v4270
  %4455 = vmatpush1.bf16.msra.mxu0 %v4269
  %4456 = vmatprep.subr.bf16.mxu0 %v4279
  %4457 = vmatpush1.bf16.msra.mxu0 %v4278
  %4458 = vmatprep.subr.bf16.mxu0 %v4288
  %4459 = vmatpush1.bf16.msra.mxu0 %v4287
  %4460 = vmatprep.subr.bf16.mxu0 %v4297
  %4461 = vmatpush1.bf16.msra.mxu0 %v4296
  %4462 = vmatprep.subr.bf16.mxu0 %v4306
  %4463 = vmatpush1.bf16.msra.mxu0 %v4305
  %4464 = vmatprep.subr.bf16.mxu0 %v4315
  %4465 = vmatpush1.bf16.msra.mxu0 %v4314
  %4466 = vmatprep.subr.bf16.mxu0 %v4324
  %4467 = vmatpush1.bf16.msra.mxu0 %v4323
  %4468 = vmatprep.subr.bf16.mxu0 %v4333
  %4469 = vmatpush1.bf16.msra.mxu0 %v4332
  %4470 = vmatprep.subr.bf16.mxu0 0
  %4471 = vmatpush1.bf16.msra.mxu0 0
  %4472 = vmatprep.subr.bf16.mxu0 0
  %4473 = vmatpush1.bf16.msra.mxu0 0
  %4474 = vmatprep.subr.bf16.mxu0 0
  %4475 = vmatpush1.bf16.msra.mxu0 0
  %4476 = vmatprep.subr.bf16.mxu0 0
  %4477 = vmatpush1.bf16.msra.mxu0 0
  %4478 = vmatprep.subr.bf16.mxu0 0
  %4479 = vmatpush1.bf16.msra.mxu0 0
  %4480 = vmatprep.subr.bf16.mxu0 0
  %4481 = vmatpush1.bf16.msra.mxu0 0
  %4482 = vmatprep.subr.bf16.mxu0 0
  %4483 = vmatpush1.bf16.msra.mxu0 0
  %4484 = vmatprep.subr.bf16.mxu0 0
  %4485 = vmatpush1.bf16.msra.mxu0 0
  %4486 = vmatprep.mubr.bf16.mxu0 0
  %4487 = vmatmul.mubr.bf16.gmra.mrb[0].mxu0 %v3962
  %v4488 = vpop.f32.mrb[0].mxu0
  %v4489 = vadd.f32 0.0, %v4488
  %v4490 = vpop.f32.mrb[0].mxu0
  %v4491 = vadd.f32 0.0, %v4490
  %v4492 = vpop.f32.mrb[0].mxu0
  %v4493 = vadd.f32 0.0, %v4492
  %v4494 = vpop.f32.mrb[0].mxu0
  %v4495 = vadd.f32 0.0, %v4494
  %4496 = vdwg.mxu0
  %4497 = vmatprep.subr.bf16.mxu0 %v4272
  %4498 = vmatpush1.bf16.msra.mxu0 %v4271
  %4499 = vmatprep.subr.bf16.mxu0 %v4281
  %4500 = vmatpush1.bf16.msra.mxu0 %v4280
  %4501 = vmatprep.subr.bf16.mxu0 %v4290
  %4502 = vmatpush1.bf16.msra.mxu0 %v4289
  %4503 = vmatprep.subr.bf16.mxu0 %v4299
  %4504 = vmatpush1.bf16.msra.mxu0 %v4298
  %4505 = vmatprep.subr.bf16.mxu0 %v4308
  %4506 = vmatpush1.bf16.msra.mxu0 %v4307
  %4507 = vmatprep.subr.bf16.mxu0 %v4317
  %4508 = vmatpush1.bf16.msra.mxu0 %v4316
  %4509 = vmatprep.subr.bf16.mxu0 %v4326
  %4510 = vmatpush1.bf16.msra.mxu0 %v4325
  %4511 = vmatprep.subr.bf16.mxu0 %v4335
  %4512 = vmatpush1.bf16.msra.mxu0 %v4334
  %4513 = vmatprep.subr.bf16.mxu0 0
  %4514 = vmatpush1.bf16.msra.mxu0 0
  %4515 = vmatprep.subr.bf16.mxu0 0
  %4516 = vmatpush1.bf16.msra.mxu0 0
  %4517 = vmatprep.subr.bf16.mxu0 0
  %4518 = vmatpush1.bf16.msra.mxu0 0
  %4519 = vmatprep.subr.bf16.mxu0 0
  %4520 = vmatpush1.bf16.msra.mxu0 0
  %4521 = vmatprep.subr.bf16.mxu0 0
  %4522 = vmatpush1.bf16.msra.mxu0 0
  %4523 = vmatprep.subr.bf16.mxu0 0
  %4524 = vmatpush1.bf16.msra.mxu0 0
  %4525 = vmatprep.subr.bf16.mxu0 0
  %4526 = vmatpush1.bf16.msra.mxu0 0
  %4527 = vmatprep.subr.bf16.mxu0 0
  %4528 = vmatpush1.bf16.msra.mxu0 0
  %4529 = vmatprep.mubr.bf16.mxu0 0
  %4530 = vmatmul.mubr.bf16.gmra.mrb[0].mxu0 %v3962
  %v4531 = vpop.f32.mrb[0].mxu0
  %v4532 = vadd.f32 0.0, %v4531
  %v4533 = vpop.f32.mrb[0].mxu0
  %v4534 = vadd.f32 0.0, %v4533
  %v4535 = vpop.f32.mrb[0].mxu0
  %v4536 = vadd.f32 0.0, %v4535
  %v4537 = vpop.f32.mrb[0].mxu0
  %v4538 = vadd.f32 0.0, %v4537
  %4539 = vdwg.mxu0
  %4540 = vmatprep.subr.bf16.mxu0 %v4274
  %4541 = vmatpush1.bf16.msra.mxu0 %v4273
  %4542 = vmatprep.subr.bf16.mxu0 %v4283
  %4543 = vmatpush1.bf16.msra.mxu0 %v4282
  %4544 = vmatprep.subr.bf16.mxu0 %v4292
  %4545 = vmatpush1.bf16.msra.mxu0 %v4291
  %4546 = vmatprep.subr.bf16.mxu0 %v4301
  %4547 = vmatpush1.bf16.msra.mxu0 %v4300
  %4548 = vmatprep.subr.bf16.mxu0 %v4310
  %4549 = vmatpush1.bf16.msra.mxu0 %v4309
  %4550 = vmatprep.subr.bf16.mxu0 %v4319
  %4551 = vmatpush1.bf16.msra.mxu0 %v4318
  %4552 = vmatprep.subr.bf16.mxu0 %v4328
  %4553 = vmatpush1.bf16.msra.mxu0 %v4327
  %4554 = vmatprep.subr.bf16.mxu0 %v4337
  %4555 = vmatpush1.bf16.msra.mxu0 %v4336
  %4556 = vmatprep.subr.bf16.mxu0 0
  %4557 = vmatpush1.bf16.msra.mxu0 0
  %4558 = vmatprep.subr.bf16.mxu0 0
  %4559 = vmatpush1.bf16.msra.mxu0 0
  %4560 = vmatprep.subr.bf16.mxu0 0
  %4561 = vmatpush1.bf16.msra.mxu0 0
  %4562 = vmatprep.subr.bf16.mxu0 0
  %4563 = vmatpush1.bf16.msra.mxu0 0
  %4564 = vmatprep.subr.bf16.mxu0 0
  %4565 = vmatpush1.bf16.msra.mxu0 0
  %4566 = vmatprep.subr.bf16.mxu0 0
  %4567 = vmatpush1.bf16.msra.mxu0 0
  %4568 = vmatprep.subr.bf16.mxu0 0
  %4569 = vmatpush1.bf16.msra.mxu0 0
  %4570 = vmatprep.subr.bf16.mxu0 0
  %4571 = vmatpush1.bf16.msra.mxu0 0
  %4572 = vmatprep.mubr.bf16.mxu0 0
  %4573 = vmatmul.mubr.bf16.gmra.mrb[0].mxu0 %v3962
  %v4574 = vpop.f32.mrb[0].mxu0
  %v4575 = vadd.f32 0.0, %v4574
  %v4576 = vpop.f32.mrb[0].mxu0
  %v4577 = vadd.f32 0.0, %v4576
  %v4578 = vpop.f32.mrb[0].mxu0
  %v4579 = vadd.f32 0.0, %v4578
  %v4580 = vpop.f32.mrb[0].mxu0
  %v4581 = vadd.f32 0.0, %v4580
  %4582 = vdwg.mxu0
  %4583 = vmatprep.subr.bf16.mxu0 0
  %4584 = vmatpush1.bf16.msra.mxu0 %v4275
  %4585 = vmatprep.subr.bf16.mxu0 0
  %4586 = vmatpush1.bf16.msra.mxu0 %v4284
  %4587 = vmatprep.subr.bf16.mxu0 0
  %4588 = vmatpush1.bf16.msra.mxu0 %v4293
  %4589 = vmatprep.subr.bf16.mxu0 0
  %4590 = vmatpush1.bf16.msra.mxu0 %v4302
  %4591 = vmatprep.subr.bf16.mxu0 0
  %4592 = vmatpush1.bf16.msra.mxu0 %v4311
  %4593 = vmatprep.subr.bf16.mxu0 0
  %4594 = vmatpush1.bf16.msra.mxu0 %v4320
  %4595 = vmatprep.subr.bf16.mxu0 0
  %4596 = vmatpush1.bf16.msra.mxu0 %v4329
  %4597 = vmatprep.subr.bf16.mxu0 0
  %4598 = vmatpush1.bf16.msra.mxu0 %v4338
  %4599 = vmatprep.subr.bf16.mxu0 0
  %4600 = vmatpush1.bf16.msra.mxu0 0
  %4601 = vmatprep.subr.bf16.mxu0 0
  %4602 = vmatpush1.bf16.msra.mxu0 0
  %4603 = vmatprep.subr.bf16.mxu0 0
  %4604 = vmatpush1.bf16.msra.mxu0 0
  %4605 = vmatprep.subr.bf16.mxu0 0
  %4606 = vmatpush1.bf16.msra.mxu0 0
  %4607 = vmatprep.subr.bf16.mxu0 0
  %4608 = vmatpush1.bf16.msra.mxu0 0
  %4609 = vmatprep.subr.bf16.mxu0 0
  %4610 = vmatpush1.bf16.msra.mxu0 0
  %4611 = vmatprep.subr.bf16.mxu0 0
  %4612 = vmatpush1.bf16.msra.mxu0 0
  %4613 = vmatprep.subr.bf16.mxu0 0
  %4614 = vmatpush1.bf16.msra.mxu0 0
  %4615 = vmatprep.mubr.bf16.mxu0 0
  %4616 = vmatmul.mubr.bf16.gmra.mrb[0].mxu0 %v3962
  %v4617 = vpop.f32.mrb[0].mxu0
  %v4618 = vadd.f32 0.0, %v4617
  %v4619 = vpop.f32.mrb[0].mxu0
  %v4620 = vpop.f32.mrb[0].mxu0
  %v4621 = vadd.f32 0.0, %v4620
  %v4622 = vpop.f32.mrb[0].mxu0
  %4623 = vdwg.mxu0
  %v4624 = vpack.c.bf16 %v4450, %v4446
  %v4625 = vpack.c.bf16 %v4452, %v4448
  %v4626 = vpack.c.bf16 %v4493, %v4489
  %v4627 = vpack.c.bf16 %v4495, %v4491
  %v4628 = vpack.c.bf16 %v4536, %v4532
  %v4629 = vpack.c.bf16 %v4538, %v4534
  %v4630 = vpack.c.bf16 %v4579, %v4575
  %v4631 = vpack.c.bf16 %v4581, %v4577
  %v4632 = vpack.c.bf16 %v4621, %v4618
  %v4633 = vld [vmem:[%s8] sm:$0xf]
  %v4634 = vld [vmem:[%s8 + $0x4] sm:$0xf]
  %s4635 = scalar_lea.vmem %s8, 8
  %v4636 = vld [vmem:[%s4635] sm:$0xf]
  %v4637 = vld [vmem:[%s4635 + $0x4] sm:$0xf]
  %v4640 = vunpack.c.l.b16 %v4636
  %v4641 = vunpack.c.l.b16 %v4637
  %v4642 = vpack.c.b16 %v4641, %v4640
  %v4644 = vsel %vm2306, %v4642, 0
  %4646 = vmatprep.subr.bf16.mxu0 0
  %4647 = vmatpush1.bf16.msra.mxu0 %v4625
  %4648 = vmatprep.subr.bf16.mxu0 0
  %4649 = vmatpush1.bf16.msra.mxu0 0
  %4650 = vmatprep.subr.bf16.mxu0 0
  %4651 = vmatpush1.bf16.msra.mxu0 0
  %4652 = vmatprep.subr.bf16.mxu0 0
  %4653 = vmatpush1.bf16.msra.mxu0 0
  %4654 = vmatprep.subr.bf16.mxu0 0
  %4655 = vmatpush1.bf16.msra.mxu0 0
  %4656 = vmatprep.subr.bf16.mxu0 0
  %4657 = vmatpush1.bf16.msra.mxu0 0
  %4658 = vmatprep.subr.bf16.mxu0 0
  %4659 = vmatpush1.bf16.msra.mxu0 0
  %4660 = vmatprep.subr.bf16.mxu0 0
  %4661 = vmatpush1.bf16.msra.mxu0 0
  %4662 = vmatprep.subr.bf16.mxu0 0
  %4663 = vmatpush1.bf16.msra.mxu0 0
  %4664 = vmatprep.subr.bf16.mxu0 0
  %4665 = vmatpush1.bf16.msra.mxu0 0
  %4666 = vmatprep.subr.bf16.mxu0 0
  %4667 = vmatpush1.bf16.msra.mxu0 0
  %4668 = vmatprep.subr.bf16.mxu0 0
  %4669 = vmatpush1.bf16.msra.mxu0 0
  %4670 = vmatprep.subr.bf16.mxu0 0
  %4671 = vmatpush1.bf16.msra.mxu0 0
  %4672 = vmatprep.subr.bf16.mxu0 0
  %4673 = vmatpush1.bf16.msra.mxu0 0
  %4674 = vmatprep.subr.bf16.mxu0 0
  %4675 = vmatpush1.bf16.msra.mxu0 0
  %4676 = vmatprep.subr.bf16.mxu0 0
  %4677 = vmatpush1.bf16.msra.mxu0 0
  %4678 = vmatprep.mubr.bf16.mxu0 0
  %4679 = vmatmul.mubr.bf16.gmra.mrb[0].mxu0 %v4644
  %v4680 = vpop.f32.mrb[0].mxu0
  %v4681 = vadd.f32 0.0, %v4680
  %v4682 = vpop.f32.mrb[0].mxu0
  %v4683 = vpop.f32.mrb[0].mxu0
  %v4684 = vadd.f32 0.0, %v4683
  %v4685 = vpop.f32.mrb[0].mxu0
  %4686 = vdwg.mxu0
  %v4689 = vunpack.c.l.b16 %v4633
  %v4690 = vunpack.c.l.b16 %v4634
  %v4691 = vpack.c.b16 %v4690, %v4689
  %v4693 = vsel %vm2306, %v4691, 0
  %4695 = vmatprep.subr.bf16.mxu0 0
  %4696 = vmatpush1.bf16.msra.mxu0 %v4624
  %4697 = vmatprep.subr.bf16.mxu0 0
  %4698 = vmatpush1.bf16.msra.mxu0 0
  %4699 = vmatprep.subr.bf16.mxu0 0
  %4700 = vmatpush1.bf16.msra.mxu0 0
  %4701 = vmatprep.subr.bf16.mxu0 0
  %4702 = vmatpush1.bf16.msra.mxu0 0
  %4703 = vmatprep.subr.bf16.mxu0 0
  %4704 = vmatpush1.bf16.msra.mxu0 0
  %4705 = vmatprep.subr.bf16.mxu0 0
  %4706 = vmatpush1.bf16.msra.mxu0 0
  %4707 = vmatprep.subr.bf16.mxu0 0
  %4708 = vmatpush1.bf16.msra.mxu0 0
  %4709 = vmatprep.subr.bf16.mxu0 0
  %4710 = vmatpush1.bf16.msra.mxu0 0
  %4711 = vmatprep.subr.bf16.mxu0 0
  %4712 = vmatpush1.bf16.msra.mxu0 0
  %4713 = vmatprep.subr.bf16.mxu0 0
  %4714 = vmatpush1.bf16.msra.mxu0 0
  %4715 = vmatprep.subr.bf16.mxu0 0
  %4716 = vmatpush1.bf16.msra.mxu0 0
  %4717 = vmatprep.subr.bf16.mxu0 0
  %4718 = vmatpush1.bf16.msra.mxu0 0
  %4719 = vmatprep.subr.bf16.mxu0 0
  %4720 = vmatpush1.bf16.msra.mxu0 0
  %4721 = vmatprep.subr.bf16.mxu0 0
  %4722 = vmatpush1.bf16.msra.mxu0 0
  %4723 = vmatprep.subr.bf16.mxu0 0
  %4724 = vmatpush1.bf16.msra.mxu0 0
  %4725 = vmatprep.subr.bf16.mxu0 0
  %4726 = vmatpush1.bf16.msra.mxu0 0
  %4727 = vmatprep.mubr.bf16.mxu0 0
  %4728 = vmatmul.mubr.bf16.gmra.mrb[0].mxu0 %v4693
  %v4729 = vpop.f32.mrb[0].mxu0
  %v4730 = vadd.f32 %v4681, %v4729
  %v4731 = vpop.f32.mrb[0].mxu0
  %v4732 = vpop.f32.mrb[0].mxu0
  %v4733 = vadd.f32 %v4684, %v4732
  %v4734 = vpop.f32.mrb[0].mxu0
  %4735 = vdwg.mxu0
  %s4736 = scalar_lea.vmem %s8, 16
  %v4737 = vld [vmem:[%s4736] sm:$0xf]
  %v4738 = vld [vmem:[%s4736 + $0x4] sm:$0xf]
  %v4741 = vunpack.c.l.b16 %v4737
  %v4742 = vunpack.c.l.b16 %v4738
  %v4743 = vpack.c.b16 %v4742, %v4741
  %v4745 = vsel %vm2306, %v4743, 0
  %4747 = vmatprep.subr.bf16.mxu0 0
  %4748 = vmatpush1.bf16.msra.mxu0 %v4626
  %4749 = vmatprep.subr.bf16.mxu0 0
  %4750 = vmatpush1.bf16.msra.mxu0 0
  %4751 = vmatprep.subr.bf16.mxu0 0
  %4752 = vmatpush1.bf16.msra.mxu0 0
  %4753 = vmatprep.subr.bf16.mxu0 0
  %4754 = vmatpush1.bf16.msra.mxu0 0
  %4755 = vmatprep.subr.bf16.mxu0 0
  %4756 = vmatpush1.bf16.msra.mxu0 0
  %4757 = vmatprep.subr.bf16.mxu0 0
  %4758 = vmatpush1.bf16.msra.mxu0 0
  %4759 = vmatprep.subr.bf16.mxu0 0
  %4760 = vmatpush1.bf16.msra.mxu0 0
  %4761 = vmatprep.subr.bf16.mxu0 0
  %4762 = vmatpush1.bf16.msra.mxu0 0
  %4763 = vmatprep.subr.bf16.mxu0 0
  %4764 = vmatpush1.bf16.msra.mxu0 0
  %4765 = vmatprep.subr.bf16.mxu0 0
  %4766 = vmatpush1.bf16.msra.mxu0 0
  %4767 = vmatprep.subr.bf16.mxu0 0
  %4768 = vmatpush1.bf16.msra.mxu0 0
  %4769 = vmatprep.subr.bf16.mxu0 0
  %4770 = vmatpush1.bf16.msra.mxu0 0
  %4771 = vmatprep.subr.bf16.mxu0 0
  %4772 = vmatpush1.bf16.msra.mxu0 0
  %4773 = vmatprep.subr.bf16.mxu0 0
  %4774 = vmatpush1.bf16.msra.mxu0 0
  %4775 = vmatprep.subr.bf16.mxu0 0
  %4776 = vmatpush1.bf16.msra.mxu0 0
  %4777 = vmatprep.subr.bf16.mxu0 0
  %4778 = vmatpush1.bf16.msra.mxu0 0
  %4779 = vmatprep.mubr.bf16.mxu0 0
  %4780 = vmatmul.mubr.bf16.gmra.mrb[0].mxu0 %v4745
  %v4781 = vpop.f32.mrb[0].mxu0
  %v4782 = vadd.f32 0.0, %v4781
  %v4783 = vpop.f32.mrb[0].mxu0
  %v4784 = vpop.f32.mrb[0].mxu0
  %v4785 = vadd.f32 0.0, %v4784
  %v4786 = vpop.f32.mrb[0].mxu0
  %4787 = vdwg.mxu0
  %v4788 = vadd.f32 %v4730, %v4782
  %v4789 = vadd.f32 %v4733, %v4785
  %s4790 = scalar_lea.vmem %s8, 24
  %v4791 = vld [vmem:[%s4790] sm:$0xf]
  %v4792 = vld [vmem:[%s4790 + $0x4] sm:$0xf]
  %v4795 = vunpack.c.l.b16 %v4791
  %v4796 = vunpack.c.l.b16 %v4792
  %v4797 = vpack.c.b16 %v4796, %v4795
  %v4799 = vsel %vm2306, %v4797, 0
  %4801 = vmatprep.subr.bf16.mxu0 0
  %4802 = vmatpush1.bf16.msra.mxu0 %v4627
  %4803 = vmatprep.subr.bf16.mxu0 0
  %4804 = vmatpush1.bf16.msra.mxu0 0
  %4805 = vmatprep.subr.bf16.mxu0 0
  %4806 = vmatpush1.bf16.msra.mxu0 0
  %4807 = vmatprep.subr.bf16.mxu0 0
  %4808 = vmatpush1.bf16.msra.mxu0 0
  %4809 = vmatprep.subr.bf16.mxu0 0
  %4810 = vmatpush1.bf16.msra.mxu0 0
  %4811 = vmatprep.subr.bf16.mxu0 0
  %4812 = vmatpush1.bf16.msra.mxu0 0
  %4813 = vmatprep.subr.bf16.mxu0 0
  %4814 = vmatpush1.bf16.msra.mxu0 0
  %4815 = vmatprep.subr.bf16.mxu0 0
  %4816 = vmatpush1.bf16.msra.mxu0 0
  %4817 = vmatprep.subr.bf16.mxu0 0
  %4818 = vmatpush1.bf16.msra.mxu0 0
  %4819 = vmatprep.subr.bf16.mxu0 0
  %4820 = vmatpush1.bf16.msra.mxu0 0
  %4821 = vmatprep.subr.bf16.mxu0 0
  %4822 = vmatpush1.bf16.msra.mxu0 0
  %4823 = vmatprep.subr.bf16.mxu0 0
  %4824 = vmatpush1.bf16.msra.mxu0 0
  %4825 = vmatprep.subr.bf16.mxu0 0
  %4826 = vmatpush1.bf16.msra.mxu0 0
  %4827 = vmatprep.subr.bf16.mxu0 0
  %4828 = vmatpush1.bf16.msra.mxu0 0
  %4829 = vmatprep.subr.bf16.mxu0 0
  %4830 = vmatpush1.bf16.msra.mxu0 0
  %4831 = vmatprep.subr.bf16.mxu0 0
  %4832 = vmatpush1.bf16.msra.mxu0 0
  %4833 = vmatprep.mubr.bf16.mxu0 0
  %4834 = vmatmul.mubr.bf16.gmra.mrb[0].mxu0 %v4799
  %v4835 = vpop.f32.mrb[0].mxu0
  %v4836 = vadd.f32 0.0, %v4835
  %v4837 = vpop.f32.mrb[0].mxu0
  %v4838 = vpop.f32.mrb[0].mxu0
  %v4839 = vadd.f32 0.0, %v4838
  %v4840 = vpop.f32.mrb[0].mxu0
  %4841 = vdwg.mxu0
  %v4842 = vadd.f32 %v4788, %v4836
  %v4843 = vadd.f32 %v4789, %v4839
  %s4844 = scalar_lea.vmem %s8, 32
  %v4845 = vld [vmem:[%s4844] sm:$0xf]
  %v4846 = vld [vmem:[%s4844 + $0x4] sm:$0xf]
  %v4849 = vunpack.c.l.b16 %v4845
  %v4850 = vunpack.c.l.b16 %v4846
  %v4851 = vpack.c.b16 %v4850, %v4849
  %v4853 = vsel %vm2306, %v4851, 0
  %4855 = vmatprep.subr.bf16.mxu0 0
  %4856 = vmatpush1.bf16.msra.mxu0 %v4628
  %4857 = vmatprep.subr.bf16.mxu0 0
  %4858 = vmatpush1.bf16.msra.mxu0 0
  %4859 = vmatprep.subr.bf16.mxu0 0
  %4860 = vmatpush1.bf16.msra.mxu0 0
  %4861 = vmatprep.subr.bf16.mxu0 0
  %4862 = vmatpush1.bf16.msra.mxu0 0
  %4863 = vmatprep.subr.bf16.mxu0 0
  %4864 = vmatpush1.bf16.msra.mxu0 0
  %4865 = vmatprep.subr.bf16.mxu0 0
  %4866 = vmatpush1.bf16.msra.mxu0 0
  %4867 = vmatprep.subr.bf16.mxu0 0
  %4868 = vmatpush1.bf16.msra.mxu0 0
  %4869 = vmatprep.subr.bf16.mxu0 0
  %4870 = vmatpush1.bf16.msra.mxu0 0
  %4871 = vmatprep.subr.bf16.mxu0 0
  %4872 = vmatpush1.bf16.msra.mxu0 0
  %4873 = vmatprep.subr.bf16.mxu0 0
  %4874 = vmatpush1.bf16.msra.mxu0 0
  %4875 = vmatprep.subr.bf16.mxu0 0
  %4876 = vmatpush1.bf16.msra.mxu0 0
  %4877 = vmatprep.subr.bf16.mxu0 0
  %4878 = vmatpush1.bf16.msra.mxu0 0
  %4879 = vmatprep.subr.bf16.mxu0 0
  %4880 = vmatpush1.bf16.msra.mxu0 0
  %4881 = vmatprep.subr.bf16.mxu0 0
  %4882 = vmatpush1.bf16.msra.mxu0 0
  %4883 = vmatprep.subr.bf16.mxu0 0
  %4884 = vmatpush1.bf16.msra.mxu0 0
  %4885 = vmatprep.subr.bf16.mxu0 0
  %4886 = vmatpush1.bf16.msra.mxu0 0
  %4887 = vmatprep.mubr.bf16.mxu0 0
  %4888 = vmatmul.mubr.bf16.gmra.mrb[0].mxu0 %v4853
  %v4889 = vpop.f32.mrb[0].mxu0
  %v4890 = vadd.f32 0.0, %v4889
  %v4891 = vpop.f32.mrb[0].mxu0
  %v4892 = vpop.f32.mrb[0].mxu0
  %v4893 = vadd.f32 0.0, %v4892
  %v4894 = vpop.f32.mrb[0].mxu0
  %4895 = vdwg.mxu0
  %v4896 = vadd.f32 %v4842, %v4890
  %v4897 = vadd.f32 %v4843, %v4893
  %s4898 = scalar_lea.vmem %s8, 40
  %v4899 = vld [vmem:[%s4898] sm:$0xf]
  %v4900 = vld [vmem:[%s4898 + $0x4] sm:$0xf]
  %v4903 = vunpack.c.l.b16 %v4899
  %v4904 = vunpack.c.l.b16 %v4900
  %v4905 = vpack.c.b16 %v4904, %v4903
  %v4907 = vsel %vm2306, %v4905, 0
  %4909 = vmatprep.subr.bf16.mxu0 0
  %4910 = vmatpush1.bf16.msra.mxu0 %v4629
  %4911 = vmatprep.subr.bf16.mxu0 0
  %4912 = vmatpush1.bf16.msra.mxu0 0
  %4913 = vmatprep.subr.bf16.mxu0 0
  %4914 = vmatpush1.bf16.msra.mxu0 0
  %4915 = vmatprep.subr.bf16.mxu0 0
  %4916 = vmatpush1.bf16.msra.mxu0 0
  %4917 = vmatprep.subr.bf16.mxu0 0
  %4918 = vmatpush1.bf16.msra.mxu0 0
  %4919 = vmatprep.subr.bf16.mxu0 0
  %4920 = vmatpush1.bf16.msra.mxu0 0
  %4921 = vmatprep.subr.bf16.mxu0 0
  %4922 = vmatpush1.bf16.msra.mxu0 0
  %4923 = vmatprep.subr.bf16.mxu0 0
  %4924 = vmatpush1.bf16.msra.mxu0 0
  %4925 = vmatprep.subr.bf16.mxu0 0
  %4926 = vmatpush1.bf16.msra.mxu0 0
  %4927 = vmatprep.subr.bf16.mxu0 0
  %4928 = vmatpush1.bf16.msra.mxu0 0
  %4929 = vmatprep.subr.bf16.mxu0 0
  %4930 = vmatpush1.bf16.msra.mxu0 0
  %4931 = vmatprep.subr.bf16.mxu0 0
  %4932 = vmatpush1.bf16.msra.mxu0 0
  %4933 = vmatprep.subr.bf16.mxu0 0
  %4934 = vmatpush1.bf16.msra.mxu0 0
  %4935 = vmatprep.subr.bf16.mxu0 0
  %4936 = vmatpush1.bf16.msra.mxu0 0
  %4937 = vmatprep.subr.bf16.mxu0 0
  %4938 = vmatpush1.bf16.msra.mxu0 0
  %4939 = vmatprep.subr.bf16.mxu0 0
  %4940 = vmatpush1.bf16.msra.mxu0 0
  %4941 = vmatprep.mubr.bf16.mxu0 0
  %4942 = vmatmul.mubr.bf16.gmra.mrb[0].mxu0 %v4907
  %v4943 = vpop.f32.mrb[0].mxu0
  %v4944 = vadd.f32 0.0, %v4943
  %v4945 = vpop.f32.mrb[0].mxu0
  %v4946 = vpop.f32.mrb[0].mxu0
  %v4947 = vadd.f32 0.0, %v4946
  %v4948 = vpop.f32.mrb[0].mxu0
  %4949 = vdwg.mxu0
  %v4950 = vadd.f32 %v4896, %v4944
  %v4951 = vadd.f32 %v4897, %v4947
  %s4952 = scalar_lea.vmem %s8, 48
  %v4953 = vld [vmem:[%s4952] sm:$0xf]
  %v4954 = vld [vmem:[%s4952 + $0x4] sm:$0xf]
  %v4957 = vunpack.c.l.b16 %v4953
  %v4958 = vunpack.c.l.b16 %v4954
  %v4959 = vpack.c.b16 %v4958, %v4957
  %v4961 = vsel %vm2306, %v4959, 0
  %4963 = vmatprep.subr.bf16.mxu0 0
  %4964 = vmatpush1.bf16.msra.mxu0 %v4630
  %4965 = vmatprep.subr.bf16.mxu0 0
  %4966 = vmatpush1.bf16.msra.mxu0 0
  %4967 = vmatprep.subr.bf16.mxu0 0
  %4968 = vmatpush1.bf16.msra.mxu0 0
  %4969 = vmatprep.subr.bf16.mxu0 0
  %4970 = vmatpush1.bf16.msra.mxu0 0
  %4971 = vmatprep.subr.bf16.mxu0 0
  %4972 = vmatpush1.bf16.msra.mxu0 0
  %4973 = vmatprep.subr.bf16.mxu0 0
  %4974 = vmatpush1.bf16.msra.mxu0 0
  %4975 = vmatprep.subr.bf16.mxu0 0
  %4976 = vmatpush1.bf16.msra.mxu0 0
  %4977 = vmatprep.subr.bf16.mxu0 0
  %4978 = vmatpush1.bf16.msra.mxu0 0
  %4979 = vmatprep.subr.bf16.mxu0 0
  %4980 = vmatpush1.bf16.msra.mxu0 0
  %4981 = vmatprep.subr.bf16.mxu0 0
  %4982 = vmatpush1.bf16.msra.mxu0 0
  %4983 = vmatprep.subr.bf16.mxu0 0
  %4984 = vmatpush1.bf16.msra.mxu0 0
  %4985 = vmatprep.subr.bf16.mxu0 0
  %4986 = vmatpush1.bf16.msra.mxu0 0
  %4987 = vmatprep.subr.bf16.mxu0 0
  %4988 = vmatpush1.bf16.msra.mxu0 0
  %4989 = vmatprep.subr.bf16.mxu0 0
  %4990 = vmatpush1.bf16.msra.mxu0 0
  %4991 = vmatprep.subr.bf16.mxu0 0
  %4992 = vmatpush1.bf16.msra.mxu0 0
  %4993 = vmatprep.subr.bf16.mxu0 0
  %4994 = vmatpush1.bf16.msra.mxu0 0
  %4995 = vmatprep.mubr.bf16.mxu0 0
  %4996 = vmatmul.mubr.bf16.gmra.mrb[0].mxu0 %v4961
  %v4997 = vpop.f32.mrb[0].mxu0
  %v4998 = vadd.f32 0.0, %v4997
  %v4999 = vpop.f32.mrb[0].mxu0
  %v5000 = vpop.f32.mrb[0].mxu0
  %v5001 = vadd.f32 0.0, %v5000
  %v5002 = vpop.f32.mrb[0].mxu0
  %5003 = vdwg.mxu0
  %v5004 = vadd.f32 %v4950, %v4998
  %v5005 = vadd.f32 %v4951, %v5001
  %s5006 = scalar_lea.vmem %s8, 56
  %v5007 = vld [vmem:[%s5006] sm:$0xf]
  %v5008 = vld [vmem:[%s5006 + $0x4] sm:$0xf]
  %v5011 = vunpack.c.l.b16 %v5007
  %v5012 = vunpack.c.l.b16 %v5008
  %v5013 = vpack.c.b16 %v5012, %v5011
  %v5015 = vsel %vm2306, %v5013, 0
  %5017 = vmatprep.subr.bf16.mxu0 0
  %5018 = vmatpush1.bf16.msra.mxu0 %v4631
  %5019 = vmatprep.subr.bf16.mxu0 0
  %5020 = vmatpush1.bf16.msra.mxu0 0
  %5021 = vmatprep.subr.bf16.mxu0 0
  %5022 = vmatpush1.bf16.msra.mxu0 0
  %5023 = vmatprep.subr.bf16.mxu0 0
  %5024 = vmatpush1.bf16.msra.mxu0 0
  %5025 = vmatprep.subr.bf16.mxu0 0
  %5026 = vmatpush1.bf16.msra.mxu0 0
  %5027 = vmatprep.subr.bf16.mxu0 0
  %5028 = vmatpush1.bf16.msra.mxu0 0
  %5029 = vmatprep.subr.bf16.mxu0 0
  %5030 = vmatpush1.bf16.msra.mxu0 0
  %5031 = vmatprep.subr.bf16.mxu0 0
  %5032 = vmatpush1.bf16.msra.mxu0 0
  %5033 = vmatprep.subr.bf16.mxu0 0
  %5034 = vmatpush1.bf16.msra.mxu0 0
  %5035 = vmatprep.subr.bf16.mxu0 0
  %5036 = vmatpush1.bf16.msra.mxu0 0
  %5037 = vmatprep.subr.bf16.mxu0 0
  %5038 = vmatpush1.bf16.msra.mxu0 0
  %5039 = vmatprep.subr.bf16.mxu0 0
  %5040 = vmatpush1.bf16.msra.mxu0 0
  %5041 = vmatprep.subr.bf16.mxu0 0
  %5042 = vmatpush1.bf16.msra.mxu0 0
  %5043 = vmatprep.subr.bf16.mxu0 0
  %5044 = vmatpush1.bf16.msra.mxu0 0
  %5045 = vmatprep.subr.bf16.mxu0 0
  %5046 = vmatpush1.bf16.msra.mxu0 0
  %5047 = vmatprep.subr.bf16.mxu0 0
  %5048 = vmatpush1.bf16.msra.mxu0 0
  %5049 = vmatprep.mubr.bf16.mxu0 0
  %5050 = vmatmul.mubr.bf16.gmra.mrb[0].mxu0 %v5015
  %v5051 = vpop.f32.mrb[0].mxu0
  %v5052 = vadd.f32 0.0, %v5051
  %v5053 = vpop.f32.mrb[0].mxu0
  %v5054 = vpop.f32.mrb[0].mxu0
  %v5055 = vadd.f32 0.0, %v5054
  %v5056 = vpop.f32.mrb[0].mxu0
  %5057 = vdwg.mxu0
  %v5058 = vadd.f32 %v5004, %v5052
  %v5059 = vadd.f32 %v5005, %v5055
  %s5060 = scalar_lea.vmem %s8, 64
  %v5061 = vld [vmem:[%s5060] sm:$0xf]
  %v5062 = vld [vmem:[%s5060 + $0x4] sm:$0xf]
  %v5065 = vunpack.c.l.b16 %v5061
  %v5066 = vunpack.c.l.b16 %v5062
  %v5067 = vpack.c.b16 %v5066, %v5065
  %v5069 = vsel %vm2306, %v5067, 0
  %5071 = vmatprep.subr.bf16.mxu0 0
  %5072 = vmatpush1.bf16.msra.mxu0 %v4632
  %5073 = vmatprep.subr.bf16.mxu0 0
  %5074 = vmatpush1.bf16.msra.mxu0 0
  %5075 = vmatprep.subr.bf16.mxu0 0
  %5076 = vmatpush1.bf16.msra.mxu0 0
  %5077 = vmatprep.subr.bf16.mxu0 0
  %5078 = vmatpush1.bf16.msra.mxu0 0
  %5079 = vmatprep.subr.bf16.mxu0 0
  %5080 = vmatpush1.bf16.msra.mxu0 0
  %5081 = vmatprep.subr.bf16.mxu0 0
  %5082 = vmatpush1.bf16.msra.mxu0 0
  %5083 = vmatprep.subr.bf16.mxu0 0
  %5084 = vmatpush1.bf16.msra.mxu0 0
  %5085 = vmatprep.subr.bf16.mxu0 0
  %5086 = vmatpush1.bf16.msra.mxu0 0
  %5087 = vmatprep.subr.bf16.mxu0 0
  %5088 = vmatpush1.bf16.msra.mxu0 0
  %5089 = vmatprep.subr.bf16.mxu0 0
  %5090 = vmatpush1.bf16.msra.mxu0 0
  %5091 = vmatprep.subr.bf16.mxu0 0
  %5092 = vmatpush1.bf16.msra.mxu0 0
  %5093 = vmatprep.subr.bf16.mxu0 0
  %5094 = vmatpush1.bf16.msra.mxu0 0
  %5095 = vmatprep.subr.bf16.mxu0 0
  %5096 = vmatpush1.bf16.msra.mxu0 0
  %5097 = vmatprep.subr.bf16.mxu0 0
  %5098 = vmatpush1.bf16.msra.mxu0 0
  %5099 = vmatprep.subr.bf16.mxu0 0
  %5100 = vmatpush1.bf16.msra.mxu0 0
  %5101 = vmatprep.subr.bf16.mxu0 0
  %5102 = vmatpush1.bf16.msra.mxu0 0
  %5103 = vmatprep.mubr.bf16.mxu0 0
  %5104 = vmatmul.mubr.bf16.gmra.mrb[0].mxu0 %v5069
  %v5105 = vpop.f32.mrb[0].mxu0
  %v5106 = vadd.f32 0.0, %v5105
  %v5107 = vpop.f32.mrb[0].mxu0
  %v5108 = vpop.f32.mrb[0].mxu0
  %v5109 = vadd.f32 0.0, %v5108
  %v5110 = vpop.f32.mrb[0].mxu0
  %5111 = vdwg.mxu0
  %v5112 = vadd.f32 %v5058, %v5106
  %v5113 = vadd.f32 %v5059, %v5109
  %v5114 = vld [vmem:[%s9] sm:$0xff]
  %v5115 = vld [vmem:[%s9 + $0x8] sm:$0xff]
  %5117 = vset.pattern.permute.xlu0 0
  %5118 = vperm.xlu0 %5117, %v5114
  %v5119 = vpop.permute.xlu0 %5118
  %5122 = vset.pattern.permute.xlu0 0
  %5123 = vperm.xlu0 %5122, %v5115
  %v5124 = vpop.permute.xlu0 %5123
  %v5126 = vadd.f32 %v5112, %v5119
  %v5127 = vadd.f32 %v5113, %v5124
  %v5128 = vmax.f32 %v5126, 0.0
  %v5129 = vmax.f32 %v5127, 0.0
  %v5130 = vpack.c.bf16 %v5129, %v5128
  %v5131 = vld [vmem:[%s10] sm:$0xff]
  %v5132 = vld [vmem:[%s10 + $0x8] sm:$0xff]
  %v5133 = vld [vmem:[%s10 + $0x10] sm:$0xff]
  %v5134 = vld [vmem:[%s10 + $0x18] sm:$0xff]
  %v5135 = vld [vmem:[%s10 + $0x20] sm:$0xf]
  %v5136 = vld [vmem:[%s10 + $0x24] sm:$0xff]
  %v5137 = vld [vmem:[%s10 + $0x2c] sm:$0xff]
  %v5138 = vld [vmem:[%s10 + $0x34] sm:$0xff]
  %v5139 = vld [vmem:[%s10 + $0x3c] sm:$0xff]
  %v5140 = vld [vmem:[%s10 + $0x44] sm:$0xf]
  %v5141 = vld [vmem:[%s10 + $0x48] sm:$0xff]
  %v5142 = vld [vmem:[%s10 + $0x50] sm:$0xff]
  %v5143 = vld [vmem:[%s10 + $0x58] sm:$0xff]
  %v5144 = vld [vmem:[%s10 + $0x60] sm:$0xff]
  %v5145 = vld [vmem:[%s10 + $0x68] sm:$0xf]
  %v5146 = vld [vmem:[%s10 + $0x6c] sm:$0xff]
  %v5147 = vld [vmem:[%s10 + $0x74] sm:$0xff]
  %v5148 = vld [vmem:[%s10 + $0x7c] sm:$0xff]
  %v5149 = vld [vmem:[%s10 + $0x84] sm:$0xff]
  %v5150 = vld [vmem:[%s10 + $0x8c] sm:$0xf]
  %v5151 = vld [vmem:[%s10 + $0x90] sm:$0xff]
  %v5152 = vld [vmem:[%s10 + $0x98] sm:$0xff]
  %v5153 = vld [vmem:[%s10 + $0xa0] sm:$0xff]
  %v5154 = vld [vmem:[%s10 + $0xa8] sm:$0xff]
  %v5155 = vld [vmem:[%s10 + $0xb0] sm:$0xf]
  %v5156 = vld [vmem:[%s10 + $0xb4] sm:$0xff]
  %v5157 = vld [vmem:[%s10 + $0xbc] sm:$0xff]
  %v5158 = vld [vmem:[%s10 + $0xc4] sm:$0xff]
  %v5159 = vld [vmem:[%s10 + $0xcc] sm:$0xff]
  %v5160 = vld [vmem:[%s10 + $0xd4] sm:$0xf]
  %v5161 = vld [vmem:[%s10 + $0xd8] sm:$0xff]
  %v5162 = vld [vmem:[%s10 + $0xe0] sm:$0xff]
  %v5163 = vld [vmem:[%s10 + $0xe8] sm:$0xff]
  %v5164 = vld [vmem:[%s10 + $0xf0] sm:$0xff]
  %v5165 = vld [vmem:[%s10 + $0xf8] sm:$0xf]
  %v5166 = vld [vmem:[%s10 + $0xfc] sm:$0xff]
  %v5167 = vld [vmem:[%s10 + $0x104] sm:$0xff]
  %v5168 = vld [vmem:[%s10 + $0x10c] sm:$0xff]
  %v5169 = vld [vmem:[%s10 + $0x114] sm:$0xff]
  %v5170 = vld [vmem:[%s10 + $0x11c] sm:$0xf]
  %v5171 = vld [vmem:[%s10 + $0x120] sm:$0xff]
  %v5172 = vld [vmem:[%s10 + $0x128] sm:$0xff]
  %v5173 = vld [vmem:[%s10 + $0x130] sm:$0xff]
  %v5174 = vld [vmem:[%s10 + $0x138] sm:$0xff]
  %v5175 = vld [vmem:[%s10 + $0x140] sm:$0xf]
  %v5176 = vld [vmem:[%s10 + $0x144] sm:$0xff]
  %v5177 = vld [vmem:[%s10 + $0x14c] sm:$0xff]
  %v5178 = vld [vmem:[%s10 + $0x154] sm:$0xff]
  %v5179 = vld [vmem:[%s10 + $0x15c] sm:$0xff]
  %v5180 = vld [vmem:[%s10 + $0x164] sm:$0xf]
  %v5181 = vld [vmem:[%s10 + $0x168] sm:$0xff]
  %v5182 = vld [vmem:[%s10 + $0x170] sm:$0xff]
  %v5183 = vld [vmem:[%s10 + $0x178] sm:$0xff]
  %v5184 = vld [vmem:[%s10 + $0x180] sm:$0xff]
  %v5185 = vld [vmem:[%s10 + $0x188] sm:$0xf]
  %v5186 = vld [vmem:[%s10 + $0x18c] sm:$0xff]
  %v5187 = vld [vmem:[%s10 + $0x194] sm:$0xff]
  %v5188 = vld [vmem:[%s10 + $0x19c] sm:$0xff]
  %v5189 = vld [vmem:[%s10 + $0x1a4] sm:$0xff]
  %v5190 = vld [vmem:[%s10 + $0x1ac] sm:$0xf]
  %v5191 = vld [vmem:[%s10 + $0x1b0] sm:$0xff]
  %v5192 = vld [vmem:[%s10 + $0x1b8] sm:$0xff]
  %v5193 = vld [vmem:[%s10 + $0x1c0] sm:$0xff]
  %v5194 = vld [vmem:[%s10 + $0x1c8] sm:$0xff]
  %v5195 = vld [vmem:[%s10 + $0x1d0] sm:$0xf]
  %v5196 = vld [vmem:[%s10 + $0x1d4] sm:$0xff]
  %v5197 = vld [vmem:[%s10 + $0x1dc] sm:$0xff]
  %v5198 = vld [vmem:[%s10 + $0x1e4] sm:$0xff]
  %v5199 = vld [vmem:[%s10 + $0x1ec] sm:$0xff]
  %v5200 = vld [vmem:[%s10 + $0x1f4] sm:$0xf]
  %v5201 = vld [vmem:[%s10 + $0x1f8] sm:$0xff]
  %v5202 = vld [vmem:[%s10 + $0x200] sm:$0xff]
  %v5203 = vld [vmem:[%s10 + $0x208] sm:$0xff]
  %v5204 = vld [vmem:[%s10 + $0x210] sm:$0xff]
  %v5205 = vld [vmem:[%s10 + $0x218] sm:$0xf]
  %v5206 = vld [vmem:[%s10 + $0x21c] sm:$0xff]
  %v5207 = vld [vmem:[%s10 + $0x224] sm:$0xff]
  %v5208 = vld [vmem:[%s10 + $0x22c] sm:$0xff]
  %v5209 = vld [vmem:[%s10 + $0x234] sm:$0xff]
  %v5210 = vld [vmem:[%s10 + $0x23c] sm:$0xf]
  %v5291 = vunpack.c.l.b16 %v5131
  %v5292 = vunpack.c.h.b16 %v5131
  %v5293 = vunpack.c.l.b16 %v5132
  %v5294 = vunpack.c.h.b16 %v5132
  %v5295 = vunpack.c.l.b16 %v5133
  %v5296 = vunpack.c.h.b16 %v5133
  %v5297 = vunpack.c.l.b16 %v5134
  %v5298 = vunpack.c.h.b16 %v5134
  %v5299 = vunpack.c.l.b16 %v5135
  %v5300 = vunpack.c.l.b16 %v5136
  %v5301 = vunpack.c.h.b16 %v5136
  %v5302 = vunpack.c.l.b16 %v5137
  %v5303 = vunpack.c.h.b16 %v5137
  %v5304 = vunpack.c.l.b16 %v5138
  %v5305 = vunpack.c.h.b16 %v5138
  %v5306 = vunpack.c.l.b16 %v5139
  %v5307 = vunpack.c.h.b16 %v5139
  %v5308 = vunpack.c.l.b16 %v5140
  %v5309 = vunpack.c.l.b16 %v5141
  %v5310 = vunpack.c.h.b16 %v5141
  %v5311 = vunpack.c.l.b16 %v5142
  %v5312 = vunpack.c.h.b16 %v5142
  %v5313 = vunpack.c.l.b16 %v5143
  %v5314 = vunpack.c.h.b16 %v5143
  %v5315 = vunpack.c.l.b16 %v5144
  %v5316 = vunpack.c.h.b16 %v5144
  %v5317 = vunpack.c.l.b16 %v5145
  %v5318 = vunpack.c.l.b16 %v5146
  %v5319 = vunpack.c.h.b16 %v5146
  %v5320 = vunpack.c.l.b16 %v5147
  %v5321 = vunpack.c.h.b16 %v5147
  %v5322 = vunpack.c.l.b16 %v5148
  %v5323 = vunpack.c.h.b16 %v5148
  %v5324 = vunpack.c.l.b16 %v5149
  %v5325 = vunpack.c.h.b16 %v5149
  %v5326 = vunpack.c.l.b16 %v5150
  %v5327 = vunpack.c.l.b16 %v5151
  %v5328 = vunpack.c.h.b16 %v5151
  %v5329 = vunpack.c.l.b16 %v5152
  %v5330 = vunpack.c.h.b16 %v5152
  %v5331 = vunpack.c.l.b16 %v5153
  %v5332 = vunpack.c.h.b16 %v5153
  %v5333 = vunpack.c.l.b16 %v5154
  %v5334 = vunpack.c.h.b16 %v5154
  %v5335 = vunpack.c.l.b16 %v5155
  %v5336 = vunpack.c.l.b16 %v5156
  %v5337 = vunpack.c.h.b16 %v5156
  %v5338 = vunpack.c.l.b16 %v5157
  %v5339 = vunpack.c.h.b16 %v5157
  %v5340 = vunpack.c.l.b16 %v5158
  %v5341 = vunpack.c.h.b16 %v5158
  %v5342 = vunpack.c.l.b16 %v5159
  %v5343 = vunpack.c.h.b16 %v5159
  %v5344 = vunpack.c.l.b16 %v5160
  %v5345 = vunpack.c.l.b16 %v5161
  %v5346 = vunpack.c.h.b16 %v5161
  %v5347 = vunpack.c.l.b16 %v5162
  %v5348 = vunpack.c.h.b16 %v5162
  %v5349 = vunpack.c.l.b16 %v5163
  %v5350 = vunpack.c.h.b16 %v5163
  %v5351 = vunpack.c.l.b16 %v5164
  %v5352 = vunpack.c.h.b16 %v5164
  %v5353 = vunpack.c.l.b16 %v5165
  %v5354 = vunpack.c.l.b16 %v5166
  %v5355 = vunpack.c.h.b16 %v5166
  %v5356 = vunpack.c.l.b16 %v5167
  %v5357 = vunpack.c.h.b16 %v5167
  %v5358 = vunpack.c.l.b16 %v5168
  %v5359 = vunpack.c.h.b16 %v5168
  %v5360 = vunpack.c.l.b16 %v5169
  %v5361 = vunpack.c.h.b16 %v5169
  %v5362 = vunpack.c.l.b16 %v5170
  %v5363 = vunpack.c.l.b16 %v5171
  %v5364 = vunpack.c.h.b16 %v5171
  %v5365 = vunpack.c.l.b16 %v5172
  %v5366 = vunpack.c.h.b16 %v5172
  %v5367 = vunpack.c.l.b16 %v5173
  %v5368 = vunpack.c.h.b16 %v5173
  %v5369 = vunpack.c.l.b16 %v5174
  %v5370 = vunpack.c.h.b16 %v5174
  %v5371 = vunpack.c.l.b16 %v5175
  %v5372 = vunpack.c.l.b16 %v5176
  %v5373 = vunpack.c.h.b16 %v5176
  %v5374 = vunpack.c.l.b16 %v5177
  %v5375 = vunpack.c.h.b16 %v5177
  %v5376 = vunpack.c.l.b16 %v5178
  %v5377 = vunpack.c.h.b16 %v5178
  %v5378 = vunpack.c.l.b16 %v5179
  %v5379 = vunpack.c.h.b16 %v5179
  %v5380 = vunpack.c.l.b16 %v5180
  %v5381 = vunpack.c.l.b16 %v5181
  %v5382 = vunpack.c.h.b16 %v5181
  %v5383 = vunpack.c.l.b16 %v5182
  %v5384 = vunpack.c.h.b16 %v5182
  %v5385 = vunpack.c.l.b16 %v5183
  %v5386 = vunpack.c.h.b16 %v5183
  %v5387 = vunpack.c.l.b16 %v5184
  %v5388 = vunpack.c.h.b16 %v5184
  %v5389 = vunpack.c.l.b16 %v5185
  %v5390 = vunpack.c.l.b16 %v5186
  %v5391 = vunpack.c.h.b16 %v5186
  %v5392 = vunpack.c.l.b16 %v5187
  %v5393 = vunpack.c.h.b16 %v5187
  %v5394 = vunpack.c.l.b16 %v5188
  %v5395 = vunpack.c.h.b16 %v5188
  %v5396 = vunpack.c.l.b16 %v5189
  %v5397 = vunpack.c.h.b16 %v5189
  %v5398 = vunpack.c.l.b16 %v5190
  %v5399 = vunpack.c.l.b16 %v5191
  %v5400 = vunpack.c.h.b16 %v5191
  %v5401 = vunpack.c.l.b16 %v5192
  %v5402 = vunpack.c.h.b16 %v5192
  %v5403 = vunpack.c.l.b16 %v5193
  %v5404 = vunpack.c.h.b16 %v5193
  %v5405 = vunpack.c.l.b16 %v5194
  %v5406 = vunpack.c.h.b16 %v5194
  %v5407 = vunpack.c.l.b16 %v5195
  %v5408 = vunpack.c.l.b16 %v5196
  %v5409 = vunpack.c.h.b16 %v5196
  %v5410 = vunpack.c.l.b16 %v5197
  %v5411 = vunpack.c.h.b16 %v5197
  %v5412 = vunpack.c.l.b16 %v5198
  %v5413 = vunpack.c.h.b16 %v5198
  %v5414 = vunpack.c.l.b16 %v5199
  %v5415 = vunpack.c.h.b16 %v5199
  %v5416 = vunpack.c.l.b16 %v5200
  %v5417 = vunpack.c.l.b16 %v5201
  %v5418 = vunpack.c.h.b16 %v5201
  %v5419 = vunpack.c.l.b16 %v5202
  %v5420 = vunpack.c.h.b16 %v5202
  %v5421 = vunpack.c.l.b16 %v5203
  %v5422 = vunpack.c.h.b16 %v5203
  %v5423 = vunpack.c.l.b16 %v5204
  %v5424 = vunpack.c.h.b16 %v5204
  %v5425 = vunpack.c.l.b16 %v5205
  %v5426 = vunpack.c.l.b16 %v5206
  %v5427 = vunpack.c.h.b16 %v5206
  %v5428 = vunpack.c.l.b16 %v5207
  %v5429 = vunpack.c.h.b16 %v5207
  %v5430 = vunpack.c.l.b16 %v5208
  %v5431 = vunpack.c.h.b16 %v5208
  %v5432 = vunpack.c.l.b16 %v5209
  %v5433 = vunpack.c.h.b16 %v5209
  %v5434 = vunpack.c.l.b16 %v5210
  %v5435 = vpack.c.b16 %v5300, %v5291
  %v5436 = vpack.c.b16 %v5301, %v5292
  %v5437 = vpack.c.b16 %v5302, %v5293
  %v5438 = vpack.c.b16 %v5303, %v5294
  %v5439 = vpack.c.b16 %v5304, %v5295
  %v5440 = vpack.c.b16 %v5305, %v5296
  %v5441 = vpack.c.b16 %v5306, %v5297
  %v5442 = vpack.c.b16 %v5307, %v5298
  %v5443 = vpack.c.b16 %v5308, %v5299
  %v5444 = vpack.c.b16 %v5318, %v5309
  %v5445 = vpack.c.b16 %v5319, %v5310
  %v5446 = vpack.c.b16 %v5320, %v5311
  %v5447 = vpack.c.b16 %v5321, %v5312
  %v5448 = vpack.c.b16 %v5322, %v5313
  %v5449 = vpack.c.b16 %v5323, %v5314
  %v5450 = vpack.c.b16 %v5324, %v5315
  %v5451 = vpack.c.b16 %v5325, %v5316
  %v5452 = vpack.c.b16 %v5326, %v5317
  %v5453 = vpack.c.b16 %v5336, %v5327
  %v5454 = vpack.c.b16 %v5337, %v5328
  %v5455 = vpack.c.b16 %v5338, %v5329
  %v5456 = vpack.c.b16 %v5339, %v5330
  %v5457 = vpack.c.b16 %v5340, %v5331
  %v5458 = vpack.c.b16 %v5341, %v5332
  %v5459 = vpack.c.b16 %v5342, %v5333
  %v5460 = vpack.c.b16 %v5343, %v5334
  %v5461 = vpack.c.b16 %v5344, %v5335
  %v5462 = vpack.c.b16 %v5354, %v5345
  %v5463 = vpack.c.b16 %v5355, %v5346
  %v5464 = vpack.c.b16 %v5356, %v5347
  %v5465 = vpack.c.b16 %v5357, %v5348
  %v5466 = vpack.c.b16 %v5358, %v5349
  %v5467 = vpack.c.b16 %v5359, %v5350
  %v5468 = vpack.c.b16 %v5360, %v5351
  %v5469 = vpack.c.b16 %v5361, %v5352
  %v5470 = vpack.c.b16 %v5362, %v5353
  %v5471 = vpack.c.b16 %v5372, %v5363
  %v5472 = vpack.c.b16 %v5373, %v5364
  %v5473 = vpack.c.b16 %v5374, %v5365
  %v5474 = vpack.c.b16 %v5375, %v5366
  %v5475 = vpack.c.b16 %v5376, %v5367
  %v5476 = vpack.c.b16 %v5377, %v5368
  %v5477 = vpack.c.b16 %v5378, %v5369
  %v5478 = vpack.c.b16 %v5379, %v5370
  %v5479 = vpack.c.b16 %v5380, %v5371
  %v5480 = vpack.c.b16 %v5390, %v5381
  %v5481 = vpack.c.b16 %v5391, %v5382
  %v5482 = vpack.c.b16 %v5392, %v5383
  %v5483 = vpack.c.b16 %v5393, %v5384
  %v5484 = vpack.c.b16 %v5394, %v5385
  %v5485 = vpack.c.b16 %v5395, %v5386
  %v5486 = vpack.c.b16 %v5396, %v5387
  %v5487 = vpack.c.b16 %v5397, %v5388
  %v5488 = vpack.c.b16 %v5398, %v5389
  %v5489 = vpack.c.b16 %v5408, %v5399
  %v5490 = vpack.c.b16 %v5409, %v5400
  %v5491 = vpack.c.b16 %v5410, %v5401
  %v5492 = vpack.c.b16 %v5411, %v5402
  %v5493 = vpack.c.b16 %v5412, %v5403
  %v5494 = vpack.c.b16 %v5413, %v5404
  %v5495 = vpack.c.b16 %v5414, %v5405
  %v5496 = vpack.c.b16 %v5415, %v5406
  %v5497 = vpack.c.b16 %v5416, %v5407
  %v5498 = vpack.c.b16 %v5426, %v5417
  %v5499 = vpack.c.b16 %v5427, %v5418
  %v5500 = vpack.c.b16 %v5428, %v5419
  %v5501 = vpack.c.b16 %v5429, %v5420
  %v5502 = vpack.c.b16 %v5430, %v5421
  %v5503 = vpack.c.b16 %v5431, %v5422
  %v5504 = vpack.c.b16 %v5432, %v5423
  %v5505 = vpack.c.b16 %v5433, %v5424
  %v5506 = vpack.c.b16 %v5434, %v5425
  %5579 = vmatprep.subr.bf16.mxu0 %v5436
  %5580 = vmatpush1.bf16.msra.mxu0 %v5435
  %5581 = vmatprep.subr.bf16.mxu0 %v5445
  %5582 = vmatpush1.bf16.msra.mxu0 %v5444
  %5583 = vmatprep.subr.bf16.mxu0 %v5454
  %5584 = vmatpush1.bf16.msra.mxu0 %v5453
  %5585 = vmatprep.subr.bf16.mxu0 %v5463
  %5586 = vmatpush1.bf16.msra.mxu0 %v5462
  %5587 = vmatprep.subr.bf16.mxu0 %v5472
  %5588 = vmatpush1.bf16.msra.mxu0 %v5471
  %5589 = vmatprep.subr.bf16.mxu0 %v5481
  %5590 = vmatpush1.bf16.msra.mxu0 %v5480
  %5591 = vmatprep.subr.bf16.mxu0 %v5490
  %5592 = vmatpush1.bf16.msra.mxu0 %v5489
  %5593 = vmatprep.subr.bf16.mxu0 %v5499
  %5594 = vmatpush1.bf16.msra.mxu0 %v5498
  %5595 = vmatprep.subr.bf16.mxu0 0
  %5596 = vmatpush1.bf16.msra.mxu0 0
  %5597 = vmatprep.subr.bf16.mxu0 0
  %5598 = vmatpush1.bf16.msra.mxu0 0
  %5599 = vmatprep.subr.bf16.mxu0 0
  %5600 = vmatpush1.bf16.msra.mxu0 0
  %5601 = vmatprep.subr.bf16.mxu0 0
  %5602 = vmatpush1.bf16.msra.mxu0 0
  %5603 = vmatprep.subr.bf16.mxu0 0
  %5604 = vmatpush1.bf16.msra.mxu0 0
  %5605 = vmatprep.subr.bf16.mxu0 0
  %5606 = vmatpush1.bf16.msra.mxu0 0
  %5607 = vmatprep.subr.bf16.mxu0 0
  %5608 = vmatpush1.bf16.msra.mxu0 0
  %5609 = vmatprep.subr.bf16.mxu0 0
  %5610 = vmatpush1.bf16.msra.mxu0 0
  %5611 = vmatprep.mubr.bf16.mxu0 0
  %5612 = vmatmul.mubr.bf16.gmra.mrb[0].mxu0 %v5130
  %v5613 = vpop.f32.mrb[0].mxu0
  %v5614 = vadd.f32 0.0, %v5613
  %v5615 = vpop.f32.mrb[0].mxu0
  %v5616 = vadd.f32 0.0, %v5615
  %v5617 = vpop.f32.mrb[0].mxu0
  %v5618 = vadd.f32 0.0, %v5617
  %v5619 = vpop.f32.mrb[0].mxu0
  %v5620 = vadd.f32 0.0, %v5619
  %5621 = vdwg.mxu0
  %5622 = vmatprep.subr.bf16.mxu0 %v5438
  %5623 = vmatpush1.bf16.msra.mxu0 %v5437
  %5624 = vmatprep.subr.bf16.mxu0 %v5447
  %5625 = vmatpush1.bf16.msra.mxu0 %v5446
  %5626 = vmatprep.subr.bf16.mxu0 %v5456
  %5627 = vmatpush1.bf16.msra.mxu0 %v5455
  %5628 = vmatprep.subr.bf16.mxu0 %v5465
  %5629 = vmatpush1.bf16.msra.mxu0 %v5464
  %5630 = vmatprep.subr.bf16.mxu0 %v5474
  %5631 = vmatpush1.bf16.msra.mxu0 %v5473
  %5632 = vmatprep.subr.bf16.mxu0 %v5483
  %5633 = vmatpush1.bf16.msra.mxu0 %v5482
  %5634 = vmatprep.subr.bf16.mxu0 %v5492
  %5635 = vmatpush1.bf16.msra.mxu0 %v5491
  %5636 = vmatprep.subr.bf16.mxu0 %v5501
  %5637 = vmatpush1.bf16.msra.mxu0 %v5500
  %5638 = vmatprep.subr.bf16.mxu0 0
  %5639 = vmatpush1.bf16.msra.mxu0 0
  %5640 = vmatprep.subr.bf16.mxu0 0
  %5641 = vmatpush1.bf16.msra.mxu0 0
  %5642 = vmatprep.subr.bf16.mxu0 0
  %5643 = vmatpush1.bf16.msra.mxu0 0
  %5644 = vmatprep.subr.bf16.mxu0 0
  %5645 = vmatpush1.bf16.msra.mxu0 0
  %5646 = vmatprep.subr.bf16.mxu0 0
  %5647 = vmatpush1.bf16.msra.mxu0 0
  %5648 = vmatprep.subr.bf16.mxu0 0
  %5649 = vmatpush1.bf16.msra.mxu0 0
  %5650 = vmatprep.subr.bf16.mxu0 0
  %5651 = vmatpush1.bf16.msra.mxu0 0
  %5652 = vmatprep.subr.bf16.mxu0 0
  %5653 = vmatpush1.bf16.msra.mxu0 0
  %5654 = vmatprep.mubr.bf16.mxu0 0
  %5655 = vmatmul.mubr.bf16.gmra.mrb[0].mxu0 %v5130
  %v5656 = vpop.f32.mrb[0].mxu0
  %v5657 = vadd.f32 0.0, %v5656
  %v5658 = vpop.f32.mrb[0].mxu0
  %v5659 = vadd.f32 0.0, %v5658
  %v5660 = vpop.f32.mrb[0].mxu0
  %v5661 = vadd.f32 0.0, %v5660
  %v5662 = vpop.f32.mrb[0].mxu0
  %v5663 = vadd.f32 0.0, %v5662
  %5664 = vdwg.mxu0
  %5665 = vmatprep.subr.bf16.mxu0 %v5440
  %5666 = vmatpush1.bf16.msra.mxu0 %v5439
  %5667 = vmatprep.subr.bf16.mxu0 %v5449
  %5668 = vmatpush1.bf16.msra.mxu0 %v5448
  %5669 = vmatprep.subr.bf16.mxu0 %v5458
  %5670 = vmatpush1.bf16.msra.mxu0 %v5457
  %5671 = vmatprep.subr.bf16.mxu0 %v5467
  %5672 = vmatpush1.bf16.msra.mxu0 %v5466
  %5673 = vmatprep.subr.bf16.mxu0 %v5476
  %5674 = vmatpush1.bf16.msra.mxu0 %v5475
  %5675 = vmatprep.subr.bf16.mxu0 %v5485
  %5676 = vmatpush1.bf16.msra.mxu0 %v5484
  %5677 = vmatprep.subr.bf16.mxu0 %v5494
  %5678 = vmatpush1.bf16.msra.mxu0 %v5493
  %5679 = vmatprep.subr.bf16.mxu0 %v5503
  %5680 = vmatpush1.bf16.msra.mxu0 %v5502
  %5681 = vmatprep.subr.bf16.mxu0 0
  %5682 = vmatpush1.bf16.msra.mxu0 0
  %5683 = vmatprep.subr.bf16.mxu0 0
  %5684 = vmatpush1.bf16.msra.mxu0 0
  %5685 = vmatprep.subr.bf16.mxu0 0
  %5686 = vmatpush1.bf16.msra.mxu0 0
  %5687 = vmatprep.subr.bf16.mxu0 0
  %5688 = vmatpush1.bf16.msra.mxu0 0
  %5689 = vmatprep.subr.bf16.mxu0 0
  %5690 = vmatpush1.bf16.msra.mxu0 0
  %5691 = vmatprep.subr.bf16.mxu0 0
  %5692 = vmatpush1.bf16.msra.mxu0 0
  %5693 = vmatprep.subr.bf16.mxu0 0
  %5694 = vmatpush1.bf16.msra.mxu0 0
  %5695 = vmatprep.subr.bf16.mxu0 0
  %5696 = vmatpush1.bf16.msra.mxu0 0
  %5697 = vmatprep.mubr.bf16.mxu0 0
  %5698 = vmatmul.mubr.bf16.gmra.mrb[0].mxu0 %v5130
  %v5699 = vpop.f32.mrb[0].mxu0
  %v5700 = vadd.f32 0.0, %v5699
  %v5701 = vpop.f32.mrb[0].mxu0
  %v5702 = vadd.f32 0.0, %v5701
  %v5703 = vpop.f32.mrb[0].mxu0
  %v5704 = vadd.f32 0.0, %v5703
  %v5705 = vpop.f32.mrb[0].mxu0
  %v5706 = vadd.f32 0.0, %v5705
  %5707 = vdwg.mxu0
  %5708 = vmatprep.subr.bf16.mxu0 %v5442
  %5709 = vmatpush1.bf16.msra.mxu0 %v5441
  %5710 = vmatprep.subr.bf16.mxu0 %v5451
  %5711 = vmatpush1.bf16.msra.mxu0 %v5450
  %5712 = vmatprep.subr.bf16.mxu0 %v5460
  %5713 = vmatpush1.bf16.msra.mxu0 %v5459
  %5714 = vmatprep.subr.bf16.mxu0 %v5469
  %5715 = vmatpush1.bf16.msra.mxu0 %v5468
  %5716 = vmatprep.subr.bf16.mxu0 %v5478
  %5717 = vmatpush1.bf16.msra.mxu0 %v5477
  %5718 = vmatprep.subr.bf16.mxu0 %v5487
  %5719 = vmatpush1.bf16.msra.mxu0 %v5486
  %5720 = vmatprep.subr.bf16.mxu0 %v5496
  %5721 = vmatpush1.bf16.msra.mxu0 %v5495
  %5722 = vmatprep.subr.bf16.mxu0 %v5505
  %5723 = vmatpush1.bf16.msra.mxu0 %v5504
  %5724 = vmatprep.subr.bf16.mxu0 0
  %5725 = vmatpush1.bf16.msra.mxu0 0
  %5726 = vmatprep.subr.bf16.mxu0 0
  %5727 = vmatpush1.bf16.msra.mxu0 0
  %5728 = vmatprep.subr.bf16.mxu0 0
  %5729 = vmatpush1.bf16.msra.mxu0 0
  %5730 = vmatprep.subr.bf16.mxu0 0
  %5731 = vmatpush1.bf16.msra.mxu0 0
  %5732 = vmatprep.subr.bf16.mxu0 0
  %5733 = vmatpush1.bf16.msra.mxu0 0
  %5734 = vmatprep.subr.bf16.mxu0 0
  %5735 = vmatpush1.bf16.msra.mxu0 0
  %5736 = vmatprep.subr.bf16.mxu0 0
  %5737 = vmatpush1.bf16.msra.mxu0 0
  %5738 = vmatprep.subr.bf16.mxu0 0
  %5739 = vmatpush1.bf16.msra.mxu0 0
  %5740 = vmatprep.mubr.bf16.mxu0 0
  %5741 = vmatmul.mubr.bf16.gmra.mrb[0].mxu0 %v5130
  %v5742 = vpop.f32.mrb[0].mxu0
  %v5743 = vadd.f32 0.0, %v5742
  %v5744 = vpop.f32.mrb[0].mxu0
  %v5745 = vadd.f32 0.0, %v5744
  %v5746 = vpop.f32.mrb[0].mxu0
  %v5747 = vadd.f32 0.0, %v5746
  %v5748 = vpop.f32.mrb[0].mxu0
  %v5749 = vadd.f32 0.0, %v5748
  %5750 = vdwg.mxu0
  %5751 = vmatprep.subr.bf16.mxu0 0
  %5752 = vmatpush1.bf16.msra.mxu0 %v5443
  %5753 = vmatprep.subr.bf16.mxu0 0
  %5754 = vmatpush1.bf16.msra.mxu0 %v5452
  %5755 = vmatprep.subr.bf16.mxu0 0
  %5756 = vmatpush1.bf16.msra.mxu0 %v5461
  %5757 = vmatprep.subr.bf16.mxu0 0
  %5758 = vmatpush1.bf16.msra.mxu0 %v5470
  %5759 = vmatprep.subr.bf16.mxu0 0
  %5760 = vmatpush1.bf16.msra.mxu0 %v5479
  %5761 = vmatprep.subr.bf16.mxu0 0
  %5762 = vmatpush1.bf16.msra.mxu0 %v5488
  %5763 = vmatprep.subr.bf16.mxu0 0
  %5764 = vmatpush1.bf16.msra.mxu0 %v5497
  %5765 = vmatprep.subr.bf16.mxu0 0
  %5766 = vmatpush1.bf16.msra.mxu0 %v5506
  %5767 = vmatprep.subr.bf16.mxu0 0
  %5768 = vmatpush1.bf16.msra.mxu0 0
  %5769 = vmatprep.subr.bf16.mxu0 0
  %5770 = vmatpush1.bf16.msra.mxu0 0
  %5771 = vmatprep.subr.bf16.mxu0 0
  %5772 = vmatpush1.bf16.msra.mxu0 0
  %5773 = vmatprep.subr.bf16.mxu0 0
  %5774 = vmatpush1.bf16.msra.mxu0 0
  %5775 = vmatprep.subr.bf16.mxu0 0
  %5776 = vmatpush1.bf16.msra.mxu0 0
  %5777 = vmatprep.subr.bf16.mxu0 0
  %5778 = vmatpush1.bf16.msra.mxu0 0
  %5779 = vmatprep.subr.bf16.mxu0 0
  %5780 = vmatpush1.bf16.msra.mxu0 0
  %5781 = vmatprep.subr.bf16.mxu0 0
  %5782 = vmatpush1.bf16.msra.mxu0 0
  %5783 = vmatprep.mubr.bf16.mxu0 0
  %5784 = vmatmul.mubr.bf16.gmra.mrb[0].mxu0 %v5130
  %v5785 = vpop.f32.mrb[0].mxu0
  %v5786 = vadd.f32 0.0, %v5785
  %v5787 = vpop.f32.mrb[0].mxu0
  %v5788 = vpop.f32.mrb[0].mxu0
  %v5789 = vadd.f32 0.0, %v5788
  %v5790 = vpop.f32.mrb[0].mxu0
  %5791 = vdwg.mxu0
  %v5792 = vpack.c.bf16 %v5618, %v5614
  %v5793 = vpack.c.bf16 %v5620, %v5616
  %v5794 = vpack.c.bf16 %v5661, %v5657
  %v5795 = vpack.c.bf16 %v5663, %v5659
  %v5796 = vpack.c.bf16 %v5704, %v5700
  %v5797 = vpack.c.bf16 %v5706, %v5702
  %v5798 = vpack.c.bf16 %v5747, %v5743
  %v5799 = vpack.c.bf16 %v5749, %v5745
  %v5800 = vpack.c.bf16 %v5789, %v5786
  %v5801 = vld [vmem:[%s11] sm:$0xf]
  %v5802 = vld [vmem:[%s11 + $0x4] sm:$0xf]
  %v5803 = vld [vmem:[%s11 + $0x8] sm:$0xf]
  %v5804 = vld [vmem:[%s11 + $0xc] sm:$0xf]
  %s5805 = scalar_lea.vmem %s11, 16
  %v5806 = vld [vmem:[%s5805] sm:$0xf]
  %v5807 = vld [vmem:[%s5805 + $0x4] sm:$0xf]
  %v5808 = vld [vmem:[%s5805 + $0x8] sm:$0xf]
  %v5809 = vld [vmem:[%s5805 + $0xc] sm:$0xf]
  %v5814 = vunpack.c.l.b16 %v5806
  %v5815 = vunpack.c.l.b16 %v5807
  %v5816 = vunpack.c.l.b16 %v5808
  %v5817 = vunpack.c.l.b16 %v5809
  %v5818 = vpack.c.b16 %v5815, %v5814
  %v5819 = vpack.c.b16 %v5817, %v5816
  %v5821 = vsel %vm2306, %v5818, 0
  %v5824 = vsel %vm2306, %v5819, 0
  %5826 = vmatprep.subr.bf16.mxu0 0
  %5827 = vmatpush1.bf16.msra.mxu0 %v5793
  %5828 = vmatprep.subr.bf16.mxu0 0
  %5829 = vmatpush1.bf16.msra.mxu0 0
  %5830 = vmatprep.subr.bf16.mxu0 0
  %5831 = vmatpush1.bf16.msra.mxu0 0
  %5832 = vmatprep.subr.bf16.mxu0 0
  %5833 = vmatpush1.bf16.msra.mxu0 0
  %5834 = vmatprep.subr.bf16.mxu0 0
  %5835 = vmatpush1.bf16.msra.mxu0 0
  %5836 = vmatprep.subr.bf16.mxu0 0
  %5837 = vmatpush1.bf16.msra.mxu0 0
  %5838 = vmatprep.subr.bf16.mxu0 0
  %5839 = vmatpush1.bf16.msra.mxu0 0
  %5840 = vmatprep.subr.bf16.mxu0 0
  %5841 = vmatpush1.bf16.msra.mxu0 0
  %5842 = vmatprep.subr.bf16.mxu0 0
  %5843 = vmatpush1.bf16.msra.mxu0 0
  %5844 = vmatprep.subr.bf16.mxu0 0
  %5845 = vmatpush1.bf16.msra.mxu0 0
  %5846 = vmatprep.subr.bf16.mxu0 0
  %5847 = vmatpush1.bf16.msra.mxu0 0
  %5848 = vmatprep.subr.bf16.mxu0 0
  %5849 = vmatpush1.bf16.msra.mxu0 0
  %5850 = vmatprep.subr.bf16.mxu0 0
  %5851 = vmatpush1.bf16.msra.mxu0 0
  %5852 = vmatprep.subr.bf16.mxu0 0
  %5853 = vmatpush1.bf16.msra.mxu0 0
  %5854 = vmatprep.subr.bf16.mxu0 0
  %5855 = vmatpush1.bf16.msra.mxu0 0
  %5856 = vmatprep.subr.bf16.mxu0 0
  %5857 = vmatpush1.bf16.msra.mxu0 0
  %5858 = vmatprep.mubr.bf16.mxu0 0
  %5859 = vmatmul.mubr.bf16.gmra.mrb[0].mxu0 %v5821
  %v5860 = vpop.f32.mrb[0].mxu0
  %v5861 = vadd.f32 0.0, %v5860
  %v5862 = vpop.f32.mrb[0].mxu0
  %v5863 = vpop.f32.mrb[0].mxu0
  %v5864 = vadd.f32 0.0, %v5863
  %v5865 = vpop.f32.mrb[0].mxu0
  %5866 = vmatprep.mubr.bf16.mxu0 0
  %5867 = vmatmul.mubr.bf16.gmra.mrb[0].mxu0 %v5824
  %v5868 = vpop.f32.mrb[0].mxu0
  %v5869 = vadd.f32 0.0, %v5868
  %v5870 = vpop.f32.mrb[0].mxu0
  %v5871 = vpop.f32.mrb[0].mxu0
  %v5872 = vadd.f32 0.0, %v5871
  %v5873 = vpop.f32.mrb[0].mxu0
  %5874 = vdwg.mxu0
  %v5879 = vunpack.c.l.b16 %v5801
  %v5880 = vunpack.c.l.b16 %v5802
  %v5881 = vunpack.c.l.b16 %v5803
  %v5882 = vunpack.c.l.b16 %v5804
  %v5883 = vpack.c.b16 %v5880, %v5879
  %v5884 = vpack.c.b16 %v5882, %v5881
  %v5886 = vsel %vm2306, %v5883, 0
  %v5889 = vsel %vm2306, %v5884, 0
  %5891 = vmatprep.subr.bf16.mxu0 0
  %5892 = vmatpush1.bf16.msra.mxu0 %v5792
  %5893 = vmatprep.subr.bf16.mxu0 0
  %5894 = vmatpush1.bf16.msra.mxu0 0
  %5895 = vmatprep.subr.bf16.mxu0 0
  %5896 = vmatpush1.bf16.msra.mxu0 0
  %5897 = vmatprep.subr.bf16.mxu0 0
  %5898 = vmatpush1.bf16.msra.mxu0 0
  %5899 = vmatprep.subr.bf16.mxu0 0
  %5900 = vmatpush1.bf16.msra.mxu0 0
  %5901 = vmatprep.subr.bf16.mxu0 0
  %5902 = vmatpush1.bf16.msra.mxu0 0
  %5903 = vmatprep.subr.bf16.mxu0 0
  %5904 = vmatpush1.bf16.msra.mxu0 0
  %5905 = vmatprep.subr.bf16.mxu0 0
  %5906 = vmatpush1.bf16.msra.mxu0 0
  %5907 = vmatprep.subr.bf16.mxu0 0
  %5908 = vmatpush1.bf16.msra.mxu0 0
  %5909 = vmatprep.subr.bf16.mxu0 0
  %5910 = vmatpush1.bf16.msra.mxu0 0
  %5911 = vmatprep.subr.bf16.mxu0 0
  %5912 = vmatpush1.bf16.msra.mxu0 0
  %5913 = vmatprep.subr.bf16.mxu0 0
  %5914 = vmatpush1.bf16.msra.mxu0 0
  %5915 = vmatprep.subr.bf16.mxu0 0
  %5916 = vmatpush1.bf16.msra.mxu0 0
  %5917 = vmatprep.subr.bf16.mxu0 0
  %5918 = vmatpush1.bf16.msra.mxu0 0
  %5919 = vmatprep.subr.bf16.mxu0 0
  %5920 = vmatpush1.bf16.msra.mxu0 0
  %5921 = vmatprep.subr.bf16.mxu0 0
  %5922 = vmatpush1.bf16.msra.mxu0 0
  %5923 = vmatprep.mubr.bf16.mxu0 0
  %5924 = vmatmul.mubr.bf16.gmra.mrb[0].mxu0 %v5886
  %v5925 = vpop.f32.mrb[0].mxu0
  %v5926 = vadd.f32 %v5861, %v5925
  %v5927 = vpop.f32.mrb[0].mxu0
  %v5928 = vpop.f32.mrb[0].mxu0
  %v5929 = vadd.f32 %v5864, %v5928
  %v5930 = vpop.f32.mrb[0].mxu0
  %5931 = vmatprep.mubr.bf16.mxu0 0
  %5932 = vmatmul.mubr.bf16.gmra.mrb[0].mxu0 %v5889
  %v5933 = vpop.f32.mrb[0].mxu0
  %v5934 = vadd.f32 %v5869, %v5933
  %v5935 = vpop.f32.mrb[0].mxu0
  %v5936 = vpop.f32.mrb[0].mxu0
  %v5937 = vadd.f32 %v5872, %v5936
  %v5938 = vpop.f32.mrb[0].mxu0
  %5939 = vdwg.mxu0
  %s5940 = scalar_lea.vmem %s11, 32
  %v5941 = vld [vmem:[%s5940] sm:$0xf]
  %v5942 = vld [vmem:[%s5940 + $0x4] sm:$0xf]
  %v5943 = vld [vmem:[%s5940 + $0x8] sm:$0xf]
  %v5944 = vld [vmem:[%s5940 + $0xc] sm:$0xf]
  %v5949 = vunpack.c.l.b16 %v5941
  %v5950 = vunpack.c.l.b16 %v5942
  %v5951 = vunpack.c.l.b16 %v5943
  %v5952 = vunpack.c.l.b16 %v5944
  %v5953 = vpack.c.b16 %v5950, %v5949
  %v5954 = vpack.c.b16 %v5952, %v5951
  %v5956 = vsel %vm2306, %v5953, 0
  %v5959 = vsel %vm2306, %v5954, 0
  %5961 = vmatprep.subr.bf16.mxu0 0
  %5962 = vmatpush1.bf16.msra.mxu0 %v5794
  %5963 = vmatprep.subr.bf16.mxu0 0
  %5964 = vmatpush1.bf16.msra.mxu0 0
  %5965 = vmatprep.subr.bf16.mxu0 0
  %5966 = vmatpush1.bf16.msra.mxu0 0
  %5967 = vmatprep.subr.bf16.mxu0 0
  %5968 = vmatpush1.bf16.msra.mxu0 0
  %5969 = vmatprep.subr.bf16.mxu0 0
  %5970 = vmatpush1.bf16.msra.mxu0 0
  %5971 = vmatprep.subr.bf16.mxu0 0
  %5972 = vmatpush1.bf16.msra.mxu0 0
  %5973 = vmatprep.subr.bf16.mxu0 0
  %5974 = vmatpush1.bf16.msra.mxu0 0
  %5975 = vmatprep.subr.bf16.mxu0 0
  %5976 = vmatpush1.bf16.msra.mxu0 0
  %5977 = vmatprep.subr.bf16.mxu0 0
  %5978 = vmatpush1.bf16.msra.mxu0 0
  %5979 = vmatprep.subr.bf16.mxu0 0
  %5980 = vmatpush1.bf16.msra.mxu0 0
  %5981 = vmatprep.subr.bf16.mxu0 0
  %5982 = vmatpush1.bf16.msra.mxu0 0
  %5983 = vmatprep.subr.bf16.mxu0 0
  %5984 = vmatpush1.bf16.msra.mxu0 0
  %5985 = vmatprep.subr.bf16.mxu0 0
  %5986 = vmatpush1.bf16.msra.mxu0 0
  %5987 = vmatprep.subr.bf16.mxu0 0
  %5988 = vmatpush1.bf16.msra.mxu0 0
  %5989 = vmatprep.subr.bf16.mxu0 0
  %5990 = vmatpush1.bf16.msra.mxu0 0
  %5991 = vmatprep.subr.bf16.mxu0 0
  %5992 = vmatpush1.bf16.msra.mxu0 0
  %5993 = vmatprep.mubr.bf16.mxu0 0
  %5994 = vmatmul.mubr.bf16.gmra.mrb[0].mxu0 %v5956
  %v5995 = vpop.f32.mrb[0].mxu0
  %v5996 = vadd.f32 0.0, %v5995
  %v5997 = vpop.f32.mrb[0].mxu0
  %v5998 = vpop.f32.mrb[0].mxu0
  %v5999 = vadd.f32 0.0, %v5998
  %v6000 = vpop.f32.mrb[0].mxu0
  %6001 = vmatprep.mubr.bf16.mxu0 0
  %6002 = vmatmul.mubr.bf16.gmra.mrb[0].mxu0 %v5959
  %v6003 = vpop.f32.mrb[0].mxu0
  %v6004 = vadd.f32 0.0, %v6003
  %v6005 = vpop.f32.mrb[0].mxu0
  %v6006 = vpop.f32.mrb[0].mxu0
  %v6007 = vadd.f32 0.0, %v6006
  %v6008 = vpop.f32.mrb[0].mxu0
  %6009 = vdwg.mxu0
  %v6010 = vadd.f32 %v5926, %v5996
  %v6011 = vadd.f32 %v5929, %v5999
  %v6012 = vadd.f32 %v5934, %v6004
  %v6013 = vadd.f32 %v5937, %v6007
  %s6014 = scalar_lea.vmem %s11, 48
  %v6015 = vld [vmem:[%s6014] sm:$0xf]
  %v6016 = vld [vmem:[%s6014 + $0x4] sm:$0xf]
  %v6017 = vld [vmem:[%s6014 + $0x8] sm:$0xf]
  %v6018 = vld [vmem:[%s6014 + $0xc] sm:$0xf]
  %v6023 = vunpack.c.l.b16 %v6015
  %v6024 = vunpack.c.l.b16 %v6016
  %v6025 = vunpack.c.l.b16 %v6017
  %v6026 = vunpack.c.l.b16 %v6018
  %v6027 = vpack.c.b16 %v6024, %v6023
  %v6028 = vpack.c.b16 %v6026, %v6025
  %v6030 = vsel %vm2306, %v6027, 0
  %v6033 = vsel %vm2306, %v6028, 0
  %6035 = vmatprep.subr.bf16.mxu0 0
  %6036 = vmatpush1.bf16.msra.mxu0 %v5795
  %6037 = vmatprep.subr.bf16.mxu0 0
  %6038 = vmatpush1.bf16.msra.mxu0 0
  %6039 = vmatprep.subr.bf16.mxu0 0
  %6040 = vmatpush1.bf16.msra.mxu0 0
  %6041 = vmatprep.subr.bf16.mxu0 0
  %6042 = vmatpush1.bf16.msra.mxu0 0
  %6043 = vmatprep.subr.bf16.mxu0 0
  %6044 = vmatpush1.bf16.msra.mxu0 0
  %6045 = vmatprep.subr.bf16.mxu0 0
  %6046 = vmatpush1.bf16.msra.mxu0 0
  %6047 = vmatprep.subr.bf16.mxu0 0
  %6048 = vmatpush1.bf16.msra.mxu0 0
  %6049 = vmatprep.subr.bf16.mxu0 0
  %6050 = vmatpush1.bf16.msra.mxu0 0
  %6051 = vmatprep.subr.bf16.mxu0 0
  %6052 = vmatpush1.bf16.msra.mxu0 0
  %6053 = vmatprep.subr.bf16.mxu0 0
  %6054 = vmatpush1.bf16.msra.mxu0 0
  %6055 = vmatprep.subr.bf16.mxu0 0
  %6056 = vmatpush1.bf16.msra.mxu0 0
  %6057 = vmatprep.subr.bf16.mxu0 0
  %6058 = vmatpush1.bf16.msra.mxu0 0
  %6059 = vmatprep.subr.bf16.mxu0 0
  %6060 = vmatpush1.bf16.msra.mxu0 0
  %6061 = vmatprep.subr.bf16.mxu0 0
  %6062 = vmatpush1.bf16.msra.mxu0 0
  %6063 = vmatprep.subr.bf16.mxu0 0
  %6064 = vmatpush1.bf16.msra.mxu0 0
  %6065 = vmatprep.subr.bf16.mxu0 0
  %6066 = vmatpush1.bf16.msra.mxu0 0
  %6067 = vmatprep.mubr.bf16.mxu0 0
  %6068 = vmatmul.mubr.bf16.gmra.mrb[0].mxu0 %v6030
  %v6069 = vpop.f32.mrb[0].mxu0
  %v6070 = vadd.f32 0.0, %v6069
  %v6071 = vpop.f32.mrb[0].mxu0
  %v6072 = vpop.f32.mrb[0].mxu0
  %v6073 = vadd.f32 0.0, %v6072
  %v6074 = vpop.f32.mrb[0].mxu0
  %6075 = vmatprep.mubr.bf16.mxu0 0
  %6076 = vmatmul.mubr.bf16.gmra.mrb[0].mxu0 %v6033
  %v6077 = vpop.f32.mrb[0].mxu0
  %v6078 = vadd.f32 0.0, %v6077
  %v6079 = vpop.f32.mrb[0].mxu0
  %v6080 = vpop.f32.mrb[0].mxu0
  %v6081 = vadd.f32 0.0, %v6080
  %v6082 = vpop.f32.mrb[0].mxu0
  %6083 = vdwg.mxu0
  %v6084 = vadd.f32 %v6010, %v6070
  %v6085 = vadd.f32 %v6011, %v6073
  %v6086 = vadd.f32 %v6012, %v6078
  %v6087 = vadd.f32 %v6013, %v6081
  %s6088 = scalar_lea.vmem %s11, 64
  %v6089 = vld [vmem:[%s6088] sm:$0xf]
  %v6090 = vld [vmem:[%s6088 + $0x4] sm:$0xf]
  %v6091 = vld [vmem:[%s6088 + $0x8] sm:$0xf]
  %v6092 = vld [vmem:[%s6088 + $0xc] sm:$0xf]
  %v6097 = vunpack.c.l.b16 %v6089
  %v6098 = vunpack.c.l.b16 %v6090
  %v6099 = vunpack.c.l.b16 %v6091
  %v6100 = vunpack.c.l.b16 %v6092
  %v6101 = vpack.c.b16 %v6098, %v6097
  %v6102 = vpack.c.b16 %v6100, %v6099
  %v6104 = vsel %vm2306, %v6101, 0
  %v6107 = vsel %vm2306, %v6102, 0
  %6109 = vmatprep.subr.bf16.mxu0 0
  %6110 = vmatpush1.bf16.msra.mxu0 %v5796
  %6111 = vmatprep.subr.bf16.mxu0 0
  %6112 = vmatpush1.bf16.msra.mxu0 0
  %6113 = vmatprep.subr.bf16.mxu0 0
  %6114 = vmatpush1.bf16.msra.mxu0 0
  %6115 = vmatprep.subr.bf16.mxu0 0
  %6116 = vmatpush1.bf16.msra.mxu0 0
  %6117 = vmatprep.subr.bf16.mxu0 0
  %6118 = vmatpush1.bf16.msra.mxu0 0
  %6119 = vmatprep.subr.bf16.mxu0 0
  %6120 = vmatpush1.bf16.msra.mxu0 0
  %6121 = vmatprep.subr.bf16.mxu0 0
  %6122 = vmatpush1.bf16.msra.mxu0 0
  %6123 = vmatprep.subr.bf16.mxu0 0
  %6124 = vmatpush1.bf16.msra.mxu0 0
  %6125 = vmatprep.subr.bf16.mxu0 0
  %6126 = vmatpush1.bf16.msra.mxu0 0
  %6127 = vmatprep.subr.bf16.mxu0 0
  %6128 = vmatpush1.bf16.msra.mxu0 0
  %6129 = vmatprep.subr.bf16.mxu0 0
  %6130 = vmatpush1.bf16.msra.mxu0 0
  %6131 = vmatprep.subr.bf16.mxu0 0
  %6132 = vmatpush1.bf16.msra.mxu0 0
  %6133 = vmatprep.subr.bf16.mxu0 0
  %6134 = vmatpush1.bf16.msra.mxu0 0
  %6135 = vmatprep.subr.bf16.mxu0 0
  %6136 = vmatpush1.bf16.msra.mxu0 0
  %6137 = vmatprep.subr.bf16.mxu0 0
  %6138 = vmatpush1.bf16.msra.mxu0 0
  %6139 = vmatprep.subr.bf16.mxu0 0
  %6140 = vmatpush1.bf16.msra.mxu0 0
  %6141 = vmatprep.mubr.bf16.mxu0 0
  %6142 = vmatmul.mubr.bf16.gmra.mrb[0].mxu0 %v6104
  %v6143 = vpop.f32.mrb[0].mxu0
  %v6144 = vadd.f32 0.0, %v6143
  %v6145 = vpop.f32.mrb[0].mxu0
  %v6146 = vpop.f32.mrb[0].mxu0
  %v6147 = vadd.f32 0.0, %v6146
  %v6148 = vpop.f32.mrb[0].mxu0
  %6149 = vmatprep.mubr.bf16.mxu0 0
  %6150 = vmatmul.mubr.bf16.gmra.mrb[0].mxu0 %v6107
  %v6151 = vpop.f32.mrb[0].mxu0
  %v6152 = vadd.f32 0.0, %v6151
  %v6153 = vpop.f32.mrb[0].mxu0
  %v6154 = vpop.f32.mrb[0].mxu0
  %v6155 = vadd.f32 0.0, %v6154
  %v6156 = vpop.f32.mrb[0].mxu0
  %6157 = vdwg.mxu0
  %v6158 = vadd.f32 %v6084, %v6144
  %v6159 = vadd.f32 %v6085, %v6147
  %v6160 = vadd.f32 %v6086, %v6152
  %v6161 = vadd.f32 %v6087, %v6155
  %s6162 = scalar_lea.vmem %s11, 80
  %v6163 = vld [vmem:[%s6162] sm:$0xf]
  %v6164 = vld [vmem:[%s6162 + $0x4] sm:$0xf]
  %v6165 = vld [vmem:[%s6162 + $0x8] sm:$0xf]
  %v6166 = vld [vmem:[%s6162 + $0xc] sm:$0xf]
  %v6171 = vunpack.c.l.b16 %v6163
  %v6172 = vunpack.c.l.b16 %v6164
  %v6173 = vunpack.c.l.b16 %v6165
  %v6174 = vunpack.c.l.b16 %v6166
  %v6175 = vpack.c.b16 %v6172, %v6171
  %v6176 = vpack.c.b16 %v6174, %v6173
  %v6178 = vsel %vm2306, %v6175, 0
  %v6181 = vsel %vm2306, %v6176, 0
  %6183 = vmatprep.subr.bf16.mxu0 0
  %6184 = vmatpush1.bf16.msra.mxu0 %v5797
  %6185 = vmatprep.subr.bf16.mxu0 0
  %6186 = vmatpush1.bf16.msra.mxu0 0
  %6187 = vmatprep.subr.bf16.mxu0 0
  %6188 = vmatpush1.bf16.msra.mxu0 0
  %6189 = vmatprep.subr.bf16.mxu0 0
  %6190 = vmatpush1.bf16.msra.mxu0 0
  %6191 = vmatprep.subr.bf16.mxu0 0
  %6192 = vmatpush1.bf16.msra.mxu0 0
  %6193 = vmatprep.subr.bf16.mxu0 0
  %6194 = vmatpush1.bf16.msra.mxu0 0
  %6195 = vmatprep.subr.bf16.mxu0 0
  %6196 = vmatpush1.bf16.msra.mxu0 0
  %6197 = vmatprep.subr.bf16.mxu0 0
  %6198 = vmatpush1.bf16.msra.mxu0 0
  %6199 = vmatprep.subr.bf16.mxu0 0
  %6200 = vmatpush1.bf16.msra.mxu0 0
  %6201 = vmatprep.subr.bf16.mxu0 0
  %6202 = vmatpush1.bf16.msra.mxu0 0
  %6203 = vmatprep.subr.bf16.mxu0 0
  %6204 = vmatpush1.bf16.msra.mxu0 0
  %6205 = vmatprep.subr.bf16.mxu0 0
  %6206 = vmatpush1.bf16.msra.mxu0 0
  %6207 = vmatprep.subr.bf16.mxu0 0
  %6208 = vmatpush1.bf16.msra.mxu0 0
  %6209 = vmatprep.subr.bf16.mxu0 0
  %6210 = vmatpush1.bf16.msra.mxu0 0
  %6211 = vmatprep.subr.bf16.mxu0 0
  %6212 = vmatpush1.bf16.msra.mxu0 0
  %6213 = vmatprep.subr.bf16.mxu0 0
  %6214 = vmatpush1.bf16.msra.mxu0 0
  %6215 = vmatprep.mubr.bf16.mxu0 0
  %6216 = vmatmul.mubr.bf16.gmra.mrb[0].mxu0 %v6178
  %v6217 = vpop.f32.mrb[0].mxu0
  %v6218 = vadd.f32 0.0, %v6217
  %v6219 = vpop.f32.mrb[0].mxu0
  %v6220 = vpop.f32.mrb[0].mxu0
  %v6221 = vadd.f32 0.0, %v6220
  %v6222 = vpop.f32.mrb[0].mxu0
  %6223 = vmatprep.mubr.bf16.mxu0 0
  %6224 = vmatmul.mubr.bf16.gmra.mrb[0].mxu0 %v6181
  %v6225 = vpop.f32.mrb[0].mxu0
  %v6226 = vadd.f32 0.0, %v6225
  %v6227 = vpop.f32.mrb[0].mxu0
  %v6228 = vpop.f32.mrb[0].mxu0
  %v6229 = vadd.f32 0.0, %v6228
  %v6230 = vpop.f32.mrb[0].mxu0
  %6231 = vdwg.mxu0
  %v6232 = vadd.f32 %v6158, %v6218
  %v6233 = vadd.f32 %v6159, %v6221
  %v6234 = vadd.f32 %v6160, %v6226
  %v6235 = vadd.f32 %v6161, %v6229
  %s6236 = scalar_lea.vmem %s11, 96
  %v6237 = vld [vmem:[%s6236] sm:$0xf]
  %v6238 = vld [vmem:[%s6236 + $0x4] sm:$0xf]
  %v6239 = vld [vmem:[%s6236 + $0x8] sm:$0xf]
  %v6240 = vld [vmem:[%s6236 + $0xc] sm:$0xf]
  %v6245 = vunpack.c.l.b16 %v6237
  %v6246 = vunpack.c.l.b16 %v6238
  %v6247 = vunpack.c.l.b16 %v6239
  %v6248 = vunpack.c.l.b16 %v6240
  %v6249 = vpack.c.b16 %v6246, %v6245
  %v6250 = vpack.c.b16 %v6248, %v6247
  %v6252 = vsel %vm2306, %v6249, 0
  %v6255 = vsel %vm2306, %v6250, 0
  %6257 = vmatprep.subr.bf16.mxu0 0
  %6258 = vmatpush1.bf16.msra.mxu0 %v5798
  %6259 = vmatprep.subr.bf16.mxu0 0
  %6260 = vmatpush1.bf16.msra.mxu0 0
  %6261 = vmatprep.subr.bf16.mxu0 0
  %6262 = vmatpush1.bf16.msra.mxu0 0
  %6263 = vmatprep.subr.bf16.mxu0 0
  %6264 = vmatpush1.bf16.msra.mxu0 0
  %6265 = vmatprep.subr.bf16.mxu0 0
  %6266 = vmatpush1.bf16.msra.mxu0 0
  %6267 = vmatprep.subr.bf16.mxu0 0
  %6268 = vmatpush1.bf16.msra.mxu0 0
  %6269 = vmatprep.subr.bf16.mxu0 0
  %6270 = vmatpush1.bf16.msra.mxu0 0
  %6271 = vmatprep.subr.bf16.mxu0 0
  %6272 = vmatpush1.bf16.msra.mxu0 0
  %6273 = vmatprep.subr.bf16.mxu0 0
  %6274 = vmatpush1.bf16.msra.mxu0 0
  %6275 = vmatprep.subr.bf16.mxu0 0
  %6276 = vmatpush1.bf16.msra.mxu0 0
  %6277 = vmatprep.subr.bf16.mxu0 0
  %6278 = vmatpush1.bf16.msra.mxu0 0
  %6279 = vmatprep.subr.bf16.mxu0 0
  %6280 = vmatpush1.bf16.msra.mxu0 0
  %6281 = vmatprep.subr.bf16.mxu0 0
  %6282 = vmatpush1.bf16.msra.mxu0 0
  %6283 = vmatprep.subr.bf16.mxu0 0
  %6284 = vmatpush1.bf16.msra.mxu0 0
  %6285 = vmatprep.subr.bf16.mxu0 0
  %6286 = vmatpush1.bf16.msra.mxu0 0
  %6287 = vmatprep.subr.bf16.mxu0 0
  %6288 = vmatpush1.bf16.msra.mxu0 0
  %6289 = vmatprep.mubr.bf16.mxu0 0
  %6290 = vmatmul.mubr.bf16.gmra.mrb[0].mxu0 %v6252
  %v6291 = vpop.f32.mrb[0].mxu0
  %v6292 = vadd.f32 0.0, %v6291
  %v6293 = vpop.f32.mrb[0].mxu0
  %v6294 = vpop.f32.mrb[0].mxu0
  %v6295 = vadd.f32 0.0, %v6294
  %v6296 = vpop.f32.mrb[0].mxu0
  %6297 = vmatprep.mubr.bf16.mxu0 0
  %6298 = vmatmul.mubr.bf16.gmra.mrb[0].mxu0 %v6255
  %v6299 = vpop.f32.mrb[0].mxu0
  %v6300 = vadd.f32 0.0, %v6299
  %v6301 = vpop.f32.mrb[0].mxu0
  %v6302 = vpop.f32.mrb[0].mxu0
  %v6303 = vadd.f32 0.0, %v6302
  %v6304 = vpop.f32.mrb[0].mxu0
  %6305 = vdwg.mxu0
  %v6306 = vadd.f32 %v6232, %v6292
  %v6307 = vadd.f32 %v6233, %v6295
  %v6308 = vadd.f32 %v6234, %v6300
  %v6309 = vadd.f32 %v6235, %v6303
  %s6310 = scalar_lea.vmem %s11, 112
  %v6311 = vld [vmem:[%s6310] sm:$0xf]
  %v6312 = vld [vmem:[%s6310 + $0x4] sm:$0xf]
  %v6313 = vld [vmem:[%s6310 + $0x8] sm:$0xf]
  %v6314 = vld [vmem:[%s6310 + $0xc] sm:$0xf]
  %v6319 = vunpack.c.l.b16 %v6311
  %v6320 = vunpack.c.l.b16 %v6312
  %v6321 = vunpack.c.l.b16 %v6313
  %v6322 = vunpack.c.l.b16 %v6314
  %v6323 = vpack.c.b16 %v6320, %v6319
  %v6324 = vpack.c.b16 %v6322, %v6321
  %v6326 = vsel %vm2306, %v6323, 0
  %v6329 = vsel %vm2306, %v6324, 0
  %6331 = vmatprep.subr.bf16.mxu0 0
  %6332 = vmatpush1.bf16.msra.mxu0 %v5799
  %6333 = vmatprep.subr.bf16.mxu0 0
  %6334 = vmatpush1.bf16.msra.mxu0 0
  %6335 = vmatprep.subr.bf16.mxu0 0
  %6336 = vmatpush1.bf16.msra.mxu0 0
  %6337 = vmatprep.subr.bf16.mxu0 0
  %6338 = vmatpush1.bf16.msra.mxu0 0
  %6339 = vmatprep.subr.bf16.mxu0 0
  %6340 = vmatpush1.bf16.msra.mxu0 0
  %6341 = vmatprep.subr.bf16.mxu0 0
  %6342 = vmatpush1.bf16.msra.mxu0 0
  %6343 = vmatprep.subr.bf16.mxu0 0
  %6344 = vmatpush1.bf16.msra.mxu0 0
  %6345 = vmatprep.subr.bf16.mxu0 0
  %6346 = vmatpush1.bf16.msra.mxu0 0
  %6347 = vmatprep.subr.bf16.mxu0 0
  %6348 = vmatpush1.bf16.msra.mxu0 0
  %6349 = vmatprep.subr.bf16.mxu0 0
  %6350 = vmatpush1.bf16.msra.mxu0 0
  %6351 = vmatprep.subr.bf16.mxu0 0
  %6352 = vmatpush1.bf16.msra.mxu0 0
  %6353 = vmatprep.subr.bf16.mxu0 0
  %6354 = vmatpush1.bf16.msra.mxu0 0
  %6355 = vmatprep.subr.bf16.mxu0 0
  %6356 = vmatpush1.bf16.msra.mxu0 0
  %6357 = vmatprep.subr.bf16.mxu0 0
  %6358 = vmatpush1.bf16.msra.mxu0 0
  %6359 = vmatprep.subr.bf16.mxu0 0
  %6360 = vmatpush1.bf16.msra.mxu0 0
  %6361 = vmatprep.subr.bf16.mxu0 0
  %6362 = vmatpush1.bf16.msra.mxu0 0
  %6363 = vmatprep.mubr.bf16.mxu0 0
  %6364 = vmatmul.mubr.bf16.gmra.mrb[0].mxu0 %v6326
  %v6365 = vpop.f32.mrb[0].mxu0
  %v6366 = vadd.f32 0.0, %v6365
  %v6367 = vpop.f32.mrb[0].mxu0
  %v6368 = vpop.f32.mrb[0].mxu0
  %v6369 = vadd.f32 0.0, %v6368
  %v6370 = vpop.f32.mrb[0].mxu0
  %6371 = vmatprep.mubr.bf16.mxu0 0
  %6372 = vmatmul.mubr.bf16.gmra.mrb[0].mxu0 %v6329
  %v6373 = vpop.f32.mrb[0].mxu0
  %v6374 = vadd.f32 0.0, %v6373
  %v6375 = vpop.f32.mrb[0].mxu0
  %v6376 = vpop.f32.mrb[0].mxu0
  %v6377 = vadd.f32 0.0, %v6376
  %v6378 = vpop.f32.mrb[0].mxu0
  %6379 = vdwg.mxu0
  %v6380 = vadd.f32 %v6306, %v6366
  %v6381 = vadd.f32 %v6307, %v6369
  %v6382 = vadd.f32 %v6308, %v6374
  %v6383 = vadd.f32 %v6309, %v6377
  %s6384 = scalar_lea.vmem %s11, 128
  %v6385 = vld [vmem:[%s6384] sm:$0xf]
  %v6386 = vld [vmem:[%s6384 + $0x4] sm:$0xf]
  %v6387 = vld [vmem:[%s6384 + $0x8] sm:$0xf]
  %v6388 = vld [vmem:[%s6384 + $0xc] sm:$0xf]
  %v6393 = vunpack.c.l.b16 %v6385
  %v6394 = vunpack.c.l.b16 %v6386
  %v6395 = vunpack.c.l.b16 %v6387
  %v6396 = vunpack.c.l.b16 %v6388
  %v6397 = vpack.c.b16 %v6394, %v6393
  %v6398 = vpack.c.b16 %v6396, %v6395
  %v6400 = vsel %vm2306, %v6397, 0
  %v6403 = vsel %vm2306, %v6398, 0
  %6405 = vmatprep.subr.bf16.mxu0 0
  %6406 = vmatpush1.bf16.msra.mxu0 %v5800
  %6407 = vmatprep.subr.bf16.mxu0 0
  %6408 = vmatpush1.bf16.msra.mxu0 0
  %6409 = vmatprep.subr.bf16.mxu0 0
  %6410 = vmatpush1.bf16.msra.mxu0 0
  %6411 = vmatprep.subr.bf16.mxu0 0
  %6412 = vmatpush1.bf16.msra.mxu0 0
  %6413 = vmatprep.subr.bf16.mxu0 0
  %6414 = vmatpush1.bf16.msra.mxu0 0
  %6415 = vmatprep.subr.bf16.mxu0 0
  %6416 = vmatpush1.bf16.msra.mxu0 0
  %6417 = vmatprep.subr.bf16.mxu0 0
  %6418 = vmatpush1.bf16.msra.mxu0 0
  %6419 = vmatprep.subr.bf16.mxu0 0
  %6420 = vmatpush1.bf16.msra.mxu0 0
  %6421 = vmatprep.subr.bf16.mxu0 0
  %6422 = vmatpush1.bf16.msra.mxu0 0
  %6423 = vmatprep.subr.bf16.mxu0 0
  %6424 = vmatpush1.bf16.msra.mxu0 0
  %6425 = vmatprep.subr.bf16.mxu0 0
  %6426 = vmatpush1.bf16.msra.mxu0 0
  %6427 = vmatprep.subr.bf16.mxu0 0
  %6428 = vmatpush1.bf16.msra.mxu0 0
  %6429 = vmatprep.subr.bf16.mxu0 0
  %6430 = vmatpush1.bf16.msra.mxu0 0
  %6431 = vmatprep.subr.bf16.mxu0 0
  %6432 = vmatpush1.bf16.msra.mxu0 0
  %6433 = vmatprep.subr.bf16.mxu0 0
  %6434 = vmatpush1.bf16.msra.mxu0 0
  %6435 = vmatprep.subr.bf16.mxu0 0
  %6436 = vmatpush1.bf16.msra.mxu0 0
  %6437 = vmatprep.mubr.bf16.mxu0 0
  %6438 = vmatmul.mubr.bf16.gmra.mrb[0].mxu0 %v6400
  %v6439 = vpop.f32.mrb[0].mxu0
  %v6440 = vadd.f32 0.0, %v6439
  %v6441 = vpop.f32.mrb[0].mxu0
  %v6442 = vpop.f32.mrb[0].mxu0
  %v6443 = vadd.f32 0.0, %v6442
  %v6444 = vpop.f32.mrb[0].mxu0
  %6445 = vmatprep.mubr.bf16.mxu0 0
  %6446 = vmatmul.mubr.bf16.gmra.mrb[0].mxu0 %v6403
  %v6447 = vpop.f32.mrb[0].mxu0
  %v6448 = vadd.f32 0.0, %v6447
  %v6449 = vpop.f32.mrb[0].mxu0
  %v6450 = vpop.f32.mrb[0].mxu0
  %v6451 = vadd.f32 0.0, %v6450
  %v6452 = vpop.f32.mrb[0].mxu0
  %6453 = vdwg.mxu0
  %v6454 = vadd.f32 %v6380, %v6440
  %v6455 = vadd.f32 %v6381, %v6443
  %v6456 = vadd.f32 %v6382, %v6448
  %v6457 = vadd.f32 %v6383, %v6451
  %v6458 = vld [vmem:[%s12] sm:$0xff]
  %v6459 = vld [vmem:[%s12 + $0x8] sm:$0xff]
  %v6460 = vld [vmem:[%s12 + $0x10] sm:$0xff]
  %v6461 = vld [vmem:[%s12 + $0x18] sm:$0xff]
  %6463 = vset.pattern.permute.xlu0 0
  %6464 = vperm.xlu0 %6463, %v6458
  %v6465 = vpop.permute.xlu0 %6464
  %6468 = vset.pattern.permute.xlu0 0
  %6469 = vperm.xlu0 %6468, %v6459
  %v6470 = vpop.permute.xlu0 %6469
  %6473 = vset.pattern.permute.xlu0 0
  %6474 = vperm.xlu0 %6473, %v6460
  %v6475 = vpop.permute.xlu0 %6474
  %6478 = vset.pattern.permute.xlu0 0
  %6479 = vperm.xlu0 %6478, %v6461
  %v6480 = vpop.permute.xlu0 %6479
  %v6482 = vadd.f32 %v6454, %v6465
  %v6483 = vadd.f32 %v6455, %v6470
  %v6484 = vadd.f32 %v6456, %v6475
  %v6485 = vadd.f32 %v6457, %v6480
  %v6486 = vmax.f32 %v6482, 0.0
  %v6487 = vmax.f32 %v6483, 0.0
  %v6488 = vmax.f32 %v6484, 0.0
  %v6489 = vmax.f32 %v6485, 0.0
  %6490 = vst [vmem:[%s13] sm:$0xff] %v6486
  %6491 = vst [vmem:[%s13 + $0x8] sm:$0xff] %v6487
  %6492 = vst [vmem:[%s13 + $0x10] sm:$0xff] %v6488
  %6493 = vst [vmem:[%s13 + $0x18] sm:$0xff] %v6489
  // Predicated region
  $region54: #{_lambda_.1} parent=0 // pred_check
    _
  $region55: #{_lambda_.1} parent=0 // pred_check_branch
    %6495 = sbr.rel (0) target = $region57
  $region56: #{_lambda_.1} parent=0 // pred_region
    _
  $region57: #{_lambda_.1} parent=0 // pred_fallthru
    _
  // Predicated region
  $region58: #{_lambda_.1} parent=0 // pred_check
    _
  $region59: #{_lambda_.1} parent=0 // pred_check_branch
    %6497 = sbr.rel (0) target = $region61
  $region60: #{_lambda_.1} parent=0 // pred_region
    _
  $region61: #{_lambda_.1} parent=0 // pred_fallthru
    _

</llo_original>
